<compile_context>
chip_gen: v7x
topology: tpu7x:2x2x1
jax: 0.10.0
libtpu: 0.0.40
codegen_flags: <defaults>
</compile_context>

<pallas_src>
import math

import jax
import jax.numpy as jnp
from jax.experimental import pallas as pl
from jax.experimental.pallas import tpu as pltpu

EPS = 1e-5  # BatchNorm2d default eps


def _vmem_limit_bytes():
    # generation-aware scoped VMEM limit (review: don't size v6e like v7x)
    try:
        cap = int(pltpu.get_tpu_info().vmem_capacity_bytes)
    except Exception:
        cap = 64 * 1024 * 1024
    return max(32 * 1024 * 1024, min(3 * cap // 4, 96 * 1024 * 1024))


def _cparams(n_axes):
    return pltpu.CompilerParams(
        dimension_semantics=("parallel",) * n_axes,
        vmem_limit_bytes=_vmem_limit_bytes())


# --------------------------------- kernels -----------------------------------


def _conv3x3_im2col(xpad_s, w_ref, H, W):
    """3x3 conv as ONE MXU contraction with K = 9*Cin (bf16 operands, f32 acc)."""
    Cin = xpad_s.shape[-1]
    cols = []
    for ky in range(3):
        for kx in range(3):
            patch = xpad_s[pl.ds(ky, H), pl.ds(kx, W), :]       # (H, W, Cin) f32
            cols.append(patch.reshape(H * W, Cin))
    pat = jnp.concatenate(cols, axis=1).astype(jnp.bfloat16)    # (H*W, 9*Cin)
    return jnp.dot(pat, w_ref[...], preferred_element_type=jnp.float32)


def _write_stats(st_ref, acc):
    """Per-tile BN partials: (sum, sum of squared deviations about tile mean).
    Combined exactly across tiles host-side with Chan's formula."""
    n = acc.shape[0]
    s = jnp.sum(acc, axis=0, keepdims=True)                     # (1, C)
    m2 = jnp.sum((acc - s * (1.0 / n)) ** 2, axis=0, keepdims=True)
    st_ref[...] = jnp.concatenate([s, m2], axis=0).reshape(st_ref.shape)


def _conv1_kernel(x_ref, w1_ref, b1_ref, y1_ref, st1_ref, xpad_s):
    _, H, W, _ = x_ref.shape
    xpad_s[...] = jnp.zeros_like(xpad_s)                        # halo ring = 0
    xpad_s[pl.ds(1, H), pl.ds(1, W), :] = x_ref[0]
    acc1 = _conv3x3_im2col(xpad_s, w1_ref, H, W) + b1_ref[...]
    _write_stats(st1_ref, acc1)
    y1_ref[...] = acc1[None].astype(y1_ref.dtype)               # bf16 intermediate


def _conv1_bridge_kernel(x_ref, w1_ref, b1_ref, wX_ref, bX_ref,
                         y1_ref, yX_ref, st1_ref, stX_ref, xpad_s):
    _, H, W, Cin = x_ref.shape
    xv = x_ref[0]
    xpad_s[...] = jnp.zeros_like(xpad_s)
    xpad_s[pl.ds(1, H), pl.ds(1, W), :] = xv
    acc1 = _conv3x3_im2col(xpad_s, w1_ref, H, W) + b1_ref[...]
    # fused 1x1 bridge conv: x read once, no halo needed
    accX = jnp.dot(xv.reshape(H * W, Cin).astype(jnp.bfloat16), wX_ref[...],
                   preferred_element_type=jnp.float32) + bX_ref[...]
    _write_stats(st1_ref, acc1)
    _write_stats(stX_ref, accX)
    y1_ref[...] = acc1[None].astype(y1_ref.dtype)
    yX_ref[...] = accX[None].astype(yX_ref.dtype)


def _conv2_kernel(y1_ref, sc1_ref, sh1_ref, w2_ref, b2_ref, y2_ref, st2_ref, apad_s):
    """Fused: BN1(scale/shift) + ReLU + zero-halo + conv2 (one K=9*C dot) + BN2 stats."""
    C = w2_ref.shape[-1]
    Hp, Wp, _ = apad_s.shape
    H, W = Hp - 2, Wp - 2
    a = jnp.maximum(
        y1_ref[0].astype(jnp.float32) * sc1_ref[...] + sh1_ref[...], 0.0)
    apad_s[...] = jnp.zeros_like(apad_s)       # ring stays exactly zero post-activation
    apad_s[pl.ds(1, H), pl.ds(1, W), :] = a.reshape(H, W, C)
    acc2 = _conv3x3_im2col(apad_s, w2_ref, H, W) + b2_ref[...]
    _write_stats(st2_ref, acc2)
    y2_ref[...] = acc2[None].astype(y2_ref.dtype)


def _finalize_bridge_kernel(y2_ref, sc2_ref, sh2_ref, yX_ref, scX_ref, shX_ref, out_ref):
    # all operands lane-dense (H, W*C); pure full-width VPU elementwise
    a2 = jnp.maximum(y2_ref[0].astype(jnp.float32) * sc2_ref[...] + sh2_ref[...], 0.0)
    aX = jnp.maximum(yX_ref[0].astype(jnp.float32) * scX_ref[...] + shX_ref[...], 0.0)
    out_ref[...] = (a2 + aX)[None]


def _finalize_identity_kernel(y2_ref, sc2_ref, sh2_ref, x_ref, out_ref):
    a2 = jnp.maximum(y2_ref[0].astype(jnp.float32) * sc2_ref[...] + sh2_ref[...], 0.0)
    out_ref[...] = (a2 + x_ref[0])[None]


# --------------------------- pallas_call wrappers ----------------------------


def _conv1_call(x, w1, b1, wX, bX):
    N, H, W, Cin = x.shape
    Cout = w1.shape[-1]
    x_spec = pl.BlockSpec((1, H, W, Cin), lambda n: (n, 0, 0, 0))
    w1_spec = pl.BlockSpec(w1.shape, lambda n: (0, 0))           # VMEM-resident
    b_spec = pl.BlockSpec((1, Cout), lambda n: (0, 0))           # VMEM-resident
    y_spec = pl.BlockSpec((1, H * W, Cout), lambda n: (n, 0, 0))
    st_spec = pl.BlockSpec((1, 2, Cout), lambda n: (n, 0, 0))
    y_shape = jax.ShapeDtypeStruct((N, H * W, Cout), jnp.bfloat16)
    st_shape = jax.ShapeDtypeStruct((N, 2, Cout), jnp.float32)
    scratch = [pltpu.VMEM((H + 2, W + 2, Cin), jnp.float32)]
    if wX is not None:
        wX_spec = pl.BlockSpec(wX.shape, lambda n: (0, 0))
        return pl.pallas_call(
            _conv1_bridge_kernel, grid=(N,),
            in_specs=[x_spec, w1_spec, b_spec, wX_spec, b_spec],
            out_specs=(y_spec, y_spec, st_spec, st_spec),
            out_shape=(y_shape, y_shape, st_shape, st_shape),
            scratch_shapes=scratch,
            compiler_params=_cparams(1),
        )(x, w1, b1, wX, bX)
    return pl.pallas_call(
        _conv1_kernel, grid=(N,),
        in_specs=[x_spec, w1_spec, b_spec],
        out_specs=(y_spec, st_spec),
        out_shape=(y_shape, st_shape),
        scratch_shapes=scratch,
        compiler_params=_cparams(1),
    )(x, w1, b1)


def _conv2_call(y1, sc1, sh1, w2, b2, H, W):
    N = y1.shape[0]
    C = w2.shape[-1]
    y_spec = pl.BlockSpec((1, H * W, C), lambda n: (n, 0, 0))
    c_spec = pl.BlockSpec((1, C), lambda n: (0, 0))
    w_spec = pl.BlockSpec(w2.shape, lambda n: (0, 0))
    st_spec = pl.BlockSpec((1, 2, C), lambda n: (n, 0, 0))
    return pl.pallas_call(
        _conv2_kernel, grid=(N,),
        in_specs=[y_spec, c_spec, c_spec, w_spec, c_spec],
        out_specs=(y_spec, st_spec),
        out_shape=(jax.ShapeDtypeStruct((N, H * W, C), jnp.bfloat16),
                   jax.ShapeDtypeStruct((N, 2, C), jnp.float32)),
        scratch_shapes=[pltpu.VMEM((H + 2, W + 2, C), jnp.float32)],
        compiler_params=_cparams(1),
    )(y1, sc1, sh1, w2, b2)


def _finalize_call(y2_ld, sc2_t, sh2_t, bridge=None, identity=None):
    N, H, WC = y2_ld.shape
    blk = pl.BlockSpec((1, H, WC), lambda n: (n, 0, 0))
    v_spec = pl.BlockSpec((1, WC), lambda n: (0, 0))
    out_shape = jax.ShapeDtypeStruct((N, H, WC), jnp.float32)
    if bridge is not None:
        yX_ld, scX_t, shX_t = bridge
        return pl.pallas_call(
            _finalize_bridge_kernel, grid=(N,),
            in_specs=[blk, v_spec, v_spec, blk, v_spec, v_spec],
            out_specs=blk, out_shape=out_shape,
            compiler_params=_cparams(1),
        )(y2_ld, sc2_t, sh2_t, yX_ld, scX_t, shX_t)
    return pl.pallas_call(
        _finalize_identity_kernel, grid=(N,),
        in_specs=[blk, v_spec, v_spec, blk],
        out_specs=blk, out_shape=out_shape,
        compiler_params=_cparams(1),
    )(y2_ld, sc2_t, sh2_t, identity)


# ------------------------------ forward pass ---------------------------------


def _bn_scale_shift(st, count, gamma, beta):
    """Exact combine of per-tile (sum, M2) with Chan's parallel-variance formula.
    Biased variance (training-mode BN). Returns per-channel (scale, shift)."""
    T = st.shape[0]
    n_i = count // T
    sums, m2s = st[:, 0, :], st[:, 1, :]
    mean = jnp.sum(sums, axis=0) / count
    mean_i = sums / n_i
    m2 = jnp.sum(m2s, axis=0) + n_i * jnp.sum((mean_i - mean[None, :]) ** 2, axis=0)
    istd = jax.lax.rsqrt(m2 / count + EPS)
    scale = gamma * istd
    shift = beta - mean * scale
    return scale.reshape(1, -1), shift.reshape(1, -1)


def _tile_lane_dense(v, W):
    # (1, C) per-channel vector -> (1, W*C) matching the flattened (W, C) lanes
    C = v.shape[-1]
    return jnp.tile(v.reshape(-1), (W,)).reshape(1, W * C)


def residual_unit_forward_nhwc(x, p):
    N, H, W, Cin = x.shape
    Cout = p["w1"].shape[-1]
    count = N * H * W

    if p["wX"] is not None:
        y1, yX, st1, stX = _conv1_call(x, p["w1"], p["b1"], p["wX"], p["bX"])
    else:
        y1, st1 = _conv1_call(x, p["w1"], p["b1"], None, None)
        yX = stX = None

    sc1, sh1 = _bn_scale_shift(st1, count, p["g1"], p["bt1"])
    y2, st2 = _conv2_call(y1, sc1, sh1, p["w2"], p["b2"], H, W)
    sc2, sh2 = _bn_scale_shift(st2, count, p["g2"], p["bt2"])

    # free dim-merge reshapes -> lane-dense (H, W*C) layout for the mem-bound
    # finalize pass (unmasked full-width stores)
    y2_ld = y2.reshape(N, H, W * Cout)
    sc2_t, sh2_t = _tile_lane_dense(sc2, W), _tile_lane_dense(sh2, W)
    if p["wX"] is not None:
        scX, shX = _bn_scale_shift(stX, count, p["gX"], p["btX"])
        out = _finalize_call(
            y2_ld, sc2_t, sh2_t,
            bridge=(yX.reshape(N, H, W * Cout),
                    _tile_lane_dense(scX, W), _tile_lane_dense(shX, W)))
    else:
        out = _finalize_call(y2_ld, sc2_t, sh2_t, identity=x.reshape(N, H, W * Cin))
    return out.reshape(N, H, W, Cout)


def residual_unit_forward(x_nchw, params):
    # glue: NCHW (PyTorch convention) <-> NHWC (TPU-friendly) only at the boundary
    x = jnp.transpose(x_nchw, (0, 2, 3, 1)).astype(jnp.float32)
    out = residual_unit_forward_nhwc(x, params)
    return jnp.transpose(out, (0, 3, 1, 2))


# -------------------- parameter init (deterministic, like PyTorch) ------------


def xavier_uniform_conv(key, cout, cin, kh, kw, gain):
    fan_in, fan_out = cin * kh * kw, cout * kh * kw
    bound = gain * math.sqrt(6.0 / (fan_in + fan_out))
    return jax.random.uniform(key, (cout, cin, kh, kw), jnp.float32, -bound, bound)


def make_params(key, in_size, out_size):
    k1, k2, k3 = jax.random.split(key, 3)
    gain = math.sqrt(2.0)
    w1 = xavier_uniform_conv(k1, out_size, in_size, 3, 3, gain)
    w2 = xavier_uniform_conv(k2, out_size, out_size, 3, 3, gain)
    b1 = jnp.zeros((out_size,), jnp.float32)
    b2 = jnp.zeros((out_size,), jnp.float32)
    torch_p = {"w1": w1, "b1": b1, "w2": w2, "b2": b2, "wX": None, "bX": None}
    if in_size != out_size:
        # TODO(synk): PyTorch's convX uses its default kaiming-uniform init;
        # xavier is the deterministic stand-in (forward semantics unchanged).
        torch_p["wX"] = xavier_uniform_conv(k3, out_size, in_size, 1, 1, 1.0)
        torch_p["bX"] = jnp.zeros((out_size,), jnp.float32)

    def pack3x3(w):  # (Cout,Cin,3,3) -> (9*Cin, Cout), row = (ky*3+kx)*Cin + ci
        return jnp.transpose(w, (2, 3, 1, 0)).reshape(9 * w.shape[1], w.shape[0])

    ones = jnp.ones((out_size,), jnp.float32)
    zeros = jnp.zeros((out_size,), jnp.float32)
    kern_p = {
        "w1": pack3x3(w1).astype(jnp.bfloat16), "b1": b1.reshape(1, -1),
        "w2": pack3x3(w2).astype(jnp.bfloat16), "b2": b2.reshape(1, -1),
        "wX": None, "bX": None,
        # BatchNorm2d affine params at construction: gamma=1, beta=0
        "g1": ones, "bt1": zeros, "g2": ones, "bt2": zeros, "gX": ones, "btX": zeros,
    }
    if torch_p["wX"] is not None:
        kern_p["wX"] = jnp.transpose(torch_p["wX"][:, :, 0, 0]).astype(jnp.bfloat16)
        kern_p["bX"] = torch_p["bX"].reshape(1, -1)
    return torch_p, kern_p


# ------------------------ pure-JAX reference (checking) -----------------------


def _ref_conv(x, w_oihw, b, padding):
    y = jax.lax.conv_general_dilated(
        x, w_oihw, (1, 1), ((padding, padding), (padding, padding)),
        dimension_numbers=("NCHW", "OIHW", "NCHW"))
    return y + b[None, :, None, None]


def _ref_bn_relu(y):
    mean = jnp.mean(y, axis=(0, 2, 3), keepdims=True)
    var = jnp.mean((y - mean) ** 2, axis=(0, 2, 3), keepdims=True)
    return jnp.maximum((y - mean) * jax.lax.rsqrt(var + EPS), 0.0)


def residual_unit_reference(x, p):
    out1 = _ref_bn_relu(_ref_conv(x, p["w1"], p["b1"], 1))
    out2 = _ref_bn_relu(_ref_conv(out1, p["w2"], p["b2"], 1))
    bridge = x
    if p["wX"] is not None:
        bridge = _ref_bn_relu(_ref_conv(x, p["wX"], p["bX"], 0))
    return out2 + bridge


# ------------------------------------ main ------------------------------------

if __name__ == "__main__":
    N, H, W = 2, 16, 16
    key = jax.random.PRNGKey(0)
    kx1, kp1, kx2, kp2 = jax.random.split(key, 4)

    fwd = jax.jit(residual_unit_forward)

    def check(out, ref, name):
        assert out.shape == ref.shape, (name, out.shape, ref.shape)
        # bf16 MXU operands + bf16 intermediates widen tolerance vs the f32
        # reference; also check per-channel relative error so layout/fusion
        # bugs are not hidden by a loose absolute tolerance.
        ok = bool(jnp.allclose(out, ref, atol=1e-1, rtol=5e-2))
        ch_err = jnp.max(jnp.abs(out - ref), axis=(0, 2, 3))
        ch_scale = jnp.max(jnp.abs(ref), axis=(0, 2, 3)) + 1e-6
        rel = float(jnp.max(ch_err / ch_scale))
        assert ok and rel < 8e-2, f"{name}: allclose={ok} per-channel rel={rel:.4f}"

    # case 1: in_size != out_size -> exercises the 1x1-conv/BN/ReLU bridge
    Cin, Cout = 4, 8
    x = jax.random.normal(kx1, (N, Cin, H, W), jnp.float32)   # NCHW, like PyTorch
    pt1, pk1 = make_params(kp1, Cin, Cout)
    out = jax.block_until_ready(fwd(x, pk1))
    check(out, residual_unit_reference(x, pt1), "bridge")

    # case 2: in_size == out_size -> identity residual path
    C = 8
    x2 = jax.random.normal(kx2, (N, C, H, W), jnp.float32)
    pt2, pk2 = make_params(kp2, C, C)
    out2 = jax.block_until_ready(fwd(x2, pk2))
    check(out2, residual_unit_reference(x2, pt2), "identity")

    print("KERNEL_OK")
</pallas_src>

<mosaic_0001>
module attributes {stable_mosaic.version = 11 : i64} {
  func.func @_conv1_bridge_kernel(%arg0: i32, %arg1: memref<1x16x16x4xf32, #tpu.memory_space<vmem>>, %arg2: memref<36x8xbf16, #tpu.memory_space<vmem>>, %arg3: memref<1x8xf32, #tpu.memory_space<vmem>>, %arg4: memref<4x8xbf16, #tpu.memory_space<vmem>>, %arg5: memref<1x8xf32, #tpu.memory_space<vmem>>, %arg6: memref<1x256x8xbf16, #tpu.memory_space<vmem>>, %arg7: memref<1x256x8xbf16, #tpu.memory_space<vmem>>, %arg8: memref<1x2x8xf32, #tpu.memory_space<vmem>>, %arg9: memref<1x2x8xf32, #tpu.memory_space<vmem>>, %arg10: memref<18x18x4xf32, #tpu.memory_space<vmem>>) attributes {dimension_semantics = [#tpu.dimension_semantics<parallel>], iteration_bounds = array<i64: 2>, scalar_prefetch = 0 : i64, scratch_operands = 1 : i64, tpu.core_type = #tpu.core_type<tc>, window_params = [{transform_indices = @transform_0, window_bounds = array<i64: 1, 16, 16, 4>}, {pipeline_mode = #tpu.pipeline_mode<synchronous>, transform_indices = @transform_1, window_bounds = array<i64: 36, 8>}, {pipeline_mode = #tpu.pipeline_mode<synchronous>, transform_indices = @transform_2, window_bounds = array<i64: 1, 8>}, {pipeline_mode = #tpu.pipeline_mode<synchronous>, transform_indices = @transform_3, window_bounds = array<i64: 4, 8>}, {pipeline_mode = #tpu.pipeline_mode<synchronous>, transform_indices = @transform_4, window_bounds = array<i64: 1, 8>}, {transform_indices = @transform_5, window_bounds = array<i64: 1, 256, 8>}, {transform_indices = @transform_6, window_bounds = array<i64: 1, 256, 8>}, {transform_indices = @transform_7, window_bounds = array<i64: 1, 2, 8>}, {transform_indices = @transform_8, window_bounds = array<i64: 1, 2, 8>}]} {
    %c0 = arith.constant 0 : index
    %c0_0 = arith.constant 0 : index
    %c0_1 = arith.constant 0 : index
    %c0_2 = arith.constant 0 : index
    %0 = vector.load %arg1[%c0, %c0_0, %c0_1, %c0_2] : memref<1x16x16x4xf32, #tpu.memory_space<vmem>>, vector<1x16x16x4xf32>
    %1 = vector.shape_cast %0 : vector<1x16x16x4xf32> to vector<16x16x4xf32>
    %cst = arith.constant 0.000000e+00 : f32
    %2 = vector.broadcast %cst : f32 to vector<18x18x4xf32>
    %c0_3 = arith.constant 0 : index
    %c0_4 = arith.constant 0 : index
    %c0_5 = arith.constant 0 : index
    %3 = vector.load %arg10[%c0_3, %c0_4, %c0_5] : memref<18x18x4xf32, #tpu.memory_space<vmem>>, vector<18x18x4xf32>
    tpu.vector_store %arg10[%c0_3, %c0_4, %c0_5], %2 {strides = array<i32>} : memref<18x18x4xf32, #tpu.memory_space<vmem>>, vector<18x18x4xf32>,
    %c1 = arith.constant 1 : index
    %c1_6 = arith.constant 1 : index
    %c0_7 = arith.constant 0 : index
    %4 = vector.load %arg10[%c1, %c1_6, %c0_7] : memref<18x18x4xf32, #tpu.memory_space<vmem>>, vector<16x16x4xf32>
    tpu.vector_store %arg10[%c1, %c1_6, %c0_7], %1 {strides = array<i32>} : memref<18x18x4xf32, #tpu.memory_space<vmem>>, vector<16x16x4xf32>,
    %c0_8 = arith.constant 0 : index
    %c0_9 = arith.constant 0 : index
    %c0_10 = arith.constant 0 : index
    %5 = vector.load %arg10[%c0_8, %c0_9, %c0_10] : memref<18x18x4xf32, #tpu.memory_space<vmem>>, vector<16x16x4xf32>
    %6 = vector.shape_cast %5 : vector<16x16x4xf32> to vector<256x4xf32>
    %c0_11 = arith.constant 0 : index
    %c1_12 = arith.constant 1 : index
    %c0_13 = arith.constant 0 : index
    %7 = vector.load %arg10[%c0_11, %c1_12, %c0_13] : memref<18x18x4xf32, #tpu.memory_space<vmem>>, vector<16x16x4xf32>
    %8 = vector.shape_cast %7 : vector<16x16x4xf32> to vector<256x4xf32>
    %c0_14 = arith.constant 0 : index
    %c2 = arith.constant 2 : index
    %c0_15 = arith.constant 0 : index
    %9 = vector.load %arg10[%c0_14, %c2, %c0_15] : memref<18x18x4xf32, #tpu.memory_space<vmem>>, vector<16x16x4xf32>
    %10 = vector.shape_cast %9 : vector<16x16x4xf32> to vector<256x4xf32>
    %c1_16 = arith.constant 1 : index
    %c0_17 = arith.constant 0 : index
    %c0_18 = arith.constant 0 : index
    %11 = vector.load %arg10[%c1_16, %c0_17, %c0_18] : memref<18x18x4xf32, #tpu.memory_space<vmem>>, vector<16x16x4xf32>
    %12 = vector.shape_cast %11 : vector<16x16x4xf32> to vector<256x4xf32>
    %c1_19 = arith.constant 1 : index
    %c1_20 = arith.constant 1 : index
    %c0_21 = arith.constant 0 : index
    %13 = vector.load %arg10[%c1_19, %c1_20, %c0_21] : memref<18x18x4xf32, #tpu.memory_space<vmem>>, vector<16x16x4xf32>
    %14 = vector.shape_cast %13 : vector<16x16x4xf32> to vector<256x4xf32>
    %c1_22 = arith.constant 1 : index
    %c2_23 = arith.constant 2 : index
    %c0_24 = arith.constant 0 : index
    %15 = vector.load %arg10[%c1_22, %c2_23, %c0_24] : memref<18x18x4xf32, #tpu.memory_space<vmem>>, vector<16x16x4xf32>
    %16 = vector.shape_cast %15 : vector<16x16x4xf32> to vector<256x4xf32>
    %c2_25 = arith.constant 2 : index
    %c0_26 = arith.constant 0 : index
    %c0_27 = arith.constant 0 : index
    %17 = vector.load %arg10[%c2_25, %c0_26, %c0_27] : memref<18x18x4xf32, #tpu.memory_space<vmem>>, vector<16x16x4xf32>
    %18 = vector.shape_cast %17 : vector<16x16x4xf32> to vector<256x4xf32>
    %c2_28 = arith.constant 2 : index
    %c1_29 = arith.constant 1 : index
    %c0_30 = arith.constant 0 : index
    %19 = vector.load %arg10[%c2_28, %c1_29, %c0_30] : memref<18x18x4xf32, #tpu.memory_space<vmem>>, vector<16x16x4xf32>
    %20 = vector.shape_cast %19 : vector<16x16x4xf32> to vector<256x4xf32>
    %c2_31 = arith.constant 2 : index
    %c2_32 = arith.constant 2 : index
    %c0_33 = arith.constant 0 : index
    %21 = vector.load %arg10[%c2_31, %c2_32, %c0_33] : memref<18x18x4xf32, #tpu.memory_space<vmem>>, vector<16x16x4xf32>
    %22 = vector.shape_cast %21 : vector<16x16x4xf32> to vector<256x4xf32>
    %23 = tpu.concatenate %6, %8, %10, %12, %14, %16, %18, %20, %22 in 1 : vector<256x4xf32>, vector<256x4xf32>, vector<256x4xf32>, vector<256x4xf32>, vector<256x4xf32>, vector<256x4xf32>, vector<256x4xf32>, vector<256x4xf32>, vector<256x4xf32> -> vector<256x36xf32>
    %24 = arith.truncf %23 : vector<256x36xf32> to vector<256x36xbf16>
    %c0_34 = arith.constant 0 : index
    %c0_35 = arith.constant 0 : index
    %25 = vector.load %arg2[%c0_34, %c0_35] : memref<36x8xbf16, #tpu.memory_space<vmem>>, vector<36x8xbf16>
    %cst_36 = arith.constant dense<0.000000e+00> : vector<256x8xf32>
    %26 = tpu.matmul %24, %25, %cst_36 {dimension_numbers = #tpu.dot_dimension_numbers<[1], [0], [0], [1], [0, 0, 1, 1], [], []>} : vector<256x36xbf16>, vector<36x8xbf16>, vector<256x8xf32> -> vector<256x8xf32>
    %c0_37 = arith.constant 0 : index
    %c0_38 = arith.constant 0 : index
    %27 = vector.load %arg3[%c0_37, %c0_38] : memref<1x8xf32, #tpu.memory_space<vmem>>, vector<1x8xf32>
    %28 = vector.broadcast %27 : vector<1x8xf32> to vector<256x8xf32>
    %29 = arith.addf %26, %28 : vector<256x8xf32>
    %30 = vector.shape_cast %1 : vector<16x16x4xf32> to vector<256x4xf32>
    %31 = arith.truncf %30 : vector<256x4xf32> to vector<256x4xbf16>
    %c0_39 = arith.constant 0 : index
    %c0_40 = arith.constant 0 : index
    %32 = vector.load %arg4[%c0_39, %c0_40] : memref<4x8xbf16, #tpu.memory_space<vmem>>, vector<4x8xbf16>
    %cst_41 = arith.constant dense<0.000000e+00> : vector<256x8xf32>
    %33 = tpu.matmul %31, %32, %cst_41 {dimension_numbers = #tpu.dot_dimension_numbers<[1], [0], [0], [1], [0, 0, 1, 1], [], []>} : vector<256x4xbf16>, vector<4x8xbf16>, vector<256x8xf32> -> vector<256x8xf32>
    %c0_42 = arith.constant 0 : index
    %c0_43 = arith.constant 0 : index
    %34 = vector.load %arg5[%c0_42, %c0_43] : memref<1x8xf32, #tpu.memory_space<vmem>>, vector<1x8xf32>
    %35 = vector.broadcast %34 : vector<1x8xf32> to vector<256x8xf32>
    %36 = arith.addf %33, %35 : vector<256x8xf32>
    %cst_44 = arith.constant dense<0.000000e+00> : vector<8xf32>
    %37 = vector.multi_reduction <add>, %29, %cst_44 [0] : vector<256x8xf32> to vector<8xf32>
    %38 = vector.shape_cast %37 : vector<8xf32> to vector<1x8xf32>
    %cst_45 = arith.constant 3.906250e-03 : f32
    %39 = vector.broadcast %cst_45 : f32 to vector<1x8xf32>
    %40 = arith.mulf %38, %39 : vector<1x8xf32>
    %41 = vector.broadcast %40 : vector<1x8xf32> to vector<256x8xf32>
    %42 = arith.subf %29, %41 : vector<256x8xf32>
    %43 = arith.mulf %42, %42 : vector<256x8xf32>
    %cst_46 = arith.constant dense<0.000000e+00> : vector<8xf32>
    %44 = vector.multi_reduction <add>, %43, %cst_46 [0] : vector<256x8xf32> to vector<8xf32>
    %45 = vector.shape_cast %44 : vector<8xf32> to vector<1x8xf32>
    %46 = tpu.concatenate %38, %45 in 0 : vector<1x8xf32>, vector<1x8xf32> -> vector<2x8xf32>
    %47 = vector.shape_cast %46 : vector<2x8xf32> to vector<1x2x8xf32>
    %c0_47 = arith.constant 0 : index
    %c0_48 = arith.constant 0 : index
    %c0_49 = arith.constant 0 : index
    %48 = vector.load %arg8[%c0_47, %c0_48, %c0_49] : memref<1x2x8xf32, #tpu.memory_space<vmem>>, vector<1x2x8xf32>
    tpu.vector_store %arg8[%c0_47, %c0_48, %c0_49], %47 {strides = array<i32>} : memref<1x2x8xf32, #tpu.memory_space<vmem>>, vector<1x2x8xf32>,
    %cst_50 = arith.constant dense<0.000000e+00> : vector<8xf32>
    %49 = vector.multi_reduction <add>, %36, %cst_50 [0] : vector<256x8xf32> to vector<8xf32>
    %50 = vector.shape_cast %49 : vector<8xf32> to vector<1x8xf32>
    %cst_51 = arith.constant 3.906250e-03 : f32
    %51 = vector.broadcast %cst_51 : f32 to vector<1x8xf32>
    %52 = arith.mulf %50, %51 : vector<1x8xf32>
    %53 = vector.broadcast %52 : vector<1x8xf32> to vector<256x8xf32>
    %54 = arith.subf %36, %53 : vector<256x8xf32>
    %55 = arith.mulf %54, %54 : vector<256x8xf32>
    %cst_52 = arith.constant dense<0.000000e+00> : vector<8xf32>
    %56 = vector.multi_reduction <add>, %55, %cst_52 [0] : vector<256x8xf32> to vector<8xf32>
    %57 = vector.shape_cast %56 : vector<8xf32> to vector<1x8xf32>
    %58 = tpu.concatenate %50, %57 in 0 : vector<1x8xf32>, vector<1x8xf32> -> vector<2x8xf32>
    %59 = vector.shape_cast %58 : vector<2x8xf32> to vector<1x2x8xf32>
    %c0_53 = arith.constant 0 : index
    %c0_54 = arith.constant 0 : index
    %c0_55 = arith.constant 0 : index
    %60 = vector.load %arg9[%c0_53, %c0_54, %c0_55] : memref<1x2x8xf32, #tpu.memory_space<vmem>>, vector<1x2x8xf32>
    tpu.vector_store %arg9[%c0_53, %c0_54, %c0_55], %59 {strides = array<i32>} : memref<1x2x8xf32, #tpu.memory_space<vmem>>, vector<1x2x8xf32>,
    %61 = vector.shape_cast %29 : vector<256x8xf32> to vector<1x256x8xf32>
    %62 = arith.truncf %61 : vector<1x256x8xf32> to vector<1x256x8xbf16>
    %c0_56 = arith.constant 0 : index
    %c0_57 = arith.constant 0 : index
    %c0_58 = arith.constant 0 : index
    %63 = vector.load %arg6[%c0_56, %c0_57, %c0_58] : memref<1x256x8xbf16, #tpu.memory_space<vmem>>, vector<1x256x8xbf16>
    tpu.vector_store %arg6[%c0_56, %c0_57, %c0_58], %62 {strides = array<i32>} : memref<1x256x8xbf16, #tpu.memory_space<vmem>>, vector<1x256x8xbf16>,
    %64 = vector.shape_cast %36 : vector<256x8xf32> to vector<1x256x8xf32>
    %65 = arith.truncf %64 : vector<1x256x8xf32> to vector<1x256x8xbf16>
    %c0_59 = arith.constant 0 : index
    %c0_60 = arith.constant 0 : index
    %c0_61 = arith.constant 0 : index
    %66 = vector.load %arg7[%c0_59, %c0_60, %c0_61] : memref<1x256x8xbf16, #tpu.memory_space<vmem>>, vector<1x256x8xbf16>
    tpu.vector_store %arg7[%c0_59, %c0_60, %c0_61], %65 {strides = array<i32>} : memref<1x256x8xbf16, #tpu.memory_space<vmem>>, vector<1x256x8xbf16>,
    return
  }
  func.func @transform_0(%arg0: i32) -> (i32, i32, i32, i32) {
    %c0_i32 = arith.constant 0 : i32
    %c0_i32_0 = arith.constant 0 : i32
    %c0_i32_1 = arith.constant 0 : i32
    %c0_i32_2 = arith.constant 0 : i32
    return %arg0, %c0_i32, %c0_i32_0, %c0_i32_1 : i32, i32, i32, i32
  }
  func.func @transform_1(%arg0: i32) -> (i32, i32) {
    %c0_i32 = arith.constant 0 : i32
    %c0_i32_0 = arith.constant 0 : i32
    %c0_i32_1 = arith.constant 0 : i32
    return %c0_i32, %c0_i32_0 : i32, i32
  }
  func.func @transform_2(%arg0: i32) -> (i32, i32) {
    %c0_i32 = arith.constant 0 : i32
    %c0_i32_0 = arith.constant 0 : i32
    %c0_i32_1 = arith.constant 0 : i32
    return %c0_i32, %c0_i32_0 : i32, i32
  }
  func.func @transform_3(%arg0: i32) -> (i32, i32) {
    %c0_i32 = arith.constant 0 : i32
    %c0_i32_0 = arith.constant 0 : i32
    %c0_i32_1 = arith.constant 0 : i32
    return %c0_i32, %c0_i32_0 : i32, i32
  }
  func.func @transform_4(%arg0: i32) -> (i32, i32) {
    %c0_i32 = arith.constant 0 : i32
    %c0_i32_0 = arith.constant 0 : i32
    %c0_i32_1 = arith.constant 0 : i32
    return %c0_i32, %c0_i32_0 : i32, i32
  }
  func.func @transform_5(%arg0: i32) -> (i32, i32, i32) {
    %c0_i32 = arith.constant 0 : i32
    %c0_i32_0 = arith.constant 0 : i32
    %c0_i32_1 = arith.constant 0 : i32
    return %arg0, %c0_i32, %c0_i32_0 : i32, i32, i32
  }
  func.func @transform_6(%arg0: i32) -> (i32, i32, i32) {
    %c0_i32 = arith.constant 0 : i32
    %c0_i32_0 = arith.constant 0 : i32
    %c0_i32_1 = arith.constant 0 : i32
    return %arg0, %c0_i32, %c0_i32_0 : i32, i32, i32
  }
  func.func @transform_7(%arg0: i32) -> (i32, i32, i32) {
    %c0_i32 = arith.constant 0 : i32
    %c0_i32_0 = arith.constant 0 : i32
    %c0_i32_1 = arith.constant 0 : i32
    return %arg0, %c0_i32, %c0_i32_0 : i32, i32, i32
  }
  func.func @transform_8(%arg0: i32) -> (i32, i32, i32) {
    %c0_i32 = arith.constant 0 : i32
    %c0_i32_0 = arith.constant 0 : i32
    %c0_i32_1 = arith.constant 0 : i32
    return %arg0, %c0_i32, %c0_i32_0 : i32, i32, i32
  }
}

module attributes {stable_mosaic.version = 11 : i64} {
  func.func @_conv2_kernel(%arg0: i32, %arg1: memref<1x256x8xbf16, #tpu.memory_space<vmem>>, %arg2: memref<1x8xf32, #tpu.memory_space<vmem>>, %arg3: memref<1x8xf32, #tpu.memory_space<vmem>>, %arg4: memref<72x8xbf16, #tpu.memory_space<vmem>>, %arg5: memref<1x8xf32, #tpu.memory_space<vmem>>, %arg6: memref<1x256x8xbf16, #tpu.memory_space<vmem>>, %arg7: memref<1x2x8xf32, #tpu.memory_space<vmem>>, %arg8: memref<18x18x8xf32, #tpu.memory_space<vmem>>) attributes {dimension_semantics = [#tpu.dimension_semantics<parallel>], iteration_bounds = array<i64: 2>, scalar_prefetch = 0 : i64, scratch_operands = 1 : i64, tpu.core_type = #tpu.core_type<tc>, window_params = [{transform_indices = @transform_0, window_bounds = array<i64: 1, 256, 8>}, {pipeline_mode = #tpu.pipeline_mode<synchronous>, transform_indices = @transform_1, window_bounds = array<i64: 1, 8>}, {pipeline_mode = #tpu.pipeline_mode<synchronous>, transform_indices = @transform_2, window_bounds = array<i64: 1, 8>}, {pipeline_mode = #tpu.pipeline_mode<synchronous>, transform_indices = @transform_3, window_bounds = array<i64: 72, 8>}, {pipeline_mode = #tpu.pipeline_mode<synchronous>, transform_indices = @transform_4, window_bounds = array<i64: 1, 8>}, {transform_indices = @transform_5, window_bounds = array<i64: 1, 256, 8>}, {transform_indices = @transform_6, window_bounds = array<i64: 1, 2, 8>}]} {
    %c0 = arith.constant 0 : index
    %c0_0 = arith.constant 0 : index
    %c0_1 = arith.constant 0 : index
    %0 = vector.load %arg1[%c0, %c0_0, %c0_1] : memref<1x256x8xbf16, #tpu.memory_space<vmem>>, vector<1x256x8xbf16>
    %1 = vector.shape_cast %0 : vector<1x256x8xbf16> to vector<256x8xbf16>
    %2 = arith.extf %1 : vector<256x8xbf16> to vector<256x8xf32>
    %c0_2 = arith.constant 0 : index
    %c0_3 = arith.constant 0 : index
    %3 = vector.load %arg2[%c0_2, %c0_3] : memref<1x8xf32, #tpu.memory_space<vmem>>, vector<1x8xf32>
    %4 = vector.broadcast %3 : vector<1x8xf32> to vector<256x8xf32>
    %5 = arith.mulf %2, %4 : vector<256x8xf32>
    %c0_4 = arith.constant 0 : index
    %c0_5 = arith.constant 0 : index
    %6 = vector.load %arg3[%c0_4, %c0_5] : memref<1x8xf32, #tpu.memory_space<vmem>>, vector<1x8xf32>
    %7 = vector.broadcast %6 : vector<1x8xf32> to vector<256x8xf32>
    %8 = arith.addf %5, %7 : vector<256x8xf32>
    %cst = arith.constant 0.000000e+00 : f32
    %9 = vector.broadcast %cst : f32 to vector<256x8xf32>
    %10 = arith.maximumf %8, %9 : vector<256x8xf32>
    %cst_6 = arith.constant 0.000000e+00 : f32
    %11 = vector.broadcast %cst_6 : f32 to vector<18x18x8xf32>
    %c0_7 = arith.constant 0 : index
    %c0_8 = arith.constant 0 : index
    %c0_9 = arith.constant 0 : index
    %12 = vector.load %arg8[%c0_7, %c0_8, %c0_9] : memref<18x18x8xf32, #tpu.memory_space<vmem>>, vector<18x18x8xf32>
    tpu.vector_store %arg8[%c0_7, %c0_8, %c0_9], %11 {strides = array<i32>} : memref<18x18x8xf32, #tpu.memory_space<vmem>>, vector<18x18x8xf32>,
    %13 = vector.shape_cast %10 : vector<256x8xf32> to vector<16x16x8xf32>
    %c1 = arith.constant 1 : index
    %c1_10 = arith.constant 1 : index
    %c0_11 = arith.constant 0 : index
    %14 = vector.load %arg8[%c1, %c1_10, %c0_11] : memref<18x18x8xf32, #tpu.memory_space<vmem>>, vector<16x16x8xf32>
    tpu.vector_store %arg8[%c1, %c1_10, %c0_11], %13 {strides = array<i32>} : memref<18x18x8xf32, #tpu.memory_space<vmem>>, vector<16x16x8xf32>,
    %c0_12 = arith.constant 0 : index
    %c0_13 = arith.constant 0 : index
    %c0_14 = arith.constant 0 : index
    %15 = vector.load %arg8[%c0_12, %c0_13, %c0_14] : memref<18x18x8xf32, #tpu.memory_space<vmem>>, vector<16x16x8xf32>
    %16 = vector.shape_cast %15 : vector<16x16x8xf32> to vector<256x8xf32>
    %c0_15 = arith.constant 0 : index
    %c1_16 = arith.constant 1 : index
    %c0_17 = arith.constant 0 : index
    %17 = vector.load %arg8[%c0_15, %c1_16, %c0_17] : memref<18x18x8xf32, #tpu.memory_space<vmem>>, vector<16x16x8xf32>
    %18 = vector.shape_cast %17 : vector<16x16x8xf32> to vector<256x8xf32>
    %c0_18 = arith.constant 0 : index
    %c2 = arith.constant 2 : index
    %c0_19 = arith.constant 0 : index
    %19 = vector.load %arg8[%c0_18, %c2, %c0_19] : memref<18x18x8xf32, #tpu.memory_space<vmem>>, vector<16x16x8xf32>
    %20 = vector.shape_cast %19 : vector<16x16x8xf32> to vector<256x8xf32>
    %c1_20 = arith.constant 1 : index
    %c0_21 = arith.constant 0 : index
    %c0_22 = arith.constant 0 : index
    %21 = vector.load %arg8[%c1_20, %c0_21, %c0_22] : memref<18x18x8xf32, #tpu.memory_space<vmem>>, vector<16x16x8xf32>
    %22 = vector.shape_cast %21 : vector<16x16x8xf32> to vector<256x8xf32>
    %c1_23 = arith.constant 1 : index
    %c1_24 = arith.constant 1 : index
    %c0_25 = arith.constant 0 : index
    %23 = vector.load %arg8[%c1_23, %c1_24, %c0_25] : memref<18x18x8xf32, #tpu.memory_space<vmem>>, vector<16x16x8xf32>
    %24 = vector.shape_cast %23 : vector<16x16x8xf32> to vector<256x8xf32>
    %c1_26 = arith.constant 1 : index
    %c2_27 = arith.constant 2 : index
    %c0_28 = arith.constant 0 : index
    %25 = vector.load %arg8[%c1_26, %c2_27, %c0_28] : memref<18x18x8xf32, #tpu.memory_space<vmem>>, vector<16x16x8xf32>
    %26 = vector.shape_cast %25 : vector<16x16x8xf32> to vector<256x8xf32>
    %c2_29 = arith.constant 2 : index
    %c0_30 = arith.constant 0 : index
    %c0_31 = arith.constant 0 : index
    %27 = vector.load %arg8[%c2_29, %c0_30, %c0_31] : memref<18x18x8xf32, #tpu.memory_space<vmem>>, vector<16x16x8xf32>
    %28 = vector.shape_cast %27 : vector<16x16x8xf32> to vector<256x8xf32>
    %c2_32 = arith.constant 2 : index
    %c1_33 = arith.constant 1 : index
    %c0_34 = arith.constant 0 : index
    %29 = vector.load %arg8[%c2_32, %c1_33, %c0_34] : memref<18x18x8xf32, #tpu.memory_space<vmem>>, vector<16x16x8xf32>
    %30 = vector.shape_cast %29 : vector<16x16x8xf32> to vector<256x8xf32>
    %c2_35 = arith.constant 2 : index
    %c2_36 = arith.constant 2 : index
    %c0_37 = arith.constant 0 : index
    %31 = vector.load %arg8[%c2_35, %c2_36, %c0_37] : memref<18x18x8xf32, #tpu.memory_space<vmem>>, vector<16x16x8xf32>
    %32 = vector.shape_cast %31 : vector<16x16x8xf32> to vector<256x8xf32>
    %33 = tpu.concatenate %16, %18, %20, %22, %24, %26, %28, %30, %32 in 1 : vector<256x8xf32>, vector<256x8xf32>, vector<256x8xf32>, vector<256x8xf32>, vector<256x8xf32>, vector<256x8xf32>, vector<256x8xf32>, vector<256x8xf32>, vector<256x8xf32> -> vector<256x72xf32>
    %34 = arith.truncf %33 : vector<256x72xf32> to vector<256x72xbf16>
    %c0_38 = arith.constant 0 : index
    %c0_39 = arith.constant 0 : index
    %35 = vector.load %arg4[%c0_38, %c0_39] : memref<72x8xbf16, #tpu.memory_space<vmem>>, vector<72x8xbf16>
    %cst_40 = arith.constant dense<0.000000e+00> : vector<256x8xf32>
    %36 = tpu.matmul %34, %35, %cst_40 {dimension_numbers = #tpu.dot_dimension_numbers<[1], [0], [0], [1], [0, 0, 1, 1], [], []>} : vector<256x72xbf16>, vector<72x8xbf16>, vector<256x8xf32> -> vector<256x8xf32>
    %c0_41 = arith.constant 0 : index
    %c0_42 = arith.constant 0 : index
    %37 = vector.load %arg5[%c0_41, %c0_42] : memref<1x8xf32, #tpu.memory_space<vmem>>, vector<1x8xf32>
    %38 = vector.broadcast %37 : vector<1x8xf32> to vector<256x8xf32>
    %39 = arith.addf %36, %38 : vector<256x8xf32>
    %cst_43 = arith.constant dense<0.000000e+00> : vector<8xf32>
    %40 = vector.multi_reduction <add>, %39, %cst_43 [0] : vector<256x8xf32> to vector<8xf32>
    %41 = vector.shape_cast %40 : vector<8xf32> to vector<1x8xf32>
    %cst_44 = arith.constant 3.906250e-03 : f32
    %42 = vector.broadcast %cst_44 : f32 to vector<1x8xf32>
    %43 = arith.mulf %41, %42 : vector<1x8xf32>
    %44 = vector.broadcast %43 : vector<1x8xf32> to vector<256x8xf32>
    %45 = arith.subf %39, %44 : vector<256x8xf32>
    %46 = arith.mulf %45, %45 : vector<256x8xf32>
    %cst_45 = arith.constant dense<0.000000e+00> : vector<8xf32>
    %47 = vector.multi_reduction <add>, %46, %cst_45 [0] : vector<256x8xf32> to vector<8xf32>
    %48 = vector.shape_cast %47 : vector<8xf32> to vector<1x8xf32>
    %49 = tpu.concatenate %41, %48 in 0 : vector<1x8xf32>, vector<1x8xf32> -> vector<2x8xf32>
    %50 = vector.shape_cast %49 : vector<2x8xf32> to vector<1x2x8xf32>
    %c0_46 = arith.constant 0 : index
    %c0_47 = arith.constant 0 : index
    %c0_48 = arith.constant 0 : index
    %51 = vector.load %arg7[%c0_46, %c0_47, %c0_48] : memref<1x2x8xf32, #tpu.memory_space<vmem>>, vector<1x2x8xf32>
    tpu.vector_store %arg7[%c0_46, %c0_47, %c0_48], %50 {strides = array<i32>} : memref<1x2x8xf32, #tpu.memory_space<vmem>>, vector<1x2x8xf32>,
    %52 = vector.shape_cast %39 : vector<256x8xf32> to vector<1x256x8xf32>
    %53 = arith.truncf %52 : vector<1x256x8xf32> to vector<1x256x8xbf16>
    %c0_49 = arith.constant 0 : index
    %c0_50 = arith.constant 0 : index
    %c0_51 = arith.constant 0 : index
    %54 = vector.load %arg6[%c0_49, %c0_50, %c0_51] : memref<1x256x8xbf16, #tpu.memory_space<vmem>>, vector<1x256x8xbf16>
    tpu.vector_store %arg6[%c0_49, %c0_50, %c0_51], %53 {strides = array<i32>} : memref<1x256x8xbf16, #tpu.memory_space<vmem>>, vector<1x256x8xbf16>,
    return
  }
  func.func @transform_0(%arg0: i32) -> (i32, i32, i32) {
    %c0_i32 = arith.constant 0 : i32
    %c0_i32_0 = arith.constant 0 : i32
    %c0_i32_1 = arith.constant 0 : i32
    return %arg0, %c0_i32, %c0_i32_0 : i32, i32, i32
  }
  func.func @transform_1(%arg0: i32) -> (i32, i32) {
    %c0_i32 = arith.constant 0 : i32
    %c0_i32_0 = arith.constant 0 : i32
    %c0_i32_1 = arith.constant 0 : i32
    return %c0_i32, %c0_i32_0 : i32, i32
  }
  func.func @transform_2(%arg0: i32) -> (i32, i32) {
    %c0_i32 = arith.constant 0 : i32
    %c0_i32_0 = arith.constant 0 : i32
    %c0_i32_1 = arith.constant 0 : i32
    return %c0_i32, %c0_i32_0 : i32, i32
  }
  func.func @transform_3(%arg0: i32) -> (i32, i32) {
    %c0_i32 = arith.constant 0 : i32
    %c0_i32_0 = arith.constant 0 : i32
    %c0_i32_1 = arith.constant 0 : i32
    return %c0_i32, %c0_i32_0 : i32, i32
  }
  func.func @transform_4(%arg0: i32) -> (i32, i32) {
    %c0_i32 = arith.constant 0 : i32
    %c0_i32_0 = arith.constant 0 : i32
    %c0_i32_1 = arith.constant 0 : i32
    return %c0_i32, %c0_i32_0 : i32, i32
  }
  func.func @transform_5(%arg0: i32) -> (i32, i32, i32) {
    %c0_i32 = arith.constant 0 : i32
    %c0_i32_0 = arith.constant 0 : i32
    %c0_i32_1 = arith.constant 0 : i32
    return %arg0, %c0_i32, %c0_i32_0 : i32, i32, i32
  }
  func.func @transform_6(%arg0: i32) -> (i32, i32, i32) {
    %c0_i32 = arith.constant 0 : i32
    %c0_i32_0 = arith.constant 0 : i32
    %c0_i32_1 = arith.constant 0 : i32
    return %arg0, %c0_i32, %c0_i32_0 : i32, i32, i32
  }
}

module attributes {stable_mosaic.version = 11 : i64} {
  func.func @_finalize_bridge_kernel(%arg0: i32, %arg1: memref<1x16x128xbf16, #tpu.memory_space<vmem>>, %arg2: memref<1x128xf32, #tpu.memory_space<vmem>>, %arg3: memref<1x128xf32, #tpu.memory_space<vmem>>, %arg4: memref<1x16x128xbf16, #tpu.memory_space<vmem>>, %arg5: memref<1x128xf32, #tpu.memory_space<vmem>>, %arg6: memref<1x128xf32, #tpu.memory_space<vmem>>, %arg7: memref<1x16x128xf32, #tpu.memory_space<vmem>>) attributes {dimension_semantics = [#tpu.dimension_semantics<parallel>], iteration_bounds = array<i64: 2>, scalar_prefetch = 0 : i64, scratch_operands = 0 : i64, tpu.core_type = #tpu.core_type<tc>, window_params = [{transform_indices = @transform_0, window_bounds = array<i64: 1, 16, 128>}, {pipeline_mode = #tpu.pipeline_mode<synchronous>, transform_indices = @transform_1, window_bounds = array<i64: 1, 128>}, {pipeline_mode = #tpu.pipeline_mode<synchronous>, transform_indices = @transform_2, window_bounds = array<i64: 1, 128>}, {transform_indices = @transform_3, window_bounds = array<i64: 1, 16, 128>}, {pipeline_mode = #tpu.pipeline_mode<synchronous>, transform_indices = @transform_4, window_bounds = array<i64: 1, 128>}, {pipeline_mode = #tpu.pipeline_mode<synchronous>, transform_indices = @transform_5, window_bounds = array<i64: 1, 128>}, {transform_indices = @transform_6, window_bounds = array<i64: 1, 16, 128>}]} {
    %c0 = arith.constant 0 : index
    %c0_0 = arith.constant 0 : index
    %c0_1 = arith.constant 0 : index
    %0 = vector.load %arg1[%c0, %c0_0, %c0_1] : memref<1x16x128xbf16, #tpu.memory_space<vmem>>, vector<1x16x128xbf16>
    %1 = vector.shape_cast %0 : vector<1x16x128xbf16> to vector<16x128xbf16>
    %2 = arith.extf %1 : vector<16x128xbf16> to vector<16x128xf32>
    %c0_2 = arith.constant 0 : index
    %c0_3 = arith.constant 0 : index
    %3 = vector.load %arg2[%c0_2, %c0_3] : memref<1x128xf32, #tpu.memory_space<vmem>>, vector<1x128xf32>
    %4 = vector.broadcast %3 : vector<1x128xf32> to vector<16x128xf32>
    %5 = arith.mulf %2, %4 : vector<16x128xf32>
    %c0_4 = arith.constant 0 : index
    %c0_5 = arith.constant 0 : index
    %6 = vector.load %arg3[%c0_4, %c0_5] : memref<1x128xf32, #tpu.memory_space<vmem>>, vector<1x128xf32>
    %7 = vector.broadcast %6 : vector<1x128xf32> to vector<16x128xf32>
    %8 = arith.addf %5, %7 : vector<16x128xf32>
    %cst = arith.constant 0.000000e+00 : f32
    %9 = vector.broadcast %cst : f32 to vector<16x128xf32>
    %10 = arith.maximumf %8, %9 : vector<16x128xf32>
    %c0_6 = arith.constant 0 : index
    %c0_7 = arith.constant 0 : index
    %c0_8 = arith.constant 0 : index
    %11 = vector.load %arg4[%c0_6, %c0_7, %c0_8] : memref<1x16x128xbf16, #tpu.memory_space<vmem>>, vector<1x16x128xbf16>
    %12 = vector.shape_cast %11 : vector<1x16x128xbf16> to vector<16x128xbf16>
    %13 = arith.extf %12 : vector<16x128xbf16> to vector<16x128xf32>
    %c0_9 = arith.constant 0 : index
    %c0_10 = arith.constant 0 : index
    %14 = vector.load %arg5[%c0_9, %c0_10] : memref<1x128xf32, #tpu.memory_space<vmem>>, vector<1x128xf32>
    %15 = vector.broadcast %14 : vector<1x128xf32> to vector<16x128xf32>
    %16 = arith.mulf %13, %15 : vector<16x128xf32>
    %c0_11 = arith.constant 0 : index
    %c0_12 = arith.constant 0 : index
    %17 = vector.load %arg6[%c0_11, %c0_12] : memref<1x128xf32, #tpu.memory_space<vmem>>, vector<1x128xf32>
    %18 = vector.broadcast %17 : vector<1x128xf32> to vector<16x128xf32>
    %19 = arith.addf %16, %18 : vector<16x128xf32>
    %cst_13 = arith.constant 0.000000e+00 : f32
    %20 = vector.broadcast %cst_13 : f32 to vector<16x128xf32>
    %21 = arith.maximumf %19, %20 : vector<16x128xf32>
    %22 = arith.addf %10, %21 : vector<16x128xf32>
    %23 = vector.shape_cast %22 : vector<16x128xf32> to vector<1x16x128xf32>
    %c0_14 = arith.constant 0 : index
    %c0_15 = arith.constant 0 : index
    %c0_16 = arith.constant 0 : index
    %24 = vector.load %arg7[%c0_14, %c0_15, %c0_16] : memref<1x16x128xf32, #tpu.memory_space<vmem>>, vector<1x16x128xf32>
    tpu.vector_store %arg7[%c0_14, %c0_15, %c0_16], %23 {strides = array<i32>} : memref<1x16x128xf32, #tpu.memory_space<vmem>>, vector<1x16x128xf32>,
    return
  }
  func.func @transform_0(%arg0: i32) -> (i32, i32, i32) {
    %c0_i32 = arith.constant 0 : i32
    %c0_i32_0 = arith.constant 0 : i32
    %c0_i32_1 = arith.constant 0 : i32
    return %arg0, %c0_i32, %c0_i32_0 : i32, i32, i32
  }
  func.func @transform_1(%arg0: i32) -> (i32, i32) {
    %c0_i32 = arith.constant 0 : i32
    %c0_i32_0 = arith.constant 0 : i32
    %c0_i32_1 = arith.constant 0 : i32
    return %c0_i32, %c0_i32_0 : i32, i32
  }
  func.func @transform_2(%arg0: i32) -> (i32, i32) {
    %c0_i32 = arith.constant 0 : i32
    %c0_i32_0 = arith.constant 0 : i32
    %c0_i32_1 = arith.constant 0 : i32
    return %c0_i32, %c0_i32_0 : i32, i32
  }
  func.func @transform_3(%arg0: i32) -> (i32, i32, i32) {
    %c0_i32 = arith.constant 0 : i32
    %c0_i32_0 = arith.constant 0 : i32
    %c0_i32_1 = arith.constant 0 : i32
    return %arg0, %c0_i32, %c0_i32_0 : i32, i32, i32
  }
  func.func @transform_4(%arg0: i32) -> (i32, i32) {
    %c0_i32 = arith.constant 0 : i32
    %c0_i32_0 = arith.constant 0 : i32
    %c0_i32_1 = arith.constant 0 : i32
    return %c0_i32, %c0_i32_0 : i32, i32
  }
  func.func @transform_5(%arg0: i32) -> (i32, i32) {
    %c0_i32 = arith.constant 0 : i32
    %c0_i32_0 = arith.constant 0 : i32
    %c0_i32_1 = arith.constant 0 : i32
    return %c0_i32, %c0_i32_0 : i32, i32
  }
  func.func @transform_6(%arg0: i32) -> (i32, i32, i32) {
    %c0_i32 = arith.constant 0 : i32
    %c0_i32_0 = arith.constant 0 : i32
    %c0_i32_1 = arith.constant 0 : i32
    return %arg0, %c0_i32, %c0_i32_0 : i32, i32, i32
  }
}

</mosaic_0001>

<llo_original>
// kernel: tile.18
$region0: #{tile.18}
  #allocation0 [shape = 's32[1]{0}', space=sflag, size = 0x4, scoped, tag = 'scoped memory for tile.18']
  %s0 = inlined_call_operand.vmem [shape: f32[8], index: 0, kind: input, shape index: {}]
  %s1 = inlined_call_operand.vmem [shape: f32[16,8], index: 1, kind: output, shape index: {}]
  // Predicated region
  $region2: #{tile.18} parent=0 // pred_check
    _
  $region3: #{tile.18} parent=0 // pred_check_branch
    %3 = sbr.rel (0) target = $region5
  $region4: #{tile.18} parent=0 // pred_region
    _
  $region5: #{tile.18} parent=0 // pred_fallthru
    _
  %v4 = vld [vmem:[%s0] ss:$0 sm:$0xff]
  %5 = vst [vmem:[%s1] sm:$0xff] %v4
  %s6 = scalar_lea.vmem %s1, 8
  %7 = vst [vmem:[%s6] sm:$0xff] %v4

// kernel: tile.19
$region0: #{tile.19}
  %s0 = inlined_call_operand.vmem [shape: f32[16,8], index: 0, kind: input, shape index: {}]
  %s1 = inlined_call_operand.vmem [shape: f32[1,128], index: 1, kind: output, shape index: {}]
  $region1: #{tile.19} parent=0
    #allocation0 [shape = 'u8[4096]{0}', space=vmem, size = 0x1000, scoped, tag = 'scoped mem for output reshape']
    %v2 = vld [vmem:[%s0] sm:$0x1]
    %vm3 = vcmask 64512
    %4 = vst.msk [vmem:[#allocation0] sm:$0x1] %vm3, %v2
    %s5 = scalar_lea.vmem %s0, 15
    %v6 = vld [vmem:[%s5] sm:$0x1]
    %7 = vrot.lane.b32.xlu0 %v6, 120
    %v8 = vpop.permute.xlu0 %7
    %vm9 = vcmask 1048512
    %10 = vst.msk [vmem:[#allocation0] sm:$0x1] %vm9, %v8
    %s11 = scalar_lea.vmem %s0, 14
    %v12 = vld [vmem:[%s11] sm:$0x1]
    %13 = vrot.lane.b32.xlu0 %v12, 112
    %v14 = vpop.permute.xlu0 %13
    %vm15 = vcmask 982912
    %16 = vst.msk [vmem:[#allocation0] sm:$0x1] %vm15, %v14
    %s17 = scalar_lea.vmem %s0, 13
    %v18 = vld [vmem:[%s17] sm:$0x1]
    %19 = vrot.lane.b32.xlu0 %v18, 104
    %v20 = vpop.permute.xlu0 %19
    %vm21 = vcmask 917312
    %22 = vst.msk [vmem:[#allocation0] sm:$0x1] %vm21, %v20
    %s23 = scalar_lea.vmem %s0, 12
    %v24 = vld [vmem:[%s23] sm:$0x1]
    %25 = vrot.lane.b32.xlu0 %v24, 96
    %v26 = vpop.permute.xlu0 %25
    %vm27 = vcmask 851712
    %28 = vst.msk [vmem:[#allocation0] sm:$0x1] %vm27, %v26
    %s29 = scalar_lea.vmem %s0, 11
    %v30 = vld [vmem:[%s29] sm:$0x1]
    %31 = vrot.lane.b32.xlu0 %v30, 88
    %v32 = vpop.permute.xlu0 %31
    %vm33 = vcmask 786112
    %34 = vst.msk [vmem:[#allocation0] sm:$0x1] %vm33, %v32
    %s35 = scalar_lea.vmem %s0, 10
    %v36 = vld [vmem:[%s35] sm:$0x1]
    %37 = vrot.lane.b32.xlu0 %v36, 80
    %v38 = vpop.permute.xlu0 %37
    %vm39 = vcmask 720512
    %40 = vst.msk [vmem:[#allocation0] sm:$0x1] %vm39, %v38
    %s41 = scalar_lea.vmem %s0, 9
    %v42 = vld [vmem:[%s41] sm:$0x1]
    %43 = vrot.lane.b32.xlu0 %v42, 72
    %v44 = vpop.permute.xlu0 %43
    %vm45 = vcmask 654912
    %46 = vst.msk [vmem:[#allocation0] sm:$0x1] %vm45, %v44
    %s47 = scalar_lea.vmem %s0, 8
    %v48 = vld [vmem:[%s47] sm:$0x1]
    %49 = vrot.lane.b32.xlu0 %v48, 64
    %v50 = vpop.permute.xlu0 %49
    %vm51 = vcmask 589312
    %52 = vst.msk [vmem:[#allocation0] sm:$0x1] %vm51, %v50
    %s53 = scalar_lea.vmem %s0, 7
    %v54 = vld [vmem:[%s53] sm:$0x1]
    %55 = vrot.lane.b32.xlu0 %v54, 56
    %v56 = vpop.permute.xlu0 %55
    %vm57 = vcmask 523712
    %58 = vst.msk [vmem:[#allocation0] sm:$0x1] %vm57, %v56
    %s59 = scalar_lea.vmem %s0, 6
    %v60 = vld [vmem:[%s59] sm:$0x1]
    %61 = vrot.lane.b32.xlu0 %v60, 48
    %v62 = vpop.permute.xlu0 %61
    %vm63 = vcmask 458112
    %64 = vst.msk [vmem:[#allocation0] sm:$0x1] %vm63, %v62
    %s65 = scalar_lea.vmem %s0, 5
    %v66 = vld [vmem:[%s65] sm:$0x1]
    %67 = vrot.lane.b32.xlu0 %v66, 40
    %v68 = vpop.permute.xlu0 %67
    %vm69 = vcmask 392512
    %70 = vst.msk [vmem:[#allocation0] sm:$0x1] %vm69, %v68
    %s71 = scalar_lea.vmem %s0, 4
    %v72 = vld [vmem:[%s71] sm:$0x1]
    %73 = vrot.lane.b32.xlu0 %v72, 32
    %v74 = vpop.permute.xlu0 %73
    %vm75 = vcmask 326912
    %76 = vst.msk [vmem:[#allocation0] sm:$0x1] %vm75, %v74
    %s77 = scalar_lea.vmem %s0, 3
    %v78 = vld [vmem:[%s77] sm:$0x1]
    %79 = vrot.lane.b32.xlu0 %v78, 24
    %v80 = vpop.permute.xlu0 %79
    %vm81 = vcmask 261312
    %82 = vst.msk [vmem:[#allocation0] sm:$0x1] %vm81, %v80
    %s83 = scalar_lea.vmem %s0, 2
    %v84 = vld [vmem:[%s83] sm:$0x1]
    %85 = vrot.lane.b32.xlu0 %v84, 16
    %v86 = vpop.permute.xlu0 %85
    %vm87 = vcmask 195712
    %88 = vst.msk [vmem:[#allocation0] sm:$0x1] %vm87, %v86
    %s89 = scalar_lea.vmem %s0, 1
    %v90 = vld [vmem:[%s89] sm:$0x1]
    %91 = vrot.lane.b32.xlu0 %v90, 8
    %v92 = vpop.permute.xlu0 %91
    %vm93 = vcmask 130112
    %94 = vst.msk [vmem:[#allocation0] sm:$0x1] %vm93, %v92
    %s96 = sshllo.u32 0, 1
    %v98 = vld [vmem:[#allocation0] sm:%s96]
    %s99 = sshllo.u32 0, 1
    %100 = vst [vmem:[%s1] sm:%s99] %v98

// kernel: residual_unit_forward.5
$region0: #{residual_unit_forward.5}
  #allocation0 [shape = 'u32[]', space=smem, size = 0x4, offset = 0x4, fixed_abs, tag = 'smem constant byte address 0x4 - core index']
  #allocation1 [shape = 'u32[144,128]{1,0:T(1,128)}', space=vmem, size = 0x12000, scoped, tag = 'internal scratch']
  %s0 = inlined_call_operand.vmem [shape: bf16[2,16,128], index: 0, kind: input, shape index: {}]
  %s1 = inlined_call_operand.vmem [shape: f32[1,128], index: 1, kind: input, shape index: {}]
  %s2 = inlined_call_operand.vmem [shape: f32[1,128], index: 2, kind: input, shape index: {}]
  %s3 = inlined_call_operand.vmem [shape: bf16[2,16,128], index: 3, kind: input, shape index: {}]
  %s4 = inlined_call_operand.vmem [shape: f32[1,128], index: 4, kind: input, shape index: {}]
  %s5 = inlined_call_operand.vmem [shape: f32[1,128], index: 5, kind: input, shape index: {}]
  %s6 = inlined_call_operand.vmem [shape: f32[2,16,128], index: 6, kind: output, shape index: {}]
  %s7 = sld [smem:[#allocation0]]
  $region57: #{residual_unit_forward.5} parent=0
    _
  %s9 = ssub.s32 1, %s7
  %s10 = scalar_select 0, %s9, %s7
  loop: start=0, step=1, limit=4
  $region2: #{residual_unit_forward.5} parent=0 // loop_pre_header
    _
  $region3: #{residual_unit_forward.5} parent=0 // loop_header
    %s12 = sphi 0, %s16
    %p13 = scmp.ge.s32.totalorder %s12, 4
    %s22 = sphi 0, %s24
    %s25 = sphi 0, %s22
    %s26 = sphi 0, %s25
    %s42 = sphi 0, %s26
    %s46 = sphi 0, %s46
    %s48 = sphi 0, %s46
    %s49 = sphi 0, %s48
    %s63 = sphi 0, %s49
    %s67 = sphi 0, %s67
    %s69 = sphi 0, %s67
    %s70 = sphi 0, %s69
    %s84 = sphi 0, %s70
    %s90 = sphi 0, %s92
    %s93 = sphi 0, %s90
    %s94 = sphi 0, %s93
    %s110 = sphi 0, %s94
    %s114 = sphi 0, %s114
    %s116 = sphi 0, %s114
    %s117 = sphi 0, %s116
    %s131 = sphi 0, %s117
    %s135 = sphi 0, %s135
    %s137 = sphi 0, %s135
    %s138 = sphi 0, %s137
    %s152 = sphi 0, %s138
    %s158 = sphi 0, %s160
    %s161 = sphi 0, %s158
    %s162 = sphi 0, %s161
    %s178 = sphi 0, %s162
  $region4: #{residual_unit_forward.5} parent=0 // loop_header_branch
    %15 = sbr.rel (%p13) target = $region8
  $region5: #{residual_unit_forward.5} parent=0 // loop_body
    %s17 = ssub.s32 %s12, 1
    %s18 = ssub.s32 %s12, 2
    %s19 = sadd.s32 %s12, 1
    %s20 = ssub.s32 %s12, %s19
    %p21 = scmp.eq.s32.totalorder %s20, 0
    %s23 = sadd.s32 %s22, 1
    %s24 = scalar_select %p21, %s22, %s23
    %p27 = pneg %p21
    %p28 = scmp.eq.s32.totalorder %s12, 1
    %p29 = por %p27, %p28
    %p30 = scmp.ne.s32.totalorder %s22, %s25
    %p31 = scmp.eq.s32.totalorder %s12, 0
    %p32 = por %p30, %p31
    %p33 = scmp.ne.s32.totalorder %s22, %s25
    %p34 = scmp.eq.s32.totalorder %s17, 1
    %p35 = por %p33, %p34
    %p36 = scmp.ne.s32.totalorder %s25, %s26
    %p37 = scmp.eq.s32.totalorder %s17, 0
    %p38 = por %p36, %p37
    %p39 = scmp.ne.s32.totalorder %s25, %s26
    %p40 = scmp.eq.s32.totalorder %s18, 1
    %p41 = por %p39, %p40
    %p43 = scmp.ne.s32.totalorder %s26, %s42
    %p44 = scmp.eq.s32.totalorder %s18, 0
    %p45 = por %p43, %p44
    %s47 = sadd.s32 %s46, 1
    %p50 = scmp.eq.s32.totalorder %s12, 1
    %p51 = scmp.ne.s32.totalorder %s46, %s48
    %p52 = scmp.eq.s32.totalorder %s12, 0
    %p53 = por %p51, %p52
    %p54 = scmp.ne.s32.totalorder %s46, %s48
    %p55 = scmp.eq.s32.totalorder %s17, 1
    %p56 = por %p54, %p55
    %p57 = scmp.ne.s32.totalorder %s48, %s49
    %p58 = scmp.eq.s32.totalorder %s17, 0
    %p59 = por %p57, %p58
    %p60 = scmp.ne.s32.totalorder %s48, %s49
    %p61 = scmp.eq.s32.totalorder %s18, 1
    %p62 = por %p60, %p61
    %p64 = scmp.ne.s32.totalorder %s49, %s63
    %p65 = scmp.eq.s32.totalorder %s18, 0
    %p66 = por %p64, %p65
    %s68 = sadd.s32 %s67, 1
    %p71 = scmp.eq.s32.totalorder %s12, 1
    %p72 = scmp.ne.s32.totalorder %s67, %s69
    %p73 = scmp.eq.s32.totalorder %s12, 0
    %p74 = por %p72, %p73
    %p75 = scmp.ne.s32.totalorder %s67, %s69
    %p76 = scmp.eq.s32.totalorder %s17, 1
    %p77 = por %p75, %p76
    %p78 = scmp.ne.s32.totalorder %s69, %s70
    %p79 = scmp.eq.s32.totalorder %s17, 0
    %p80 = por %p78, %p79
    %p81 = scmp.ne.s32.totalorder %s69, %s70
    %p82 = scmp.eq.s32.totalorder %s18, 1
    %p83 = por %p81, %p82
    %p85 = scmp.ne.s32.totalorder %s70, %s84
    %p86 = scmp.eq.s32.totalorder %s18, 0
    %p87 = por %p85, %p86
    %s88 = ssub.s32 %s12, %s19
    %p89 = scmp.eq.s32.totalorder %s88, 0
    %s91 = sadd.s32 %s90, 1
    %s92 = scalar_select %p89, %s90, %s91
    %p95 = pneg %p89
    %p96 = scmp.eq.s32.totalorder %s12, 1
    %p97 = por %p95, %p96
    %p98 = scmp.ne.s32.totalorder %s90, %s93
    %p99 = scmp.eq.s32.totalorder %s12, 0
    %p100 = por %p98, %p99
    %p101 = scmp.ne.s32.totalorder %s90, %s93
    %p102 = scmp.eq.s32.totalorder %s17, 1
    %p103 = por %p101, %p102
    %p104 = scmp.ne.s32.totalorder %s93, %s94
    %p105 = scmp.eq.s32.totalorder %s17, 0
    %p106 = por %p104, %p105
    %p107 = scmp.ne.s32.totalorder %s93, %s94
    %p108 = scmp.eq.s32.totalorder %s18, 1
    %p109 = por %p107, %p108
    %p111 = scmp.ne.s32.totalorder %s94, %s110
    %p112 = scmp.eq.s32.totalorder %s18, 0
    %p113 = por %p111, %p112
    %s115 = sadd.s32 %s114, 1
    %p118 = scmp.eq.s32.totalorder %s12, 1
    %p119 = scmp.ne.s32.totalorder %s114, %s116
    %p120 = scmp.eq.s32.totalorder %s12, 0
    %p121 = por %p119, %p120
    %p122 = scmp.ne.s32.totalorder %s114, %s116
    %p123 = scmp.eq.s32.totalorder %s17, 1
    %p124 = por %p122, %p123
    %p125 = scmp.ne.s32.totalorder %s116, %s117
    %p126 = scmp.eq.s32.totalorder %s17, 0
    %p127 = por %p125, %p126
    %p128 = scmp.ne.s32.totalorder %s116, %s117
    %p129 = scmp.eq.s32.totalorder %s18, 1
    %p130 = por %p128, %p129
    %p132 = scmp.ne.s32.totalorder %s117, %s131
    %p133 = scmp.eq.s32.totalorder %s18, 0
    %p134 = por %p132, %p133
    %s136 = sadd.s32 %s135, 1
    %p139 = scmp.eq.s32.totalorder %s12, 1
    %p140 = scmp.ne.s32.totalorder %s135, %s137
    %p141 = scmp.eq.s32.totalorder %s12, 0
    %p142 = por %p140, %p141
    %p143 = scmp.ne.s32.totalorder %s135, %s137
    %p144 = scmp.eq.s32.totalorder %s17, 1
    %p145 = por %p143, %p144
    %p146 = scmp.ne.s32.totalorder %s137, %s138
    %p147 = scmp.eq.s32.totalorder %s17, 0
    %p148 = por %p146, %p147
    %p149 = scmp.ne.s32.totalorder %s137, %s138
    %p150 = scmp.eq.s32.totalorder %s18, 1
    %p151 = por %p149, %p150
    %p153 = scmp.ne.s32.totalorder %s138, %s152
    %p154 = scmp.eq.s32.totalorder %s18, 0
    %p155 = por %p153, %p154
    %s156 = ssub.s32 %s12, %s19
    %p157 = scmp.eq.s32.totalorder %s156, 0
    %s159 = sadd.s32 %s158, 1
    %s160 = scalar_select %p157, %s158, %s159
    %p163 = pneg %p157
    %p164 = scmp.eq.s32.totalorder %s12, 1
    %p165 = por %p163, %p164
    %p166 = scmp.ne.s32.totalorder %s158, %s161
    %p167 = scmp.eq.s32.totalorder %s12, 0
    %p168 = por %p166, %p167
    %p169 = scmp.ne.s32.totalorder %s158, %s161
    %p170 = scmp.eq.s32.totalorder %s17, 1
    %p171 = por %p169, %p170
    %p172 = scmp.ne.s32.totalorder %s161, %s162
    %p173 = scmp.eq.s32.totalorder %s17, 0
    %p174 = por %p172, %p173
    %p175 = scmp.ne.s32.totalorder %s161, %s162
    %p176 = scmp.eq.s32.totalorder %s18, 1
    %p177 = por %p175, %p176
    %p179 = scmp.ne.s32.totalorder %s162, %s178
    %p180 = scmp.eq.s32.totalorder %s18, 0
    %p181 = por %p179, %p180
    %p182 = scmp.le.s32.totalorder 1, %s12
    %p183 = scmp.lt.s32.totalorder %s12, 3
    %p184 = pnand %p182, %p183
    %p185 = pneg %p184
    // Predicated region
    $region9: #{residual_unit_forward.5} parent=5 // pred_check
      _
    $region10: #{residual_unit_forward.5} parent=5 // pred_check_branch
      %187 = sbr.rel (%p184) target = $region12
    $region11: #{residual_unit_forward.5} parent=5 // pred_region
      %s188 = ssub.s32 %s12, 1
      // Predicated region
      $region13: #{residual_unit_forward.5} parent=11 // pred_check
        %p189 = pneg %p59
      $region14: #{residual_unit_forward.5} parent=11 // pred_check_branch
        %191 = sbr.rel (%p189) target = $region16
      $region15: #{residual_unit_forward.5} parent=11 // pred_region
        _
      $region16: #{residual_unit_forward.5} parent=11 // pred_fallthru
        _
      // Predicated region
      $region17: #{residual_unit_forward.5} parent=11 // pred_check
        %p192 = pneg %p80
      $region18: #{residual_unit_forward.5} parent=11 // pred_check_branch
        %194 = sbr.rel (%p192) target = $region20
      $region19: #{residual_unit_forward.5} parent=11 // pred_region
        _
      $region20: #{residual_unit_forward.5} parent=11 // pred_fallthru
        _
      // Predicated region
      $region21: #{residual_unit_forward.5} parent=11 // pred_check
        %p195 = pneg %p127
      $region22: #{residual_unit_forward.5} parent=11 // pred_check_branch
        %197 = sbr.rel (%p195) target = $region24
      $region23: #{residual_unit_forward.5} parent=11 // pred_region
        _
      $region24: #{residual_unit_forward.5} parent=11 // pred_fallthru
        _
      // Predicated region
      $region25: #{residual_unit_forward.5} parent=11 // pred_check
        %p198 = pneg %p148
      $region26: #{residual_unit_forward.5} parent=11 // pred_check_branch
        %200 = sbr.rel (%p198) target = $region28
      $region27: #{residual_unit_forward.5} parent=11 // pred_region
        _
      $region28: #{residual_unit_forward.5} parent=11 // pred_fallthru
        _
    $region12: #{residual_unit_forward.5} parent=5 // pred_fallthru
      _
    %p201 = scmp.lt.s32.totalorder %s12, 2
    // Predicated region
    $region29: #{residual_unit_forward.5} parent=5 // pred_check
      %p202 = pneg %p201
    $region30: #{residual_unit_forward.5} parent=5 // pred_check_branch
      %204 = sbr.rel (%p202) target = $region32
    $region31: #{residual_unit_forward.5} parent=5 // pred_region
      // Predicated region
      $region33: #{residual_unit_forward.5} parent=31 // pred_check
        %p205 = pneg %p32
      $region34: #{residual_unit_forward.5} parent=31 // pred_check_branch
        %207 = sbr.rel (%p205) target = $region36
      $region35: #{residual_unit_forward.5} parent=31 // pred_region
        %p208 = scmp.lt.s32.totalorder %s12, 1
        %s209 = scalar_select %p208, %s12, 1
        %s210 = smul.addr %s209, 2
        %s211 = smul.addr %s210, 4
        %s212 = scalar_lea.vmem %s0, %s211
      $region36: #{residual_unit_forward.5} parent=31 // pred_fallthru
        _
      // Predicated region
      $region37: #{residual_unit_forward.5} parent=31 // pred_check
        %p213 = pneg %p100
      $region38: #{residual_unit_forward.5} parent=31 // pred_check_branch
        %215 = sbr.rel (%p213) target = $region40
      $region39: #{residual_unit_forward.5} parent=31 // pred_region
        %p216 = scmp.lt.s32.totalorder %s12, 1
        %s217 = scalar_select %p216, %s12, 1
        %s218 = smul.addr %s217, 2
        %s219 = smul.addr %s218, 4
        %s220 = scalar_lea.vmem %s3, %s219
      $region40: #{residual_unit_forward.5} parent=31 // pred_fallthru
        _
    $region32: #{residual_unit_forward.5} parent=5 // pred_fallthru
      _
    %p221 = scmp.le.s32.totalorder 1, %s12
    %p222 = scmp.lt.s32.totalorder %s12, 3
    %p223 = pnand %p221, %p222
    %p224 = pneg %p223
    // Predicated region
    $region41: #{residual_unit_forward.5} parent=5 // pred_check
      _
    $region42: #{residual_unit_forward.5} parent=5 // pred_check_branch
      %226 = sbr.rel (%p223) target = $region44
    $region43: #{residual_unit_forward.5} parent=5 // pred_region
      %s227 = ssub.s32 %s12, 1
      %p228 = scmp.lt.s32.totalorder %s17, 1
      %s229 = scalar_select %p228, %s17, 1
      %s230 = smul.addr %s229, 2
      %s231 = smul.addr %s230, 4
      %s232 = scalar_lea.vmem %s0, %s231
      %p233 = pneg %p38
      %p234 = pneg %p35
      %p235 = pneg %p59
      %p236 = pneg %p56
      %p237 = pneg %p80
      %p238 = pneg %p77
      %p239 = scmp.lt.s32.totalorder %s17, 1
      %s240 = scalar_select %p239, %s17, 1
      %s241 = smul.addr %s240, 2
      %s242 = smul.addr %s241, 4
      %s243 = scalar_lea.vmem %s3, %s242
      %p244 = pneg %p106
      %p245 = pneg %p103
      %p246 = pneg %p127
      %p247 = pneg %p124
      %p248 = pneg %p148
      %p249 = pneg %p145
      %p250 = pneg %p174
      %p251 = pneg %p171
      %p252 = scmp.lt.s32.totalorder %s17, 1
      %s253 = scalar_select %p252, %s17, 1
      %s254 = smul.addr %s253, 2
      %s255 = smul.addr %s254, 8
      %s256 = scalar_lea.vmem %s6, %s255
      %p257 = scmp.lt.s32.totalorder %s17, 1
      %s258 = scalar_select %p257, %s17, 1
      %s259 = smul.addr %s258, 2
      %s260 = smul.addr %s259, 4
      %s261 = scalar_lea.vmem %s0, %s260
      %p262 = scmp.lt.s32.totalorder %s17, 1
      %s263 = scalar_select %p262, %s17, 1
      %s264 = smul.addr %s263, 2
      %s265 = smul.addr %s264, 4
      %s266 = scalar_lea.vmem %s3, %s265
      %p267 = scmp.lt.s32.totalorder %s17, 1
      %s268 = scalar_select %p267, %s17, 1
      %s269 = smul.addr %s268, 2
      %s270 = smul.addr %s269, 8
      %s271 = scalar_lea.vmem %s6, %s270
      %v272 = vld [vmem:[%s261] sm:$0xf]
      %v273 = vld [vmem:[%s261 + $0x4] sm:$0xf]
      %v274 = vunpack.c.l.bf16 %v272
      %v275 = vunpack.c.l.bf16 %v273
      %v276 = vld [vmem:[%s1] sm:$0x1]
      %v278 = vlaneseq
      %v279 = vshrl.u32 %v278, 7
      %v280 = vsub.s32 0, %v279
      %v281 = vrot.slane %v276, %v280
      %v283 = vmul.f32 %v274, %v281
      %v284 = vmul.f32 %v275, %v281
      %v285 = vld [vmem:[%s2] sm:$0x1]
      %v287 = vlaneseq
      %v288 = vshrl.u32 %v287, 7
      %v289 = vsub.s32 0, %v288
      %v290 = vrot.slane %v285, %v289
      %v292 = vadd.f32 %v283, %v290
      %v293 = vadd.f32 %v284, %v290
      %v294 = vmax.f32 %v292, 0.0
      %v295 = vmax.f32 %v293, 0.0
      %v296 = vld [vmem:[%s266] sm:$0xf]
      %v297 = vld [vmem:[%s266 + $0x4] sm:$0xf]
      %v298 = vunpack.c.l.bf16 %v296
      %v299 = vunpack.c.l.bf16 %v297
      %v300 = vld [vmem:[%s4] sm:$0x1]
      %v302 = vlaneseq
      %v303 = vshrl.u32 %v302, 7
      %v304 = vsub.s32 0, %v303
      %v305 = vrot.slane %v300, %v304
      %v307 = vmul.f32 %v298, %v305
      %v308 = vmul.f32 %v299, %v305
      %v309 = vld [vmem:[%s5] sm:$0x1]
      %v311 = vlaneseq
      %v312 = vshrl.u32 %v311, 7
      %v313 = vsub.s32 0, %v312
      %v314 = vrot.slane %v309, %v313
      %v316 = vadd.f32 %v307, %v314
      %v317 = vadd.f32 %v308, %v314
      %v318 = vmax.f32 %v316, 0.0
      %v319 = vmax.f32 %v317, 0.0
      %v320 = vadd.f32 %v294, %v318
      %v321 = vadd.f32 %v295, %v319
      %322 = vst [vmem:[%s271] sm:$0xff] %v320
      %323 = vst [vmem:[%s271 + $0x8] sm:$0xff] %v321
      %p324 = scmp.lt.s32.totalorder %s17, 1
      %s325 = scalar_select %p324, %s17, 1
      %s326 = smul.addr %s325, 2
      %s327 = smul.addr %s326, 8
      %s328 = scalar_lea.vmem %s6, %s327
      // Predicated region
      $region45: #{residual_unit_forward.5} parent=43 // pred_check
        %p329 = pneg %p171
      $region46: #{residual_unit_forward.5} parent=43 // pred_check_branch
        %331 = sbr.rel (%p329) target = $region48
      $region47: #{residual_unit_forward.5} parent=43 // pred_region
        _
      $region48: #{residual_unit_forward.5} parent=43 // pred_fallthru
        _
    $region44: #{residual_unit_forward.5} parent=5 // pred_fallthru
      _
    %p332 = scmp.le.s32.totalorder 2, %s12
    // Predicated region
    $region49: #{residual_unit_forward.5} parent=5 // pred_check
      %p333 = pneg %p332
    $region50: #{residual_unit_forward.5} parent=5 // pred_check_branch
      %335 = sbr.rel (%p333) target = $region52
    $region51: #{residual_unit_forward.5} parent=5 // pred_region
      %s336 = ssub.s32 %s12, 2
      // Predicated region
      $region53: #{residual_unit_forward.5} parent=51 // pred_check
        %p337 = pneg %p177
      $region54: #{residual_unit_forward.5} parent=51 // pred_check_branch
        %339 = sbr.rel (%p337) target = $region56
      $region55: #{residual_unit_forward.5} parent=51 // pred_region
        %p340 = scmp.lt.s32.totalorder %s18, 1
        %s341 = scalar_select %p340, %s18, 1
        %s342 = smul.addr %s341, 2
        %s343 = smul.addr %s342, 8
        %s344 = scalar_lea.vmem %s6, %s343
      $region56: #{residual_unit_forward.5} parent=51 // pred_fallthru
        _
    $region52: #{residual_unit_forward.5} parent=5 // pred_fallthru
      _
  $region6: #{residual_unit_forward.5} parent=0 // loop_footer
    %s16 = sadd.s32 1, %s12
  $region7: #{residual_unit_forward.5} parent=0 // loop_footer_branch
    %11 = sbr.rel target = $region3
  $region8: #{residual_unit_forward.5} parent=0 // loop_exit
    _

// kernel: residual_unit_forward.4
$region0: #{residual_unit_forward.4}
  #allocation0 [shape = 'u32[]', space=smem, size = 0x4, offset = 0x4, fixed_abs, tag = 'smem constant byte address 0x4 - core index']
  #allocation1 [shape = 'u32[144,128]{1,0:T(1,128)}', space=vmem, size = 0x12000, scoped, tag = 'internal scratch']
  #allocation2 [shape = 'f32[18,18,8]{2,1,0:T(8,128)}', space=vmem, size = 0x36000, scoped, tag = 'scratch operand']
  %s0 = inlined_call_operand.vmem [shape: bf16[2,256,8], index: 0, kind: input, shape index: {}]
  %s1 = inlined_call_operand.vmem [shape: f32[1,8], index: 1, kind: input, shape index: {}]
  %s2 = inlined_call_operand.vmem [shape: f32[1,8], index: 2, kind: input, shape index: {}]
  %s3 = inlined_call_operand.vmem [shape: bf16[72,8], index: 3, kind: input, shape index: {}]
  %s4 = inlined_call_operand.vmem [shape: f32[1,8], index: 4, kind: input, shape index: {}]
  %s5 = inlined_call_operand.vmem [shape: bf16[2,256,8], index: 5, kind: output, shape index: {0}]
  %s6 = inlined_call_operand.vmem [shape: f32[2,2,8], index: 6, kind: output, shape index: {1}]
  %7 = xla_tuple %s5, %s6
  %s8 = sld [smem:[#allocation0]]
  $region61: #{residual_unit_forward.4} parent=0
    _
  %s10 = ssub.s32 1, %s8
  %s11 = scalar_select 0, %s10, %s8
  loop: start=0, step=1, limit=4
  $region2: #{residual_unit_forward.4} parent=0 // loop_pre_header
    _
  $region3: #{residual_unit_forward.4} parent=0 // loop_header
    %s13 = sphi 0, %s17
    %p14 = scmp.ge.s32.totalorder %s13, 4
    %s23 = sphi 0, %s25
    %s26 = sphi 0, %s23
    %s27 = sphi 0, %s26
    %s43 = sphi 0, %s27
    %s47 = sphi 0, %s47
    %s49 = sphi 0, %s47
    %s50 = sphi 0, %s49
    %s64 = sphi 0, %s50
    %s68 = sphi 0, %s68
    %s70 = sphi 0, %s68
    %s71 = sphi 0, %s70
    %s85 = sphi 0, %s71
    %s89 = sphi 0, %s89
    %s91 = sphi 0, %s89
    %s92 = sphi 0, %s91
    %s106 = sphi 0, %s92
    %s110 = sphi 0, %s110
    %s112 = sphi 0, %s110
    %s113 = sphi 0, %s112
    %s127 = sphi 0, %s113
    %s133 = sphi 0, %s135
    %s136 = sphi 0, %s133
    %s137 = sphi 0, %s136
    %s153 = sphi 0, %s137
    %s159 = sphi 0, %s161
    %s162 = sphi 0, %s159
    %s163 = sphi 0, %s162
    %s179 = sphi 0, %s163
  $region4: #{residual_unit_forward.4} parent=0 // loop_header_branch
    %16 = sbr.rel (%p14) target = $region8
  $region5: #{residual_unit_forward.4} parent=0 // loop_body
    %s18 = ssub.s32 %s13, 1
    %s19 = ssub.s32 %s13, 2
    %s20 = sadd.s32 %s13, 1
    %s21 = ssub.s32 %s13, %s20
    %p22 = scmp.eq.s32.totalorder %s21, 0
    %s24 = sadd.s32 %s23, 1
    %s25 = scalar_select %p22, %s23, %s24
    %p28 = pneg %p22
    %p29 = scmp.eq.s32.totalorder %s13, 1
    %p30 = por %p28, %p29
    %p31 = scmp.ne.s32.totalorder %s23, %s26
    %p32 = scmp.eq.s32.totalorder %s13, 0
    %p33 = por %p31, %p32
    %p34 = scmp.ne.s32.totalorder %s23, %s26
    %p35 = scmp.eq.s32.totalorder %s18, 1
    %p36 = por %p34, %p35
    %p37 = scmp.ne.s32.totalorder %s26, %s27
    %p38 = scmp.eq.s32.totalorder %s18, 0
    %p39 = por %p37, %p38
    %p40 = scmp.ne.s32.totalorder %s26, %s27
    %p41 = scmp.eq.s32.totalorder %s19, 1
    %p42 = por %p40, %p41
    %p44 = scmp.ne.s32.totalorder %s27, %s43
    %p45 = scmp.eq.s32.totalorder %s19, 0
    %p46 = por %p44, %p45
    %s48 = sadd.s32 %s47, 1
    %p51 = scmp.eq.s32.totalorder %s13, 1
    %p52 = scmp.ne.s32.totalorder %s47, %s49
    %p53 = scmp.eq.s32.totalorder %s13, 0
    %p54 = por %p52, %p53
    %p55 = scmp.ne.s32.totalorder %s47, %s49
    %p56 = scmp.eq.s32.totalorder %s18, 1
    %p57 = por %p55, %p56
    %p58 = scmp.ne.s32.totalorder %s49, %s50
    %p59 = scmp.eq.s32.totalorder %s18, 0
    %p60 = por %p58, %p59
    %p61 = scmp.ne.s32.totalorder %s49, %s50
    %p62 = scmp.eq.s32.totalorder %s19, 1
    %p63 = por %p61, %p62
    %p65 = scmp.ne.s32.totalorder %s50, %s64
    %p66 = scmp.eq.s32.totalorder %s19, 0
    %p67 = por %p65, %p66
    %s69 = sadd.s32 %s68, 1
    %p72 = scmp.eq.s32.totalorder %s13, 1
    %p73 = scmp.ne.s32.totalorder %s68, %s70
    %p74 = scmp.eq.s32.totalorder %s13, 0
    %p75 = por %p73, %p74
    %p76 = scmp.ne.s32.totalorder %s68, %s70
    %p77 = scmp.eq.s32.totalorder %s18, 1
    %p78 = por %p76, %p77
    %p79 = scmp.ne.s32.totalorder %s70, %s71
    %p80 = scmp.eq.s32.totalorder %s18, 0
    %p81 = por %p79, %p80
    %p82 = scmp.ne.s32.totalorder %s70, %s71
    %p83 = scmp.eq.s32.totalorder %s19, 1
    %p84 = por %p82, %p83
    %p86 = scmp.ne.s32.totalorder %s71, %s85
    %p87 = scmp.eq.s32.totalorder %s19, 0
    %p88 = por %p86, %p87
    %s90 = sadd.s32 %s89, 1
    %p93 = scmp.eq.s32.totalorder %s13, 1
    %p94 = scmp.ne.s32.totalorder %s89, %s91
    %p95 = scmp.eq.s32.totalorder %s13, 0
    %p96 = por %p94, %p95
    %p97 = scmp.ne.s32.totalorder %s89, %s91
    %p98 = scmp.eq.s32.totalorder %s18, 1
    %p99 = por %p97, %p98
    %p100 = scmp.ne.s32.totalorder %s91, %s92
    %p101 = scmp.eq.s32.totalorder %s18, 0
    %p102 = por %p100, %p101
    %p103 = scmp.ne.s32.totalorder %s91, %s92
    %p104 = scmp.eq.s32.totalorder %s19, 1
    %p105 = por %p103, %p104
    %p107 = scmp.ne.s32.totalorder %s92, %s106
    %p108 = scmp.eq.s32.totalorder %s19, 0
    %p109 = por %p107, %p108
    %s111 = sadd.s32 %s110, 1
    %p114 = scmp.eq.s32.totalorder %s13, 1
    %p115 = scmp.ne.s32.totalorder %s110, %s112
    %p116 = scmp.eq.s32.totalorder %s13, 0
    %p117 = por %p115, %p116
    %p118 = scmp.ne.s32.totalorder %s110, %s112
    %p119 = scmp.eq.s32.totalorder %s18, 1
    %p120 = por %p118, %p119
    %p121 = scmp.ne.s32.totalorder %s112, %s113
    %p122 = scmp.eq.s32.totalorder %s18, 0
    %p123 = por %p121, %p122
    %p124 = scmp.ne.s32.totalorder %s112, %s113
    %p125 = scmp.eq.s32.totalorder %s19, 1
    %p126 = por %p124, %p125
    %p128 = scmp.ne.s32.totalorder %s113, %s127
    %p129 = scmp.eq.s32.totalorder %s19, 0
    %p130 = por %p128, %p129
    %s131 = ssub.s32 %s13, %s20
    %p132 = scmp.eq.s32.totalorder %s131, 0
    %s134 = sadd.s32 %s133, 1
    %s135 = scalar_select %p132, %s133, %s134
    %p138 = pneg %p132
    %p139 = scmp.eq.s32.totalorder %s13, 1
    %p140 = por %p138, %p139
    %p141 = scmp.ne.s32.totalorder %s133, %s136
    %p142 = scmp.eq.s32.totalorder %s13, 0
    %p143 = por %p141, %p142
    %p144 = scmp.ne.s32.totalorder %s133, %s136
    %p145 = scmp.eq.s32.totalorder %s18, 1
    %p146 = por %p144, %p145
    %p147 = scmp.ne.s32.totalorder %s136, %s137
    %p148 = scmp.eq.s32.totalorder %s18, 0
    %p149 = por %p147, %p148
    %p150 = scmp.ne.s32.totalorder %s136, %s137
    %p151 = scmp.eq.s32.totalorder %s19, 1
    %p152 = por %p150, %p151
    %p154 = scmp.ne.s32.totalorder %s137, %s153
    %p155 = scmp.eq.s32.totalorder %s19, 0
    %p156 = por %p154, %p155
    %s157 = ssub.s32 %s13, %s20
    %p158 = scmp.eq.s32.totalorder %s157, 0
    %s160 = sadd.s32 %s159, 1
    %s161 = scalar_select %p158, %s159, %s160
    %p164 = pneg %p158
    %p165 = scmp.eq.s32.totalorder %s13, 1
    %p166 = por %p164, %p165
    %p167 = scmp.ne.s32.totalorder %s159, %s162
    %p168 = scmp.eq.s32.totalorder %s13, 0
    %p169 = por %p167, %p168
    %p170 = scmp.ne.s32.totalorder %s159, %s162
    %p171 = scmp.eq.s32.totalorder %s18, 1
    %p172 = por %p170, %p171
    %p173 = scmp.ne.s32.totalorder %s162, %s163
    %p174 = scmp.eq.s32.totalorder %s18, 0
    %p175 = por %p173, %p174
    %p176 = scmp.ne.s32.totalorder %s162, %s163
    %p177 = scmp.eq.s32.totalorder %s19, 1
    %p178 = por %p176, %p177
    %p180 = scmp.ne.s32.totalorder %s163, %s179
    %p181 = scmp.eq.s32.totalorder %s19, 0
    %p182 = por %p180, %p181
    %p183 = scmp.le.s32.totalorder 1, %s13
    %p184 = scmp.lt.s32.totalorder %s13, 3
    %p185 = pnand %p183, %p184
    %p186 = pneg %p185
    // Predicated region
    $region9: #{residual_unit_forward.4} parent=5 // pred_check
      _
    $region10: #{residual_unit_forward.4} parent=5 // pred_check_branch
      %188 = sbr.rel (%p185) target = $region12
    $region11: #{residual_unit_forward.4} parent=5 // pred_region
      %s189 = ssub.s32 %s13, 1
      // Predicated region
      $region13: #{residual_unit_forward.4} parent=11 // pred_check
        %p190 = pneg %p60
      $region14: #{residual_unit_forward.4} parent=11 // pred_check_branch
        %192 = sbr.rel (%p190) target = $region16
      $region15: #{residual_unit_forward.4} parent=11 // pred_region
        _
      $region16: #{residual_unit_forward.4} parent=11 // pred_fallthru
        _
      // Predicated region
      $region17: #{residual_unit_forward.4} parent=11 // pred_check
        %p193 = pneg %p81
      $region18: #{residual_unit_forward.4} parent=11 // pred_check_branch
        %195 = sbr.rel (%p193) target = $region20
      $region19: #{residual_unit_forward.4} parent=11 // pred_region
        _
      $region20: #{residual_unit_forward.4} parent=11 // pred_fallthru
        _
      // Predicated region
      $region21: #{residual_unit_forward.4} parent=11 // pred_check
        %p196 = pneg %p102
      $region22: #{residual_unit_forward.4} parent=11 // pred_check_branch
        %198 = sbr.rel (%p196) target = $region24
      $region23: #{residual_unit_forward.4} parent=11 // pred_region
        _
      $region24: #{residual_unit_forward.4} parent=11 // pred_fallthru
        _
      // Predicated region
      $region25: #{residual_unit_forward.4} parent=11 // pred_check
        %p199 = pneg %p123
      $region26: #{residual_unit_forward.4} parent=11 // pred_check_branch
        %201 = sbr.rel (%p199) target = $region28
      $region27: #{residual_unit_forward.4} parent=11 // pred_region
        _
      $region28: #{residual_unit_forward.4} parent=11 // pred_fallthru
        _
    $region12: #{residual_unit_forward.4} parent=5 // pred_fallthru
      _
    %p202 = scmp.lt.s32.totalorder %s13, 2
    // Predicated region
    $region29: #{residual_unit_forward.4} parent=5 // pred_check
      %p203 = pneg %p202
    $region30: #{residual_unit_forward.4} parent=5 // pred_check_branch
      %205 = sbr.rel (%p203) target = $region32
    $region31: #{residual_unit_forward.4} parent=5 // pred_region
      // Predicated region
      $region33: #{residual_unit_forward.4} parent=31 // pred_check
        %p206 = pneg %p33
      $region34: #{residual_unit_forward.4} parent=31 // pred_check_branch
        %208 = sbr.rel (%p206) target = $region36
      $region35: #{residual_unit_forward.4} parent=31 // pred_region
        %p209 = scmp.lt.s32.totalorder %s13, 1
        %s210 = scalar_select %p209, %s13, 1
        %s211 = smul.addr %s210, 32
        %s212 = smul.addr %s211, 4
        %s213 = scalar_lea.vmem %s0, %s212
      $region36: #{residual_unit_forward.4} parent=31 // pred_fallthru
        _
    $region32: #{residual_unit_forward.4} parent=5 // pred_fallthru
      _
    %p214 = scmp.le.s32.totalorder 1, %s13
    %p215 = scmp.lt.s32.totalorder %s13, 3
    %p216 = pnand %p214, %p215
    %p217 = pneg %p216
    // Predicated region
    $region37: #{residual_unit_forward.4} parent=5 // pred_check
      _
    $region38: #{residual_unit_forward.4} parent=5 // pred_check_branch
      %219 = sbr.rel (%p216) target = $region40
    $region39: #{residual_unit_forward.4} parent=5 // pred_region
      %s220 = ssub.s32 %s13, 1
      %p221 = scmp.lt.s32.totalorder %s18, 1
      %s222 = scalar_select %p221, %s18, 1
      %s223 = smul.addr %s222, 32
      %s224 = smul.addr %s223, 4
      %s225 = scalar_lea.vmem %s0, %s224
      %p226 = pneg %p39
      %p227 = pneg %p36
      %p228 = pneg %p60
      %p229 = pneg %p57
      %p230 = pneg %p81
      %p231 = pneg %p78
      %p232 = pneg %p102
      %p233 = pneg %p99
      %p234 = pneg %p123
      %p235 = pneg %p120
      %p236 = pneg %p149
      %p237 = pneg %p146
      %p238 = scmp.lt.s32.totalorder %s18, 1
      %s239 = scalar_select %p238, %s18, 1
      %s240 = smul.addr %s239, 32
      %s241 = smul.addr %s240, 4
      %s242 = scalar_lea.vmem %s5, %s241
      %p243 = pneg %p175
      %p244 = pneg %p172
      %p245 = scmp.lt.s32.totalorder %s18, 1
      %s246 = scalar_select %p245, %s18, 1
      %s247 = smul.addr %s246, 2
      %s248 = scalar_lea.vmem %s6, %s247
      %p249 = scmp.lt.s32.totalorder %s18, 1
      %s250 = scalar_select %p249, %s18, 1
      %s251 = smul.addr %s250, 32
      %s252 = smul.addr %s251, 4
      %s253 = scalar_lea.vmem %s0, %s252
      %p254 = scmp.lt.s32.totalorder %s18, 1
      %s255 = scalar_select %p254, %s18, 1
      %s256 = smul.addr %s255, 32
      %s257 = smul.addr %s256, 4
      %s258 = scalar_lea.vmem %s5, %s257
      %p259 = scmp.lt.s32.totalorder %s18, 1
      %s260 = scalar_select %p259, %s18, 1
      %s261 = smul.addr %s260, 2
      %s262 = scalar_lea.vmem %s6, %s261
      %v264 = vld [vmem:[%s253] sm:$0xf]
      %v265 = vld [vmem:[%s253 + $0x4] sm:$0xf]
      %v266 = vld [vmem:[%s253 + $0x8] sm:$0xf]
      %v267 = vld [vmem:[%s253 + $0xc] sm:$0xf]
      %v268 = vld [vmem:[%s253 + $0x10] sm:$0xf]
      %v269 = vld [vmem:[%s253 + $0x14] sm:$0xf]
      %v270 = vld [vmem:[%s253 + $0x18] sm:$0xf]
      %v271 = vld [vmem:[%s253 + $0x1c] sm:$0xf]
      %v272 = vld [vmem:[%s253 + $0x20] sm:$0xf]
      %v273 = vld [vmem:[%s253 + $0x24] sm:$0xf]
      %v274 = vld [vmem:[%s253 + $0x28] sm:$0xf]
      %v275 = vld [vmem:[%s253 + $0x2c] sm:$0xf]
      %v276 = vld [vmem:[%s253 + $0x30] sm:$0xf]
      %v277 = vld [vmem:[%s253 + $0x34] sm:$0xf]
      %v278 = vld [vmem:[%s253 + $0x38] sm:$0xf]
      %v279 = vld [vmem:[%s253 + $0x3c] sm:$0xf]
      %v280 = vld [vmem:[%s253 + $0x40] sm:$0xf]
      %v281 = vld [vmem:[%s253 + $0x44] sm:$0xf]
      %v282 = vld [vmem:[%s253 + $0x48] sm:$0xf]
      %v283 = vld [vmem:[%s253 + $0x4c] sm:$0xf]
      %v284 = vld [vmem:[%s253 + $0x50] sm:$0xf]
      %v285 = vld [vmem:[%s253 + $0x54] sm:$0xf]
      %v286 = vld [vmem:[%s253 + $0x58] sm:$0xf]
      %v287 = vld [vmem:[%s253 + $0x5c] sm:$0xf]
      %v288 = vld [vmem:[%s253 + $0x60] sm:$0xf]
      %v289 = vld [vmem:[%s253 + $0x64] sm:$0xf]
      %v290 = vld [vmem:[%s253 + $0x68] sm:$0xf]
      %v291 = vld [vmem:[%s253 + $0x6c] sm:$0xf]
      %v292 = vld [vmem:[%s253 + $0x70] sm:$0xf]
      %v293 = vld [vmem:[%s253 + $0x74] sm:$0xf]
      %v294 = vld [vmem:[%s253 + $0x78] sm:$0xf]
      %v295 = vld [vmem:[%s253 + $0x7c] sm:$0xf]
      %v296 = vunpack.c.l.bf16 %v264
      %v297 = vunpack.c.l.bf16 %v265
      %v298 = vunpack.c.l.bf16 %v266
      %v299 = vunpack.c.l.bf16 %v267
      %v300 = vunpack.c.l.bf16 %v268
      %v301 = vunpack.c.l.bf16 %v269
      %v302 = vunpack.c.l.bf16 %v270
      %v303 = vunpack.c.l.bf16 %v271
      %v304 = vunpack.c.l.bf16 %v272
      %v305 = vunpack.c.l.bf16 %v273
      %v306 = vunpack.c.l.bf16 %v274
      %v307 = vunpack.c.l.bf16 %v275
      %v308 = vunpack.c.l.bf16 %v276
      %v309 = vunpack.c.l.bf16 %v277
      %v310 = vunpack.c.l.bf16 %v278
      %v311 = vunpack.c.l.bf16 %v279
      %v312 = vunpack.c.l.bf16 %v280
      %v313 = vunpack.c.l.bf16 %v281
      %v314 = vunpack.c.l.bf16 %v282
      %v315 = vunpack.c.l.bf16 %v283
      %v316 = vunpack.c.l.bf16 %v284
      %v317 = vunpack.c.l.bf16 %v285
      %v318 = vunpack.c.l.bf16 %v286
      %v319 = vunpack.c.l.bf16 %v287
      %v320 = vunpack.c.l.bf16 %v288
      %v321 = vunpack.c.l.bf16 %v289
      %v322 = vunpack.c.l.bf16 %v290
      %v323 = vunpack.c.l.bf16 %v291
      %v324 = vunpack.c.l.bf16 %v292
      %v325 = vunpack.c.l.bf16 %v293
      %v326 = vunpack.c.l.bf16 %v294
      %v327 = vunpack.c.l.bf16 %v295
      %v328 = vld [vmem:[%s1] sm:$0x1]
      %v330 = vlaneseq
      %v331 = vshrl.u32 %v330, 7
      %v332 = vsub.s32 0, %v331
      %v333 = vrot.slane %v328, %v332
      %v335 = vmul.f32 %v296, %v333
      %v336 = vmul.f32 %v297, %v333
      %v337 = vmul.f32 %v298, %v333
      %v338 = vmul.f32 %v299, %v333
      %v339 = vmul.f32 %v300, %v333
      %v340 = vmul.f32 %v301, %v333
      %v341 = vmul.f32 %v302, %v333
      %v342 = vmul.f32 %v303, %v333
      %v343 = vmul.f32 %v304, %v333
      %v344 = vmul.f32 %v305, %v333
      %v345 = vmul.f32 %v306, %v333
      %v346 = vmul.f32 %v307, %v333
      %v347 = vmul.f32 %v308, %v333
      %v348 = vmul.f32 %v309, %v333
      %v349 = vmul.f32 %v310, %v333
      %v350 = vmul.f32 %v311, %v333
      %v351 = vmul.f32 %v312, %v333
      %v352 = vmul.f32 %v313, %v333
      %v353 = vmul.f32 %v314, %v333
      %v354 = vmul.f32 %v315, %v333
      %v355 = vmul.f32 %v316, %v333
      %v356 = vmul.f32 %v317, %v333
      %v357 = vmul.f32 %v318, %v333
      %v358 = vmul.f32 %v319, %v333
      %v359 = vmul.f32 %v320, %v333
      %v360 = vmul.f32 %v321, %v333
      %v361 = vmul.f32 %v322, %v333
      %v362 = vmul.f32 %v323, %v333
      %v363 = vmul.f32 %v324, %v333
      %v364 = vmul.f32 %v325, %v333
      %v365 = vmul.f32 %v326, %v333
      %v366 = vmul.f32 %v327, %v333
      %v367 = vld [vmem:[%s2] sm:$0x1]
      %v369 = vlaneseq
      %v370 = vshrl.u32 %v369, 7
      %v371 = vsub.s32 0, %v370
      %v372 = vrot.slane %v367, %v371
      %v374 = vadd.f32 %v335, %v372
      %v375 = vadd.f32 %v336, %v372
      %v376 = vadd.f32 %v337, %v372
      %v377 = vadd.f32 %v338, %v372
      %v378 = vadd.f32 %v339, %v372
      %v379 = vadd.f32 %v340, %v372
      %v380 = vadd.f32 %v341, %v372
      %v381 = vadd.f32 %v342, %v372
      %v382 = vadd.f32 %v343, %v372
      %v383 = vadd.f32 %v344, %v372
      %v384 = vadd.f32 %v345, %v372
      %v385 = vadd.f32 %v346, %v372
      %v386 = vadd.f32 %v347, %v372
      %v387 = vadd.f32 %v348, %v372
      %v388 = vadd.f32 %v349, %v372
      %v389 = vadd.f32 %v350, %v372
      %v390 = vadd.f32 %v351, %v372
      %v391 = vadd.f32 %v352, %v372
      %v392 = vadd.f32 %v353, %v372
      %v393 = vadd.f32 %v354, %v372
      %v394 = vadd.f32 %v355, %v372
      %v395 = vadd.f32 %v356, %v372
      %v396 = vadd.f32 %v357, %v372
      %v397 = vadd.f32 %v358, %v372
      %v398 = vadd.f32 %v359, %v372
      %v399 = vadd.f32 %v360, %v372
      %v400 = vadd.f32 %v361, %v372
      %v401 = vadd.f32 %v362, %v372
      %v402 = vadd.f32 %v363, %v372
      %v403 = vadd.f32 %v364, %v372
      %v404 = vadd.f32 %v365, %v372
      %v405 = vadd.f32 %v366, %v372
      %v406 = vmax.f32 %v374, 0.0
      %v407 = vmax.f32 %v375, 0.0
      %v408 = vmax.f32 %v376, 0.0
      %v409 = vmax.f32 %v377, 0.0
      %v410 = vmax.f32 %v378, 0.0
      %v411 = vmax.f32 %v379, 0.0
      %v412 = vmax.f32 %v380, 0.0
      %v413 = vmax.f32 %v381, 0.0
      %v414 = vmax.f32 %v382, 0.0
      %v415 = vmax.f32 %v383, 0.0
      %v416 = vmax.f32 %v384, 0.0
      %v417 = vmax.f32 %v385, 0.0
      %v418 = vmax.f32 %v386, 0.0
      %v419 = vmax.f32 %v387, 0.0
      %v420 = vmax.f32 %v388, 0.0
      %v421 = vmax.f32 %v389, 0.0
      %v422 = vmax.f32 %v390, 0.0
      %v423 = vmax.f32 %v391, 0.0
      %v424 = vmax.f32 %v392, 0.0
      %v425 = vmax.f32 %v393, 0.0
      %v426 = vmax.f32 %v394, 0.0
      %v427 = vmax.f32 %v395, 0.0
      %v428 = vmax.f32 %v396, 0.0
      %v429 = vmax.f32 %v397, 0.0
      %v430 = vmax.f32 %v398, 0.0
      %v431 = vmax.f32 %v399, 0.0
      %v432 = vmax.f32 %v400, 0.0
      %v433 = vmax.f32 %v401, 0.0
      %v434 = vmax.f32 %v402, 0.0
      %v435 = vmax.f32 %v403, 0.0
      %v436 = vmax.f32 %v404, 0.0
      %v437 = vmax.f32 %v405, 0.0
      %vm438 = vcmask 64512
      %439 = vst.msk [vmem:[#allocation2] sm:$0xff] %vm438, 0.0
      %440 = vst.msk [vmem:[#allocation2 + $0x8] sm:$0xff] %vm438, 0.0
      %vm441 = vcmask 58368
      %442 = vst.msk [vmem:[#allocation2 + $0x10] sm:$0x3] %vm441, 0.0
      %443 = vst.msk [vmem:[#allocation2 + $0x18] sm:$0xff] %vm438, 0.0
      %444 = vst.msk [vmem:[#allocation2 + $0x20] sm:$0xff] %vm438, 0.0
      %445 = vst.msk [vmem:[#allocation2 + $0x28] sm:$0x3] %vm441, 0.0
      %446 = vst.msk [vmem:[#allocation2 + $0x30] sm:$0xff] %vm438, 0.0
      %447 = vst.msk [vmem:[#allocation2 + $0x38] sm:$0xff] %vm438, 0.0
      %448 = vst.msk [vmem:[#allocation2 + $0x40] sm:$0x3] %vm441, 0.0
      %449 = vst.msk [vmem:[#allocation2 + $0x48] sm:$0xff] %vm438, 0.0
      %450 = vst.msk [vmem:[#allocation2 + $0x50] sm:$0xff] %vm438, 0.0
      %451 = vst.msk [vmem:[#allocation2 + $0x58] sm:$0x3] %vm441, 0.0
      %452 = vst.msk [vmem:[#allocation2 + $0x60] sm:$0xff] %vm438, 0.0
      %453 = vst.msk [vmem:[#allocation2 + $0x68] sm:$0xff] %vm438, 0.0
      %454 = vst.msk [vmem:[#allocation2 + $0x70] sm:$0x3] %vm441, 0.0
      %455 = vst.msk [vmem:[#allocation2 + $0x78] sm:$0xff] %vm438, 0.0
      %456 = vst.msk [vmem:[#allocation2 + $0x80] sm:$0xff] %vm438, 0.0
      %457 = vst.msk [vmem:[#allocation2 + $0x88] sm:$0x3] %vm441, 0.0
      %458 = vst.msk [vmem:[#allocation2 + $0x90] sm:$0xff] %vm438, 0.0
      %459 = vst.msk [vmem:[#allocation2 + $0x98] sm:$0xff] %vm438, 0.0
      %460 = vst.msk [vmem:[#allocation2 + $0xa0] sm:$0x3] %vm441, 0.0
      %461 = vst.msk [vmem:[#allocation2 + $0xa8] sm:$0xff] %vm438, 0.0
      %462 = vst.msk [vmem:[#allocation2 + $0xb0] sm:$0xff] %vm438, 0.0
      %463 = vst.msk [vmem:[#allocation2 + $0xb8] sm:$0x3] %vm441, 0.0
      %464 = vst.msk [vmem:[#allocation2 + $0xc0] sm:$0xff] %vm438, 0.0
      %465 = vst.msk [vmem:[#allocation2 + $0xc8] sm:$0xff] %vm438, 0.0
      %466 = vst.msk [vmem:[#allocation2 + $0xd0] sm:$0x3] %vm441, 0.0
      %467 = vst.msk [vmem:[#allocation2 + $0xd8] sm:$0xff] %vm438, 0.0
      %468 = vst.msk [vmem:[#allocation2 + $0xe0] sm:$0xff] %vm438, 0.0
      %469 = vst.msk [vmem:[#allocation2 + $0xe8] sm:$0x3] %vm441, 0.0
      %470 = vst.msk [vmem:[#allocation2 + $0xf0] sm:$0xff] %vm438, 0.0
      %471 = vst.msk [vmem:[#allocation2 + $0xf8] sm:$0xff] %vm438, 0.0
      %472 = vst.msk [vmem:[#allocation2 + $0x100] sm:$0x3] %vm441, 0.0
      %473 = vst.msk [vmem:[#allocation2 + $0x108] sm:$0xff] %vm438, 0.0
      %474 = vst.msk [vmem:[#allocation2 + $0x110] sm:$0xff] %vm438, 0.0
      %475 = vst.msk [vmem:[#allocation2 + $0x118] sm:$0x3] %vm441, 0.0
      %476 = vst.msk [vmem:[#allocation2 + $0x120] sm:$0xff] %vm438, 0.0
      %477 = vst.msk [vmem:[#allocation2 + $0x128] sm:$0xff] %vm438, 0.0
      %478 = vst.msk [vmem:[#allocation2 + $0x130] sm:$0x3] %vm441, 0.0
      %479 = vst.msk [vmem:[#allocation2 + $0x138] sm:$0xff] %vm438, 0.0
      %480 = vst.msk [vmem:[#allocation2 + $0x140] sm:$0xff] %vm438, 0.0
      %481 = vst.msk [vmem:[#allocation2 + $0x148] sm:$0x3] %vm441, 0.0
      %482 = vst.msk [vmem:[#allocation2 + $0x150] sm:$0xff] %vm438, 0.0
      %483 = vst.msk [vmem:[#allocation2 + $0x158] sm:$0xff] %vm438, 0.0
      %484 = vst.msk [vmem:[#allocation2 + $0x160] sm:$0x3] %vm441, 0.0
      %485 = vst.msk [vmem:[#allocation2 + $0x168] sm:$0xff] %vm438, 0.0
      %486 = vst.msk [vmem:[#allocation2 + $0x170] sm:$0xff] %vm438, 0.0
      %487 = vst.msk [vmem:[#allocation2 + $0x178] sm:$0x3] %vm441, 0.0
      %488 = vst.msk [vmem:[#allocation2 + $0x180] sm:$0xff] %vm438, 0.0
      %489 = vst.msk [vmem:[#allocation2 + $0x188] sm:$0xff] %vm438, 0.0
      %490 = vst.msk [vmem:[#allocation2 + $0x190] sm:$0x3] %vm441, 0.0
      %491 = vst.msk [vmem:[#allocation2 + $0x198] sm:$0xff] %vm438, 0.0
      %492 = vst.msk [vmem:[#allocation2 + $0x1a0] sm:$0xff] %vm438, 0.0
      %493 = vst.msk [vmem:[#allocation2 + $0x1a8] sm:$0x3] %vm441, 0.0
      %s494 = scalar_lea.vmem [#allocation2], 24
      %495 = vst.msk [vmem:[%s494 + $0x1] sm:$0xff] %vm438, %v406
      %496 = vst.msk [vmem:[%s494 + $0x9] sm:$0xff] %vm438, %v407
      %497 = vst.msk [vmem:[%s494 + $0x19] sm:$0xff] %vm438, %v408
      %498 = vst.msk [vmem:[%s494 + $0x21] sm:$0xff] %vm438, %v409
      %499 = vst.msk [vmem:[%s494 + $0x31] sm:$0xff] %vm438, %v410
      %500 = vst.msk [vmem:[%s494 + $0x39] sm:$0xff] %vm438, %v411
      %501 = vst.msk [vmem:[%s494 + $0x49] sm:$0xff] %vm438, %v412
      %502 = vst.msk [vmem:[%s494 + $0x51] sm:$0xff] %vm438, %v413
      %503 = vst.msk [vmem:[%s494 + $0x61] sm:$0xff] %vm438, %v414
      %504 = vst.msk [vmem:[%s494 + $0x69] sm:$0xff] %vm438, %v415
      %505 = vst.msk [vmem:[%s494 + $0x79] sm:$0xff] %vm438, %v416
      %506 = vst.msk [vmem:[%s494 + $0x81] sm:$0xff] %vm438, %v417
      %507 = vst.msk [vmem:[%s494 + $0x91] sm:$0xff] %vm438, %v418
      %508 = vst.msk [vmem:[%s494 + $0x99] sm:$0xff] %vm438, %v419
      %509 = vst.msk [vmem:[%s494 + $0xa9] sm:$0xff] %vm438, %v420
      %510 = vst.msk [vmem:[%s494 + $0xb1] sm:$0xff] %vm438, %v421
      %511 = vst.msk [vmem:[%s494 + $0xc1] sm:$0xff] %vm438, %v422
      %512 = vst.msk [vmem:[%s494 + $0xc9] sm:$0xff] %vm438, %v423
      %513 = vst.msk [vmem:[%s494 + $0xd9] sm:$0xff] %vm438, %v424
      %514 = vst.msk [vmem:[%s494 + $0xe1] sm:$0xff] %vm438, %v425
      %515 = vst.msk [vmem:[%s494 + $0xf1] sm:$0xff] %vm438, %v426
      %516 = vst.msk [vmem:[%s494 + $0xf9] sm:$0xff] %vm438, %v427
      %517 = vst.msk [vmem:[%s494 + $0x109] sm:$0xff] %vm438, %v428
      %518 = vst.msk [vmem:[%s494 + $0x111] sm:$0xff] %vm438, %v429
      %519 = vst.msk [vmem:[%s494 + $0x121] sm:$0xff] %vm438, %v430
      %520 = vst.msk [vmem:[%s494 + $0x129] sm:$0xff] %vm438, %v431
      %521 = vst.msk [vmem:[%s494 + $0x139] sm:$0xff] %vm438, %v432
      %522 = vst.msk [vmem:[%s494 + $0x141] sm:$0xff] %vm438, %v433
      %523 = vst.msk [vmem:[%s494 + $0x151] sm:$0xff] %vm438, %v434
      %524 = vst.msk [vmem:[%s494 + $0x159] sm:$0xff] %vm438, %v435
      %525 = vst.msk [vmem:[%s494 + $0x169] sm:$0xff] %vm438, %v436
      %526 = vst.msk [vmem:[%s494 + $0x171] sm:$0xff] %vm438, %v437
      %v527 = vld [vmem:[#allocation2] sm:$0xff]
      %v528 = vld [vmem:[#allocation2 + $0x8] sm:$0xff]
      %v529 = vld [vmem:[#allocation2 + $0x18] sm:$0xff]
      %v530 = vld [vmem:[#allocation2 + $0x20] sm:$0xff]
      %v531 = vld [vmem:[#allocation2 + $0x30] sm:$0xff]
      %v532 = vld [vmem:[#allocation2 + $0x38] sm:$0xff]
      %v533 = vld [vmem:[#allocation2 + $0x48] sm:$0xff]
      %v534 = vld [vmem:[#allocation2 + $0x50] sm:$0xff]
      %v535 = vld [vmem:[#allocation2 + $0x60] sm:$0xff]
      %v536 = vld [vmem:[#allocation2 + $0x68] sm:$0xff]
      %v537 = vld [vmem:[#allocation2 + $0x78] sm:$0xff]
      %v538 = vld [vmem:[#allocation2 + $0x80] sm:$0xff]
      %v539 = vld [vmem:[#allocation2 + $0x90] sm:$0xff]
      %v540 = vld [vmem:[#allocation2 + $0x98] sm:$0xff]
      %v541 = vld [vmem:[#allocation2 + $0xa8] sm:$0xff]
      %v542 = vld [vmem:[#allocation2 + $0xb0] sm:$0xff]
      %v543 = vld [vmem:[#allocation2 + $0xc0] sm:$0xff]
      %v544 = vld [vmem:[#allocation2 + $0xc8] sm:$0xff]
      %v545 = vld [vmem:[#allocation2 + $0xd8] sm:$0xff]
      %v546 = vld [vmem:[#allocation2 + $0xe0] sm:$0xff]
      %v547 = vld [vmem:[#allocation2 + $0xf0] sm:$0xff]
      %v548 = vld [vmem:[#allocation2 + $0xf8] sm:$0xff]
      %v549 = vld [vmem:[#allocation2 + $0x108] sm:$0xff]
      %v550 = vld [vmem:[#allocation2 + $0x110] sm:$0xff]
      %v551 = vld [vmem:[#allocation2 + $0x120] sm:$0xff]
      %v552 = vld [vmem:[#allocation2 + $0x128] sm:$0xff]
      %v553 = vld [vmem:[#allocation2 + $0x138] sm:$0xff]
      %v554 = vld [vmem:[#allocation2 + $0x140] sm:$0xff]
      %v555 = vld [vmem:[#allocation2 + $0x150] sm:$0xff]
      %v556 = vld [vmem:[#allocation2 + $0x158] sm:$0xff]
      %v557 = vld [vmem:[#allocation2 + $0x168] sm:$0xff]
      %v558 = vld [vmem:[#allocation2 + $0x170] sm:$0xff]
      %v559 = vld [vmem:[#allocation2 + $0x1] sm:$0xff]
      %v560 = vld [vmem:[#allocation2 + $0x9] sm:$0xff]
      %v561 = vld [vmem:[#allocation2 + $0x19] sm:$0xff]
      %v562 = vld [vmem:[#allocation2 + $0x21] sm:$0xff]
      %v563 = vld [vmem:[#allocation2 + $0x31] sm:$0xff]
      %v564 = vld [vmem:[#allocation2 + $0x39] sm:$0xff]
      %v565 = vld [vmem:[#allocation2 + $0x49] sm:$0xff]
      %v566 = vld [vmem:[#allocation2 + $0x51] sm:$0xff]
      %v567 = vld [vmem:[#allocation2 + $0x61] sm:$0xff]
      %v568 = vld [vmem:[#allocation2 + $0x69] sm:$0xff]
      %v569 = vld [vmem:[#allocation2 + $0x79] sm:$0xff]
      %v570 = vld [vmem:[#allocation2 + $0x81] sm:$0xff]
      %v571 = vld [vmem:[#allocation2 + $0x91] sm:$0xff]
      %v572 = vld [vmem:[#allocation2 + $0x99] sm:$0xff]
      %v573 = vld [vmem:[#allocation2 + $0xa9] sm:$0xff]
      %v574 = vld [vmem:[#allocation2 + $0xb1] sm:$0xff]
      %v575 = vld [vmem:[#allocation2 + $0xc1] sm:$0xff]
      %v576 = vld [vmem:[#allocation2 + $0xc9] sm:$0xff]
      %v577 = vld [vmem:[#allocation2 + $0xd9] sm:$0xff]
      %v578 = vld [vmem:[#allocation2 + $0xe1] sm:$0xff]
      %v579 = vld [vmem:[#allocation2 + $0xf1] sm:$0xff]
      %v580 = vld [vmem:[#allocation2 + $0xf9] sm:$0xff]
      %v581 = vld [vmem:[#allocation2 + $0x109] sm:$0xff]
      %v582 = vld [vmem:[#allocation2 + $0x111] sm:$0xff]
      %v583 = vld [vmem:[#allocation2 + $0x121] sm:$0xff]
      %v584 = vld [vmem:[#allocation2 + $0x129] sm:$0xff]
      %v585 = vld [vmem:[#allocation2 + $0x139] sm:$0xff]
      %v586 = vld [vmem:[#allocation2 + $0x141] sm:$0xff]
      %v587 = vld [vmem:[#allocation2 + $0x151] sm:$0xff]
      %v588 = vld [vmem:[#allocation2 + $0x159] sm:$0xff]
      %v589 = vld [vmem:[#allocation2 + $0x169] sm:$0xff]
      %v590 = vld [vmem:[#allocation2 + $0x171] sm:$0xff]
      %v591 = vld [vmem:[#allocation2 + $0x2] sm:$0xff]
      %v592 = vld [vmem:[#allocation2 + $0xa] sm:$0xff]
      %v593 = vld [vmem:[#allocation2 + $0x1a] sm:$0xff]
      %v594 = vld [vmem:[#allocation2 + $0x22] sm:$0xff]
      %v595 = vld [vmem:[#allocation2 + $0x32] sm:$0xff]
      %v596 = vld [vmem:[#allocation2 + $0x3a] sm:$0xff]
      %v597 = vld [vmem:[#allocation2 + $0x4a] sm:$0xff]
      %v598 = vld [vmem:[#allocation2 + $0x52] sm:$0xff]
      %v599 = vld [vmem:[#allocation2 + $0x62] sm:$0xff]
      %v600 = vld [vmem:[#allocation2 + $0x6a] sm:$0xff]
      %v601 = vld [vmem:[#allocation2 + $0x7a] sm:$0xff]
      %v602 = vld [vmem:[#allocation2 + $0x82] sm:$0xff]
      %v603 = vld [vmem:[#allocation2 + $0x92] sm:$0xff]
      %v604 = vld [vmem:[#allocation2 + $0x9a] sm:$0xff]
      %v605 = vld [vmem:[#allocation2 + $0xaa] sm:$0xff]
      %v606 = vld [vmem:[#allocation2 + $0xb2] sm:$0xff]
      %v607 = vld [vmem:[#allocation2 + $0xc2] sm:$0xff]
      %v608 = vld [vmem:[#allocation2 + $0xca] sm:$0xff]
      %v609 = vld [vmem:[#allocation2 + $0xda] sm:$0xff]
      %v610 = vld [vmem:[#allocation2 + $0xe2] sm:$0xff]
      %v611 = vld [vmem:[#allocation2 + $0xf2] sm:$0xff]
      %v612 = vld [vmem:[#allocation2 + $0xfa] sm:$0xff]
      %v613 = vld [vmem:[#allocation2 + $0x10a] sm:$0xff]
      %v614 = vld [vmem:[#allocation2 + $0x112] sm:$0xff]
      %v615 = vld [vmem:[#allocation2 + $0x122] sm:$0xff]
      %v616 = vld [vmem:[#allocation2 + $0x12a] sm:$0xff]
      %v617 = vld [vmem:[#allocation2 + $0x13a] sm:$0xff]
      %v618 = vld [vmem:[#allocation2 + $0x142] sm:$0xff]
      %v619 = vld [vmem:[#allocation2 + $0x152] sm:$0xff]
      %v620 = vld [vmem:[#allocation2 + $0x15a] sm:$0xff]
      %v621 = vld [vmem:[#allocation2 + $0x16a] sm:$0xff]
      %v622 = vld [vmem:[#allocation2 + $0x172] sm:$0xff]
      %v623 = vld [vmem:[%s494] sm:$0xff]
      %v624 = vld [vmem:[%s494 + $0x8] sm:$0xff]
      %v625 = vld [vmem:[%s494 + $0x18] sm:$0xff]
      %v626 = vld [vmem:[%s494 + $0x20] sm:$0xff]
      %v627 = vld [vmem:[%s494 + $0x30] sm:$0xff]
      %v628 = vld [vmem:[%s494 + $0x38] sm:$0xff]
      %v629 = vld [vmem:[%s494 + $0x48] sm:$0xff]
      %v630 = vld [vmem:[%s494 + $0x50] sm:$0xff]
      %v631 = vld [vmem:[%s494 + $0x60] sm:$0xff]
      %v632 = vld [vmem:[%s494 + $0x68] sm:$0xff]
      %v633 = vld [vmem:[%s494 + $0x78] sm:$0xff]
      %v634 = vld [vmem:[%s494 + $0x80] sm:$0xff]
      %v635 = vld [vmem:[%s494 + $0x90] sm:$0xff]
      %v636 = vld [vmem:[%s494 + $0x98] sm:$0xff]
      %v637 = vld [vmem:[%s494 + $0xa8] sm:$0xff]
      %v638 = vld [vmem:[%s494 + $0xb0] sm:$0xff]
      %v639 = vld [vmem:[%s494 + $0xc0] sm:$0xff]
      %v640 = vld [vmem:[%s494 + $0xc8] sm:$0xff]
      %v641 = vld [vmem:[%s494 + $0xd8] sm:$0xff]
      %v642 = vld [vmem:[%s494 + $0xe0] sm:$0xff]
      %v643 = vld [vmem:[%s494 + $0xf0] sm:$0xff]
      %v644 = vld [vmem:[%s494 + $0xf8] sm:$0xff]
      %v645 = vld [vmem:[%s494 + $0x108] sm:$0xff]
      %v646 = vld [vmem:[%s494 + $0x110] sm:$0xff]
      %v647 = vld [vmem:[%s494 + $0x120] sm:$0xff]
      %v648 = vld [vmem:[%s494 + $0x128] sm:$0xff]
      %v649 = vld [vmem:[%s494 + $0x138] sm:$0xff]
      %v650 = vld [vmem:[%s494 + $0x140] sm:$0xff]
      %v651 = vld [vmem:[%s494 + $0x150] sm:$0xff]
      %v652 = vld [vmem:[%s494 + $0x158] sm:$0xff]
      %v653 = vld [vmem:[%s494 + $0x168] sm:$0xff]
      %v654 = vld [vmem:[%s494 + $0x170] sm:$0xff]
      %v655 = vld [vmem:[%s494 + $0x1] sm:$0xff]
      %v656 = vld [vmem:[%s494 + $0x9] sm:$0xff]
      %v657 = vld [vmem:[%s494 + $0x19] sm:$0xff]
      %v658 = vld [vmem:[%s494 + $0x21] sm:$0xff]
      %v659 = vld [vmem:[%s494 + $0x31] sm:$0xff]
      %v660 = vld [vmem:[%s494 + $0x39] sm:$0xff]
      %v661 = vld [vmem:[%s494 + $0x49] sm:$0xff]
      %v662 = vld [vmem:[%s494 + $0x51] sm:$0xff]
      %v663 = vld [vmem:[%s494 + $0x61] sm:$0xff]
      %v664 = vld [vmem:[%s494 + $0x69] sm:$0xff]
      %v665 = vld [vmem:[%s494 + $0x79] sm:$0xff]
      %v666 = vld [vmem:[%s494 + $0x81] sm:$0xff]
      %v667 = vld [vmem:[%s494 + $0x91] sm:$0xff]
      %v668 = vld [vmem:[%s494 + $0x99] sm:$0xff]
      %v669 = vld [vmem:[%s494 + $0xa9] sm:$0xff]
      %v670 = vld [vmem:[%s494 + $0xb1] sm:$0xff]
      %v671 = vld [vmem:[%s494 + $0xc1] sm:$0xff]
      %v672 = vld [vmem:[%s494 + $0xc9] sm:$0xff]
      %v673 = vld [vmem:[%s494 + $0xd9] sm:$0xff]
      %v674 = vld [vmem:[%s494 + $0xe1] sm:$0xff]
      %v675 = vld [vmem:[%s494 + $0xf1] sm:$0xff]
      %v676 = vld [vmem:[%s494 + $0xf9] sm:$0xff]
      %v677 = vld [vmem:[%s494 + $0x109] sm:$0xff]
      %v678 = vld [vmem:[%s494 + $0x111] sm:$0xff]
      %v679 = vld [vmem:[%s494 + $0x121] sm:$0xff]
      %v680 = vld [vmem:[%s494 + $0x129] sm:$0xff]
      %v681 = vld [vmem:[%s494 + $0x139] sm:$0xff]
      %v682 = vld [vmem:[%s494 + $0x141] sm:$0xff]
      %v683 = vld [vmem:[%s494 + $0x151] sm:$0xff]
      %v684 = vld [vmem:[%s494 + $0x159] sm:$0xff]
      %v685 = vld [vmem:[%s494 + $0x169] sm:$0xff]
      %v686 = vld [vmem:[%s494 + $0x171] sm:$0xff]
      %v687 = vld [vmem:[%s494 + $0x2] sm:$0xff]
      %v688 = vld [vmem:[%s494 + $0xa] sm:$0xff]
      %v689 = vld [vmem:[%s494 + $0x1a] sm:$0xff]
      %v690 = vld [vmem:[%s494 + $0x22] sm:$0xff]
      %v691 = vld [vmem:[%s494 + $0x32] sm:$0xff]
      %v692 = vld [vmem:[%s494 + $0x3a] sm:$0xff]
      %v693 = vld [vmem:[%s494 + $0x4a] sm:$0xff]
      %v694 = vld [vmem:[%s494 + $0x52] sm:$0xff]
      %v695 = vld [vmem:[%s494 + $0x62] sm:$0xff]
      %v696 = vld [vmem:[%s494 + $0x6a] sm:$0xff]
      %v697 = vld [vmem:[%s494 + $0x7a] sm:$0xff]
      %v698 = vld [vmem:[%s494 + $0x82] sm:$0xff]
      %v699 = vld [vmem:[%s494 + $0x92] sm:$0xff]
      %v700 = vld [vmem:[%s494 + $0x9a] sm:$0xff]
      %v701 = vld [vmem:[%s494 + $0xaa] sm:$0xff]
      %v702 = vld [vmem:[%s494 + $0xb2] sm:$0xff]
      %v703 = vld [vmem:[%s494 + $0xc2] sm:$0xff]
      %v704 = vld [vmem:[%s494 + $0xca] sm:$0xff]
      %v705 = vld [vmem:[%s494 + $0xda] sm:$0xff]
      %v706 = vld [vmem:[%s494 + $0xe2] sm:$0xff]
      %v707 = vld [vmem:[%s494 + $0xf2] sm:$0xff]
      %v708 = vld [vmem:[%s494 + $0xfa] sm:$0xff]
      %v709 = vld [vmem:[%s494 + $0x10a] sm:$0xff]
      %v710 = vld [vmem:[%s494 + $0x112] sm:$0xff]
      %v711 = vld [vmem:[%s494 + $0x122] sm:$0xff]
      %v712 = vld [vmem:[%s494 + $0x12a] sm:$0xff]
      %v713 = vld [vmem:[%s494 + $0x13a] sm:$0xff]
      %v714 = vld [vmem:[%s494 + $0x142] sm:$0xff]
      %v715 = vld [vmem:[%s494 + $0x152] sm:$0xff]
      %v716 = vld [vmem:[%s494 + $0x15a] sm:$0xff]
      %v717 = vld [vmem:[%s494 + $0x16a] sm:$0xff]
      %v718 = vld [vmem:[%s494 + $0x172] sm:$0xff]
      %s719 = scalar_lea.vmem [#allocation2], 48
      %v720 = vld [vmem:[%s719] sm:$0xff]
      %v721 = vld [vmem:[%s719 + $0x8] sm:$0xff]
      %v722 = vld [vmem:[%s719 + $0x18] sm:$0xff]
      %v723 = vld [vmem:[%s719 + $0x20] sm:$0xff]
      %v724 = vld [vmem:[%s719 + $0x30] sm:$0xff]
      %v725 = vld [vmem:[%s719 + $0x38] sm:$0xff]
      %v726 = vld [vmem:[%s719 + $0x48] sm:$0xff]
      %v727 = vld [vmem:[%s719 + $0x50] sm:$0xff]
      %v728 = vld [vmem:[%s719 + $0x60] sm:$0xff]
      %v729 = vld [vmem:[%s719 + $0x68] sm:$0xff]
      %v730 = vld [vmem:[%s719 + $0x78] sm:$0xff]
      %v731 = vld [vmem:[%s719 + $0x80] sm:$0xff]
      %v732 = vld [vmem:[%s719 + $0x90] sm:$0xff]
      %v733 = vld [vmem:[%s719 + $0x98] sm:$0xff]
      %v734 = vld [vmem:[%s719 + $0xa8] sm:$0xff]
      %v735 = vld [vmem:[%s719 + $0xb0] sm:$0xff]
      %v736 = vld [vmem:[%s719 + $0xc0] sm:$0xff]
      %v737 = vld [vmem:[%s719 + $0xc8] sm:$0xff]
      %v738 = vld [vmem:[%s719 + $0xd8] sm:$0xff]
      %v739 = vld [vmem:[%s719 + $0xe0] sm:$0xff]
      %v740 = vld [vmem:[%s719 + $0xf0] sm:$0xff]
      %v741 = vld [vmem:[%s719 + $0xf8] sm:$0xff]
      %v742 = vld [vmem:[%s719 + $0x108] sm:$0xff]
      %v743 = vld [vmem:[%s719 + $0x110] sm:$0xff]
      %v744 = vld [vmem:[%s719 + $0x120] sm:$0xff]
      %v745 = vld [vmem:[%s719 + $0x128] sm:$0xff]
      %v746 = vld [vmem:[%s719 + $0x138] sm:$0xff]
      %v747 = vld [vmem:[%s719 + $0x140] sm:$0xff]
      %v748 = vld [vmem:[%s719 + $0x150] sm:$0xff]
      %v749 = vld [vmem:[%s719 + $0x158] sm:$0xff]
      %v750 = vld [vmem:[%s719 + $0x168] sm:$0xff]
      %v751 = vld [vmem:[%s719 + $0x170] sm:$0xff]
      %v752 = vld [vmem:[%s719 + $0x1] sm:$0xff]
      %v753 = vld [vmem:[%s719 + $0x9] sm:$0xff]
      %v754 = vld [vmem:[%s719 + $0x19] sm:$0xff]
      %v755 = vld [vmem:[%s719 + $0x21] sm:$0xff]
      %v756 = vld [vmem:[%s719 + $0x31] sm:$0xff]
      %v757 = vld [vmem:[%s719 + $0x39] sm:$0xff]
      %v758 = vld [vmem:[%s719 + $0x49] sm:$0xff]
      %v759 = vld [vmem:[%s719 + $0x51] sm:$0xff]
      %v760 = vld [vmem:[%s719 + $0x61] sm:$0xff]
      %v761 = vld [vmem:[%s719 + $0x69] sm:$0xff]
      %v762 = vld [vmem:[%s719 + $0x79] sm:$0xff]
      %v763 = vld [vmem:[%s719 + $0x81] sm:$0xff]
      %v764 = vld [vmem:[%s719 + $0x91] sm:$0xff]
      %v765 = vld [vmem:[%s719 + $0x99] sm:$0xff]
      %v766 = vld [vmem:[%s719 + $0xa9] sm:$0xff]
      %v767 = vld [vmem:[%s719 + $0xb1] sm:$0xff]
      %v768 = vld [vmem:[%s719 + $0xc1] sm:$0xff]
      %v769 = vld [vmem:[%s719 + $0xc9] sm:$0xff]
      %v770 = vld [vmem:[%s719 + $0xd9] sm:$0xff]
      %v771 = vld [vmem:[%s719 + $0xe1] sm:$0xff]
      %v772 = vld [vmem:[%s719 + $0xf1] sm:$0xff]
      %v773 = vld [vmem:[%s719 + $0xf9] sm:$0xff]
      %v774 = vld [vmem:[%s719 + $0x109] sm:$0xff]
      %v775 = vld [vmem:[%s719 + $0x111] sm:$0xff]
      %v776 = vld [vmem:[%s719 + $0x121] sm:$0xff]
      %v777 = vld [vmem:[%s719 + $0x129] sm:$0xff]
      %v778 = vld [vmem:[%s719 + $0x139] sm:$0xff]
      %v779 = vld [vmem:[%s719 + $0x141] sm:$0xff]
      %v780 = vld [vmem:[%s719 + $0x151] sm:$0xff]
      %v781 = vld [vmem:[%s719 + $0x159] sm:$0xff]
      %v782 = vld [vmem:[%s719 + $0x169] sm:$0xff]
      %v783 = vld [vmem:[%s719 + $0x171] sm:$0xff]
      %v784 = vld [vmem:[%s719 + $0x2] sm:$0xff]
      %v785 = vld [vmem:[%s719 + $0xa] sm:$0xff]
      %v786 = vld [vmem:[%s719 + $0x1a] sm:$0xff]
      %v787 = vld [vmem:[%s719 + $0x22] sm:$0xff]
      %v788 = vld [vmem:[%s719 + $0x32] sm:$0xff]
      %v789 = vld [vmem:[%s719 + $0x3a] sm:$0xff]
      %v790 = vld [vmem:[%s719 + $0x4a] sm:$0xff]
      %v791 = vld [vmem:[%s719 + $0x52] sm:$0xff]
      %v792 = vld [vmem:[%s719 + $0x62] sm:$0xff]
      %v793 = vld [vmem:[%s719 + $0x6a] sm:$0xff]
      %v794 = vld [vmem:[%s719 + $0x7a] sm:$0xff]
      %v795 = vld [vmem:[%s719 + $0x82] sm:$0xff]
      %v796 = vld [vmem:[%s719 + $0x92] sm:$0xff]
      %v797 = vld [vmem:[%s719 + $0x9a] sm:$0xff]
      %v798 = vld [vmem:[%s719 + $0xaa] sm:$0xff]
      %v799 = vld [vmem:[%s719 + $0xb2] sm:$0xff]
      %v800 = vld [vmem:[%s719 + $0xc2] sm:$0xff]
      %v801 = vld [vmem:[%s719 + $0xca] sm:$0xff]
      %v802 = vld [vmem:[%s719 + $0xda] sm:$0xff]
      %v803 = vld [vmem:[%s719 + $0xe2] sm:$0xff]
      %v804 = vld [vmem:[%s719 + $0xf2] sm:$0xff]
      %v805 = vld [vmem:[%s719 + $0xfa] sm:$0xff]
      %v806 = vld [vmem:[%s719 + $0x10a] sm:$0xff]
      %v807 = vld [vmem:[%s719 + $0x112] sm:$0xff]
      %v808 = vld [vmem:[%s719 + $0x122] sm:$0xff]
      %v809 = vld [vmem:[%s719 + $0x12a] sm:$0xff]
      %v810 = vld [vmem:[%s719 + $0x13a] sm:$0xff]
      %v811 = vld [vmem:[%s719 + $0x142] sm:$0xff]
      %v812 = vld [vmem:[%s719 + $0x152] sm:$0xff]
      %v813 = vld [vmem:[%s719 + $0x15a] sm:$0xff]
      %v814 = vld [vmem:[%s719 + $0x16a] sm:$0xff]
      %v815 = vld [vmem:[%s719 + $0x172] sm:$0xff]
      %848 = vrot.lane.b32.xlu0 %v559, 8
      %v849 = vpop.permute.xlu0 %848
      %850 = vrot.lane.b32.xlu0 %v560, 8
      %v851 = vpop.permute.xlu0 %850
      %852 = vrot.lane.b32.xlu0 %v561, 8
      %v853 = vpop.permute.xlu0 %852
      %854 = vrot.lane.b32.xlu0 %v562, 8
      %v855 = vpop.permute.xlu0 %854
      %856 = vrot.lane.b32.xlu0 %v563, 8
      %v857 = vpop.permute.xlu0 %856
      %858 = vrot.lane.b32.xlu0 %v564, 8
      %v859 = vpop.permute.xlu0 %858
      %860 = vrot.lane.b32.xlu0 %v565, 8
      %v861 = vpop.permute.xlu0 %860
      %862 = vrot.lane.b32.xlu0 %v566, 8
      %v863 = vpop.permute.xlu0 %862
      %864 = vrot.lane.b32.xlu0 %v567, 8
      %v865 = vpop.permute.xlu0 %864
      %866 = vrot.lane.b32.xlu0 %v568, 8
      %v867 = vpop.permute.xlu0 %866
      %868 = vrot.lane.b32.xlu0 %v569, 8
      %v869 = vpop.permute.xlu0 %868
      %870 = vrot.lane.b32.xlu0 %v570, 8
      %v871 = vpop.permute.xlu0 %870
      %872 = vrot.lane.b32.xlu0 %v571, 8
      %v873 = vpop.permute.xlu0 %872
      %874 = vrot.lane.b32.xlu0 %v572, 8
      %v875 = vpop.permute.xlu0 %874
      %876 = vrot.lane.b32.xlu0 %v573, 8
      %v877 = vpop.permute.xlu0 %876
      %878 = vrot.lane.b32.xlu0 %v574, 8
      %v879 = vpop.permute.xlu0 %878
      %880 = vrot.lane.b32.xlu0 %v575, 8
      %v881 = vpop.permute.xlu0 %880
      %882 = vrot.lane.b32.xlu0 %v576, 8
      %v883 = vpop.permute.xlu0 %882
      %884 = vrot.lane.b32.xlu0 %v577, 8
      %v885 = vpop.permute.xlu0 %884
      %886 = vrot.lane.b32.xlu0 %v578, 8
      %v887 = vpop.permute.xlu0 %886
      %888 = vrot.lane.b32.xlu0 %v579, 8
      %v889 = vpop.permute.xlu0 %888
      %890 = vrot.lane.b32.xlu0 %v580, 8
      %v891 = vpop.permute.xlu0 %890
      %892 = vrot.lane.b32.xlu0 %v581, 8
      %v893 = vpop.permute.xlu0 %892
      %894 = vrot.lane.b32.xlu0 %v582, 8
      %v895 = vpop.permute.xlu0 %894
      %896 = vrot.lane.b32.xlu0 %v583, 8
      %v897 = vpop.permute.xlu0 %896
      %898 = vrot.lane.b32.xlu0 %v584, 8
      %v899 = vpop.permute.xlu0 %898
      %900 = vrot.lane.b32.xlu0 %v585, 8
      %v901 = vpop.permute.xlu0 %900
      %902 = vrot.lane.b32.xlu0 %v586, 8
      %v903 = vpop.permute.xlu0 %902
      %904 = vrot.lane.b32.xlu0 %v587, 8
      %v905 = vpop.permute.xlu0 %904
      %906 = vrot.lane.b32.xlu0 %v588, 8
      %v907 = vpop.permute.xlu0 %906
      %908 = vrot.lane.b32.xlu0 %v589, 8
      %v909 = vpop.permute.xlu0 %908
      %910 = vrot.lane.b32.xlu0 %v590, 8
      %v911 = vpop.permute.xlu0 %910
      %976 = vrot.lane.b32.xlu0 %v591, 16
      %v977 = vpop.permute.xlu0 %976
      %978 = vrot.lane.b32.xlu0 %v592, 16
      %v979 = vpop.permute.xlu0 %978
      %980 = vrot.lane.b32.xlu0 %v593, 16
      %v981 = vpop.permute.xlu0 %980
      %982 = vrot.lane.b32.xlu0 %v594, 16
      %v983 = vpop.permute.xlu0 %982
      %984 = vrot.lane.b32.xlu0 %v595, 16
      %v985 = vpop.permute.xlu0 %984
      %986 = vrot.lane.b32.xlu0 %v596, 16
      %v987 = vpop.permute.xlu0 %986
      %988 = vrot.lane.b32.xlu0 %v597, 16
      %v989 = vpop.permute.xlu0 %988
      %990 = vrot.lane.b32.xlu0 %v598, 16
      %v991 = vpop.permute.xlu0 %990
      %992 = vrot.lane.b32.xlu0 %v599, 16
      %v993 = vpop.permute.xlu0 %992
      %994 = vrot.lane.b32.xlu0 %v600, 16
      %v995 = vpop.permute.xlu0 %994
      %996 = vrot.lane.b32.xlu0 %v601, 16
      %v997 = vpop.permute.xlu0 %996
      %998 = vrot.lane.b32.xlu0 %v602, 16
      %v999 = vpop.permute.xlu0 %998
      %1000 = vrot.lane.b32.xlu0 %v603, 16
      %v1001 = vpop.permute.xlu0 %1000
      %1002 = vrot.lane.b32.xlu0 %v604, 16
      %v1003 = vpop.permute.xlu0 %1002
      %1004 = vrot.lane.b32.xlu0 %v605, 16
      %v1005 = vpop.permute.xlu0 %1004
      %1006 = vrot.lane.b32.xlu0 %v606, 16
      %v1007 = vpop.permute.xlu0 %1006
      %1008 = vrot.lane.b32.xlu0 %v607, 16
      %v1009 = vpop.permute.xlu0 %1008
      %1010 = vrot.lane.b32.xlu0 %v608, 16
      %v1011 = vpop.permute.xlu0 %1010
      %1012 = vrot.lane.b32.xlu0 %v609, 16
      %v1013 = vpop.permute.xlu0 %1012
      %1014 = vrot.lane.b32.xlu0 %v610, 16
      %v1015 = vpop.permute.xlu0 %1014
      %1016 = vrot.lane.b32.xlu0 %v611, 16
      %v1017 = vpop.permute.xlu0 %1016
      %1018 = vrot.lane.b32.xlu0 %v612, 16
      %v1019 = vpop.permute.xlu0 %1018
      %1020 = vrot.lane.b32.xlu0 %v613, 16
      %v1021 = vpop.permute.xlu0 %1020
      %1022 = vrot.lane.b32.xlu0 %v614, 16
      %v1023 = vpop.permute.xlu0 %1022
      %1024 = vrot.lane.b32.xlu0 %v615, 16
      %v1025 = vpop.permute.xlu0 %1024
      %1026 = vrot.lane.b32.xlu0 %v616, 16
      %v1027 = vpop.permute.xlu0 %1026
      %1028 = vrot.lane.b32.xlu0 %v617, 16
      %v1029 = vpop.permute.xlu0 %1028
      %1030 = vrot.lane.b32.xlu0 %v618, 16
      %v1031 = vpop.permute.xlu0 %1030
      %1032 = vrot.lane.b32.xlu0 %v619, 16
      %v1033 = vpop.permute.xlu0 %1032
      %1034 = vrot.lane.b32.xlu0 %v620, 16
      %v1035 = vpop.permute.xlu0 %1034
      %1036 = vrot.lane.b32.xlu0 %v621, 16
      %v1037 = vpop.permute.xlu0 %1036
      %1038 = vrot.lane.b32.xlu0 %v622, 16
      %v1039 = vpop.permute.xlu0 %1038
      %1104 = vrot.lane.b32.xlu0 %v623, 24
      %v1105 = vpop.permute.xlu0 %1104
      %1106 = vrot.lane.b32.xlu0 %v624, 24
      %v1107 = vpop.permute.xlu0 %1106
      %1108 = vrot.lane.b32.xlu0 %v625, 24
      %v1109 = vpop.permute.xlu0 %1108
      %1110 = vrot.lane.b32.xlu0 %v626, 24
      %v1111 = vpop.permute.xlu0 %1110
      %1112 = vrot.lane.b32.xlu0 %v627, 24
      %v1113 = vpop.permute.xlu0 %1112
      %1114 = vrot.lane.b32.xlu0 %v628, 24
      %v1115 = vpop.permute.xlu0 %1114
      %1116 = vrot.lane.b32.xlu0 %v629, 24
      %v1117 = vpop.permute.xlu0 %1116
      %1118 = vrot.lane.b32.xlu0 %v630, 24
      %v1119 = vpop.permute.xlu0 %1118
      %1120 = vrot.lane.b32.xlu0 %v631, 24
      %v1121 = vpop.permute.xlu0 %1120
      %1122 = vrot.lane.b32.xlu0 %v632, 24
      %v1123 = vpop.permute.xlu0 %1122
      %1124 = vrot.lane.b32.xlu0 %v633, 24
      %v1125 = vpop.permute.xlu0 %1124
      %1126 = vrot.lane.b32.xlu0 %v634, 24
      %v1127 = vpop.permute.xlu0 %1126
      %1128 = vrot.lane.b32.xlu0 %v635, 24
      %v1129 = vpop.permute.xlu0 %1128
      %1130 = vrot.lane.b32.xlu0 %v636, 24
      %v1131 = vpop.permute.xlu0 %1130
      %1132 = vrot.lane.b32.xlu0 %v637, 24
      %v1133 = vpop.permute.xlu0 %1132
      %1134 = vrot.lane.b32.xlu0 %v638, 24
      %v1135 = vpop.permute.xlu0 %1134
      %1136 = vrot.lane.b32.xlu0 %v639, 24
      %v1137 = vpop.permute.xlu0 %1136
      %1138 = vrot.lane.b32.xlu0 %v640, 24
      %v1139 = vpop.permute.xlu0 %1138
      %1140 = vrot.lane.b32.xlu0 %v641, 24
      %v1141 = vpop.permute.xlu0 %1140
      %1142 = vrot.lane.b32.xlu0 %v642, 24
      %v1143 = vpop.permute.xlu0 %1142
      %1144 = vrot.lane.b32.xlu0 %v643, 24
      %v1145 = vpop.permute.xlu0 %1144
      %1146 = vrot.lane.b32.xlu0 %v644, 24
      %v1147 = vpop.permute.xlu0 %1146
      %1148 = vrot.lane.b32.xlu0 %v645, 24
      %v1149 = vpop.permute.xlu0 %1148
      %1150 = vrot.lane.b32.xlu0 %v646, 24
      %v1151 = vpop.permute.xlu0 %1150
      %1152 = vrot.lane.b32.xlu0 %v647, 24
      %v1153 = vpop.permute.xlu0 %1152
      %1154 = vrot.lane.b32.xlu0 %v648, 24
      %v1155 = vpop.permute.xlu0 %1154
      %1156 = vrot.lane.b32.xlu0 %v649, 24
      %v1157 = vpop.permute.xlu0 %1156
      %1158 = vrot.lane.b32.xlu0 %v650, 24
      %v1159 = vpop.permute.xlu0 %1158
      %1160 = vrot.lane.b32.xlu0 %v651, 24
      %v1161 = vpop.permute.xlu0 %1160
      %1162 = vrot.lane.b32.xlu0 %v652, 24
      %v1163 = vpop.permute.xlu0 %1162
      %1164 = vrot.lane.b32.xlu0 %v653, 24
      %v1165 = vpop.permute.xlu0 %1164
      %1166 = vrot.lane.b32.xlu0 %v654, 24
      %v1167 = vpop.permute.xlu0 %1166
      %1232 = vrot.lane.b32.xlu0 %v655, 32
      %v1233 = vpop.permute.xlu0 %1232
      %1234 = vrot.lane.b32.xlu0 %v656, 32
      %v1235 = vpop.permute.xlu0 %1234
      %1236 = vrot.lane.b32.xlu0 %v657, 32
      %v1237 = vpop.permute.xlu0 %1236
      %1238 = vrot.lane.b32.xlu0 %v658, 32
      %v1239 = vpop.permute.xlu0 %1238
      %1240 = vrot.lane.b32.xlu0 %v659, 32
      %v1241 = vpop.permute.xlu0 %1240
      %1242 = vrot.lane.b32.xlu0 %v660, 32
      %v1243 = vpop.permute.xlu0 %1242
      %1244 = vrot.lane.b32.xlu0 %v661, 32
      %v1245 = vpop.permute.xlu0 %1244
      %1246 = vrot.lane.b32.xlu0 %v662, 32
      %v1247 = vpop.permute.xlu0 %1246
      %1248 = vrot.lane.b32.xlu0 %v663, 32
      %v1249 = vpop.permute.xlu0 %1248
      %1250 = vrot.lane.b32.xlu0 %v664, 32
      %v1251 = vpop.permute.xlu0 %1250
      %1252 = vrot.lane.b32.xlu0 %v665, 32
      %v1253 = vpop.permute.xlu0 %1252
      %1254 = vrot.lane.b32.xlu0 %v666, 32
      %v1255 = vpop.permute.xlu0 %1254
      %1256 = vrot.lane.b32.xlu0 %v667, 32
      %v1257 = vpop.permute.xlu0 %1256
      %1258 = vrot.lane.b32.xlu0 %v668, 32
      %v1259 = vpop.permute.xlu0 %1258
      %1260 = vrot.lane.b32.xlu0 %v669, 32
      %v1261 = vpop.permute.xlu0 %1260
      %1262 = vrot.lane.b32.xlu0 %v670, 32
      %v1263 = vpop.permute.xlu0 %1262
      %1264 = vrot.lane.b32.xlu0 %v671, 32
      %v1265 = vpop.permute.xlu0 %1264
      %1266 = vrot.lane.b32.xlu0 %v672, 32
      %v1267 = vpop.permute.xlu0 %1266
      %1268 = vrot.lane.b32.xlu0 %v673, 32
      %v1269 = vpop.permute.xlu0 %1268
      %1270 = vrot.lane.b32.xlu0 %v674, 32
      %v1271 = vpop.permute.xlu0 %1270
      %1272 = vrot.lane.b32.xlu0 %v675, 32
      %v1273 = vpop.permute.xlu0 %1272
      %1274 = vrot.lane.b32.xlu0 %v676, 32
      %v1275 = vpop.permute.xlu0 %1274
      %1276 = vrot.lane.b32.xlu0 %v677, 32
      %v1277 = vpop.permute.xlu0 %1276
      %1278 = vrot.lane.b32.xlu0 %v678, 32
      %v1279 = vpop.permute.xlu0 %1278
      %1280 = vrot.lane.b32.xlu0 %v679, 32
      %v1281 = vpop.permute.xlu0 %1280
      %1282 = vrot.lane.b32.xlu0 %v680, 32
      %v1283 = vpop.permute.xlu0 %1282
      %1284 = vrot.lane.b32.xlu0 %v681, 32
      %v1285 = vpop.permute.xlu0 %1284
      %1286 = vrot.lane.b32.xlu0 %v682, 32
      %v1287 = vpop.permute.xlu0 %1286
      %1288 = vrot.lane.b32.xlu0 %v683, 32
      %v1289 = vpop.permute.xlu0 %1288
      %1290 = vrot.lane.b32.xlu0 %v684, 32
      %v1291 = vpop.permute.xlu0 %1290
      %1292 = vrot.lane.b32.xlu0 %v685, 32
      %v1293 = vpop.permute.xlu0 %1292
      %1294 = vrot.lane.b32.xlu0 %v686, 32
      %v1295 = vpop.permute.xlu0 %1294
      %1360 = vrot.lane.b32.xlu0 %v687, 40
      %v1361 = vpop.permute.xlu0 %1360
      %1362 = vrot.lane.b32.xlu0 %v688, 40
      %v1363 = vpop.permute.xlu0 %1362
      %1364 = vrot.lane.b32.xlu0 %v689, 40
      %v1365 = vpop.permute.xlu0 %1364
      %1366 = vrot.lane.b32.xlu0 %v690, 40
      %v1367 = vpop.permute.xlu0 %1366
      %1368 = vrot.lane.b32.xlu0 %v691, 40
      %v1369 = vpop.permute.xlu0 %1368
      %1370 = vrot.lane.b32.xlu0 %v692, 40
      %v1371 = vpop.permute.xlu0 %1370
      %1372 = vrot.lane.b32.xlu0 %v693, 40
      %v1373 = vpop.permute.xlu0 %1372
      %1374 = vrot.lane.b32.xlu0 %v694, 40
      %v1375 = vpop.permute.xlu0 %1374
      %1376 = vrot.lane.b32.xlu0 %v695, 40
      %v1377 = vpop.permute.xlu0 %1376
      %1378 = vrot.lane.b32.xlu0 %v696, 40
      %v1379 = vpop.permute.xlu0 %1378
      %1380 = vrot.lane.b32.xlu0 %v697, 40
      %v1381 = vpop.permute.xlu0 %1380
      %1382 = vrot.lane.b32.xlu0 %v698, 40
      %v1383 = vpop.permute.xlu0 %1382
      %1384 = vrot.lane.b32.xlu0 %v699, 40
      %v1385 = vpop.permute.xlu0 %1384
      %1386 = vrot.lane.b32.xlu0 %v700, 40
      %v1387 = vpop.permute.xlu0 %1386
      %1388 = vrot.lane.b32.xlu0 %v701, 40
      %v1389 = vpop.permute.xlu0 %1388
      %1390 = vrot.lane.b32.xlu0 %v702, 40
      %v1391 = vpop.permute.xlu0 %1390
      %1392 = vrot.lane.b32.xlu0 %v703, 40
      %v1393 = vpop.permute.xlu0 %1392
      %1394 = vrot.lane.b32.xlu0 %v704, 40
      %v1395 = vpop.permute.xlu0 %1394
      %1396 = vrot.lane.b32.xlu0 %v705, 40
      %v1397 = vpop.permute.xlu0 %1396
      %1398 = vrot.lane.b32.xlu0 %v706, 40
      %v1399 = vpop.permute.xlu0 %1398
      %1400 = vrot.lane.b32.xlu0 %v707, 40
      %v1401 = vpop.permute.xlu0 %1400
      %1402 = vrot.lane.b32.xlu0 %v708, 40
      %v1403 = vpop.permute.xlu0 %1402
      %1404 = vrot.lane.b32.xlu0 %v709, 40
      %v1405 = vpop.permute.xlu0 %1404
      %1406 = vrot.lane.b32.xlu0 %v710, 40
      %v1407 = vpop.permute.xlu0 %1406
      %1408 = vrot.lane.b32.xlu0 %v711, 40
      %v1409 = vpop.permute.xlu0 %1408
      %1410 = vrot.lane.b32.xlu0 %v712, 40
      %v1411 = vpop.permute.xlu0 %1410
      %1412 = vrot.lane.b32.xlu0 %v713, 40
      %v1413 = vpop.permute.xlu0 %1412
      %1414 = vrot.lane.b32.xlu0 %v714, 40
      %v1415 = vpop.permute.xlu0 %1414
      %1416 = vrot.lane.b32.xlu0 %v715, 40
      %v1417 = vpop.permute.xlu0 %1416
      %1418 = vrot.lane.b32.xlu0 %v716, 40
      %v1419 = vpop.permute.xlu0 %1418
      %1420 = vrot.lane.b32.xlu0 %v717, 40
      %v1421 = vpop.permute.xlu0 %1420
      %1422 = vrot.lane.b32.xlu0 %v718, 40
      %v1423 = vpop.permute.xlu0 %1422
      %1488 = vrot.lane.b32.xlu0 %v720, 48
      %v1489 = vpop.permute.xlu0 %1488
      %1490 = vrot.lane.b32.xlu0 %v721, 48
      %v1491 = vpop.permute.xlu0 %1490
      %1492 = vrot.lane.b32.xlu0 %v722, 48
      %v1493 = vpop.permute.xlu0 %1492
      %1494 = vrot.lane.b32.xlu0 %v723, 48
      %v1495 = vpop.permute.xlu0 %1494
      %1496 = vrot.lane.b32.xlu0 %v724, 48
      %v1497 = vpop.permute.xlu0 %1496
      %1498 = vrot.lane.b32.xlu0 %v725, 48
      %v1499 = vpop.permute.xlu0 %1498
      %1500 = vrot.lane.b32.xlu0 %v726, 48
      %v1501 = vpop.permute.xlu0 %1500
      %1502 = vrot.lane.b32.xlu0 %v727, 48
      %v1503 = vpop.permute.xlu0 %1502
      %1504 = vrot.lane.b32.xlu0 %v728, 48
      %v1505 = vpop.permute.xlu0 %1504
      %1506 = vrot.lane.b32.xlu0 %v729, 48
      %v1507 = vpop.permute.xlu0 %1506
      %1508 = vrot.lane.b32.xlu0 %v730, 48
      %v1509 = vpop.permute.xlu0 %1508
      %1510 = vrot.lane.b32.xlu0 %v731, 48
      %v1511 = vpop.permute.xlu0 %1510
      %1512 = vrot.lane.b32.xlu0 %v732, 48
      %v1513 = vpop.permute.xlu0 %1512
      %1514 = vrot.lane.b32.xlu0 %v733, 48
      %v1515 = vpop.permute.xlu0 %1514
      %1516 = vrot.lane.b32.xlu0 %v734, 48
      %v1517 = vpop.permute.xlu0 %1516
      %1518 = vrot.lane.b32.xlu0 %v735, 48
      %v1519 = vpop.permute.xlu0 %1518
      %1520 = vrot.lane.b32.xlu0 %v736, 48
      %v1521 = vpop.permute.xlu0 %1520
      %1522 = vrot.lane.b32.xlu0 %v737, 48
      %v1523 = vpop.permute.xlu0 %1522
      %1524 = vrot.lane.b32.xlu0 %v738, 48
      %v1525 = vpop.permute.xlu0 %1524
      %1526 = vrot.lane.b32.xlu0 %v739, 48
      %v1527 = vpop.permute.xlu0 %1526
      %1528 = vrot.lane.b32.xlu0 %v740, 48
      %v1529 = vpop.permute.xlu0 %1528
      %1530 = vrot.lane.b32.xlu0 %v741, 48
      %v1531 = vpop.permute.xlu0 %1530
      %1532 = vrot.lane.b32.xlu0 %v742, 48
      %v1533 = vpop.permute.xlu0 %1532
      %1534 = vrot.lane.b32.xlu0 %v743, 48
      %v1535 = vpop.permute.xlu0 %1534
      %1536 = vrot.lane.b32.xlu0 %v744, 48
      %v1537 = vpop.permute.xlu0 %1536
      %1538 = vrot.lane.b32.xlu0 %v745, 48
      %v1539 = vpop.permute.xlu0 %1538
      %1540 = vrot.lane.b32.xlu0 %v746, 48
      %v1541 = vpop.permute.xlu0 %1540
      %1542 = vrot.lane.b32.xlu0 %v747, 48
      %v1543 = vpop.permute.xlu0 %1542
      %1544 = vrot.lane.b32.xlu0 %v748, 48
      %v1545 = vpop.permute.xlu0 %1544
      %1546 = vrot.lane.b32.xlu0 %v749, 48
      %v1547 = vpop.permute.xlu0 %1546
      %1548 = vrot.lane.b32.xlu0 %v750, 48
      %v1549 = vpop.permute.xlu0 %1548
      %1550 = vrot.lane.b32.xlu0 %v751, 48
      %v1551 = vpop.permute.xlu0 %1550
      %1616 = vrot.lane.b32.xlu0 %v752, 56
      %v1617 = vpop.permute.xlu0 %1616
      %1618 = vrot.lane.b32.xlu0 %v753, 56
      %v1619 = vpop.permute.xlu0 %1618
      %1620 = vrot.lane.b32.xlu0 %v754, 56
      %v1621 = vpop.permute.xlu0 %1620
      %1622 = vrot.lane.b32.xlu0 %v755, 56
      %v1623 = vpop.permute.xlu0 %1622
      %1624 = vrot.lane.b32.xlu0 %v756, 56
      %v1625 = vpop.permute.xlu0 %1624
      %1626 = vrot.lane.b32.xlu0 %v757, 56
      %v1627 = vpop.permute.xlu0 %1626
      %1628 = vrot.lane.b32.xlu0 %v758, 56
      %v1629 = vpop.permute.xlu0 %1628
      %1630 = vrot.lane.b32.xlu0 %v759, 56
      %v1631 = vpop.permute.xlu0 %1630
      %1632 = vrot.lane.b32.xlu0 %v760, 56
      %v1633 = vpop.permute.xlu0 %1632
      %1634 = vrot.lane.b32.xlu0 %v761, 56
      %v1635 = vpop.permute.xlu0 %1634
      %1636 = vrot.lane.b32.xlu0 %v762, 56
      %v1637 = vpop.permute.xlu0 %1636
      %1638 = vrot.lane.b32.xlu0 %v763, 56
      %v1639 = vpop.permute.xlu0 %1638
      %1640 = vrot.lane.b32.xlu0 %v764, 56
      %v1641 = vpop.permute.xlu0 %1640
      %1642 = vrot.lane.b32.xlu0 %v765, 56
      %v1643 = vpop.permute.xlu0 %1642
      %1644 = vrot.lane.b32.xlu0 %v766, 56
      %v1645 = vpop.permute.xlu0 %1644
      %1646 = vrot.lane.b32.xlu0 %v767, 56
      %v1647 = vpop.permute.xlu0 %1646
      %1648 = vrot.lane.b32.xlu0 %v768, 56
      %v1649 = vpop.permute.xlu0 %1648
      %1650 = vrot.lane.b32.xlu0 %v769, 56
      %v1651 = vpop.permute.xlu0 %1650
      %1652 = vrot.lane.b32.xlu0 %v770, 56
      %v1653 = vpop.permute.xlu0 %1652
      %1654 = vrot.lane.b32.xlu0 %v771, 56
      %v1655 = vpop.permute.xlu0 %1654
      %1656 = vrot.lane.b32.xlu0 %v772, 56
      %v1657 = vpop.permute.xlu0 %1656
      %1658 = vrot.lane.b32.xlu0 %v773, 56
      %v1659 = vpop.permute.xlu0 %1658
      %1660 = vrot.lane.b32.xlu0 %v774, 56
      %v1661 = vpop.permute.xlu0 %1660
      %1662 = vrot.lane.b32.xlu0 %v775, 56
      %v1663 = vpop.permute.xlu0 %1662
      %1664 = vrot.lane.b32.xlu0 %v776, 56
      %v1665 = vpop.permute.xlu0 %1664
      %1666 = vrot.lane.b32.xlu0 %v777, 56
      %v1667 = vpop.permute.xlu0 %1666
      %1668 = vrot.lane.b32.xlu0 %v778, 56
      %v1669 = vpop.permute.xlu0 %1668
      %1670 = vrot.lane.b32.xlu0 %v779, 56
      %v1671 = vpop.permute.xlu0 %1670
      %1672 = vrot.lane.b32.xlu0 %v780, 56
      %v1673 = vpop.permute.xlu0 %1672
      %1674 = vrot.lane.b32.xlu0 %v781, 56
      %v1675 = vpop.permute.xlu0 %1674
      %1676 = vrot.lane.b32.xlu0 %v782, 56
      %v1677 = vpop.permute.xlu0 %1676
      %1678 = vrot.lane.b32.xlu0 %v783, 56
      %v1679 = vpop.permute.xlu0 %1678
      %1744 = vrot.lane.b32.xlu0 %v784, 64
      %v1745 = vpop.permute.xlu0 %1744
      %1746 = vrot.lane.b32.xlu0 %v785, 64
      %v1747 = vpop.permute.xlu0 %1746
      %1748 = vrot.lane.b32.xlu0 %v786, 64
      %v1749 = vpop.permute.xlu0 %1748
      %1750 = vrot.lane.b32.xlu0 %v787, 64
      %v1751 = vpop.permute.xlu0 %1750
      %1752 = vrot.lane.b32.xlu0 %v788, 64
      %v1753 = vpop.permute.xlu0 %1752
      %1754 = vrot.lane.b32.xlu0 %v789, 64
      %v1755 = vpop.permute.xlu0 %1754
      %1756 = vrot.lane.b32.xlu0 %v790, 64
      %v1757 = vpop.permute.xlu0 %1756
      %1758 = vrot.lane.b32.xlu0 %v791, 64
      %v1759 = vpop.permute.xlu0 %1758
      %1760 = vrot.lane.b32.xlu0 %v792, 64
      %v1761 = vpop.permute.xlu0 %1760
      %1762 = vrot.lane.b32.xlu0 %v793, 64
      %v1763 = vpop.permute.xlu0 %1762
      %1764 = vrot.lane.b32.xlu0 %v794, 64
      %v1765 = vpop.permute.xlu0 %1764
      %1766 = vrot.lane.b32.xlu0 %v795, 64
      %v1767 = vpop.permute.xlu0 %1766
      %1768 = vrot.lane.b32.xlu0 %v796, 64
      %v1769 = vpop.permute.xlu0 %1768
      %1770 = vrot.lane.b32.xlu0 %v797, 64
      %v1771 = vpop.permute.xlu0 %1770
      %1772 = vrot.lane.b32.xlu0 %v798, 64
      %v1773 = vpop.permute.xlu0 %1772
      %1774 = vrot.lane.b32.xlu0 %v799, 64
      %v1775 = vpop.permute.xlu0 %1774
      %1776 = vrot.lane.b32.xlu0 %v800, 64
      %v1777 = vpop.permute.xlu0 %1776
      %1778 = vrot.lane.b32.xlu0 %v801, 64
      %v1779 = vpop.permute.xlu0 %1778
      %1780 = vrot.lane.b32.xlu0 %v802, 64
      %v1781 = vpop.permute.xlu0 %1780
      %1782 = vrot.lane.b32.xlu0 %v803, 64
      %v1783 = vpop.permute.xlu0 %1782
      %1784 = vrot.lane.b32.xlu0 %v804, 64
      %v1785 = vpop.permute.xlu0 %1784
      %1786 = vrot.lane.b32.xlu0 %v805, 64
      %v1787 = vpop.permute.xlu0 %1786
      %1788 = vrot.lane.b32.xlu0 %v806, 64
      %v1789 = vpop.permute.xlu0 %1788
      %1790 = vrot.lane.b32.xlu0 %v807, 64
      %v1791 = vpop.permute.xlu0 %1790
      %1792 = vrot.lane.b32.xlu0 %v808, 64
      %v1793 = vpop.permute.xlu0 %1792
      %1794 = vrot.lane.b32.xlu0 %v809, 64
      %v1795 = vpop.permute.xlu0 %1794
      %1796 = vrot.lane.b32.xlu0 %v810, 64
      %v1797 = vpop.permute.xlu0 %1796
      %1798 = vrot.lane.b32.xlu0 %v811, 64
      %v1799 = vpop.permute.xlu0 %1798
      %1800 = vrot.lane.b32.xlu0 %v812, 64
      %v1801 = vpop.permute.xlu0 %1800
      %1802 = vrot.lane.b32.xlu0 %v813, 64
      %v1803 = vpop.permute.xlu0 %1802
      %1804 = vrot.lane.b32.xlu0 %v814, 64
      %v1805 = vpop.permute.xlu0 %1804
      %1806 = vrot.lane.b32.xlu0 %v815, 64
      %v1807 = vpop.permute.xlu0 %1806
      %v1840 = vsel %vm438, %v527, %v849
      %v1841 = vsel %vm438, %v528, %v851
      %v1842 = vsel %vm438, %v529, %v853
      %v1843 = vsel %vm438, %v530, %v855
      %v1844 = vsel %vm438, %v531, %v857
      %v1845 = vsel %vm438, %v532, %v859
      %v1846 = vsel %vm438, %v533, %v861
      %v1847 = vsel %vm438, %v534, %v863
      %v1848 = vsel %vm438, %v535, %v865
      %v1849 = vsel %vm438, %v536, %v867
      %v1850 = vsel %vm438, %v537, %v869
      %v1851 = vsel %vm438, %v538, %v871
      %v1852 = vsel %vm438, %v539, %v873
      %v1853 = vsel %vm438, %v540, %v875
      %v1854 = vsel %vm438, %v541, %v877
      %v1855 = vsel %vm438, %v542, %v879
      %v1856 = vsel %vm438, %v543, %v881
      %v1857 = vsel %vm438, %v544, %v883
      %v1858 = vsel %vm438, %v545, %v885
      %v1859 = vsel %vm438, %v546, %v887
      %v1860 = vsel %vm438, %v547, %v889
      %v1861 = vsel %vm438, %v548, %v891
      %v1862 = vsel %vm438, %v549, %v893
      %v1863 = vsel %vm438, %v550, %v895
      %v1864 = vsel %vm438, %v551, %v897
      %v1865 = vsel %vm438, %v552, %v899
      %v1866 = vsel %vm438, %v553, %v901
      %v1867 = vsel %vm438, %v554, %v903
      %v1868 = vsel %vm438, %v555, %v905
      %v1869 = vsel %vm438, %v556, %v907
      %v1870 = vsel %vm438, %v557, %v909
      %v1871 = vsel %vm438, %v558, %v911
      %vm1872 = vcmask 130048
      %v1873 = vsel %vm1872, %v1840, %v977
      %v1874 = vsel %vm1872, %v1841, %v979
      %v1875 = vsel %vm1872, %v1842, %v981
      %v1876 = vsel %vm1872, %v1843, %v983
      %v1877 = vsel %vm1872, %v1844, %v985
      %v1878 = vsel %vm1872, %v1845, %v987
      %v1879 = vsel %vm1872, %v1846, %v989
      %v1880 = vsel %vm1872, %v1847, %v991
      %v1881 = vsel %vm1872, %v1848, %v993
      %v1882 = vsel %vm1872, %v1849, %v995
      %v1883 = vsel %vm1872, %v1850, %v997
      %v1884 = vsel %vm1872, %v1851, %v999
      %v1885 = vsel %vm1872, %v1852, %v1001
      %v1886 = vsel %vm1872, %v1853, %v1003
      %v1887 = vsel %vm1872, %v1854, %v1005
      %v1888 = vsel %vm1872, %v1855, %v1007
      %v1889 = vsel %vm1872, %v1856, %v1009
      %v1890 = vsel %vm1872, %v1857, %v1011
      %v1891 = vsel %vm1872, %v1858, %v1013
      %v1892 = vsel %vm1872, %v1859, %v1015
      %v1893 = vsel %vm1872, %v1860, %v1017
      %v1894 = vsel %vm1872, %v1861, %v1019
      %v1895 = vsel %vm1872, %v1862, %v1021
      %v1896 = vsel %vm1872, %v1863, %v1023
      %v1897 = vsel %vm1872, %v1864, %v1025
      %v1898 = vsel %vm1872, %v1865, %v1027
      %v1899 = vsel %vm1872, %v1866, %v1029
      %v1900 = vsel %vm1872, %v1867, %v1031
      %v1901 = vsel %vm1872, %v1868, %v1033
      %v1902 = vsel %vm1872, %v1869, %v1035
      %v1903 = vsel %vm1872, %v1870, %v1037
      %v1904 = vsel %vm1872, %v1871, %v1039
      %vm1905 = vcmask 195584
      %v1906 = vsel %vm1905, %v1873, %v1105
      %v1907 = vsel %vm1905, %v1874, %v1107
      %v1908 = vsel %vm1905, %v1875, %v1109
      %v1909 = vsel %vm1905, %v1876, %v1111
      %v1910 = vsel %vm1905, %v1877, %v1113
      %v1911 = vsel %vm1905, %v1878, %v1115
      %v1912 = vsel %vm1905, %v1879, %v1117
      %v1913 = vsel %vm1905, %v1880, %v1119
      %v1914 = vsel %vm1905, %v1881, %v1121
      %v1915 = vsel %vm1905, %v1882, %v1123
      %v1916 = vsel %vm1905, %v1883, %v1125
      %v1917 = vsel %vm1905, %v1884, %v1127
      %v1918 = vsel %vm1905, %v1885, %v1129
      %v1919 = vsel %vm1905, %v1886, %v1131
      %v1920 = vsel %vm1905, %v1887, %v1133
      %v1921 = vsel %vm1905, %v1888, %v1135
      %v1922 = vsel %vm1905, %v1889, %v1137
      %v1923 = vsel %vm1905, %v1890, %v1139
      %v1924 = vsel %vm1905, %v1891, %v1141
      %v1925 = vsel %vm1905, %v1892, %v1143
      %v1926 = vsel %vm1905, %v1893, %v1145
      %v1927 = vsel %vm1905, %v1894, %v1147
      %v1928 = vsel %vm1905, %v1895, %v1149
      %v1929 = vsel %vm1905, %v1896, %v1151
      %v1930 = vsel %vm1905, %v1897, %v1153
      %v1931 = vsel %vm1905, %v1898, %v1155
      %v1932 = vsel %vm1905, %v1899, %v1157
      %v1933 = vsel %vm1905, %v1900, %v1159
      %v1934 = vsel %vm1905, %v1901, %v1161
      %v1935 = vsel %vm1905, %v1902, %v1163
      %v1936 = vsel %vm1905, %v1903, %v1165
      %v1937 = vsel %vm1905, %v1904, %v1167
      %vm1938 = vcmask 261120
      %v1939 = vsel %vm1938, %v1906, %v1233
      %v1940 = vsel %vm1938, %v1907, %v1235
      %v1941 = vsel %vm1938, %v1908, %v1237
      %v1942 = vsel %vm1938, %v1909, %v1239
      %v1943 = vsel %vm1938, %v1910, %v1241
      %v1944 = vsel %vm1938, %v1911, %v1243
      %v1945 = vsel %vm1938, %v1912, %v1245
      %v1946 = vsel %vm1938, %v1913, %v1247
      %v1947 = vsel %vm1938, %v1914, %v1249
      %v1948 = vsel %vm1938, %v1915, %v1251
      %v1949 = vsel %vm1938, %v1916, %v1253
      %v1950 = vsel %vm1938, %v1917, %v1255
      %v1951 = vsel %vm1938, %v1918, %v1257
      %v1952 = vsel %vm1938, %v1919, %v1259
      %v1953 = vsel %vm1938, %v1920, %v1261
      %v1954 = vsel %vm1938, %v1921, %v1263
      %v1955 = vsel %vm1938, %v1922, %v1265
      %v1956 = vsel %vm1938, %v1923, %v1267
      %v1957 = vsel %vm1938, %v1924, %v1269
      %v1958 = vsel %vm1938, %v1925, %v1271
      %v1959 = vsel %vm1938, %v1926, %v1273
      %v1960 = vsel %vm1938, %v1927, %v1275
      %v1961 = vsel %vm1938, %v1928, %v1277
      %v1962 = vsel %vm1938, %v1929, %v1279
      %v1963 = vsel %vm1938, %v1930, %v1281
      %v1964 = vsel %vm1938, %v1931, %v1283
      %v1965 = vsel %vm1938, %v1932, %v1285
      %v1966 = vsel %vm1938, %v1933, %v1287
      %v1967 = vsel %vm1938, %v1934, %v1289
      %v1968 = vsel %vm1938, %v1935, %v1291
      %v1969 = vsel %vm1938, %v1936, %v1293
      %v1970 = vsel %vm1938, %v1937, %v1295
      %vm1971 = vcmask 326656
      %v1972 = vsel %vm1971, %v1939, %v1361
      %v1973 = vsel %vm1971, %v1940, %v1363
      %v1974 = vsel %vm1971, %v1941, %v1365
      %v1975 = vsel %vm1971, %v1942, %v1367
      %v1976 = vsel %vm1971, %v1943, %v1369
      %v1977 = vsel %vm1971, %v1944, %v1371
      %v1978 = vsel %vm1971, %v1945, %v1373
      %v1979 = vsel %vm1971, %v1946, %v1375
      %v1980 = vsel %vm1971, %v1947, %v1377
      %v1981 = vsel %vm1971, %v1948, %v1379
      %v1982 = vsel %vm1971, %v1949, %v1381
      %v1983 = vsel %vm1971, %v1950, %v1383
      %v1984 = vsel %vm1971, %v1951, %v1385
      %v1985 = vsel %vm1971, %v1952, %v1387
      %v1986 = vsel %vm1971, %v1953, %v1389
      %v1987 = vsel %vm1971, %v1954, %v1391
      %v1988 = vsel %vm1971, %v1955, %v1393
      %v1989 = vsel %vm1971, %v1956, %v1395
      %v1990 = vsel %vm1971, %v1957, %v1397
      %v1991 = vsel %vm1971, %v1958, %v1399
      %v1992 = vsel %vm1971, %v1959, %v1401
      %v1993 = vsel %vm1971, %v1960, %v1403
      %v1994 = vsel %vm1971, %v1961, %v1405
      %v1995 = vsel %vm1971, %v1962, %v1407
      %v1996 = vsel %vm1971, %v1963, %v1409
      %v1997 = vsel %vm1971, %v1964, %v1411
      %v1998 = vsel %vm1971, %v1965, %v1413
      %v1999 = vsel %vm1971, %v1966, %v1415
      %v2000 = vsel %vm1971, %v1967, %v1417
      %v2001 = vsel %vm1971, %v1968, %v1419
      %v2002 = vsel %vm1971, %v1969, %v1421
      %v2003 = vsel %vm1971, %v1970, %v1423
      %vm2004 = vcmask 392192
      %v2005 = vsel %vm2004, %v1972, %v1489
      %v2006 = vsel %vm2004, %v1973, %v1491
      %v2007 = vsel %vm2004, %v1974, %v1493
      %v2008 = vsel %vm2004, %v1975, %v1495
      %v2009 = vsel %vm2004, %v1976, %v1497
      %v2010 = vsel %vm2004, %v1977, %v1499
      %v2011 = vsel %vm2004, %v1978, %v1501
      %v2012 = vsel %vm2004, %v1979, %v1503
      %v2013 = vsel %vm2004, %v1980, %v1505
      %v2014 = vsel %vm2004, %v1981, %v1507
      %v2015 = vsel %vm2004, %v1982, %v1509
      %v2016 = vsel %vm2004, %v1983, %v1511
      %v2017 = vsel %vm2004, %v1984, %v1513
      %v2018 = vsel %vm2004, %v1985, %v1515
      %v2019 = vsel %vm2004, %v1986, %v1517
      %v2020 = vsel %vm2004, %v1987, %v1519
      %v2021 = vsel %vm2004, %v1988, %v1521
      %v2022 = vsel %vm2004, %v1989, %v1523
      %v2023 = vsel %vm2004, %v1990, %v1525
      %v2024 = vsel %vm2004, %v1991, %v1527
      %v2025 = vsel %vm2004, %v1992, %v1529
      %v2026 = vsel %vm2004, %v1993, %v1531
      %v2027 = vsel %vm2004, %v1994, %v1533
      %v2028 = vsel %vm2004, %v1995, %v1535
      %v2029 = vsel %vm2004, %v1996, %v1537
      %v2030 = vsel %vm2004, %v1997, %v1539
      %v2031 = vsel %vm2004, %v1998, %v1541
      %v2032 = vsel %vm2004, %v1999, %v1543
      %v2033 = vsel %vm2004, %v2000, %v1545
      %v2034 = vsel %vm2004, %v2001, %v1547
      %v2035 = vsel %vm2004, %v2002, %v1549
      %v2036 = vsel %vm2004, %v2003, %v1551
      %vm2037 = vcmask 457728
      %v2038 = vsel %vm2037, %v2005, %v1617
      %v2039 = vsel %vm2037, %v2006, %v1619
      %v2040 = vsel %vm2037, %v2007, %v1621
      %v2041 = vsel %vm2037, %v2008, %v1623
      %v2042 = vsel %vm2037, %v2009, %v1625
      %v2043 = vsel %vm2037, %v2010, %v1627
      %v2044 = vsel %vm2037, %v2011, %v1629
      %v2045 = vsel %vm2037, %v2012, %v1631
      %v2046 = vsel %vm2037, %v2013, %v1633
      %v2047 = vsel %vm2037, %v2014, %v1635
      %v2048 = vsel %vm2037, %v2015, %v1637
      %v2049 = vsel %vm2037, %v2016, %v1639
      %v2050 = vsel %vm2037, %v2017, %v1641
      %v2051 = vsel %vm2037, %v2018, %v1643
      %v2052 = vsel %vm2037, %v2019, %v1645
      %v2053 = vsel %vm2037, %v2020, %v1647
      %v2054 = vsel %vm2037, %v2021, %v1649
      %v2055 = vsel %vm2037, %v2022, %v1651
      %v2056 = vsel %vm2037, %v2023, %v1653
      %v2057 = vsel %vm2037, %v2024, %v1655
      %v2058 = vsel %vm2037, %v2025, %v1657
      %v2059 = vsel %vm2037, %v2026, %v1659
      %v2060 = vsel %vm2037, %v2027, %v1661
      %v2061 = vsel %vm2037, %v2028, %v1663
      %v2062 = vsel %vm2037, %v2029, %v1665
      %v2063 = vsel %vm2037, %v2030, %v1667
      %v2064 = vsel %vm2037, %v2031, %v1669
      %v2065 = vsel %vm2037, %v2032, %v1671
      %v2066 = vsel %vm2037, %v2033, %v1673
      %v2067 = vsel %vm2037, %v2034, %v1675
      %v2068 = vsel %vm2037, %v2035, %v1677
      %v2069 = vsel %vm2037, %v2036, %v1679
      %vm2070 = vcmask 523264
      %v2071 = vsel %vm2070, %v2038, %v1745
      %v2072 = vsel %vm2070, %v2039, %v1747
      %v2073 = vsel %vm2070, %v2040, %v1749
      %v2074 = vsel %vm2070, %v2041, %v1751
      %v2075 = vsel %vm2070, %v2042, %v1753
      %v2076 = vsel %vm2070, %v2043, %v1755
      %v2077 = vsel %vm2070, %v2044, %v1757
      %v2078 = vsel %vm2070, %v2045, %v1759
      %v2079 = vsel %vm2070, %v2046, %v1761
      %v2080 = vsel %vm2070, %v2047, %v1763
      %v2081 = vsel %vm2070, %v2048, %v1765
      %v2082 = vsel %vm2070, %v2049, %v1767
      %v2083 = vsel %vm2070, %v2050, %v1769
      %v2084 = vsel %vm2070, %v2051, %v1771
      %v2085 = vsel %vm2070, %v2052, %v1773
      %v2086 = vsel %vm2070, %v2053, %v1775
      %v2087 = vsel %vm2070, %v2054, %v1777
      %v2088 = vsel %vm2070, %v2055, %v1779
      %v2089 = vsel %vm2070, %v2056, %v1781
      %v2090 = vsel %vm2070, %v2057, %v1783
      %v2091 = vsel %vm2070, %v2058, %v1785
      %v2092 = vsel %vm2070, %v2059, %v1787
      %v2093 = vsel %vm2070, %v2060, %v1789
      %v2094 = vsel %vm2070, %v2061, %v1791
      %v2095 = vsel %vm2070, %v2062, %v1793
      %v2096 = vsel %vm2070, %v2063, %v1795
      %v2097 = vsel %vm2070, %v2064, %v1797
      %v2098 = vsel %vm2070, %v2065, %v1799
      %v2099 = vsel %vm2070, %v2066, %v1801
      %v2100 = vsel %vm2070, %v2067, %v1803
      %v2101 = vsel %vm2070, %v2068, %v1805
      %v2102 = vsel %vm2070, %v2069, %v1807
      %v2103 = vpack.c.bf16 %v2072, %v2071
      %v2104 = vpack.c.bf16 %v2074, %v2073
      %v2105 = vpack.c.bf16 %v2076, %v2075
      %v2106 = vpack.c.bf16 %v2078, %v2077
      %v2107 = vpack.c.bf16 %v2080, %v2079
      %v2108 = vpack.c.bf16 %v2082, %v2081
      %v2109 = vpack.c.bf16 %v2084, %v2083
      %v2110 = vpack.c.bf16 %v2086, %v2085
      %v2111 = vpack.c.bf16 %v2088, %v2087
      %v2112 = vpack.c.bf16 %v2090, %v2089
      %v2113 = vpack.c.bf16 %v2092, %v2091
      %v2114 = vpack.c.bf16 %v2094, %v2093
      %v2115 = vpack.c.bf16 %v2096, %v2095
      %v2116 = vpack.c.bf16 %v2098, %v2097
      %v2117 = vpack.c.bf16 %v2100, %v2099
      %v2118 = vpack.c.bf16 %v2102, %v2101
      %v2119 = vld [vmem:[%s3] sm:$0xf]
      %v2120 = vld [vmem:[%s3 + $0x4] sm:$0xf]
      %v2121 = vld [vmem:[%s3 + $0x8] sm:$0xf]
      %v2122 = vld [vmem:[%s3 + $0xc] sm:$0xf]
      %v2123 = vld [vmem:[%s3 + $0x10] sm:$0xf]
      %v2124 = vld [vmem:[%s3 + $0x14] sm:$0xf]
      %v2125 = vld [vmem:[%s3 + $0x18] sm:$0xf]
      %v2126 = vld [vmem:[%s3 + $0x1c] sm:$0xf]
      %v2127 = vld [vmem:[%s3 + $0x20] sm:$0xf]
      %v2128 = vld [vmem:[%s4] sm:$0x1]
      %v2130 = vlaneseq
      %v2131 = vshrl.u32 %v2130, 7
      %v2132 = vsub.s32 0, %v2131
      %v2133 = vrot.slane %v2128, %v2132
      %v2144 = vunpack.c.l.b16 %v2119
      %v2145 = vunpack.c.l.b16 %v2120
      %v2146 = vunpack.c.l.b16 %v2121
      %v2147 = vunpack.c.l.b16 %v2122
      %v2148 = vunpack.c.l.b16 %v2123
      %v2149 = vunpack.c.l.b16 %v2124
      %v2150 = vunpack.c.l.b16 %v2125
      %v2151 = vunpack.c.l.b16 %v2126
      %v2152 = vunpack.c.l.b16 %v2127
      %v2153 = vpack.c.b16 %v2145, %v2144
      %v2154 = vpack.c.b16 %v2147, %v2146
      %v2155 = vpack.c.b16 %v2149, %v2148
      %v2156 = vpack.c.b16 %v2151, %v2150
      %v2157 = vpack.c.b16 %v2152, %v2152
      %vm2162 = vcmask 588800
      %v2164 = vsel %vm2162, %v2103, 0
      %v2167 = vsel %vm2162, %v2104, 0
      %v2170 = vsel %vm2162, %v2105, 0
      %v2173 = vsel %vm2162, %v2106, 0
      %v2176 = vsel %vm2162, %v2107, 0
      %v2179 = vsel %vm2162, %v2108, 0
      %v2182 = vsel %vm2162, %v2109, 0
      %v2185 = vsel %vm2162, %v2110, 0
      %v2188 = vsel %vm2162, %v2111, 0
      %v2191 = vsel %vm2162, %v2112, 0
      %v2194 = vsel %vm2162, %v2113, 0
      %v2197 = vsel %vm2162, %v2114, 0
      %v2200 = vsel %vm2162, %v2115, 0
      %v2203 = vsel %vm2162, %v2116, 0
      %v2206 = vsel %vm2162, %v2117, 0
      %v2209 = vsel %vm2162, %v2118, 0
      %vm2211 = vcmask 1043456
      %v2213 = vsel %vm2211, %v2157, 0
      %2215 = vmatprep.subr.bf16.mxu0 0
      %2216 = vmatpush1.bf16.msra.mxu0 %v2153
      %2217 = vmatprep.subr.bf16.mxu0 0
      %2218 = vmatpush1.bf16.msra.mxu0 %v2154
      %2219 = vmatprep.subr.bf16.mxu0 0
      %2220 = vmatpush1.bf16.msra.mxu0 %v2155
      %2221 = vmatprep.subr.bf16.mxu0 0
      %2222 = vmatpush1.bf16.msra.mxu0 %v2156
      %2223 = vmatprep.subr.bf16.mxu0 0
      %2224 = vmatpush1.bf16.msra.mxu0 %v2213
      %2225 = vmatprep.subr.bf16.mxu0 0
      %2226 = vmatpush1.bf16.msra.mxu0 0
      %2227 = vmatprep.subr.bf16.mxu0 0
      %2228 = vmatpush1.bf16.msra.mxu0 0
      %2229 = vmatprep.subr.bf16.mxu0 0
      %2230 = vmatpush1.bf16.msra.mxu0 0
      %2231 = vmatprep.subr.bf16.mxu0 0
      %2232 = vmatpush1.bf16.msra.mxu0 0
      %2233 = vmatprep.subr.bf16.mxu0 0
      %2234 = vmatpush1.bf16.msra.mxu0 0
      %2235 = vmatprep.subr.bf16.mxu0 0
      %2236 = vmatpush1.bf16.msra.mxu0 0
      %2237 = vmatprep.subr.bf16.mxu0 0
      %2238 = vmatpush1.bf16.msra.mxu0 0
      %2239 = vmatprep.subr.bf16.mxu0 0
      %2240 = vmatpush1.bf16.msra.mxu0 0
      %2241 = vmatprep.subr.bf16.mxu0 0
      %2242 = vmatpush1.bf16.msra.mxu0 0
      %2243 = vmatprep.subr.bf16.mxu0 0
      %2244 = vmatpush1.bf16.msra.mxu0 0
      %2245 = vmatprep.subr.bf16.mxu0 0
      %2246 = vmatpush1.bf16.msra.mxu0 0
      %2247 = vmatprep.mubr.bf16.mxu0 0
      %2248 = vmatmul.mubr.bf16.gmra.mrb[0].mxu0 %v2164
      %v2249 = vpop.f32.mrb[0].mxu0
      %v2250 = vadd.f32 %v2133, %v2249
      %v2251 = vpop.f32.mrb[0].mxu0
      %v2252 = vpop.f32.mrb[0].mxu0
      %v2253 = vadd.f32 %v2133, %v2252
      %v2254 = vpop.f32.mrb[0].mxu0
      %2255 = vmatprep.mubr.bf16.mxu0 0
      %2256 = vmatmul.mubr.bf16.gmra.mrb[0].mxu0 %v2167
      %v2257 = vpop.f32.mrb[0].mxu0
      %v2258 = vadd.f32 %v2133, %v2257
      %v2259 = vpop.f32.mrb[0].mxu0
      %v2260 = vpop.f32.mrb[0].mxu0
      %v2261 = vadd.f32 %v2133, %v2260
      %v2262 = vpop.f32.mrb[0].mxu0
      %2263 = vmatprep.mubr.bf16.mxu0 0
      %2264 = vmatmul.mubr.bf16.gmra.mrb[0].mxu0 %v2170
      %v2265 = vpop.f32.mrb[0].mxu0
      %v2266 = vadd.f32 %v2133, %v2265
      %v2267 = vpop.f32.mrb[0].mxu0
      %v2268 = vpop.f32.mrb[0].mxu0
      %v2269 = vadd.f32 %v2133, %v2268
      %v2270 = vpop.f32.mrb[0].mxu0
      %2271 = vmatprep.mubr.bf16.mxu0 0
      %2272 = vmatmul.mubr.bf16.gmra.mrb[0].mxu0 %v2173
      %v2273 = vpop.f32.mrb[0].mxu0
      %v2274 = vadd.f32 %v2133, %v2273
      %v2275 = vpop.f32.mrb[0].mxu0
      %v2276 = vpop.f32.mrb[0].mxu0
      %v2277 = vadd.f32 %v2133, %v2276
      %v2278 = vpop.f32.mrb[0].mxu0
      %2279 = vmatprep.mubr.bf16.mxu0 0
      %2280 = vmatmul.mubr.bf16.gmra.mrb[0].mxu0 %v2176
      %v2281 = vpop.f32.mrb[0].mxu0
      %v2282 = vadd.f32 %v2133, %v2281
      %v2283 = vpop.f32.mrb[0].mxu0
      %v2284 = vpop.f32.mrb[0].mxu0
      %v2285 = vadd.f32 %v2133, %v2284
      %v2286 = vpop.f32.mrb[0].mxu0
      %2287 = vmatprep.mubr.bf16.mxu0 0
      %2288 = vmatmul.mubr.bf16.gmra.mrb[0].mxu0 %v2179
      %v2289 = vpop.f32.mrb[0].mxu0
      %v2290 = vadd.f32 %v2133, %v2289
      %v2291 = vpop.f32.mrb[0].mxu0
      %v2292 = vpop.f32.mrb[0].mxu0
      %v2293 = vadd.f32 %v2133, %v2292
      %v2294 = vpop.f32.mrb[0].mxu0
      %2295 = vmatprep.mubr.bf16.mxu0 0
      %2296 = vmatmul.mubr.bf16.gmra.mrb[0].mxu0 %v2182
      %v2297 = vpop.f32.mrb[0].mxu0
      %v2298 = vadd.f32 %v2133, %v2297
      %v2299 = vpop.f32.mrb[0].mxu0
      %v2300 = vpop.f32.mrb[0].mxu0
      %v2301 = vadd.f32 %v2133, %v2300
      %v2302 = vpop.f32.mrb[0].mxu0
      %2303 = vmatprep.mubr.bf16.mxu0 0
      %2304 = vmatmul.mubr.bf16.gmra.mrb[0].mxu0 %v2185
      %v2305 = vpop.f32.mrb[0].mxu0
      %v2306 = vadd.f32 %v2133, %v2305
      %v2307 = vpop.f32.mrb[0].mxu0
      %v2308 = vpop.f32.mrb[0].mxu0
      %v2309 = vadd.f32 %v2133, %v2308
      %v2310 = vpop.f32.mrb[0].mxu0
      %2311 = vmatprep.mubr.bf16.mxu0 0
      %2312 = vmatmul.mubr.bf16.gmra.mrb[0].mxu0 %v2188
      %v2313 = vpop.f32.mrb[0].mxu0
      %v2314 = vadd.f32 %v2133, %v2313
      %v2315 = vpop.f32.mrb[0].mxu0
      %v2316 = vpop.f32.mrb[0].mxu0
      %v2317 = vadd.f32 %v2133, %v2316
      %v2318 = vpop.f32.mrb[0].mxu0
      %2319 = vmatprep.mubr.bf16.mxu0 0
      %2320 = vmatmul.mubr.bf16.gmra.mrb[0].mxu0 %v2191
      %v2321 = vpop.f32.mrb[0].mxu0
      %v2322 = vadd.f32 %v2133, %v2321
      %v2323 = vpop.f32.mrb[0].mxu0
      %v2324 = vpop.f32.mrb[0].mxu0
      %v2325 = vadd.f32 %v2133, %v2324
      %v2326 = vpop.f32.mrb[0].mxu0
      %2327 = vmatprep.mubr.bf16.mxu0 0
      %2328 = vmatmul.mubr.bf16.gmra.mrb[0].mxu0 %v2194
      %v2329 = vpop.f32.mrb[0].mxu0
      %v2330 = vadd.f32 %v2133, %v2329
      %v2331 = vpop.f32.mrb[0].mxu0
      %v2332 = vpop.f32.mrb[0].mxu0
      %v2333 = vadd.f32 %v2133, %v2332
      %v2334 = vpop.f32.mrb[0].mxu0
      %2335 = vmatprep.mubr.bf16.mxu0 0
      %2336 = vmatmul.mubr.bf16.gmra.mrb[0].mxu0 %v2197
      %v2337 = vpop.f32.mrb[0].mxu0
      %v2338 = vadd.f32 %v2133, %v2337
      %v2339 = vpop.f32.mrb[0].mxu0
      %v2340 = vpop.f32.mrb[0].mxu0
      %v2341 = vadd.f32 %v2133, %v2340
      %v2342 = vpop.f32.mrb[0].mxu0
      %2343 = vmatprep.mubr.bf16.mxu0 0
      %2344 = vmatmul.mubr.bf16.gmra.mrb[0].mxu0 %v2200
      %v2345 = vpop.f32.mrb[0].mxu0
      %v2346 = vadd.f32 %v2133, %v2345
      %v2347 = vpop.f32.mrb[0].mxu0
      %v2348 = vpop.f32.mrb[0].mxu0
      %v2349 = vadd.f32 %v2133, %v2348
      %v2350 = vpop.f32.mrb[0].mxu0
      %2351 = vmatprep.mubr.bf16.mxu0 0
      %2352 = vmatmul.mubr.bf16.gmra.mrb[0].mxu0 %v2203
      %v2353 = vpop.f32.mrb[0].mxu0
      %v2354 = vadd.f32 %v2133, %v2353
      %v2355 = vpop.f32.mrb[0].mxu0
      %v2356 = vpop.f32.mrb[0].mxu0
      %v2357 = vadd.f32 %v2133, %v2356
      %v2358 = vpop.f32.mrb[0].mxu0
      %2359 = vmatprep.mubr.bf16.mxu0 0
      %2360 = vmatmul.mubr.bf16.gmra.mrb[0].mxu0 %v2206
      %v2361 = vpop.f32.mrb[0].mxu0
      %v2362 = vadd.f32 %v2133, %v2361
      %v2363 = vpop.f32.mrb[0].mxu0
      %v2364 = vpop.f32.mrb[0].mxu0
      %v2365 = vadd.f32 %v2133, %v2364
      %v2366 = vpop.f32.mrb[0].mxu0
      %2367 = vmatprep.mubr.bf16.mxu0 0
      %2368 = vmatmul.mubr.bf16.gmra.mrb[0].mxu0 %v2209
      %v2369 = vpop.f32.mrb[0].mxu0
      %v2370 = vadd.f32 %v2133, %v2369
      %v2371 = vpop.f32.mrb[0].mxu0
      %v2372 = vpop.f32.mrb[0].mxu0
      %v2373 = vadd.f32 %v2133, %v2372
      %v2374 = vpop.f32.mrb[0].mxu0
      %2375 = vdwg.mxu0
      %v2376 = vsel %vm438, %v2250, 0.0
      %v2377 = vsel %vm438, %v2253, 0.0
      %v2378 = vadd.f32 %v2376, %v2377
      %v2379 = vsel %vm438, %v2258, 0.0
      %v2380 = vadd.f32 %v2378, %v2379
      %v2381 = vsel %vm438, %v2261, 0.0
      %v2382 = vadd.f32 %v2380, %v2381
      %v2383 = vsel %vm438, %v2266, 0.0
      %v2384 = vadd.f32 %v2382, %v2383
      %v2385 = vsel %vm438, %v2269, 0.0
      %v2386 = vadd.f32 %v2384, %v2385
      %v2387 = vsel %vm438, %v2274, 0.0
      %v2388 = vadd.f32 %v2386, %v2387
      %v2389 = vsel %vm438, %v2277, 0.0
      %v2390 = vadd.f32 %v2388, %v2389
      %v2391 = vsel %vm438, %v2282, 0.0
      %v2392 = vadd.f32 %v2390, %v2391
      %v2393 = vsel %vm438, %v2285, 0.0
      %v2394 = vadd.f32 %v2392, %v2393
      %v2395 = vsel %vm438, %v2290, 0.0
      %v2396 = vadd.f32 %v2394, %v2395
      %v2397 = vsel %vm438, %v2293, 0.0
      %v2398 = vadd.f32 %v2396, %v2397
      %v2399 = vsel %vm438, %v2298, 0.0
      %v2400 = vadd.f32 %v2398, %v2399
      %v2401 = vsel %vm438, %v2301, 0.0
      %v2402 = vadd.f32 %v2400, %v2401
      %v2403 = vsel %vm438, %v2306, 0.0
      %v2404 = vadd.f32 %v2402, %v2403
      %v2405 = vsel %vm438, %v2309, 0.0
      %v2406 = vadd.f32 %v2404, %v2405
      %v2407 = vsel %vm438, %v2314, 0.0
      %v2408 = vadd.f32 %v2406, %v2407
      %v2409 = vsel %vm438, %v2317, 0.0
      %v2410 = vadd.f32 %v2408, %v2409
      %v2411 = vsel %vm438, %v2322, 0.0
      %v2412 = vadd.f32 %v2410, %v2411
      %v2413 = vsel %vm438, %v2325, 0.0
      %v2414 = vadd.f32 %v2412, %v2413
      %v2415 = vsel %vm438, %v2330, 0.0
      %v2416 = vadd.f32 %v2414, %v2415
      %v2417 = vsel %vm438, %v2333, 0.0
      %v2418 = vadd.f32 %v2416, %v2417
      %v2419 = vsel %vm438, %v2338, 0.0
      %v2420 = vadd.f32 %v2418, %v2419
      %v2421 = vsel %vm438, %v2341, 0.0
      %v2422 = vadd.f32 %v2420, %v2421
      %v2423 = vsel %vm438, %v2346, 0.0
      %v2424 = vadd.f32 %v2422, %v2423
      %v2425 = vsel %vm438, %v2349, 0.0
      %v2426 = vadd.f32 %v2424, %v2425
      %v2427 = vsel %vm438, %v2354, 0.0
      %v2428 = vadd.f32 %v2426, %v2427
      %v2429 = vsel %vm438, %v2357, 0.0
      %v2430 = vadd.f32 %v2428, %v2429
      %v2431 = vsel %vm438, %v2362, 0.0
      %v2432 = vadd.f32 %v2430, %v2431
      %v2433 = vsel %vm438, %v2365, 0.0
      %v2434 = vadd.f32 %v2432, %v2433
      %v2435 = vsel %vm438, %v2370, 0.0
      %v2436 = vadd.f32 %v2434, %v2435
      %v2437 = vsel %vm438, %v2373, 0.0
      %v2438 = vadd.f32 %v2436, %v2437
      %v2439 = vrot.slane %v2438, 4
      %v2440 = vadd.f32 %v2438, %v2439
      %v2441 = vrot.slane %v2440, 2
      %v2442 = vadd.f32 %v2440, %v2441
      %v2443 = vrot.slane %v2442, 1
      %v2444 = vadd.f32 %v2442, %v2443
      %v2445 = vmul.f32 %v2444, 0.00390625
      %v2446 = vsub.f32 %v2250, %v2445
      %v2447 = vsub.f32 %v2253, %v2445
      %v2448 = vsub.f32 %v2258, %v2445
      %v2449 = vsub.f32 %v2261, %v2445
      %v2450 = vsub.f32 %v2266, %v2445
      %v2451 = vsub.f32 %v2269, %v2445
      %v2452 = vsub.f32 %v2274, %v2445
      %v2453 = vsub.f32 %v2277, %v2445
      %v2454 = vsub.f32 %v2282, %v2445
      %v2455 = vsub.f32 %v2285, %v2445
      %v2456 = vsub.f32 %v2290, %v2445
      %v2457 = vsub.f32 %v2293, %v2445
      %v2458 = vsub.f32 %v2298, %v2445
      %v2459 = vsub.f32 %v2301, %v2445
      %v2460 = vsub.f32 %v2306, %v2445
      %v2461 = vsub.f32 %v2309, %v2445
      %v2462 = vsub.f32 %v2314, %v2445
      %v2463 = vsub.f32 %v2317, %v2445
      %v2464 = vsub.f32 %v2322, %v2445
      %v2465 = vsub.f32 %v2325, %v2445
      %v2466 = vsub.f32 %v2330, %v2445
      %v2467 = vsub.f32 %v2333, %v2445
      %v2468 = vsub.f32 %v2338, %v2445
      %v2469 = vsub.f32 %v2341, %v2445
      %v2470 = vsub.f32 %v2346, %v2445
      %v2471 = vsub.f32 %v2349, %v2445
      %v2472 = vsub.f32 %v2354, %v2445
      %v2473 = vsub.f32 %v2357, %v2445
      %v2474 = vsub.f32 %v2362, %v2445
      %v2475 = vsub.f32 %v2365, %v2445
      %v2476 = vsub.f32 %v2370, %v2445
      %v2477 = vsub.f32 %v2373, %v2445
      %v2478 = vmul.f32 %v2446, %v2446
      %v2479 = vmul.f32 %v2447, %v2447
      %v2480 = vmul.f32 %v2448, %v2448
      %v2481 = vmul.f32 %v2449, %v2449
      %v2482 = vmul.f32 %v2450, %v2450
      %v2483 = vmul.f32 %v2451, %v2451
      %v2484 = vmul.f32 %v2452, %v2452
      %v2485 = vmul.f32 %v2453, %v2453
      %v2486 = vmul.f32 %v2454, %v2454
      %v2487 = vmul.f32 %v2455, %v2455
      %v2488 = vmul.f32 %v2456, %v2456
      %v2489 = vmul.f32 %v2457, %v2457
      %v2490 = vmul.f32 %v2458, %v2458
      %v2491 = vmul.f32 %v2459, %v2459
      %v2492 = vmul.f32 %v2460, %v2460
      %v2493 = vmul.f32 %v2461, %v2461
      %v2494 = vmul.f32 %v2462, %v2462
      %v2495 = vmul.f32 %v2463, %v2463
      %v2496 = vmul.f32 %v2464, %v2464
      %v2497 = vmul.f32 %v2465, %v2465
      %v2498 = vmul.f32 %v2466, %v2466
      %v2499 = vmul.f32 %v2467, %v2467
      %v2500 = vmul.f32 %v2468, %v2468
      %v2501 = vmul.f32 %v2469, %v2469
      %v2502 = vmul.f32 %v2470, %v2470
      %v2503 = vmul.f32 %v2471, %v2471
      %v2504 = vmul.f32 %v2472, %v2472
      %v2505 = vmul.f32 %v2473, %v2473
      %v2506 = vmul.f32 %v2474, %v2474
      %v2507 = vmul.f32 %v2475, %v2475
      %v2508 = vmul.f32 %v2476, %v2476
      %v2509 = vmul.f32 %v2477, %v2477
      %v2510 = vsel %vm438, %v2478, 0.0
      %v2511 = vsel %vm438, %v2479, 0.0
      %v2512 = vadd.f32 %v2510, %v2511
      %v2513 = vsel %vm438, %v2480, 0.0
      %v2514 = vadd.f32 %v2512, %v2513
      %v2515 = vsel %vm438, %v2481, 0.0
      %v2516 = vadd.f32 %v2514, %v2515
      %v2517 = vsel %vm438, %v2482, 0.0
      %v2518 = vadd.f32 %v2516, %v2517
      %v2519 = vsel %vm438, %v2483, 0.0
      %v2520 = vadd.f32 %v2518, %v2519
      %v2521 = vsel %vm438, %v2484, 0.0
      %v2522 = vadd.f32 %v2520, %v2521
      %v2523 = vsel %vm438, %v2485, 0.0
      %v2524 = vadd.f32 %v2522, %v2523
      %v2525 = vsel %vm438, %v2486, 0.0
      %v2526 = vadd.f32 %v2524, %v2525
      %v2527 = vsel %vm438, %v2487, 0.0
      %v2528 = vadd.f32 %v2526, %v2527
      %v2529 = vsel %vm438, %v2488, 0.0
      %v2530 = vadd.f32 %v2528, %v2529
      %v2531 = vsel %vm438, %v2489, 0.0
      %v2532 = vadd.f32 %v2530, %v2531
      %v2533 = vsel %vm438, %v2490, 0.0
      %v2534 = vadd.f32 %v2532, %v2533
      %v2535 = vsel %vm438, %v2491, 0.0
      %v2536 = vadd.f32 %v2534, %v2535
      %v2537 = vsel %vm438, %v2492, 0.0
      %v2538 = vadd.f32 %v2536, %v2537
      %v2539 = vsel %vm438, %v2493, 0.0
      %v2540 = vadd.f32 %v2538, %v2539
      %v2541 = vsel %vm438, %v2494, 0.0
      %v2542 = vadd.f32 %v2540, %v2541
      %v2543 = vsel %vm438, %v2495, 0.0
      %v2544 = vadd.f32 %v2542, %v2543
      %v2545 = vsel %vm438, %v2496, 0.0
      %v2546 = vadd.f32 %v2544, %v2545
      %v2547 = vsel %vm438, %v2497, 0.0
      %v2548 = vadd.f32 %v2546, %v2547
      %v2549 = vsel %vm438, %v2498, 0.0
      %v2550 = vadd.f32 %v2548, %v2549
      %v2551 = vsel %vm438, %v2499, 0.0
      %v2552 = vadd.f32 %v2550, %v2551
      %v2553 = vsel %vm438, %v2500, 0.0
      %v2554 = vadd.f32 %v2552, %v2553
      %v2555 = vsel %vm438, %v2501, 0.0
      %v2556 = vadd.f32 %v2554, %v2555
      %v2557 = vsel %vm438, %v2502, 0.0
      %v2558 = vadd.f32 %v2556, %v2557
      %v2559 = vsel %vm438, %v2503, 0.0
      %v2560 = vadd.f32 %v2558, %v2559
      %v2561 = vsel %vm438, %v2504, 0.0
      %v2562 = vadd.f32 %v2560, %v2561
      %v2563 = vsel %vm438, %v2505, 0.0
      %v2564 = vadd.f32 %v2562, %v2563
      %v2565 = vsel %vm438, %v2506, 0.0
      %v2566 = vadd.f32 %v2564, %v2565
      %v2567 = vsel %vm438, %v2507, 0.0
      %v2568 = vadd.f32 %v2566, %v2567
      %v2569 = vsel %vm438, %v2508, 0.0
      %v2570 = vadd.f32 %v2568, %v2569
      %v2571 = vsel %vm438, %v2509, 0.0
      %v2572 = vadd.f32 %v2570, %v2571
      %v2573 = vrot.slane %v2572, 4
      %v2574 = vadd.f32 %v2572, %v2573
      %v2575 = vrot.slane %v2574, 2
      %v2576 = vadd.f32 %v2574, %v2575
      %v2577 = vrot.slane %v2576, 1
      %v2578 = vadd.f32 %v2576, %v2577
      %vm2579 = vcmask 1040384
      %v2580 = vsel %vm2579, %v2444, %v2578
      %2581 = vst.msk [vmem:[%s262] sm:$0x3] %vm441, %v2580
      %v2582 = vpack.c.bf16 %v2253, %v2250
      %v2583 = vpack.c.bf16 %v2261, %v2258
      %v2584 = vpack.c.bf16 %v2269, %v2266
      %v2585 = vpack.c.bf16 %v2277, %v2274
      %v2586 = vpack.c.bf16 %v2285, %v2282
      %v2587 = vpack.c.bf16 %v2293, %v2290
      %v2588 = vpack.c.bf16 %v2301, %v2298
      %v2589 = vpack.c.bf16 %v2309, %v2306
      %v2590 = vpack.c.bf16 %v2317, %v2314
      %v2591 = vpack.c.bf16 %v2325, %v2322
      %v2592 = vpack.c.bf16 %v2333, %v2330
      %v2593 = vpack.c.bf16 %v2341, %v2338
      %v2594 = vpack.c.bf16 %v2349, %v2346
      %v2595 = vpack.c.bf16 %v2357, %v2354
      %v2596 = vpack.c.bf16 %v2365, %v2362
      %v2597 = vpack.c.bf16 %v2373, %v2370
      %v2614 = vunpack.c.l.b16 %v2582
      %v2615 = vunpack.c.h.b16 %v2582
      %v2616 = vunpack.c.l.b16 %v2583
      %v2617 = vunpack.c.h.b16 %v2583
      %v2618 = vunpack.c.l.b16 %v2584
      %v2619 = vunpack.c.h.b16 %v2584
      %v2620 = vunpack.c.l.b16 %v2585
      %v2621 = vunpack.c.h.b16 %v2585
      %v2622 = vunpack.c.l.b16 %v2586
      %v2623 = vunpack.c.h.b16 %v2586
      %v2624 = vunpack.c.l.b16 %v2587
      %v2625 = vunpack.c.h.b16 %v2587
      %v2626 = vunpack.c.l.b16 %v2588
      %v2627 = vunpack.c.h.b16 %v2588
      %v2628 = vunpack.c.l.b16 %v2589
      %v2629 = vunpack.c.h.b16 %v2589
      %v2630 = vunpack.c.l.b16 %v2590
      %v2631 = vunpack.c.h.b16 %v2590
      %v2632 = vunpack.c.l.b16 %v2591
      %v2633 = vunpack.c.h.b16 %v2591
      %v2634 = vunpack.c.l.b16 %v2592
      %v2635 = vunpack.c.h.b16 %v2592
      %v2636 = vunpack.c.l.b16 %v2593
      %v2637 = vunpack.c.h.b16 %v2593
      %v2638 = vunpack.c.l.b16 %v2594
      %v2639 = vunpack.c.h.b16 %v2594
      %v2640 = vunpack.c.l.b16 %v2595
      %v2641 = vunpack.c.h.b16 %v2595
      %v2642 = vunpack.c.l.b16 %v2596
      %v2643 = vunpack.c.h.b16 %v2596
      %v2644 = vunpack.c.l.b16 %v2597
      %v2645 = vunpack.c.h.b16 %v2597
      %v2646 = vpack.c.b16 %v2614, %v2614
      %v2647 = vpack.c.b16 %v2615, %v2615
      %v2648 = vpack.c.b16 %v2616, %v2616
      %v2649 = vpack.c.b16 %v2617, %v2617
      %v2650 = vpack.c.b16 %v2618, %v2618
      %v2651 = vpack.c.b16 %v2619, %v2619
      %v2652 = vpack.c.b16 %v2620, %v2620
      %v2653 = vpack.c.b16 %v2621, %v2621
      %v2654 = vpack.c.b16 %v2622, %v2622
      %v2655 = vpack.c.b16 %v2623, %v2623
      %v2656 = vpack.c.b16 %v2624, %v2624
      %v2657 = vpack.c.b16 %v2625, %v2625
      %v2658 = vpack.c.b16 %v2626, %v2626
      %v2659 = vpack.c.b16 %v2627, %v2627
      %v2660 = vpack.c.b16 %v2628, %v2628
      %v2661 = vpack.c.b16 %v2629, %v2629
      %v2662 = vpack.c.b16 %v2630, %v2630
      %v2663 = vpack.c.b16 %v2631, %v2631
      %v2664 = vpack.c.b16 %v2632, %v2632
      %v2665 = vpack.c.b16 %v2633, %v2633
      %v2666 = vpack.c.b16 %v2634, %v2634
      %v2667 = vpack.c.b16 %v2635, %v2635
      %v2668 = vpack.c.b16 %v2636, %v2636
      %v2669 = vpack.c.b16 %v2637, %v2637
      %v2670 = vpack.c.b16 %v2638, %v2638
      %v2671 = vpack.c.b16 %v2639, %v2639
      %v2672 = vpack.c.b16 %v2640, %v2640
      %v2673 = vpack.c.b16 %v2641, %v2641
      %v2674 = vpack.c.b16 %v2642, %v2642
      %v2675 = vpack.c.b16 %v2643, %v2643
      %v2676 = vpack.c.b16 %v2644, %v2644
      %v2677 = vpack.c.b16 %v2645, %v2645
      %vm2710 = vcmask 60416
      %2711 = vst.msk [vmem:[%s258] sm:$0xf] %vm2710, %v2646
      %2712 = vst.msk [vmem:[%s258 + $0x4] sm:$0xf] %vm2710, %v2647
      %2713 = vst.msk [vmem:[%s258 + $0x8] sm:$0xf] %vm2710, %v2648
      %2714 = vst.msk [vmem:[%s258 + $0xc] sm:$0xf] %vm2710, %v2649
      %2715 = vst.msk [vmem:[%s258 + $0x10] sm:$0xf] %vm2710, %v2650
      %2716 = vst.msk [vmem:[%s258 + $0x14] sm:$0xf] %vm2710, %v2651
      %2717 = vst.msk [vmem:[%s258 + $0x18] sm:$0xf] %vm2710, %v2652
      %2718 = vst.msk [vmem:[%s258 + $0x1c] sm:$0xf] %vm2710, %v2653
      %2719 = vst.msk [vmem:[%s258 + $0x20] sm:$0xf] %vm2710, %v2654
      %2720 = vst.msk [vmem:[%s258 + $0x24] sm:$0xf] %vm2710, %v2655
      %2721 = vst.msk [vmem:[%s258 + $0x28] sm:$0xf] %vm2710, %v2656
      %2722 = vst.msk [vmem:[%s258 + $0x2c] sm:$0xf] %vm2710, %v2657
      %2723 = vst.msk [vmem:[%s258 + $0x30] sm:$0xf] %vm2710, %v2658
      %2724 = vst.msk [vmem:[%s258 + $0x34] sm:$0xf] %vm2710, %v2659
      %2725 = vst.msk [vmem:[%s258 + $0x38] sm:$0xf] %vm2710, %v2660
      %2726 = vst.msk [vmem:[%s258 + $0x3c] sm:$0xf] %vm2710, %v2661
      %2727 = vst.msk [vmem:[%s258 + $0x40] sm:$0xf] %vm2710, %v2662
      %2728 = vst.msk [vmem:[%s258 + $0x44] sm:$0xf] %vm2710, %v2663
      %2729 = vst.msk [vmem:[%s258 + $0x48] sm:$0xf] %vm2710, %v2664
      %2730 = vst.msk [vmem:[%s258 + $0x4c] sm:$0xf] %vm2710, %v2665
      %2731 = vst.msk [vmem:[%s258 + $0x50] sm:$0xf] %vm2710, %v2666
      %2732 = vst.msk [vmem:[%s258 + $0x54] sm:$0xf] %vm2710, %v2667
      %2733 = vst.msk [vmem:[%s258 + $0x58] sm:$0xf] %vm2710, %v2668
      %2734 = vst.msk [vmem:[%s258 + $0x5c] sm:$0xf] %vm2710, %v2669
      %2735 = vst.msk [vmem:[%s258 + $0x60] sm:$0xf] %vm2710, %v2670
      %2736 = vst.msk [vmem:[%s258 + $0x64] sm:$0xf] %vm2710, %v2671
      %2737 = vst.msk [vmem:[%s258 + $0x68] sm:$0xf] %vm2710, %v2672
      %2738 = vst.msk [vmem:[%s258 + $0x6c] sm:$0xf] %vm2710, %v2673
      %2739 = vst.msk [vmem:[%s258 + $0x70] sm:$0xf] %vm2710, %v2674
      %2740 = vst.msk [vmem:[%s258 + $0x74] sm:$0xf] %vm2710, %v2675
      %2741 = vst.msk [vmem:[%s258 + $0x78] sm:$0xf] %vm2710, %v2676
      %2742 = vst.msk [vmem:[%s258 + $0x7c] sm:$0xf] %vm2710, %v2677
      %p2743 = scmp.lt.s32.totalorder %s18, 1
      %s2744 = scalar_select %p2743, %s18, 1
      %s2745 = smul.addr %s2744, 32
      %s2746 = smul.addr %s2745, 4
      %s2747 = scalar_lea.vmem %s5, %s2746
      %p2748 = scmp.lt.s32.totalorder %s18, 1
      %s2749 = scalar_select %p2748, %s18, 1
      %s2750 = smul.addr %s2749, 2
      %s2751 = scalar_lea.vmem %s6, %s2750
      // Predicated region
      $region41: #{residual_unit_forward.4} parent=39 // pred_check
        %p2752 = pneg %p146
      $region42: #{residual_unit_forward.4} parent=39 // pred_check_branch
        %2754 = sbr.rel (%p2752) target = $region44
      $region43: #{residual_unit_forward.4} parent=39 // pred_region
        _
      $region44: #{residual_unit_forward.4} parent=39 // pred_fallthru
        _
      // Predicated region
      $region45: #{residual_unit_forward.4} parent=39 // pred_check
        %p2755 = pneg %p172
      $region46: #{residual_unit_forward.4} parent=39 // pred_check_branch
        %2757 = sbr.rel (%p2755) target = $region48
      $region47: #{residual_unit_forward.4} parent=39 // pred_region
        _
      $region48: #{residual_unit_forward.4} parent=39 // pred_fallthru
        _
    $region40: #{residual_unit_forward.4} parent=5 // pred_fallthru
      _
    %p2758 = scmp.le.s32.totalorder 2, %s13
    // Predicated region
    $region49: #{residual_unit_forward.4} parent=5 // pred_check
      %p2759 = pneg %p2758
    $region50: #{residual_unit_forward.4} parent=5 // pred_check_branch
      %2761 = sbr.rel (%p2759) target = $region52
    $region51: #{residual_unit_forward.4} parent=5 // pred_region
      %s2762 = ssub.s32 %s13, 2
      // Predicated region
      $region53: #{residual_unit_forward.4} parent=51 // pred_check
        %p2763 = pneg %p152
      $region54: #{residual_unit_forward.4} parent=51 // pred_check_branch
        %2765 = sbr.rel (%p2763) target = $region56
      $region55: #{residual_unit_forward.4} parent=51 // pred_region
        %p2766 = scmp.lt.s32.totalorder %s19, 1
        %s2767 = scalar_select %p2766, %s19, 1
        %s2768 = smul.addr %s2767, 32
        %s2769 = smul.addr %s2768, 4
        %s2770 = scalar_lea.vmem %s5, %s2769
      $region56: #{residual_unit_forward.4} parent=51 // pred_fallthru
        _
      // Predicated region
      $region57: #{residual_unit_forward.4} parent=51 // pred_check
        %p2771 = pneg %p178
      $region58: #{residual_unit_forward.4} parent=51 // pred_check_branch
        %2773 = sbr.rel (%p2771) target = $region60
      $region59: #{residual_unit_forward.4} parent=51 // pred_region
        %p2774 = scmp.lt.s32.totalorder %s19, 1
        %s2775 = scalar_select %p2774, %s19, 1
        %s2776 = smul.addr %s2775, 2
        %s2777 = scalar_lea.vmem %s6, %s2776
      $region60: #{residual_unit_forward.4} parent=51 // pred_fallthru
        _
    $region52: #{residual_unit_forward.4} parent=5 // pred_fallthru
      _
  $region6: #{residual_unit_forward.4} parent=0 // loop_footer
    %s17 = sadd.s32 1, %s13
  $region7: #{residual_unit_forward.4} parent=0 // loop_footer_branch
    %12 = sbr.rel target = $region3
  $region8: #{residual_unit_forward.4} parent=0 // loop_exit
    _

// kernel: residual_unit_forward.3
$region0: #{residual_unit_forward.3}
  #allocation0 [shape = 'u32[]', space=smem, size = 0x4, offset = 0x4, fixed_abs, tag = 'smem constant byte address 0x4 - core index']
  #allocation1 [shape = 'u32[144,128]{1,0:T(1,128)}', space=vmem, size = 0x12000, scoped, tag = 'internal scratch']
  #allocation2 [shape = 'f32[18,18,4]{2,1,0:T(8,128)}', space=vmem, size = 0x36000, scoped, tag = 'scratch operand']
  %s0 = inlined_call_operand.vmem [shape: f32[2,16,16,4], index: 0, kind: input, shape index: {}]
  %s1 = inlined_call_operand.vmem [shape: bf16[36,8], index: 1, kind: input, shape index: {}]
  %s2 = inlined_call_operand.vmem [shape: f32[1,8], index: 2, kind: input, shape index: {}]
  %s3 = inlined_call_operand.vmem [shape: bf16[4,8], index: 3, kind: input, shape index: {}]
  %s4 = inlined_call_operand.vmem [shape: f32[1,8], index: 4, kind: input, shape index: {}]
  %s5 = inlined_call_operand.vmem [shape: bf16[2,256,8], index: 5, kind: output, shape index: {0}]
  %s6 = inlined_call_operand.vmem [shape: bf16[2,256,8], index: 6, kind: output, shape index: {1}]
  %s7 = inlined_call_operand.vmem [shape: f32[2,2,8], index: 7, kind: output, shape index: {2}]
  %s8 = inlined_call_operand.vmem [shape: f32[2,2,8], index: 8, kind: output, shape index: {3}]
  %9 = xla_tuple %s5, %s6, %s7, %s8
  %s10 = sld [smem:[#allocation0]]
  $region77: #{residual_unit_forward.3} parent=0
    _
  %s12 = ssub.s32 1, %s10
  %s13 = scalar_select 0, %s12, %s10
  loop: start=0, step=1, limit=4
  $region2: #{residual_unit_forward.3} parent=0 // loop_pre_header
    _
  $region3: #{residual_unit_forward.3} parent=0 // loop_header
    %s15 = sphi 0, %s19
    %p16 = scmp.ge.s32.totalorder %s15, 4
    %s25 = sphi 0, %s27
    %s28 = sphi 0, %s25
    %s29 = sphi 0, %s28
    %s45 = sphi 0, %s29
    %s49 = sphi 0, %s49
    %s51 = sphi 0, %s49
    %s52 = sphi 0, %s51
    %s66 = sphi 0, %s52
    %s70 = sphi 0, %s70
    %s72 = sphi 0, %s70
    %s73 = sphi 0, %s72
    %s87 = sphi 0, %s73
    %s91 = sphi 0, %s91
    %s93 = sphi 0, %s91
    %s94 = sphi 0, %s93
    %s108 = sphi 0, %s94
    %s112 = sphi 0, %s112
    %s114 = sphi 0, %s112
    %s115 = sphi 0, %s114
    %s129 = sphi 0, %s115
    %s135 = sphi 0, %s137
    %s138 = sphi 0, %s135
    %s139 = sphi 0, %s138
    %s155 = sphi 0, %s139
    %s161 = sphi 0, %s163
    %s164 = sphi 0, %s161
    %s165 = sphi 0, %s164
    %s181 = sphi 0, %s165
    %s187 = sphi 0, %s189
    %s190 = sphi 0, %s187
    %s191 = sphi 0, %s190
    %s207 = sphi 0, %s191
    %s213 = sphi 0, %s215
    %s216 = sphi 0, %s213
    %s217 = sphi 0, %s216
    %s233 = sphi 0, %s217
  $region4: #{residual_unit_forward.3} parent=0 // loop_header_branch
    %18 = sbr.rel (%p16) target = $region8
  $region5: #{residual_unit_forward.3} parent=0 // loop_body
    %s20 = ssub.s32 %s15, 1
    %s21 = ssub.s32 %s15, 2
    %s22 = sadd.s32 %s15, 1
    %s23 = ssub.s32 %s15, %s22
    %p24 = scmp.eq.s32.totalorder %s23, 0
    %s26 = sadd.s32 %s25, 1
    %s27 = scalar_select %p24, %s25, %s26
    %p30 = pneg %p24
    %p31 = scmp.eq.s32.totalorder %s15, 1
    %p32 = por %p30, %p31
    %p33 = scmp.ne.s32.totalorder %s25, %s28
    %p34 = scmp.eq.s32.totalorder %s15, 0
    %p35 = por %p33, %p34
    %p36 = scmp.ne.s32.totalorder %s25, %s28
    %p37 = scmp.eq.s32.totalorder %s20, 1
    %p38 = por %p36, %p37
    %p39 = scmp.ne.s32.totalorder %s28, %s29
    %p40 = scmp.eq.s32.totalorder %s20, 0
    %p41 = por %p39, %p40
    %p42 = scmp.ne.s32.totalorder %s28, %s29
    %p43 = scmp.eq.s32.totalorder %s21, 1
    %p44 = por %p42, %p43
    %p46 = scmp.ne.s32.totalorder %s29, %s45
    %p47 = scmp.eq.s32.totalorder %s21, 0
    %p48 = por %p46, %p47
    %s50 = sadd.s32 %s49, 1
    %p53 = scmp.eq.s32.totalorder %s15, 1
    %p54 = scmp.ne.s32.totalorder %s49, %s51
    %p55 = scmp.eq.s32.totalorder %s15, 0
    %p56 = por %p54, %p55
    %p57 = scmp.ne.s32.totalorder %s49, %s51
    %p58 = scmp.eq.s32.totalorder %s20, 1
    %p59 = por %p57, %p58
    %p60 = scmp.ne.s32.totalorder %s51, %s52
    %p61 = scmp.eq.s32.totalorder %s20, 0
    %p62 = por %p60, %p61
    %p63 = scmp.ne.s32.totalorder %s51, %s52
    %p64 = scmp.eq.s32.totalorder %s21, 1
    %p65 = por %p63, %p64
    %p67 = scmp.ne.s32.totalorder %s52, %s66
    %p68 = scmp.eq.s32.totalorder %s21, 0
    %p69 = por %p67, %p68
    %s71 = sadd.s32 %s70, 1
    %p74 = scmp.eq.s32.totalorder %s15, 1
    %p75 = scmp.ne.s32.totalorder %s70, %s72
    %p76 = scmp.eq.s32.totalorder %s15, 0
    %p77 = por %p75, %p76
    %p78 = scmp.ne.s32.totalorder %s70, %s72
    %p79 = scmp.eq.s32.totalorder %s20, 1
    %p80 = por %p78, %p79
    %p81 = scmp.ne.s32.totalorder %s72, %s73
    %p82 = scmp.eq.s32.totalorder %s20, 0
    %p83 = por %p81, %p82
    %p84 = scmp.ne.s32.totalorder %s72, %s73
    %p85 = scmp.eq.s32.totalorder %s21, 1
    %p86 = por %p84, %p85
    %p88 = scmp.ne.s32.totalorder %s73, %s87
    %p89 = scmp.eq.s32.totalorder %s21, 0
    %p90 = por %p88, %p89
    %s92 = sadd.s32 %s91, 1
    %p95 = scmp.eq.s32.totalorder %s15, 1
    %p96 = scmp.ne.s32.totalorder %s91, %s93
    %p97 = scmp.eq.s32.totalorder %s15, 0
    %p98 = por %p96, %p97
    %p99 = scmp.ne.s32.totalorder %s91, %s93
    %p100 = scmp.eq.s32.totalorder %s20, 1
    %p101 = por %p99, %p100
    %p102 = scmp.ne.s32.totalorder %s93, %s94
    %p103 = scmp.eq.s32.totalorder %s20, 0
    %p104 = por %p102, %p103
    %p105 = scmp.ne.s32.totalorder %s93, %s94
    %p106 = scmp.eq.s32.totalorder %s21, 1
    %p107 = por %p105, %p106
    %p109 = scmp.ne.s32.totalorder %s94, %s108
    %p110 = scmp.eq.s32.totalorder %s21, 0
    %p111 = por %p109, %p110
    %s113 = sadd.s32 %s112, 1
    %p116 = scmp.eq.s32.totalorder %s15, 1
    %p117 = scmp.ne.s32.totalorder %s112, %s114
    %p118 = scmp.eq.s32.totalorder %s15, 0
    %p119 = por %p117, %p118
    %p120 = scmp.ne.s32.totalorder %s112, %s114
    %p121 = scmp.eq.s32.totalorder %s20, 1
    %p122 = por %p120, %p121
    %p123 = scmp.ne.s32.totalorder %s114, %s115
    %p124 = scmp.eq.s32.totalorder %s20, 0
    %p125 = por %p123, %p124
    %p126 = scmp.ne.s32.totalorder %s114, %s115
    %p127 = scmp.eq.s32.totalorder %s21, 1
    %p128 = por %p126, %p127
    %p130 = scmp.ne.s32.totalorder %s115, %s129
    %p131 = scmp.eq.s32.totalorder %s21, 0
    %p132 = por %p130, %p131
    %s133 = ssub.s32 %s15, %s22
    %p134 = scmp.eq.s32.totalorder %s133, 0
    %s136 = sadd.s32 %s135, 1
    %s137 = scalar_select %p134, %s135, %s136
    %p140 = pneg %p134
    %p141 = scmp.eq.s32.totalorder %s15, 1
    %p142 = por %p140, %p141
    %p143 = scmp.ne.s32.totalorder %s135, %s138
    %p144 = scmp.eq.s32.totalorder %s15, 0
    %p145 = por %p143, %p144
    %p146 = scmp.ne.s32.totalorder %s135, %s138
    %p147 = scmp.eq.s32.totalorder %s20, 1
    %p148 = por %p146, %p147
    %p149 = scmp.ne.s32.totalorder %s138, %s139
    %p150 = scmp.eq.s32.totalorder %s20, 0
    %p151 = por %p149, %p150
    %p152 = scmp.ne.s32.totalorder %s138, %s139
    %p153 = scmp.eq.s32.totalorder %s21, 1
    %p154 = por %p152, %p153
    %p156 = scmp.ne.s32.totalorder %s139, %s155
    %p157 = scmp.eq.s32.totalorder %s21, 0
    %p158 = por %p156, %p157
    %s159 = ssub.s32 %s15, %s22
    %p160 = scmp.eq.s32.totalorder %s159, 0
    %s162 = sadd.s32 %s161, 1
    %s163 = scalar_select %p160, %s161, %s162
    %p166 = pneg %p160
    %p167 = scmp.eq.s32.totalorder %s15, 1
    %p168 = por %p166, %p167
    %p169 = scmp.ne.s32.totalorder %s161, %s164
    %p170 = scmp.eq.s32.totalorder %s15, 0
    %p171 = por %p169, %p170
    %p172 = scmp.ne.s32.totalorder %s161, %s164
    %p173 = scmp.eq.s32.totalorder %s20, 1
    %p174 = por %p172, %p173
    %p175 = scmp.ne.s32.totalorder %s164, %s165
    %p176 = scmp.eq.s32.totalorder %s20, 0
    %p177 = por %p175, %p176
    %p178 = scmp.ne.s32.totalorder %s164, %s165
    %p179 = scmp.eq.s32.totalorder %s21, 1
    %p180 = por %p178, %p179
    %p182 = scmp.ne.s32.totalorder %s165, %s181
    %p183 = scmp.eq.s32.totalorder %s21, 0
    %p184 = por %p182, %p183
    %s185 = ssub.s32 %s15, %s22
    %p186 = scmp.eq.s32.totalorder %s185, 0
    %s188 = sadd.s32 %s187, 1
    %s189 = scalar_select %p186, %s187, %s188
    %p192 = pneg %p186
    %p193 = scmp.eq.s32.totalorder %s15, 1
    %p194 = por %p192, %p193
    %p195 = scmp.ne.s32.totalorder %s187, %s190
    %p196 = scmp.eq.s32.totalorder %s15, 0
    %p197 = por %p195, %p196
    %p198 = scmp.ne.s32.totalorder %s187, %s190
    %p199 = scmp.eq.s32.totalorder %s20, 1
    %p200 = por %p198, %p199
    %p201 = scmp.ne.s32.totalorder %s190, %s191
    %p202 = scmp.eq.s32.totalorder %s20, 0
    %p203 = por %p201, %p202
    %p204 = scmp.ne.s32.totalorder %s190, %s191
    %p205 = scmp.eq.s32.totalorder %s21, 1
    %p206 = por %p204, %p205
    %p208 = scmp.ne.s32.totalorder %s191, %s207
    %p209 = scmp.eq.s32.totalorder %s21, 0
    %p210 = por %p208, %p209
    %s211 = ssub.s32 %s15, %s22
    %p212 = scmp.eq.s32.totalorder %s211, 0
    %s214 = sadd.s32 %s213, 1
    %s215 = scalar_select %p212, %s213, %s214
    %p218 = pneg %p212
    %p219 = scmp.eq.s32.totalorder %s15, 1
    %p220 = por %p218, %p219
    %p221 = scmp.ne.s32.totalorder %s213, %s216
    %p222 = scmp.eq.s32.totalorder %s15, 0
    %p223 = por %p221, %p222
    %p224 = scmp.ne.s32.totalorder %s213, %s216
    %p225 = scmp.eq.s32.totalorder %s20, 1
    %p226 = por %p224, %p225
    %p227 = scmp.ne.s32.totalorder %s216, %s217
    %p228 = scmp.eq.s32.totalorder %s20, 0
    %p229 = por %p227, %p228
    %p230 = scmp.ne.s32.totalorder %s216, %s217
    %p231 = scmp.eq.s32.totalorder %s21, 1
    %p232 = por %p230, %p231
    %p234 = scmp.ne.s32.totalorder %s217, %s233
    %p235 = scmp.eq.s32.totalorder %s21, 0
    %p236 = por %p234, %p235
    %p237 = scmp.le.s32.totalorder 1, %s15
    %p238 = scmp.lt.s32.totalorder %s15, 3
    %p239 = pnand %p237, %p238
    %p240 = pneg %p239
    // Predicated region
    $region9: #{residual_unit_forward.3} parent=5 // pred_check
      _
    $region10: #{residual_unit_forward.3} parent=5 // pred_check_branch
      %242 = sbr.rel (%p239) target = $region12
    $region11: #{residual_unit_forward.3} parent=5 // pred_region
      %s243 = ssub.s32 %s15, 1
      // Predicated region
      $region13: #{residual_unit_forward.3} parent=11 // pred_check
        %p244 = pneg %p62
      $region14: #{residual_unit_forward.3} parent=11 // pred_check_branch
        %246 = sbr.rel (%p244) target = $region16
      $region15: #{residual_unit_forward.3} parent=11 // pred_region
        _
      $region16: #{residual_unit_forward.3} parent=11 // pred_fallthru
        _
      // Predicated region
      $region17: #{residual_unit_forward.3} parent=11 // pred_check
        %p247 = pneg %p83
      $region18: #{residual_unit_forward.3} parent=11 // pred_check_branch
        %249 = sbr.rel (%p247) target = $region20
      $region19: #{residual_unit_forward.3} parent=11 // pred_region
        _
      $region20: #{residual_unit_forward.3} parent=11 // pred_fallthru
        _
      // Predicated region
      $region21: #{residual_unit_forward.3} parent=11 // pred_check
        %p250 = pneg %p104
      $region22: #{residual_unit_forward.3} parent=11 // pred_check_branch
        %252 = sbr.rel (%p250) target = $region24
      $region23: #{residual_unit_forward.3} parent=11 // pred_region
        _
      $region24: #{residual_unit_forward.3} parent=11 // pred_fallthru
        _
      // Predicated region
      $region25: #{residual_unit_forward.3} parent=11 // pred_check
        %p253 = pneg %p125
      $region26: #{residual_unit_forward.3} parent=11 // pred_check_branch
        %255 = sbr.rel (%p253) target = $region28
      $region27: #{residual_unit_forward.3} parent=11 // pred_region
        _
      $region28: #{residual_unit_forward.3} parent=11 // pred_fallthru
        _
    $region12: #{residual_unit_forward.3} parent=5 // pred_fallthru
      _
    %p256 = scmp.lt.s32.totalorder %s15, 2
    // Predicated region
    $region29: #{residual_unit_forward.3} parent=5 // pred_check
      %p257 = pneg %p256
    $region30: #{residual_unit_forward.3} parent=5 // pred_check_branch
      %259 = sbr.rel (%p257) target = $region32
    $region31: #{residual_unit_forward.3} parent=5 // pred_region
      // Predicated region
      $region33: #{residual_unit_forward.3} parent=31 // pred_check
        %p260 = pneg %p35
      $region34: #{residual_unit_forward.3} parent=31 // pred_check_branch
        %262 = sbr.rel (%p260) target = $region36
      $region35: #{residual_unit_forward.3} parent=31 // pred_region
        %p263 = scmp.lt.s32.totalorder %s15, 1
        %s264 = scalar_select %p263, %s15, 1
        %s265 = smul.addr %s264, 32
        %s266 = smul.addr %s265, 8
        %s267 = scalar_lea.vmem %s0, %s266
      $region36: #{residual_unit_forward.3} parent=31 // pred_fallthru
        _
    $region32: #{residual_unit_forward.3} parent=5 // pred_fallthru
      _
    %p268 = scmp.le.s32.totalorder 1, %s15
    %p269 = scmp.lt.s32.totalorder %s15, 3
    %p270 = pnand %p268, %p269
    %p271 = pneg %p270
    // Predicated region
    $region37: #{residual_unit_forward.3} parent=5 // pred_check
      _
    $region38: #{residual_unit_forward.3} parent=5 // pred_check_branch
      %273 = sbr.rel (%p270) target = $region40
    $region39: #{residual_unit_forward.3} parent=5 // pred_region
      %s274 = ssub.s32 %s15, 1
      %p275 = scmp.lt.s32.totalorder %s20, 1
      %s276 = scalar_select %p275, %s20, 1
      %s277 = smul.addr %s276, 32
      %s278 = smul.addr %s277, 8
      %s279 = scalar_lea.vmem %s0, %s278
      %p280 = pneg %p41
      %p281 = pneg %p38
      %p282 = pneg %p62
      %p283 = pneg %p59
      %p284 = pneg %p83
      %p285 = pneg %p80
      %p286 = pneg %p104
      %p287 = pneg %p101
      %p288 = pneg %p125
      %p289 = pneg %p122
      %p290 = pneg %p151
      %p291 = pneg %p148
      %p292 = scmp.lt.s32.totalorder %s20, 1
      %s293 = scalar_select %p292, %s20, 1
      %s294 = smul.addr %s293, 32
      %s295 = smul.addr %s294, 4
      %s296 = scalar_lea.vmem %s5, %s295
      %p297 = pneg %p177
      %p298 = pneg %p174
      %p299 = scmp.lt.s32.totalorder %s20, 1
      %s300 = scalar_select %p299, %s20, 1
      %s301 = smul.addr %s300, 32
      %s302 = smul.addr %s301, 4
      %s303 = scalar_lea.vmem %s6, %s302
      %p304 = pneg %p203
      %p305 = pneg %p200
      %p306 = scmp.lt.s32.totalorder %s20, 1
      %s307 = scalar_select %p306, %s20, 1
      %s308 = smul.addr %s307, 2
      %s309 = scalar_lea.vmem %s7, %s308
      %p310 = pneg %p229
      %p311 = pneg %p226
      %p312 = scmp.lt.s32.totalorder %s20, 1
      %s313 = scalar_select %p312, %s20, 1
      %s314 = smul.addr %s313, 2
      %s315 = scalar_lea.vmem %s8, %s314
      %p316 = scmp.lt.s32.totalorder %s20, 1
      %s317 = scalar_select %p316, %s20, 1
      %s318 = smul.addr %s317, 32
      %s319 = smul.addr %s318, 8
      %s320 = scalar_lea.vmem %s0, %s319
      %p321 = scmp.lt.s32.totalorder %s20, 1
      %s322 = scalar_select %p321, %s20, 1
      %s323 = smul.addr %s322, 32
      %s324 = smul.addr %s323, 4
      %s325 = scalar_lea.vmem %s5, %s324
      %p326 = scmp.lt.s32.totalorder %s20, 1
      %s327 = scalar_select %p326, %s20, 1
      %s328 = smul.addr %s327, 32
      %s329 = smul.addr %s328, 4
      %s330 = scalar_lea.vmem %s6, %s329
      %p331 = scmp.lt.s32.totalorder %s20, 1
      %s332 = scalar_select %p331, %s20, 1
      %s333 = smul.addr %s332, 2
      %s334 = scalar_lea.vmem %s7, %s333
      %p335 = scmp.lt.s32.totalorder %s20, 1
      %s336 = scalar_select %p335, %s20, 1
      %s337 = smul.addr %s336, 2
      %s338 = scalar_lea.vmem %s8, %s337
      %v340 = vld [vmem:[%s320] sm:$0xff]
      %v341 = vld [vmem:[%s320 + $0x8] sm:$0xff]
      %v342 = vld [vmem:[%s320 + $0x10] sm:$0xff]
      %v343 = vld [vmem:[%s320 + $0x18] sm:$0xff]
      %v344 = vld [vmem:[%s320 + $0x20] sm:$0xff]
      %v345 = vld [vmem:[%s320 + $0x28] sm:$0xff]
      %v346 = vld [vmem:[%s320 + $0x30] sm:$0xff]
      %v347 = vld [vmem:[%s320 + $0x38] sm:$0xff]
      %v348 = vld [vmem:[%s320 + $0x40] sm:$0xff]
      %v349 = vld [vmem:[%s320 + $0x48] sm:$0xff]
      %v350 = vld [vmem:[%s320 + $0x50] sm:$0xff]
      %v351 = vld [vmem:[%s320 + $0x58] sm:$0xff]
      %v352 = vld [vmem:[%s320 + $0x60] sm:$0xff]
      %v353 = vld [vmem:[%s320 + $0x68] sm:$0xff]
      %v354 = vld [vmem:[%s320 + $0x70] sm:$0xff]
      %v355 = vld [vmem:[%s320 + $0x78] sm:$0xff]
      %v356 = vld [vmem:[%s320 + $0x80] sm:$0xff]
      %v357 = vld [vmem:[%s320 + $0x88] sm:$0xff]
      %v358 = vld [vmem:[%s320 + $0x90] sm:$0xff]
      %v359 = vld [vmem:[%s320 + $0x98] sm:$0xff]
      %v360 = vld [vmem:[%s320 + $0xa0] sm:$0xff]
      %v361 = vld [vmem:[%s320 + $0xa8] sm:$0xff]
      %v362 = vld [vmem:[%s320 + $0xb0] sm:$0xff]
      %v363 = vld [vmem:[%s320 + $0xb8] sm:$0xff]
      %v364 = vld [vmem:[%s320 + $0xc0] sm:$0xff]
      %v365 = vld [vmem:[%s320 + $0xc8] sm:$0xff]
      %v366 = vld [vmem:[%s320 + $0xd0] sm:$0xff]
      %v367 = vld [vmem:[%s320 + $0xd8] sm:$0xff]
      %v368 = vld [vmem:[%s320 + $0xe0] sm:$0xff]
      %v369 = vld [vmem:[%s320 + $0xe8] sm:$0xff]
      %v370 = vld [vmem:[%s320 + $0xf0] sm:$0xff]
      %v371 = vld [vmem:[%s320 + $0xf8] sm:$0xff]
      %vm372 = vcmask 31744
      %373 = vst.msk [vmem:[#allocation2] sm:$0xff] %vm372, 0.0
      %374 = vst.msk [vmem:[#allocation2 + $0x8] sm:$0xff] %vm372, 0.0
      %vm375 = vcmask 25600
      %376 = vst.msk [vmem:[#allocation2 + $0x10] sm:$0x3] %vm375, 0.0
      %377 = vst.msk [vmem:[#allocation2 + $0x18] sm:$0xff] %vm372, 0.0
      %378 = vst.msk [vmem:[#allocation2 + $0x20] sm:$0xff] %vm372, 0.0
      %379 = vst.msk [vmem:[#allocation2 + $0x28] sm:$0x3] %vm375, 0.0
      %380 = vst.msk [vmem:[#allocation2 + $0x30] sm:$0xff] %vm372, 0.0
      %381 = vst.msk [vmem:[#allocation2 + $0x38] sm:$0xff] %vm372, 0.0
      %382 = vst.msk [vmem:[#allocation2 + $0x40] sm:$0x3] %vm375, 0.0
      %383 = vst.msk [vmem:[#allocation2 + $0x48] sm:$0xff] %vm372, 0.0
      %384 = vst.msk [vmem:[#allocation2 + $0x50] sm:$0xff] %vm372, 0.0
      %385 = vst.msk [vmem:[#allocation2 + $0x58] sm:$0x3] %vm375, 0.0
      %386 = vst.msk [vmem:[#allocation2 + $0x60] sm:$0xff] %vm372, 0.0
      %387 = vst.msk [vmem:[#allocation2 + $0x68] sm:$0xff] %vm372, 0.0
      %388 = vst.msk [vmem:[#allocation2 + $0x70] sm:$0x3] %vm375, 0.0
      %389 = vst.msk [vmem:[#allocation2 + $0x78] sm:$0xff] %vm372, 0.0
      %390 = vst.msk [vmem:[#allocation2 + $0x80] sm:$0xff] %vm372, 0.0
      %391 = vst.msk [vmem:[#allocation2 + $0x88] sm:$0x3] %vm375, 0.0
      %392 = vst.msk [vmem:[#allocation2 + $0x90] sm:$0xff] %vm372, 0.0
      %393 = vst.msk [vmem:[#allocation2 + $0x98] sm:$0xff] %vm372, 0.0
      %394 = vst.msk [vmem:[#allocation2 + $0xa0] sm:$0x3] %vm375, 0.0
      %395 = vst.msk [vmem:[#allocation2 + $0xa8] sm:$0xff] %vm372, 0.0
      %396 = vst.msk [vmem:[#allocation2 + $0xb0] sm:$0xff] %vm372, 0.0
      %397 = vst.msk [vmem:[#allocation2 + $0xb8] sm:$0x3] %vm375, 0.0
      %398 = vst.msk [vmem:[#allocation2 + $0xc0] sm:$0xff] %vm372, 0.0
      %399 = vst.msk [vmem:[#allocation2 + $0xc8] sm:$0xff] %vm372, 0.0
      %400 = vst.msk [vmem:[#allocation2 + $0xd0] sm:$0x3] %vm375, 0.0
      %401 = vst.msk [vmem:[#allocation2 + $0xd8] sm:$0xff] %vm372, 0.0
      %402 = vst.msk [vmem:[#allocation2 + $0xe0] sm:$0xff] %vm372, 0.0
      %403 = vst.msk [vmem:[#allocation2 + $0xe8] sm:$0x3] %vm375, 0.0
      %404 = vst.msk [vmem:[#allocation2 + $0xf0] sm:$0xff] %vm372, 0.0
      %405 = vst.msk [vmem:[#allocation2 + $0xf8] sm:$0xff] %vm372, 0.0
      %406 = vst.msk [vmem:[#allocation2 + $0x100] sm:$0x3] %vm375, 0.0
      %407 = vst.msk [vmem:[#allocation2 + $0x108] sm:$0xff] %vm372, 0.0
      %408 = vst.msk [vmem:[#allocation2 + $0x110] sm:$0xff] %vm372, 0.0
      %409 = vst.msk [vmem:[#allocation2 + $0x118] sm:$0x3] %vm375, 0.0
      %410 = vst.msk [vmem:[#allocation2 + $0x120] sm:$0xff] %vm372, 0.0
      %411 = vst.msk [vmem:[#allocation2 + $0x128] sm:$0xff] %vm372, 0.0
      %412 = vst.msk [vmem:[#allocation2 + $0x130] sm:$0x3] %vm375, 0.0
      %413 = vst.msk [vmem:[#allocation2 + $0x138] sm:$0xff] %vm372, 0.0
      %414 = vst.msk [vmem:[#allocation2 + $0x140] sm:$0xff] %vm372, 0.0
      %415 = vst.msk [vmem:[#allocation2 + $0x148] sm:$0x3] %vm375, 0.0
      %416 = vst.msk [vmem:[#allocation2 + $0x150] sm:$0xff] %vm372, 0.0
      %417 = vst.msk [vmem:[#allocation2 + $0x158] sm:$0xff] %vm372, 0.0
      %418 = vst.msk [vmem:[#allocation2 + $0x160] sm:$0x3] %vm375, 0.0
      %419 = vst.msk [vmem:[#allocation2 + $0x168] sm:$0xff] %vm372, 0.0
      %420 = vst.msk [vmem:[#allocation2 + $0x170] sm:$0xff] %vm372, 0.0
      %421 = vst.msk [vmem:[#allocation2 + $0x178] sm:$0x3] %vm375, 0.0
      %422 = vst.msk [vmem:[#allocation2 + $0x180] sm:$0xff] %vm372, 0.0
      %423 = vst.msk [vmem:[#allocation2 + $0x188] sm:$0xff] %vm372, 0.0
      %424 = vst.msk [vmem:[#allocation2 + $0x190] sm:$0x3] %vm375, 0.0
      %425 = vst.msk [vmem:[#allocation2 + $0x198] sm:$0xff] %vm372, 0.0
      %426 = vst.msk [vmem:[#allocation2 + $0x1a0] sm:$0xff] %vm372, 0.0
      %427 = vst.msk [vmem:[#allocation2 + $0x1a8] sm:$0x3] %vm375, 0.0
      %s428 = scalar_lea.vmem [#allocation2], 24
      %429 = vst.msk [vmem:[%s428 + $0x1] sm:$0xff] %vm372, %v340
      %430 = vst.msk [vmem:[%s428 + $0x9] sm:$0xff] %vm372, %v341
      %431 = vst.msk [vmem:[%s428 + $0x19] sm:$0xff] %vm372, %v342
      %432 = vst.msk [vmem:[%s428 + $0x21] sm:$0xff] %vm372, %v343
      %433 = vst.msk [vmem:[%s428 + $0x31] sm:$0xff] %vm372, %v344
      %434 = vst.msk [vmem:[%s428 + $0x39] sm:$0xff] %vm372, %v345
      %435 = vst.msk [vmem:[%s428 + $0x49] sm:$0xff] %vm372, %v346
      %436 = vst.msk [vmem:[%s428 + $0x51] sm:$0xff] %vm372, %v347
      %437 = vst.msk [vmem:[%s428 + $0x61] sm:$0xff] %vm372, %v348
      %438 = vst.msk [vmem:[%s428 + $0x69] sm:$0xff] %vm372, %v349
      %439 = vst.msk [vmem:[%s428 + $0x79] sm:$0xff] %vm372, %v350
      %440 = vst.msk [vmem:[%s428 + $0x81] sm:$0xff] %vm372, %v351
      %441 = vst.msk [vmem:[%s428 + $0x91] sm:$0xff] %vm372, %v352
      %442 = vst.msk [vmem:[%s428 + $0x99] sm:$0xff] %vm372, %v353
      %443 = vst.msk [vmem:[%s428 + $0xa9] sm:$0xff] %vm372, %v354
      %444 = vst.msk [vmem:[%s428 + $0xb1] sm:$0xff] %vm372, %v355
      %445 = vst.msk [vmem:[%s428 + $0xc1] sm:$0xff] %vm372, %v356
      %446 = vst.msk [vmem:[%s428 + $0xc9] sm:$0xff] %vm372, %v357
      %447 = vst.msk [vmem:[%s428 + $0xd9] sm:$0xff] %vm372, %v358
      %448 = vst.msk [vmem:[%s428 + $0xe1] sm:$0xff] %vm372, %v359
      %449 = vst.msk [vmem:[%s428 + $0xf1] sm:$0xff] %vm372, %v360
      %450 = vst.msk [vmem:[%s428 + $0xf9] sm:$0xff] %vm372, %v361
      %451 = vst.msk [vmem:[%s428 + $0x109] sm:$0xff] %vm372, %v362
      %452 = vst.msk [vmem:[%s428 + $0x111] sm:$0xff] %vm372, %v363
      %453 = vst.msk [vmem:[%s428 + $0x121] sm:$0xff] %vm372, %v364
      %454 = vst.msk [vmem:[%s428 + $0x129] sm:$0xff] %vm372, %v365
      %455 = vst.msk [vmem:[%s428 + $0x139] sm:$0xff] %vm372, %v366
      %456 = vst.msk [vmem:[%s428 + $0x141] sm:$0xff] %vm372, %v367
      %457 = vst.msk [vmem:[%s428 + $0x151] sm:$0xff] %vm372, %v368
      %458 = vst.msk [vmem:[%s428 + $0x159] sm:$0xff] %vm372, %v369
      %459 = vst.msk [vmem:[%s428 + $0x169] sm:$0xff] %vm372, %v370
      %460 = vst.msk [vmem:[%s428 + $0x171] sm:$0xff] %vm372, %v371
      %v461 = vld [vmem:[#allocation2] sm:$0xff]
      %v462 = vld [vmem:[#allocation2 + $0x8] sm:$0xff]
      %v463 = vld [vmem:[#allocation2 + $0x18] sm:$0xff]
      %v464 = vld [vmem:[#allocation2 + $0x20] sm:$0xff]
      %v465 = vld [vmem:[#allocation2 + $0x30] sm:$0xff]
      %v466 = vld [vmem:[#allocation2 + $0x38] sm:$0xff]
      %v467 = vld [vmem:[#allocation2 + $0x48] sm:$0xff]
      %v468 = vld [vmem:[#allocation2 + $0x50] sm:$0xff]
      %v469 = vld [vmem:[#allocation2 + $0x60] sm:$0xff]
      %v470 = vld [vmem:[#allocation2 + $0x68] sm:$0xff]
      %v471 = vld [vmem:[#allocation2 + $0x78] sm:$0xff]
      %v472 = vld [vmem:[#allocation2 + $0x80] sm:$0xff]
      %v473 = vld [vmem:[#allocation2 + $0x90] sm:$0xff]
      %v474 = vld [vmem:[#allocation2 + $0x98] sm:$0xff]
      %v475 = vld [vmem:[#allocation2 + $0xa8] sm:$0xff]
      %v476 = vld [vmem:[#allocation2 + $0xb0] sm:$0xff]
      %v477 = vld [vmem:[#allocation2 + $0xc0] sm:$0xff]
      %v478 = vld [vmem:[#allocation2 + $0xc8] sm:$0xff]
      %v479 = vld [vmem:[#allocation2 + $0xd8] sm:$0xff]
      %v480 = vld [vmem:[#allocation2 + $0xe0] sm:$0xff]
      %v481 = vld [vmem:[#allocation2 + $0xf0] sm:$0xff]
      %v482 = vld [vmem:[#allocation2 + $0xf8] sm:$0xff]
      %v483 = vld [vmem:[#allocation2 + $0x108] sm:$0xff]
      %v484 = vld [vmem:[#allocation2 + $0x110] sm:$0xff]
      %v485 = vld [vmem:[#allocation2 + $0x120] sm:$0xff]
      %v486 = vld [vmem:[#allocation2 + $0x128] sm:$0xff]
      %v487 = vld [vmem:[#allocation2 + $0x138] sm:$0xff]
      %v488 = vld [vmem:[#allocation2 + $0x140] sm:$0xff]
      %v489 = vld [vmem:[#allocation2 + $0x150] sm:$0xff]
      %v490 = vld [vmem:[#allocation2 + $0x158] sm:$0xff]
      %v491 = vld [vmem:[#allocation2 + $0x168] sm:$0xff]
      %v492 = vld [vmem:[#allocation2 + $0x170] sm:$0xff]
      %v493 = vld [vmem:[#allocation2 + $0x1] sm:$0xff]
      %v494 = vld [vmem:[#allocation2 + $0x9] sm:$0xff]
      %v495 = vld [vmem:[#allocation2 + $0x19] sm:$0xff]
      %v496 = vld [vmem:[#allocation2 + $0x21] sm:$0xff]
      %v497 = vld [vmem:[#allocation2 + $0x31] sm:$0xff]
      %v498 = vld [vmem:[#allocation2 + $0x39] sm:$0xff]
      %v499 = vld [vmem:[#allocation2 + $0x49] sm:$0xff]
      %v500 = vld [vmem:[#allocation2 + $0x51] sm:$0xff]
      %v501 = vld [vmem:[#allocation2 + $0x61] sm:$0xff]
      %v502 = vld [vmem:[#allocation2 + $0x69] sm:$0xff]
      %v503 = vld [vmem:[#allocation2 + $0x79] sm:$0xff]
      %v504 = vld [vmem:[#allocation2 + $0x81] sm:$0xff]
      %v505 = vld [vmem:[#allocation2 + $0x91] sm:$0xff]
      %v506 = vld [vmem:[#allocation2 + $0x99] sm:$0xff]
      %v507 = vld [vmem:[#allocation2 + $0xa9] sm:$0xff]
      %v508 = vld [vmem:[#allocation2 + $0xb1] sm:$0xff]
      %v509 = vld [vmem:[#allocation2 + $0xc1] sm:$0xff]
      %v510 = vld [vmem:[#allocation2 + $0xc9] sm:$0xff]
      %v511 = vld [vmem:[#allocation2 + $0xd9] sm:$0xff]
      %v512 = vld [vmem:[#allocation2 + $0xe1] sm:$0xff]
      %v513 = vld [vmem:[#allocation2 + $0xf1] sm:$0xff]
      %v514 = vld [vmem:[#allocation2 + $0xf9] sm:$0xff]
      %v515 = vld [vmem:[#allocation2 + $0x109] sm:$0xff]
      %v516 = vld [vmem:[#allocation2 + $0x111] sm:$0xff]
      %v517 = vld [vmem:[#allocation2 + $0x121] sm:$0xff]
      %v518 = vld [vmem:[#allocation2 + $0x129] sm:$0xff]
      %v519 = vld [vmem:[#allocation2 + $0x139] sm:$0xff]
      %v520 = vld [vmem:[#allocation2 + $0x141] sm:$0xff]
      %v521 = vld [vmem:[#allocation2 + $0x151] sm:$0xff]
      %v522 = vld [vmem:[#allocation2 + $0x159] sm:$0xff]
      %v523 = vld [vmem:[#allocation2 + $0x169] sm:$0xff]
      %v524 = vld [vmem:[#allocation2 + $0x171] sm:$0xff]
      %v525 = vld [vmem:[#allocation2 + $0x2] sm:$0xff]
      %v526 = vld [vmem:[#allocation2 + $0xa] sm:$0xff]
      %v527 = vld [vmem:[#allocation2 + $0x1a] sm:$0xff]
      %v528 = vld [vmem:[#allocation2 + $0x22] sm:$0xff]
      %v529 = vld [vmem:[#allocation2 + $0x32] sm:$0xff]
      %v530 = vld [vmem:[#allocation2 + $0x3a] sm:$0xff]
      %v531 = vld [vmem:[#allocation2 + $0x4a] sm:$0xff]
      %v532 = vld [vmem:[#allocation2 + $0x52] sm:$0xff]
      %v533 = vld [vmem:[#allocation2 + $0x62] sm:$0xff]
      %v534 = vld [vmem:[#allocation2 + $0x6a] sm:$0xff]
      %v535 = vld [vmem:[#allocation2 + $0x7a] sm:$0xff]
      %v536 = vld [vmem:[#allocation2 + $0x82] sm:$0xff]
      %v537 = vld [vmem:[#allocation2 + $0x92] sm:$0xff]
      %v538 = vld [vmem:[#allocation2 + $0x9a] sm:$0xff]
      %v539 = vld [vmem:[#allocation2 + $0xaa] sm:$0xff]
      %v540 = vld [vmem:[#allocation2 + $0xb2] sm:$0xff]
      %v541 = vld [vmem:[#allocation2 + $0xc2] sm:$0xff]
      %v542 = vld [vmem:[#allocation2 + $0xca] sm:$0xff]
      %v543 = vld [vmem:[#allocation2 + $0xda] sm:$0xff]
      %v544 = vld [vmem:[#allocation2 + $0xe2] sm:$0xff]
      %v545 = vld [vmem:[#allocation2 + $0xf2] sm:$0xff]
      %v546 = vld [vmem:[#allocation2 + $0xfa] sm:$0xff]
      %v547 = vld [vmem:[#allocation2 + $0x10a] sm:$0xff]
      %v548 = vld [vmem:[#allocation2 + $0x112] sm:$0xff]
      %v549 = vld [vmem:[#allocation2 + $0x122] sm:$0xff]
      %v550 = vld [vmem:[#allocation2 + $0x12a] sm:$0xff]
      %v551 = vld [vmem:[#allocation2 + $0x13a] sm:$0xff]
      %v552 = vld [vmem:[#allocation2 + $0x142] sm:$0xff]
      %v553 = vld [vmem:[#allocation2 + $0x152] sm:$0xff]
      %v554 = vld [vmem:[#allocation2 + $0x15a] sm:$0xff]
      %v555 = vld [vmem:[#allocation2 + $0x16a] sm:$0xff]
      %v556 = vld [vmem:[#allocation2 + $0x172] sm:$0xff]
      %v557 = vld [vmem:[%s428] sm:$0xff]
      %v558 = vld [vmem:[%s428 + $0x8] sm:$0xff]
      %v559 = vld [vmem:[%s428 + $0x18] sm:$0xff]
      %v560 = vld [vmem:[%s428 + $0x20] sm:$0xff]
      %v561 = vld [vmem:[%s428 + $0x30] sm:$0xff]
      %v562 = vld [vmem:[%s428 + $0x38] sm:$0xff]
      %v563 = vld [vmem:[%s428 + $0x48] sm:$0xff]
      %v564 = vld [vmem:[%s428 + $0x50] sm:$0xff]
      %v565 = vld [vmem:[%s428 + $0x60] sm:$0xff]
      %v566 = vld [vmem:[%s428 + $0x68] sm:$0xff]
      %v567 = vld [vmem:[%s428 + $0x78] sm:$0xff]
      %v568 = vld [vmem:[%s428 + $0x80] sm:$0xff]
      %v569 = vld [vmem:[%s428 + $0x90] sm:$0xff]
      %v570 = vld [vmem:[%s428 + $0x98] sm:$0xff]
      %v571 = vld [vmem:[%s428 + $0xa8] sm:$0xff]
      %v572 = vld [vmem:[%s428 + $0xb0] sm:$0xff]
      %v573 = vld [vmem:[%s428 + $0xc0] sm:$0xff]
      %v574 = vld [vmem:[%s428 + $0xc8] sm:$0xff]
      %v575 = vld [vmem:[%s428 + $0xd8] sm:$0xff]
      %v576 = vld [vmem:[%s428 + $0xe0] sm:$0xff]
      %v577 = vld [vmem:[%s428 + $0xf0] sm:$0xff]
      %v578 = vld [vmem:[%s428 + $0xf8] sm:$0xff]
      %v579 = vld [vmem:[%s428 + $0x108] sm:$0xff]
      %v580 = vld [vmem:[%s428 + $0x110] sm:$0xff]
      %v581 = vld [vmem:[%s428 + $0x120] sm:$0xff]
      %v582 = vld [vmem:[%s428 + $0x128] sm:$0xff]
      %v583 = vld [vmem:[%s428 + $0x138] sm:$0xff]
      %v584 = vld [vmem:[%s428 + $0x140] sm:$0xff]
      %v585 = vld [vmem:[%s428 + $0x150] sm:$0xff]
      %v586 = vld [vmem:[%s428 + $0x158] sm:$0xff]
      %v587 = vld [vmem:[%s428 + $0x168] sm:$0xff]
      %v588 = vld [vmem:[%s428 + $0x170] sm:$0xff]
      %v589 = vld [vmem:[%s428 + $0x1] sm:$0xff]
      %v590 = vld [vmem:[%s428 + $0x9] sm:$0xff]
      %v591 = vld [vmem:[%s428 + $0x19] sm:$0xff]
      %v592 = vld [vmem:[%s428 + $0x21] sm:$0xff]
      %v593 = vld [vmem:[%s428 + $0x31] sm:$0xff]
      %v594 = vld [vmem:[%s428 + $0x39] sm:$0xff]
      %v595 = vld [vmem:[%s428 + $0x49] sm:$0xff]
      %v596 = vld [vmem:[%s428 + $0x51] sm:$0xff]
      %v597 = vld [vmem:[%s428 + $0x61] sm:$0xff]
      %v598 = vld [vmem:[%s428 + $0x69] sm:$0xff]
      %v599 = vld [vmem:[%s428 + $0x79] sm:$0xff]
      %v600 = vld [vmem:[%s428 + $0x81] sm:$0xff]
      %v601 = vld [vmem:[%s428 + $0x91] sm:$0xff]
      %v602 = vld [vmem:[%s428 + $0x99] sm:$0xff]
      %v603 = vld [vmem:[%s428 + $0xa9] sm:$0xff]
      %v604 = vld [vmem:[%s428 + $0xb1] sm:$0xff]
      %v605 = vld [vmem:[%s428 + $0xc1] sm:$0xff]
      %v606 = vld [vmem:[%s428 + $0xc9] sm:$0xff]
      %v607 = vld [vmem:[%s428 + $0xd9] sm:$0xff]
      %v608 = vld [vmem:[%s428 + $0xe1] sm:$0xff]
      %v609 = vld [vmem:[%s428 + $0xf1] sm:$0xff]
      %v610 = vld [vmem:[%s428 + $0xf9] sm:$0xff]
      %v611 = vld [vmem:[%s428 + $0x109] sm:$0xff]
      %v612 = vld [vmem:[%s428 + $0x111] sm:$0xff]
      %v613 = vld [vmem:[%s428 + $0x121] sm:$0xff]
      %v614 = vld [vmem:[%s428 + $0x129] sm:$0xff]
      %v615 = vld [vmem:[%s428 + $0x139] sm:$0xff]
      %v616 = vld [vmem:[%s428 + $0x141] sm:$0xff]
      %v617 = vld [vmem:[%s428 + $0x151] sm:$0xff]
      %v618 = vld [vmem:[%s428 + $0x159] sm:$0xff]
      %v619 = vld [vmem:[%s428 + $0x169] sm:$0xff]
      %v620 = vld [vmem:[%s428 + $0x171] sm:$0xff]
      %v621 = vld [vmem:[%s428 + $0x2] sm:$0xff]
      %v622 = vld [vmem:[%s428 + $0xa] sm:$0xff]
      %v623 = vld [vmem:[%s428 + $0x1a] sm:$0xff]
      %v624 = vld [vmem:[%s428 + $0x22] sm:$0xff]
      %v625 = vld [vmem:[%s428 + $0x32] sm:$0xff]
      %v626 = vld [vmem:[%s428 + $0x3a] sm:$0xff]
      %v627 = vld [vmem:[%s428 + $0x4a] sm:$0xff]
      %v628 = vld [vmem:[%s428 + $0x52] sm:$0xff]
      %v629 = vld [vmem:[%s428 + $0x62] sm:$0xff]
      %v630 = vld [vmem:[%s428 + $0x6a] sm:$0xff]
      %v631 = vld [vmem:[%s428 + $0x7a] sm:$0xff]
      %v632 = vld [vmem:[%s428 + $0x82] sm:$0xff]
      %v633 = vld [vmem:[%s428 + $0x92] sm:$0xff]
      %v634 = vld [vmem:[%s428 + $0x9a] sm:$0xff]
      %v635 = vld [vmem:[%s428 + $0xaa] sm:$0xff]
      %v636 = vld [vmem:[%s428 + $0xb2] sm:$0xff]
      %v637 = vld [vmem:[%s428 + $0xc2] sm:$0xff]
      %v638 = vld [vmem:[%s428 + $0xca] sm:$0xff]
      %v639 = vld [vmem:[%s428 + $0xda] sm:$0xff]
      %v640 = vld [vmem:[%s428 + $0xe2] sm:$0xff]
      %v641 = vld [vmem:[%s428 + $0xf2] sm:$0xff]
      %v642 = vld [vmem:[%s428 + $0xfa] sm:$0xff]
      %v643 = vld [vmem:[%s428 + $0x10a] sm:$0xff]
      %v644 = vld [vmem:[%s428 + $0x112] sm:$0xff]
      %v645 = vld [vmem:[%s428 + $0x122] sm:$0xff]
      %v646 = vld [vmem:[%s428 + $0x12a] sm:$0xff]
      %v647 = vld [vmem:[%s428 + $0x13a] sm:$0xff]
      %v648 = vld [vmem:[%s428 + $0x142] sm:$0xff]
      %v649 = vld [vmem:[%s428 + $0x152] sm:$0xff]
      %v650 = vld [vmem:[%s428 + $0x15a] sm:$0xff]
      %v651 = vld [vmem:[%s428 + $0x16a] sm:$0xff]
      %v652 = vld [vmem:[%s428 + $0x172] sm:$0xff]
      %s653 = scalar_lea.vmem [#allocation2], 48
      %v654 = vld [vmem:[%s653] sm:$0xff]
      %v655 = vld [vmem:[%s653 + $0x8] sm:$0xff]
      %v656 = vld [vmem:[%s653 + $0x18] sm:$0xff]
      %v657 = vld [vmem:[%s653 + $0x20] sm:$0xff]
      %v658 = vld [vmem:[%s653 + $0x30] sm:$0xff]
      %v659 = vld [vmem:[%s653 + $0x38] sm:$0xff]
      %v660 = vld [vmem:[%s653 + $0x48] sm:$0xff]
      %v661 = vld [vmem:[%s653 + $0x50] sm:$0xff]
      %v662 = vld [vmem:[%s653 + $0x60] sm:$0xff]
      %v663 = vld [vmem:[%s653 + $0x68] sm:$0xff]
      %v664 = vld [vmem:[%s653 + $0x78] sm:$0xff]
      %v665 = vld [vmem:[%s653 + $0x80] sm:$0xff]
      %v666 = vld [vmem:[%s653 + $0x90] sm:$0xff]
      %v667 = vld [vmem:[%s653 + $0x98] sm:$0xff]
      %v668 = vld [vmem:[%s653 + $0xa8] sm:$0xff]
      %v669 = vld [vmem:[%s653 + $0xb0] sm:$0xff]
      %v670 = vld [vmem:[%s653 + $0xc0] sm:$0xff]
      %v671 = vld [vmem:[%s653 + $0xc8] sm:$0xff]
      %v672 = vld [vmem:[%s653 + $0xd8] sm:$0xff]
      %v673 = vld [vmem:[%s653 + $0xe0] sm:$0xff]
      %v674 = vld [vmem:[%s653 + $0xf0] sm:$0xff]
      %v675 = vld [vmem:[%s653 + $0xf8] sm:$0xff]
      %v676 = vld [vmem:[%s653 + $0x108] sm:$0xff]
      %v677 = vld [vmem:[%s653 + $0x110] sm:$0xff]
      %v678 = vld [vmem:[%s653 + $0x120] sm:$0xff]
      %v679 = vld [vmem:[%s653 + $0x128] sm:$0xff]
      %v680 = vld [vmem:[%s653 + $0x138] sm:$0xff]
      %v681 = vld [vmem:[%s653 + $0x140] sm:$0xff]
      %v682 = vld [vmem:[%s653 + $0x150] sm:$0xff]
      %v683 = vld [vmem:[%s653 + $0x158] sm:$0xff]
      %v684 = vld [vmem:[%s653 + $0x168] sm:$0xff]
      %v685 = vld [vmem:[%s653 + $0x170] sm:$0xff]
      %v686 = vld [vmem:[%s653 + $0x1] sm:$0xff]
      %v687 = vld [vmem:[%s653 + $0x9] sm:$0xff]
      %v688 = vld [vmem:[%s653 + $0x19] sm:$0xff]
      %v689 = vld [vmem:[%s653 + $0x21] sm:$0xff]
      %v690 = vld [vmem:[%s653 + $0x31] sm:$0xff]
      %v691 = vld [vmem:[%s653 + $0x39] sm:$0xff]
      %v692 = vld [vmem:[%s653 + $0x49] sm:$0xff]
      %v693 = vld [vmem:[%s653 + $0x51] sm:$0xff]
      %v694 = vld [vmem:[%s653 + $0x61] sm:$0xff]
      %v695 = vld [vmem:[%s653 + $0x69] sm:$0xff]
      %v696 = vld [vmem:[%s653 + $0x79] sm:$0xff]
      %v697 = vld [vmem:[%s653 + $0x81] sm:$0xff]
      %v698 = vld [vmem:[%s653 + $0x91] sm:$0xff]
      %v699 = vld [vmem:[%s653 + $0x99] sm:$0xff]
      %v700 = vld [vmem:[%s653 + $0xa9] sm:$0xff]
      %v701 = vld [vmem:[%s653 + $0xb1] sm:$0xff]
      %v702 = vld [vmem:[%s653 + $0xc1] sm:$0xff]
      %v703 = vld [vmem:[%s653 + $0xc9] sm:$0xff]
      %v704 = vld [vmem:[%s653 + $0xd9] sm:$0xff]
      %v705 = vld [vmem:[%s653 + $0xe1] sm:$0xff]
      %v706 = vld [vmem:[%s653 + $0xf1] sm:$0xff]
      %v707 = vld [vmem:[%s653 + $0xf9] sm:$0xff]
      %v708 = vld [vmem:[%s653 + $0x109] sm:$0xff]
      %v709 = vld [vmem:[%s653 + $0x111] sm:$0xff]
      %v710 = vld [vmem:[%s653 + $0x121] sm:$0xff]
      %v711 = vld [vmem:[%s653 + $0x129] sm:$0xff]
      %v712 = vld [vmem:[%s653 + $0x139] sm:$0xff]
      %v713 = vld [vmem:[%s653 + $0x141] sm:$0xff]
      %v714 = vld [vmem:[%s653 + $0x151] sm:$0xff]
      %v715 = vld [vmem:[%s653 + $0x159] sm:$0xff]
      %v716 = vld [vmem:[%s653 + $0x169] sm:$0xff]
      %v717 = vld [vmem:[%s653 + $0x171] sm:$0xff]
      %v718 = vld [vmem:[%s653 + $0x2] sm:$0xff]
      %v719 = vld [vmem:[%s653 + $0xa] sm:$0xff]
      %v720 = vld [vmem:[%s653 + $0x1a] sm:$0xff]
      %v721 = vld [vmem:[%s653 + $0x22] sm:$0xff]
      %v722 = vld [vmem:[%s653 + $0x32] sm:$0xff]
      %v723 = vld [vmem:[%s653 + $0x3a] sm:$0xff]
      %v724 = vld [vmem:[%s653 + $0x4a] sm:$0xff]
      %v725 = vld [vmem:[%s653 + $0x52] sm:$0xff]
      %v726 = vld [vmem:[%s653 + $0x62] sm:$0xff]
      %v727 = vld [vmem:[%s653 + $0x6a] sm:$0xff]
      %v728 = vld [vmem:[%s653 + $0x7a] sm:$0xff]
      %v729 = vld [vmem:[%s653 + $0x82] sm:$0xff]
      %v730 = vld [vmem:[%s653 + $0x92] sm:$0xff]
      %v731 = vld [vmem:[%s653 + $0x9a] sm:$0xff]
      %v732 = vld [vmem:[%s653 + $0xaa] sm:$0xff]
      %v733 = vld [vmem:[%s653 + $0xb2] sm:$0xff]
      %v734 = vld [vmem:[%s653 + $0xc2] sm:$0xff]
      %v735 = vld [vmem:[%s653 + $0xca] sm:$0xff]
      %v736 = vld [vmem:[%s653 + $0xda] sm:$0xff]
      %v737 = vld [vmem:[%s653 + $0xe2] sm:$0xff]
      %v738 = vld [vmem:[%s653 + $0xf2] sm:$0xff]
      %v739 = vld [vmem:[%s653 + $0xfa] sm:$0xff]
      %v740 = vld [vmem:[%s653 + $0x10a] sm:$0xff]
      %v741 = vld [vmem:[%s653 + $0x112] sm:$0xff]
      %v742 = vld [vmem:[%s653 + $0x122] sm:$0xff]
      %v743 = vld [vmem:[%s653 + $0x12a] sm:$0xff]
      %v744 = vld [vmem:[%s653 + $0x13a] sm:$0xff]
      %v745 = vld [vmem:[%s653 + $0x142] sm:$0xff]
      %v746 = vld [vmem:[%s653 + $0x152] sm:$0xff]
      %v747 = vld [vmem:[%s653 + $0x15a] sm:$0xff]
      %v748 = vld [vmem:[%s653 + $0x16a] sm:$0xff]
      %v749 = vld [vmem:[%s653 + $0x172] sm:$0xff]
      %782 = vrot.lane.b32.xlu0 %v493, 4
      %v783 = vpop.permute.xlu0 %782
      %784 = vrot.lane.b32.xlu0 %v494, 4
      %v785 = vpop.permute.xlu0 %784
      %786 = vrot.lane.b32.xlu0 %v495, 4
      %v787 = vpop.permute.xlu0 %786
      %788 = vrot.lane.b32.xlu0 %v496, 4
      %v789 = vpop.permute.xlu0 %788
      %790 = vrot.lane.b32.xlu0 %v497, 4
      %v791 = vpop.permute.xlu0 %790
      %792 = vrot.lane.b32.xlu0 %v498, 4
      %v793 = vpop.permute.xlu0 %792
      %794 = vrot.lane.b32.xlu0 %v499, 4
      %v795 = vpop.permute.xlu0 %794
      %796 = vrot.lane.b32.xlu0 %v500, 4
      %v797 = vpop.permute.xlu0 %796
      %798 = vrot.lane.b32.xlu0 %v501, 4
      %v799 = vpop.permute.xlu0 %798
      %800 = vrot.lane.b32.xlu0 %v502, 4
      %v801 = vpop.permute.xlu0 %800
      %802 = vrot.lane.b32.xlu0 %v503, 4
      %v803 = vpop.permute.xlu0 %802
      %804 = vrot.lane.b32.xlu0 %v504, 4
      %v805 = vpop.permute.xlu0 %804
      %806 = vrot.lane.b32.xlu0 %v505, 4
      %v807 = vpop.permute.xlu0 %806
      %808 = vrot.lane.b32.xlu0 %v506, 4
      %v809 = vpop.permute.xlu0 %808
      %810 = vrot.lane.b32.xlu0 %v507, 4
      %v811 = vpop.permute.xlu0 %810
      %812 = vrot.lane.b32.xlu0 %v508, 4
      %v813 = vpop.permute.xlu0 %812
      %814 = vrot.lane.b32.xlu0 %v509, 4
      %v815 = vpop.permute.xlu0 %814
      %816 = vrot.lane.b32.xlu0 %v510, 4
      %v817 = vpop.permute.xlu0 %816
      %818 = vrot.lane.b32.xlu0 %v511, 4
      %v819 = vpop.permute.xlu0 %818
      %820 = vrot.lane.b32.xlu0 %v512, 4
      %v821 = vpop.permute.xlu0 %820
      %822 = vrot.lane.b32.xlu0 %v513, 4
      %v823 = vpop.permute.xlu0 %822
      %824 = vrot.lane.b32.xlu0 %v514, 4
      %v825 = vpop.permute.xlu0 %824
      %826 = vrot.lane.b32.xlu0 %v515, 4
      %v827 = vpop.permute.xlu0 %826
      %828 = vrot.lane.b32.xlu0 %v516, 4
      %v829 = vpop.permute.xlu0 %828
      %830 = vrot.lane.b32.xlu0 %v517, 4
      %v831 = vpop.permute.xlu0 %830
      %832 = vrot.lane.b32.xlu0 %v518, 4
      %v833 = vpop.permute.xlu0 %832
      %834 = vrot.lane.b32.xlu0 %v519, 4
      %v835 = vpop.permute.xlu0 %834
      %836 = vrot.lane.b32.xlu0 %v520, 4
      %v837 = vpop.permute.xlu0 %836
      %838 = vrot.lane.b32.xlu0 %v521, 4
      %v839 = vpop.permute.xlu0 %838
      %840 = vrot.lane.b32.xlu0 %v522, 4
      %v841 = vpop.permute.xlu0 %840
      %842 = vrot.lane.b32.xlu0 %v523, 4
      %v843 = vpop.permute.xlu0 %842
      %844 = vrot.lane.b32.xlu0 %v524, 4
      %v845 = vpop.permute.xlu0 %844
      %910 = vrot.lane.b32.xlu0 %v525, 8
      %v911 = vpop.permute.xlu0 %910
      %912 = vrot.lane.b32.xlu0 %v526, 8
      %v913 = vpop.permute.xlu0 %912
      %914 = vrot.lane.b32.xlu0 %v527, 8
      %v915 = vpop.permute.xlu0 %914
      %916 = vrot.lane.b32.xlu0 %v528, 8
      %v917 = vpop.permute.xlu0 %916
      %918 = vrot.lane.b32.xlu0 %v529, 8
      %v919 = vpop.permute.xlu0 %918
      %920 = vrot.lane.b32.xlu0 %v530, 8
      %v921 = vpop.permute.xlu0 %920
      %922 = vrot.lane.b32.xlu0 %v531, 8
      %v923 = vpop.permute.xlu0 %922
      %924 = vrot.lane.b32.xlu0 %v532, 8
      %v925 = vpop.permute.xlu0 %924
      %926 = vrot.lane.b32.xlu0 %v533, 8
      %v927 = vpop.permute.xlu0 %926
      %928 = vrot.lane.b32.xlu0 %v534, 8
      %v929 = vpop.permute.xlu0 %928
      %930 = vrot.lane.b32.xlu0 %v535, 8
      %v931 = vpop.permute.xlu0 %930
      %932 = vrot.lane.b32.xlu0 %v536, 8
      %v933 = vpop.permute.xlu0 %932
      %934 = vrot.lane.b32.xlu0 %v537, 8
      %v935 = vpop.permute.xlu0 %934
      %936 = vrot.lane.b32.xlu0 %v538, 8
      %v937 = vpop.permute.xlu0 %936
      %938 = vrot.lane.b32.xlu0 %v539, 8
      %v939 = vpop.permute.xlu0 %938
      %940 = vrot.lane.b32.xlu0 %v540, 8
      %v941 = vpop.permute.xlu0 %940
      %942 = vrot.lane.b32.xlu0 %v541, 8
      %v943 = vpop.permute.xlu0 %942
      %944 = vrot.lane.b32.xlu0 %v542, 8
      %v945 = vpop.permute.xlu0 %944
      %946 = vrot.lane.b32.xlu0 %v543, 8
      %v947 = vpop.permute.xlu0 %946
      %948 = vrot.lane.b32.xlu0 %v544, 8
      %v949 = vpop.permute.xlu0 %948
      %950 = vrot.lane.b32.xlu0 %v545, 8
      %v951 = vpop.permute.xlu0 %950
      %952 = vrot.lane.b32.xlu0 %v546, 8
      %v953 = vpop.permute.xlu0 %952
      %954 = vrot.lane.b32.xlu0 %v547, 8
      %v955 = vpop.permute.xlu0 %954
      %956 = vrot.lane.b32.xlu0 %v548, 8
      %v957 = vpop.permute.xlu0 %956
      %958 = vrot.lane.b32.xlu0 %v549, 8
      %v959 = vpop.permute.xlu0 %958
      %960 = vrot.lane.b32.xlu0 %v550, 8
      %v961 = vpop.permute.xlu0 %960
      %962 = vrot.lane.b32.xlu0 %v551, 8
      %v963 = vpop.permute.xlu0 %962
      %964 = vrot.lane.b32.xlu0 %v552, 8
      %v965 = vpop.permute.xlu0 %964
      %966 = vrot.lane.b32.xlu0 %v553, 8
      %v967 = vpop.permute.xlu0 %966
      %968 = vrot.lane.b32.xlu0 %v554, 8
      %v969 = vpop.permute.xlu0 %968
      %970 = vrot.lane.b32.xlu0 %v555, 8
      %v971 = vpop.permute.xlu0 %970
      %972 = vrot.lane.b32.xlu0 %v556, 8
      %v973 = vpop.permute.xlu0 %972
      %1038 = vrot.lane.b32.xlu0 %v557, 12
      %v1039 = vpop.permute.xlu0 %1038
      %1040 = vrot.lane.b32.xlu0 %v558, 12
      %v1041 = vpop.permute.xlu0 %1040
      %1042 = vrot.lane.b32.xlu0 %v559, 12
      %v1043 = vpop.permute.xlu0 %1042
      %1044 = vrot.lane.b32.xlu0 %v560, 12
      %v1045 = vpop.permute.xlu0 %1044
      %1046 = vrot.lane.b32.xlu0 %v561, 12
      %v1047 = vpop.permute.xlu0 %1046
      %1048 = vrot.lane.b32.xlu0 %v562, 12
      %v1049 = vpop.permute.xlu0 %1048
      %1050 = vrot.lane.b32.xlu0 %v563, 12
      %v1051 = vpop.permute.xlu0 %1050
      %1052 = vrot.lane.b32.xlu0 %v564, 12
      %v1053 = vpop.permute.xlu0 %1052
      %1054 = vrot.lane.b32.xlu0 %v565, 12
      %v1055 = vpop.permute.xlu0 %1054
      %1056 = vrot.lane.b32.xlu0 %v566, 12
      %v1057 = vpop.permute.xlu0 %1056
      %1058 = vrot.lane.b32.xlu0 %v567, 12
      %v1059 = vpop.permute.xlu0 %1058
      %1060 = vrot.lane.b32.xlu0 %v568, 12
      %v1061 = vpop.permute.xlu0 %1060
      %1062 = vrot.lane.b32.xlu0 %v569, 12
      %v1063 = vpop.permute.xlu0 %1062
      %1064 = vrot.lane.b32.xlu0 %v570, 12
      %v1065 = vpop.permute.xlu0 %1064
      %1066 = vrot.lane.b32.xlu0 %v571, 12
      %v1067 = vpop.permute.xlu0 %1066
      %1068 = vrot.lane.b32.xlu0 %v572, 12
      %v1069 = vpop.permute.xlu0 %1068
      %1070 = vrot.lane.b32.xlu0 %v573, 12
      %v1071 = vpop.permute.xlu0 %1070
      %1072 = vrot.lane.b32.xlu0 %v574, 12
      %v1073 = vpop.permute.xlu0 %1072
      %1074 = vrot.lane.b32.xlu0 %v575, 12
      %v1075 = vpop.permute.xlu0 %1074
      %1076 = vrot.lane.b32.xlu0 %v576, 12
      %v1077 = vpop.permute.xlu0 %1076
      %1078 = vrot.lane.b32.xlu0 %v577, 12
      %v1079 = vpop.permute.xlu0 %1078
      %1080 = vrot.lane.b32.xlu0 %v578, 12
      %v1081 = vpop.permute.xlu0 %1080
      %1082 = vrot.lane.b32.xlu0 %v579, 12
      %v1083 = vpop.permute.xlu0 %1082
      %1084 = vrot.lane.b32.xlu0 %v580, 12
      %v1085 = vpop.permute.xlu0 %1084
      %1086 = vrot.lane.b32.xlu0 %v581, 12
      %v1087 = vpop.permute.xlu0 %1086
      %1088 = vrot.lane.b32.xlu0 %v582, 12
      %v1089 = vpop.permute.xlu0 %1088
      %1090 = vrot.lane.b32.xlu0 %v583, 12
      %v1091 = vpop.permute.xlu0 %1090
      %1092 = vrot.lane.b32.xlu0 %v584, 12
      %v1093 = vpop.permute.xlu0 %1092
      %1094 = vrot.lane.b32.xlu0 %v585, 12
      %v1095 = vpop.permute.xlu0 %1094
      %1096 = vrot.lane.b32.xlu0 %v586, 12
      %v1097 = vpop.permute.xlu0 %1096
      %1098 = vrot.lane.b32.xlu0 %v587, 12
      %v1099 = vpop.permute.xlu0 %1098
      %1100 = vrot.lane.b32.xlu0 %v588, 12
      %v1101 = vpop.permute.xlu0 %1100
      %1166 = vrot.lane.b32.xlu0 %v589, 16
      %v1167 = vpop.permute.xlu0 %1166
      %1168 = vrot.lane.b32.xlu0 %v590, 16
      %v1169 = vpop.permute.xlu0 %1168
      %1170 = vrot.lane.b32.xlu0 %v591, 16
      %v1171 = vpop.permute.xlu0 %1170
      %1172 = vrot.lane.b32.xlu0 %v592, 16
      %v1173 = vpop.permute.xlu0 %1172
      %1174 = vrot.lane.b32.xlu0 %v593, 16
      %v1175 = vpop.permute.xlu0 %1174
      %1176 = vrot.lane.b32.xlu0 %v594, 16
      %v1177 = vpop.permute.xlu0 %1176
      %1178 = vrot.lane.b32.xlu0 %v595, 16
      %v1179 = vpop.permute.xlu0 %1178
      %1180 = vrot.lane.b32.xlu0 %v596, 16
      %v1181 = vpop.permute.xlu0 %1180
      %1182 = vrot.lane.b32.xlu0 %v597, 16
      %v1183 = vpop.permute.xlu0 %1182
      %1184 = vrot.lane.b32.xlu0 %v598, 16
      %v1185 = vpop.permute.xlu0 %1184
      %1186 = vrot.lane.b32.xlu0 %v599, 16
      %v1187 = vpop.permute.xlu0 %1186
      %1188 = vrot.lane.b32.xlu0 %v600, 16
      %v1189 = vpop.permute.xlu0 %1188
      %1190 = vrot.lane.b32.xlu0 %v601, 16
      %v1191 = vpop.permute.xlu0 %1190
      %1192 = vrot.lane.b32.xlu0 %v602, 16
      %v1193 = vpop.permute.xlu0 %1192
      %1194 = vrot.lane.b32.xlu0 %v603, 16
      %v1195 = vpop.permute.xlu0 %1194
      %1196 = vrot.lane.b32.xlu0 %v604, 16
      %v1197 = vpop.permute.xlu0 %1196
      %1198 = vrot.lane.b32.xlu0 %v605, 16
      %v1199 = vpop.permute.xlu0 %1198
      %1200 = vrot.lane.b32.xlu0 %v606, 16
      %v1201 = vpop.permute.xlu0 %1200
      %1202 = vrot.lane.b32.xlu0 %v607, 16
      %v1203 = vpop.permute.xlu0 %1202
      %1204 = vrot.lane.b32.xlu0 %v608, 16
      %v1205 = vpop.permute.xlu0 %1204
      %1206 = vrot.lane.b32.xlu0 %v609, 16
      %v1207 = vpop.permute.xlu0 %1206
      %1208 = vrot.lane.b32.xlu0 %v610, 16
      %v1209 = vpop.permute.xlu0 %1208
      %1210 = vrot.lane.b32.xlu0 %v611, 16
      %v1211 = vpop.permute.xlu0 %1210
      %1212 = vrot.lane.b32.xlu0 %v612, 16
      %v1213 = vpop.permute.xlu0 %1212
      %1214 = vrot.lane.b32.xlu0 %v613, 16
      %v1215 = vpop.permute.xlu0 %1214
      %1216 = vrot.lane.b32.xlu0 %v614, 16
      %v1217 = vpop.permute.xlu0 %1216
      %1218 = vrot.lane.b32.xlu0 %v615, 16
      %v1219 = vpop.permute.xlu0 %1218
      %1220 = vrot.lane.b32.xlu0 %v616, 16
      %v1221 = vpop.permute.xlu0 %1220
      %1222 = vrot.lane.b32.xlu0 %v617, 16
      %v1223 = vpop.permute.xlu0 %1222
      %1224 = vrot.lane.b32.xlu0 %v618, 16
      %v1225 = vpop.permute.xlu0 %1224
      %1226 = vrot.lane.b32.xlu0 %v619, 16
      %v1227 = vpop.permute.xlu0 %1226
      %1228 = vrot.lane.b32.xlu0 %v620, 16
      %v1229 = vpop.permute.xlu0 %1228
      %1294 = vrot.lane.b32.xlu0 %v621, 20
      %v1295 = vpop.permute.xlu0 %1294
      %1296 = vrot.lane.b32.xlu0 %v622, 20
      %v1297 = vpop.permute.xlu0 %1296
      %1298 = vrot.lane.b32.xlu0 %v623, 20
      %v1299 = vpop.permute.xlu0 %1298
      %1300 = vrot.lane.b32.xlu0 %v624, 20
      %v1301 = vpop.permute.xlu0 %1300
      %1302 = vrot.lane.b32.xlu0 %v625, 20
      %v1303 = vpop.permute.xlu0 %1302
      %1304 = vrot.lane.b32.xlu0 %v626, 20
      %v1305 = vpop.permute.xlu0 %1304
      %1306 = vrot.lane.b32.xlu0 %v627, 20
      %v1307 = vpop.permute.xlu0 %1306
      %1308 = vrot.lane.b32.xlu0 %v628, 20
      %v1309 = vpop.permute.xlu0 %1308
      %1310 = vrot.lane.b32.xlu0 %v629, 20
      %v1311 = vpop.permute.xlu0 %1310
      %1312 = vrot.lane.b32.xlu0 %v630, 20
      %v1313 = vpop.permute.xlu0 %1312
      %1314 = vrot.lane.b32.xlu0 %v631, 20
      %v1315 = vpop.permute.xlu0 %1314
      %1316 = vrot.lane.b32.xlu0 %v632, 20
      %v1317 = vpop.permute.xlu0 %1316
      %1318 = vrot.lane.b32.xlu0 %v633, 20
      %v1319 = vpop.permute.xlu0 %1318
      %1320 = vrot.lane.b32.xlu0 %v634, 20
      %v1321 = vpop.permute.xlu0 %1320
      %1322 = vrot.lane.b32.xlu0 %v635, 20
      %v1323 = vpop.permute.xlu0 %1322
      %1324 = vrot.lane.b32.xlu0 %v636, 20
      %v1325 = vpop.permute.xlu0 %1324
      %1326 = vrot.lane.b32.xlu0 %v637, 20
      %v1327 = vpop.permute.xlu0 %1326
      %1328 = vrot.lane.b32.xlu0 %v638, 20
      %v1329 = vpop.permute.xlu0 %1328
      %1330 = vrot.lane.b32.xlu0 %v639, 20
      %v1331 = vpop.permute.xlu0 %1330
      %1332 = vrot.lane.b32.xlu0 %v640, 20
      %v1333 = vpop.permute.xlu0 %1332
      %1334 = vrot.lane.b32.xlu0 %v641, 20
      %v1335 = vpop.permute.xlu0 %1334
      %1336 = vrot.lane.b32.xlu0 %v642, 20
      %v1337 = vpop.permute.xlu0 %1336
      %1338 = vrot.lane.b32.xlu0 %v643, 20
      %v1339 = vpop.permute.xlu0 %1338
      %1340 = vrot.lane.b32.xlu0 %v644, 20
      %v1341 = vpop.permute.xlu0 %1340
      %1342 = vrot.lane.b32.xlu0 %v645, 20
      %v1343 = vpop.permute.xlu0 %1342
      %1344 = vrot.lane.b32.xlu0 %v646, 20
      %v1345 = vpop.permute.xlu0 %1344
      %1346 = vrot.lane.b32.xlu0 %v647, 20
      %v1347 = vpop.permute.xlu0 %1346
      %1348 = vrot.lane.b32.xlu0 %v648, 20
      %v1349 = vpop.permute.xlu0 %1348
      %1350 = vrot.lane.b32.xlu0 %v649, 20
      %v1351 = vpop.permute.xlu0 %1350
      %1352 = vrot.lane.b32.xlu0 %v650, 20
      %v1353 = vpop.permute.xlu0 %1352
      %1354 = vrot.lane.b32.xlu0 %v651, 20
      %v1355 = vpop.permute.xlu0 %1354
      %1356 = vrot.lane.b32.xlu0 %v652, 20
      %v1357 = vpop.permute.xlu0 %1356
      %1422 = vrot.lane.b32.xlu0 %v654, 24
      %v1423 = vpop.permute.xlu0 %1422
      %1424 = vrot.lane.b32.xlu0 %v655, 24
      %v1425 = vpop.permute.xlu0 %1424
      %1426 = vrot.lane.b32.xlu0 %v656, 24
      %v1427 = vpop.permute.xlu0 %1426
      %1428 = vrot.lane.b32.xlu0 %v657, 24
      %v1429 = vpop.permute.xlu0 %1428
      %1430 = vrot.lane.b32.xlu0 %v658, 24
      %v1431 = vpop.permute.xlu0 %1430
      %1432 = vrot.lane.b32.xlu0 %v659, 24
      %v1433 = vpop.permute.xlu0 %1432
      %1434 = vrot.lane.b32.xlu0 %v660, 24
      %v1435 = vpop.permute.xlu0 %1434
      %1436 = vrot.lane.b32.xlu0 %v661, 24
      %v1437 = vpop.permute.xlu0 %1436
      %1438 = vrot.lane.b32.xlu0 %v662, 24
      %v1439 = vpop.permute.xlu0 %1438
      %1440 = vrot.lane.b32.xlu0 %v663, 24
      %v1441 = vpop.permute.xlu0 %1440
      %1442 = vrot.lane.b32.xlu0 %v664, 24
      %v1443 = vpop.permute.xlu0 %1442
      %1444 = vrot.lane.b32.xlu0 %v665, 24
      %v1445 = vpop.permute.xlu0 %1444
      %1446 = vrot.lane.b32.xlu0 %v666, 24
      %v1447 = vpop.permute.xlu0 %1446
      %1448 = vrot.lane.b32.xlu0 %v667, 24
      %v1449 = vpop.permute.xlu0 %1448
      %1450 = vrot.lane.b32.xlu0 %v668, 24
      %v1451 = vpop.permute.xlu0 %1450
      %1452 = vrot.lane.b32.xlu0 %v669, 24
      %v1453 = vpop.permute.xlu0 %1452
      %1454 = vrot.lane.b32.xlu0 %v670, 24
      %v1455 = vpop.permute.xlu0 %1454
      %1456 = vrot.lane.b32.xlu0 %v671, 24
      %v1457 = vpop.permute.xlu0 %1456
      %1458 = vrot.lane.b32.xlu0 %v672, 24
      %v1459 = vpop.permute.xlu0 %1458
      %1460 = vrot.lane.b32.xlu0 %v673, 24
      %v1461 = vpop.permute.xlu0 %1460
      %1462 = vrot.lane.b32.xlu0 %v674, 24
      %v1463 = vpop.permute.xlu0 %1462
      %1464 = vrot.lane.b32.xlu0 %v675, 24
      %v1465 = vpop.permute.xlu0 %1464
      %1466 = vrot.lane.b32.xlu0 %v676, 24
      %v1467 = vpop.permute.xlu0 %1466
      %1468 = vrot.lane.b32.xlu0 %v677, 24
      %v1469 = vpop.permute.xlu0 %1468
      %1470 = vrot.lane.b32.xlu0 %v678, 24
      %v1471 = vpop.permute.xlu0 %1470
      %1472 = vrot.lane.b32.xlu0 %v679, 24
      %v1473 = vpop.permute.xlu0 %1472
      %1474 = vrot.lane.b32.xlu0 %v680, 24
      %v1475 = vpop.permute.xlu0 %1474
      %1476 = vrot.lane.b32.xlu0 %v681, 24
      %v1477 = vpop.permute.xlu0 %1476
      %1478 = vrot.lane.b32.xlu0 %v682, 24
      %v1479 = vpop.permute.xlu0 %1478
      %1480 = vrot.lane.b32.xlu0 %v683, 24
      %v1481 = vpop.permute.xlu0 %1480
      %1482 = vrot.lane.b32.xlu0 %v684, 24
      %v1483 = vpop.permute.xlu0 %1482
      %1484 = vrot.lane.b32.xlu0 %v685, 24
      %v1485 = vpop.permute.xlu0 %1484
      %1550 = vrot.lane.b32.xlu0 %v686, 28
      %v1551 = vpop.permute.xlu0 %1550
      %1552 = vrot.lane.b32.xlu0 %v687, 28
      %v1553 = vpop.permute.xlu0 %1552
      %1554 = vrot.lane.b32.xlu0 %v688, 28
      %v1555 = vpop.permute.xlu0 %1554
      %1556 = vrot.lane.b32.xlu0 %v689, 28
      %v1557 = vpop.permute.xlu0 %1556
      %1558 = vrot.lane.b32.xlu0 %v690, 28
      %v1559 = vpop.permute.xlu0 %1558
      %1560 = vrot.lane.b32.xlu0 %v691, 28
      %v1561 = vpop.permute.xlu0 %1560
      %1562 = vrot.lane.b32.xlu0 %v692, 28
      %v1563 = vpop.permute.xlu0 %1562
      %1564 = vrot.lane.b32.xlu0 %v693, 28
      %v1565 = vpop.permute.xlu0 %1564
      %1566 = vrot.lane.b32.xlu0 %v694, 28
      %v1567 = vpop.permute.xlu0 %1566
      %1568 = vrot.lane.b32.xlu0 %v695, 28
      %v1569 = vpop.permute.xlu0 %1568
      %1570 = vrot.lane.b32.xlu0 %v696, 28
      %v1571 = vpop.permute.xlu0 %1570
      %1572 = vrot.lane.b32.xlu0 %v697, 28
      %v1573 = vpop.permute.xlu0 %1572
      %1574 = vrot.lane.b32.xlu0 %v698, 28
      %v1575 = vpop.permute.xlu0 %1574
      %1576 = vrot.lane.b32.xlu0 %v699, 28
      %v1577 = vpop.permute.xlu0 %1576
      %1578 = vrot.lane.b32.xlu0 %v700, 28
      %v1579 = vpop.permute.xlu0 %1578
      %1580 = vrot.lane.b32.xlu0 %v701, 28
      %v1581 = vpop.permute.xlu0 %1580
      %1582 = vrot.lane.b32.xlu0 %v702, 28
      %v1583 = vpop.permute.xlu0 %1582
      %1584 = vrot.lane.b32.xlu0 %v703, 28
      %v1585 = vpop.permute.xlu0 %1584
      %1586 = vrot.lane.b32.xlu0 %v704, 28
      %v1587 = vpop.permute.xlu0 %1586
      %1588 = vrot.lane.b32.xlu0 %v705, 28
      %v1589 = vpop.permute.xlu0 %1588
      %1590 = vrot.lane.b32.xlu0 %v706, 28
      %v1591 = vpop.permute.xlu0 %1590
      %1592 = vrot.lane.b32.xlu0 %v707, 28
      %v1593 = vpop.permute.xlu0 %1592
      %1594 = vrot.lane.b32.xlu0 %v708, 28
      %v1595 = vpop.permute.xlu0 %1594
      %1596 = vrot.lane.b32.xlu0 %v709, 28
      %v1597 = vpop.permute.xlu0 %1596
      %1598 = vrot.lane.b32.xlu0 %v710, 28
      %v1599 = vpop.permute.xlu0 %1598
      %1600 = vrot.lane.b32.xlu0 %v711, 28
      %v1601 = vpop.permute.xlu0 %1600
      %1602 = vrot.lane.b32.xlu0 %v712, 28
      %v1603 = vpop.permute.xlu0 %1602
      %1604 = vrot.lane.b32.xlu0 %v713, 28
      %v1605 = vpop.permute.xlu0 %1604
      %1606 = vrot.lane.b32.xlu0 %v714, 28
      %v1607 = vpop.permute.xlu0 %1606
      %1608 = vrot.lane.b32.xlu0 %v715, 28
      %v1609 = vpop.permute.xlu0 %1608
      %1610 = vrot.lane.b32.xlu0 %v716, 28
      %v1611 = vpop.permute.xlu0 %1610
      %1612 = vrot.lane.b32.xlu0 %v717, 28
      %v1613 = vpop.permute.xlu0 %1612
      %1678 = vrot.lane.b32.xlu0 %v718, 32
      %v1679 = vpop.permute.xlu0 %1678
      %1680 = vrot.lane.b32.xlu0 %v719, 32
      %v1681 = vpop.permute.xlu0 %1680
      %1682 = vrot.lane.b32.xlu0 %v720, 32
      %v1683 = vpop.permute.xlu0 %1682
      %1684 = vrot.lane.b32.xlu0 %v721, 32
      %v1685 = vpop.permute.xlu0 %1684
      %1686 = vrot.lane.b32.xlu0 %v722, 32
      %v1687 = vpop.permute.xlu0 %1686
      %1688 = vrot.lane.b32.xlu0 %v723, 32
      %v1689 = vpop.permute.xlu0 %1688
      %1690 = vrot.lane.b32.xlu0 %v724, 32
      %v1691 = vpop.permute.xlu0 %1690
      %1692 = vrot.lane.b32.xlu0 %v725, 32
      %v1693 = vpop.permute.xlu0 %1692
      %1694 = vrot.lane.b32.xlu0 %v726, 32
      %v1695 = vpop.permute.xlu0 %1694
      %1696 = vrot.lane.b32.xlu0 %v727, 32
      %v1697 = vpop.permute.xlu0 %1696
      %1698 = vrot.lane.b32.xlu0 %v728, 32
      %v1699 = vpop.permute.xlu0 %1698
      %1700 = vrot.lane.b32.xlu0 %v729, 32
      %v1701 = vpop.permute.xlu0 %1700
      %1702 = vrot.lane.b32.xlu0 %v730, 32
      %v1703 = vpop.permute.xlu0 %1702
      %1704 = vrot.lane.b32.xlu0 %v731, 32
      %v1705 = vpop.permute.xlu0 %1704
      %1706 = vrot.lane.b32.xlu0 %v732, 32
      %v1707 = vpop.permute.xlu0 %1706
      %1708 = vrot.lane.b32.xlu0 %v733, 32
      %v1709 = vpop.permute.xlu0 %1708
      %1710 = vrot.lane.b32.xlu0 %v734, 32
      %v1711 = vpop.permute.xlu0 %1710
      %1712 = vrot.lane.b32.xlu0 %v735, 32
      %v1713 = vpop.permute.xlu0 %1712
      %1714 = vrot.lane.b32.xlu0 %v736, 32
      %v1715 = vpop.permute.xlu0 %1714
      %1716 = vrot.lane.b32.xlu0 %v737, 32
      %v1717 = vpop.permute.xlu0 %1716
      %1718 = vrot.lane.b32.xlu0 %v738, 32
      %v1719 = vpop.permute.xlu0 %1718
      %1720 = vrot.lane.b32.xlu0 %v739, 32
      %v1721 = vpop.permute.xlu0 %1720
      %1722 = vrot.lane.b32.xlu0 %v740, 32
      %v1723 = vpop.permute.xlu0 %1722
      %1724 = vrot.lane.b32.xlu0 %v741, 32
      %v1725 = vpop.permute.xlu0 %1724
      %1726 = vrot.lane.b32.xlu0 %v742, 32
      %v1727 = vpop.permute.xlu0 %1726
      %1728 = vrot.lane.b32.xlu0 %v743, 32
      %v1729 = vpop.permute.xlu0 %1728
      %1730 = vrot.lane.b32.xlu0 %v744, 32
      %v1731 = vpop.permute.xlu0 %1730
      %1732 = vrot.lane.b32.xlu0 %v745, 32
      %v1733 = vpop.permute.xlu0 %1732
      %1734 = vrot.lane.b32.xlu0 %v746, 32
      %v1735 = vpop.permute.xlu0 %1734
      %1736 = vrot.lane.b32.xlu0 %v747, 32
      %v1737 = vpop.permute.xlu0 %1736
      %1738 = vrot.lane.b32.xlu0 %v748, 32
      %v1739 = vpop.permute.xlu0 %1738
      %1740 = vrot.lane.b32.xlu0 %v749, 32
      %v1741 = vpop.permute.xlu0 %1740
      %v1774 = vsel %vm372, %v461, %v783
      %v1775 = vsel %vm372, %v462, %v785
      %v1776 = vsel %vm372, %v463, %v787
      %v1777 = vsel %vm372, %v464, %v789
      %v1778 = vsel %vm372, %v465, %v791
      %v1779 = vsel %vm372, %v466, %v793
      %v1780 = vsel %vm372, %v467, %v795
      %v1781 = vsel %vm372, %v468, %v797
      %v1782 = vsel %vm372, %v469, %v799
      %v1783 = vsel %vm372, %v470, %v801
      %v1784 = vsel %vm372, %v471, %v803
      %v1785 = vsel %vm372, %v472, %v805
      %v1786 = vsel %vm372, %v473, %v807
      %v1787 = vsel %vm372, %v474, %v809
      %v1788 = vsel %vm372, %v475, %v811
      %v1789 = vsel %vm372, %v476, %v813
      %v1790 = vsel %vm372, %v477, %v815
      %v1791 = vsel %vm372, %v478, %v817
      %v1792 = vsel %vm372, %v479, %v819
      %v1793 = vsel %vm372, %v480, %v821
      %v1794 = vsel %vm372, %v481, %v823
      %v1795 = vsel %vm372, %v482, %v825
      %v1796 = vsel %vm372, %v483, %v827
      %v1797 = vsel %vm372, %v484, %v829
      %v1798 = vsel %vm372, %v485, %v831
      %v1799 = vsel %vm372, %v486, %v833
      %v1800 = vsel %vm372, %v487, %v835
      %v1801 = vsel %vm372, %v488, %v837
      %v1802 = vsel %vm372, %v489, %v839
      %v1803 = vsel %vm372, %v490, %v841
      %v1804 = vsel %vm372, %v491, %v843
      %v1805 = vsel %vm372, %v492, %v845
      %vm1806 = vcmask 64512
      %v1807 = vsel %vm1806, %v1774, %v911
      %v1808 = vsel %vm1806, %v1775, %v913
      %v1809 = vsel %vm1806, %v1776, %v915
      %v1810 = vsel %vm1806, %v1777, %v917
      %v1811 = vsel %vm1806, %v1778, %v919
      %v1812 = vsel %vm1806, %v1779, %v921
      %v1813 = vsel %vm1806, %v1780, %v923
      %v1814 = vsel %vm1806, %v1781, %v925
      %v1815 = vsel %vm1806, %v1782, %v927
      %v1816 = vsel %vm1806, %v1783, %v929
      %v1817 = vsel %vm1806, %v1784, %v931
      %v1818 = vsel %vm1806, %v1785, %v933
      %v1819 = vsel %vm1806, %v1786, %v935
      %v1820 = vsel %vm1806, %v1787, %v937
      %v1821 = vsel %vm1806, %v1788, %v939
      %v1822 = vsel %vm1806, %v1789, %v941
      %v1823 = vsel %vm1806, %v1790, %v943
      %v1824 = vsel %vm1806, %v1791, %v945
      %v1825 = vsel %vm1806, %v1792, %v947
      %v1826 = vsel %vm1806, %v1793, %v949
      %v1827 = vsel %vm1806, %v1794, %v951
      %v1828 = vsel %vm1806, %v1795, %v953
      %v1829 = vsel %vm1806, %v1796, %v955
      %v1830 = vsel %vm1806, %v1797, %v957
      %v1831 = vsel %vm1806, %v1798, %v959
      %v1832 = vsel %vm1806, %v1799, %v961
      %v1833 = vsel %vm1806, %v1800, %v963
      %v1834 = vsel %vm1806, %v1801, %v965
      %v1835 = vsel %vm1806, %v1802, %v967
      %v1836 = vsel %vm1806, %v1803, %v969
      %v1837 = vsel %vm1806, %v1804, %v971
      %v1838 = vsel %vm1806, %v1805, %v973
      %vm1839 = vcmask 97280
      %v1840 = vsel %vm1839, %v1807, %v1039
      %v1841 = vsel %vm1839, %v1808, %v1041
      %v1842 = vsel %vm1839, %v1809, %v1043
      %v1843 = vsel %vm1839, %v1810, %v1045
      %v1844 = vsel %vm1839, %v1811, %v1047
      %v1845 = vsel %vm1839, %v1812, %v1049
      %v1846 = vsel %vm1839, %v1813, %v1051
      %v1847 = vsel %vm1839, %v1814, %v1053
      %v1848 = vsel %vm1839, %v1815, %v1055
      %v1849 = vsel %vm1839, %v1816, %v1057
      %v1850 = vsel %vm1839, %v1817, %v1059
      %v1851 = vsel %vm1839, %v1818, %v1061
      %v1852 = vsel %vm1839, %v1819, %v1063
      %v1853 = vsel %vm1839, %v1820, %v1065
      %v1854 = vsel %vm1839, %v1821, %v1067
      %v1855 = vsel %vm1839, %v1822, %v1069
      %v1856 = vsel %vm1839, %v1823, %v1071
      %v1857 = vsel %vm1839, %v1824, %v1073
      %v1858 = vsel %vm1839, %v1825, %v1075
      %v1859 = vsel %vm1839, %v1826, %v1077
      %v1860 = vsel %vm1839, %v1827, %v1079
      %v1861 = vsel %vm1839, %v1828, %v1081
      %v1862 = vsel %vm1839, %v1829, %v1083
      %v1863 = vsel %vm1839, %v1830, %v1085
      %v1864 = vsel %vm1839, %v1831, %v1087
      %v1865 = vsel %vm1839, %v1832, %v1089
      %v1866 = vsel %vm1839, %v1833, %v1091
      %v1867 = vsel %vm1839, %v1834, %v1093
      %v1868 = vsel %vm1839, %v1835, %v1095
      %v1869 = vsel %vm1839, %v1836, %v1097
      %v1870 = vsel %vm1839, %v1837, %v1099
      %v1871 = vsel %vm1839, %v1838, %v1101
      %vm1872 = vcmask 130048
      %v1873 = vsel %vm1872, %v1840, %v1167
      %v1874 = vsel %vm1872, %v1841, %v1169
      %v1875 = vsel %vm1872, %v1842, %v1171
      %v1876 = vsel %vm1872, %v1843, %v1173
      %v1877 = vsel %vm1872, %v1844, %v1175
      %v1878 = vsel %vm1872, %v1845, %v1177
      %v1879 = vsel %vm1872, %v1846, %v1179
      %v1880 = vsel %vm1872, %v1847, %v1181
      %v1881 = vsel %vm1872, %v1848, %v1183
      %v1882 = vsel %vm1872, %v1849, %v1185
      %v1883 = vsel %vm1872, %v1850, %v1187
      %v1884 = vsel %vm1872, %v1851, %v1189
      %v1885 = vsel %vm1872, %v1852, %v1191
      %v1886 = vsel %vm1872, %v1853, %v1193
      %v1887 = vsel %vm1872, %v1854, %v1195
      %v1888 = vsel %vm1872, %v1855, %v1197
      %v1889 = vsel %vm1872, %v1856, %v1199
      %v1890 = vsel %vm1872, %v1857, %v1201
      %v1891 = vsel %vm1872, %v1858, %v1203
      %v1892 = vsel %vm1872, %v1859, %v1205
      %v1893 = vsel %vm1872, %v1860, %v1207
      %v1894 = vsel %vm1872, %v1861, %v1209
      %v1895 = vsel %vm1872, %v1862, %v1211
      %v1896 = vsel %vm1872, %v1863, %v1213
      %v1897 = vsel %vm1872, %v1864, %v1215
      %v1898 = vsel %vm1872, %v1865, %v1217
      %v1899 = vsel %vm1872, %v1866, %v1219
      %v1900 = vsel %vm1872, %v1867, %v1221
      %v1901 = vsel %vm1872, %v1868, %v1223
      %v1902 = vsel %vm1872, %v1869, %v1225
      %v1903 = vsel %vm1872, %v1870, %v1227
      %v1904 = vsel %vm1872, %v1871, %v1229
      %vm1905 = vcmask 162816
      %v1906 = vsel %vm1905, %v1873, %v1295
      %v1907 = vsel %vm1905, %v1874, %v1297
      %v1908 = vsel %vm1905, %v1875, %v1299
      %v1909 = vsel %vm1905, %v1876, %v1301
      %v1910 = vsel %vm1905, %v1877, %v1303
      %v1911 = vsel %vm1905, %v1878, %v1305
      %v1912 = vsel %vm1905, %v1879, %v1307
      %v1913 = vsel %vm1905, %v1880, %v1309
      %v1914 = vsel %vm1905, %v1881, %v1311
      %v1915 = vsel %vm1905, %v1882, %v1313
      %v1916 = vsel %vm1905, %v1883, %v1315
      %v1917 = vsel %vm1905, %v1884, %v1317
      %v1918 = vsel %vm1905, %v1885, %v1319
      %v1919 = vsel %vm1905, %v1886, %v1321
      %v1920 = vsel %vm1905, %v1887, %v1323
      %v1921 = vsel %vm1905, %v1888, %v1325
      %v1922 = vsel %vm1905, %v1889, %v1327
      %v1923 = vsel %vm1905, %v1890, %v1329
      %v1924 = vsel %vm1905, %v1891, %v1331
      %v1925 = vsel %vm1905, %v1892, %v1333
      %v1926 = vsel %vm1905, %v1893, %v1335
      %v1927 = vsel %vm1905, %v1894, %v1337
      %v1928 = vsel %vm1905, %v1895, %v1339
      %v1929 = vsel %vm1905, %v1896, %v1341
      %v1930 = vsel %vm1905, %v1897, %v1343
      %v1931 = vsel %vm1905, %v1898, %v1345
      %v1932 = vsel %vm1905, %v1899, %v1347
      %v1933 = vsel %vm1905, %v1900, %v1349
      %v1934 = vsel %vm1905, %v1901, %v1351
      %v1935 = vsel %vm1905, %v1902, %v1353
      %v1936 = vsel %vm1905, %v1903, %v1355
      %v1937 = vsel %vm1905, %v1904, %v1357
      %vm1938 = vcmask 195584
      %v1939 = vsel %vm1938, %v1906, %v1423
      %v1940 = vsel %vm1938, %v1907, %v1425
      %v1941 = vsel %vm1938, %v1908, %v1427
      %v1942 = vsel %vm1938, %v1909, %v1429
      %v1943 = vsel %vm1938, %v1910, %v1431
      %v1944 = vsel %vm1938, %v1911, %v1433
      %v1945 = vsel %vm1938, %v1912, %v1435
      %v1946 = vsel %vm1938, %v1913, %v1437
      %v1947 = vsel %vm1938, %v1914, %v1439
      %v1948 = vsel %vm1938, %v1915, %v1441
      %v1949 = vsel %vm1938, %v1916, %v1443
      %v1950 = vsel %vm1938, %v1917, %v1445
      %v1951 = vsel %vm1938, %v1918, %v1447
      %v1952 = vsel %vm1938, %v1919, %v1449
      %v1953 = vsel %vm1938, %v1920, %v1451
      %v1954 = vsel %vm1938, %v1921, %v1453
      %v1955 = vsel %vm1938, %v1922, %v1455
      %v1956 = vsel %vm1938, %v1923, %v1457
      %v1957 = vsel %vm1938, %v1924, %v1459
      %v1958 = vsel %vm1938, %v1925, %v1461
      %v1959 = vsel %vm1938, %v1926, %v1463
      %v1960 = vsel %vm1938, %v1927, %v1465
      %v1961 = vsel %vm1938, %v1928, %v1467
      %v1962 = vsel %vm1938, %v1929, %v1469
      %v1963 = vsel %vm1938, %v1930, %v1471
      %v1964 = vsel %vm1938, %v1931, %v1473
      %v1965 = vsel %vm1938, %v1932, %v1475
      %v1966 = vsel %vm1938, %v1933, %v1477
      %v1967 = vsel %vm1938, %v1934, %v1479
      %v1968 = vsel %vm1938, %v1935, %v1481
      %v1969 = vsel %vm1938, %v1936, %v1483
      %v1970 = vsel %vm1938, %v1937, %v1485
      %vm1971 = vcmask 228352
      %v1972 = vsel %vm1971, %v1939, %v1551
      %v1973 = vsel %vm1971, %v1940, %v1553
      %v1974 = vsel %vm1971, %v1941, %v1555
      %v1975 = vsel %vm1971, %v1942, %v1557
      %v1976 = vsel %vm1971, %v1943, %v1559
      %v1977 = vsel %vm1971, %v1944, %v1561
      %v1978 = vsel %vm1971, %v1945, %v1563
      %v1979 = vsel %vm1971, %v1946, %v1565
      %v1980 = vsel %vm1971, %v1947, %v1567
      %v1981 = vsel %vm1971, %v1948, %v1569
      %v1982 = vsel %vm1971, %v1949, %v1571
      %v1983 = vsel %vm1971, %v1950, %v1573
      %v1984 = vsel %vm1971, %v1951, %v1575
      %v1985 = vsel %vm1971, %v1952, %v1577
      %v1986 = vsel %vm1971, %v1953, %v1579
      %v1987 = vsel %vm1971, %v1954, %v1581
      %v1988 = vsel %vm1971, %v1955, %v1583
      %v1989 = vsel %vm1971, %v1956, %v1585
      %v1990 = vsel %vm1971, %v1957, %v1587
      %v1991 = vsel %vm1971, %v1958, %v1589
      %v1992 = vsel %vm1971, %v1959, %v1591
      %v1993 = vsel %vm1971, %v1960, %v1593
      %v1994 = vsel %vm1971, %v1961, %v1595
      %v1995 = vsel %vm1971, %v1962, %v1597
      %v1996 = vsel %vm1971, %v1963, %v1599
      %v1997 = vsel %vm1971, %v1964, %v1601
      %v1998 = vsel %vm1971, %v1965, %v1603
      %v1999 = vsel %vm1971, %v1966, %v1605
      %v2000 = vsel %vm1971, %v1967, %v1607
      %v2001 = vsel %vm1971, %v1968, %v1609
      %v2002 = vsel %vm1971, %v1969, %v1611
      %v2003 = vsel %vm1971, %v1970, %v1613
      %vm2004 = vcmask 261120
      %v2005 = vsel %vm2004, %v1972, %v1679
      %v2006 = vsel %vm2004, %v1973, %v1681
      %v2007 = vsel %vm2004, %v1974, %v1683
      %v2008 = vsel %vm2004, %v1975, %v1685
      %v2009 = vsel %vm2004, %v1976, %v1687
      %v2010 = vsel %vm2004, %v1977, %v1689
      %v2011 = vsel %vm2004, %v1978, %v1691
      %v2012 = vsel %vm2004, %v1979, %v1693
      %v2013 = vsel %vm2004, %v1980, %v1695
      %v2014 = vsel %vm2004, %v1981, %v1697
      %v2015 = vsel %vm2004, %v1982, %v1699
      %v2016 = vsel %vm2004, %v1983, %v1701
      %v2017 = vsel %vm2004, %v1984, %v1703
      %v2018 = vsel %vm2004, %v1985, %v1705
      %v2019 = vsel %vm2004, %v1986, %v1707
      %v2020 = vsel %vm2004, %v1987, %v1709
      %v2021 = vsel %vm2004, %v1988, %v1711
      %v2022 = vsel %vm2004, %v1989, %v1713
      %v2023 = vsel %vm2004, %v1990, %v1715
      %v2024 = vsel %vm2004, %v1991, %v1717
      %v2025 = vsel %vm2004, %v1992, %v1719
      %v2026 = vsel %vm2004, %v1993, %v1721
      %v2027 = vsel %vm2004, %v1994, %v1723
      %v2028 = vsel %vm2004, %v1995, %v1725
      %v2029 = vsel %vm2004, %v1996, %v1727
      %v2030 = vsel %vm2004, %v1997, %v1729
      %v2031 = vsel %vm2004, %v1998, %v1731
      %v2032 = vsel %vm2004, %v1999, %v1733
      %v2033 = vsel %vm2004, %v2000, %v1735
      %v2034 = vsel %vm2004, %v2001, %v1737
      %v2035 = vsel %vm2004, %v2002, %v1739
      %v2036 = vsel %vm2004, %v2003, %v1741
      %v2037 = vpack.c.bf16 %v2006, %v2005
      %v2038 = vpack.c.bf16 %v2008, %v2007
      %v2039 = vpack.c.bf16 %v2010, %v2009
      %v2040 = vpack.c.bf16 %v2012, %v2011
      %v2041 = vpack.c.bf16 %v2014, %v2013
      %v2042 = vpack.c.bf16 %v2016, %v2015
      %v2043 = vpack.c.bf16 %v2018, %v2017
      %v2044 = vpack.c.bf16 %v2020, %v2019
      %v2045 = vpack.c.bf16 %v2022, %v2021
      %v2046 = vpack.c.bf16 %v2024, %v2023
      %v2047 = vpack.c.bf16 %v2026, %v2025
      %v2048 = vpack.c.bf16 %v2028, %v2027
      %v2049 = vpack.c.bf16 %v2030, %v2029
      %v2050 = vpack.c.bf16 %v2032, %v2031
      %v2051 = vpack.c.bf16 %v2034, %v2033
      %v2052 = vpack.c.bf16 %v2036, %v2035
      %v2053 = vld [vmem:[%s1] sm:$0xf]
      %v2054 = vld [vmem:[%s1 + $0x4] sm:$0xf]
      %v2055 = vld [vmem:[%s1 + $0x8] sm:$0xf]
      %v2056 = vld [vmem:[%s1 + $0xc] sm:$0xf]
      %v2057 = vld [vmem:[%s1 + $0x10] sm:$0x3]
      %v2058 = vld [vmem:[%s2] sm:$0x1]
      %v2060 = vlaneseq
      %v2061 = vshrl.u32 %v2060, 7
      %v2062 = vsub.s32 0, %v2061
      %v2063 = vrot.slane %v2058, %v2062
      %v2070 = vunpack.c.l.b16 %v2053
      %v2071 = vunpack.c.l.b16 %v2054
      %v2072 = vunpack.c.l.b16 %v2055
      %v2073 = vunpack.c.l.b16 %v2056
      %v2074 = vunpack.c.l.b16 %v2057
      %v2075 = vpack.c.b16 %v2071, %v2070
      %v2076 = vpack.c.b16 %v2073, %v2072
      %v2077 = vpack.c.b16 %v2074, %v2074
      %vm2080 = vcmask 293888
      %v2082 = vsel %vm2080, %v2037, 0
      %v2085 = vsel %vm2080, %v2038, 0
      %v2088 = vsel %vm2080, %v2039, 0
      %v2091 = vsel %vm2080, %v2040, 0
      %v2094 = vsel %vm2080, %v2041, 0
      %v2097 = vsel %vm2080, %v2042, 0
      %v2100 = vsel %vm2080, %v2043, 0
      %v2103 = vsel %vm2080, %v2044, 0
      %v2106 = vsel %vm2080, %v2045, 0
      %v2109 = vsel %vm2080, %v2046, 0
      %v2112 = vsel %vm2080, %v2047, 0
      %v2115 = vsel %vm2080, %v2048, 0
      %v2118 = vsel %vm2080, %v2049, 0
      %v2121 = vsel %vm2080, %v2050, 0
      %v2124 = vsel %vm2080, %v2051, 0
      %v2127 = vsel %vm2080, %v2052, 0
      %vm2129 = vcmask 1041408
      %v2131 = vsel %vm2129, %v2077, 0
      %2133 = vmatprep.subr.bf16.mxu0 0
      %2134 = vmatpush1.bf16.msra.mxu0 %v2075
      %2135 = vmatprep.subr.bf16.mxu0 0
      %2136 = vmatpush1.bf16.msra.mxu0 %v2076
      %2137 = vmatprep.subr.bf16.mxu0 0
      %2138 = vmatpush1.bf16.msra.mxu0 %v2131
      %2139 = vmatprep.subr.bf16.mxu0 0
      %2140 = vmatpush1.bf16.msra.mxu0 0
      %2141 = vmatprep.subr.bf16.mxu0 0
      %2142 = vmatpush1.bf16.msra.mxu0 0
      %2143 = vmatprep.subr.bf16.mxu0 0
      %2144 = vmatpush1.bf16.msra.mxu0 0
      %2145 = vmatprep.subr.bf16.mxu0 0
      %2146 = vmatpush1.bf16.msra.mxu0 0
      %2147 = vmatprep.subr.bf16.mxu0 0
      %2148 = vmatpush1.bf16.msra.mxu0 0
      %2149 = vmatprep.subr.bf16.mxu0 0
      %2150 = vmatpush1.bf16.msra.mxu0 0
      %2151 = vmatprep.subr.bf16.mxu0 0
      %2152 = vmatpush1.bf16.msra.mxu0 0
      %2153 = vmatprep.subr.bf16.mxu0 0
      %2154 = vmatpush1.bf16.msra.mxu0 0
      %2155 = vmatprep.subr.bf16.mxu0 0
      %2156 = vmatpush1.bf16.msra.mxu0 0
      %2157 = vmatprep.subr.bf16.mxu0 0
      %2158 = vmatpush1.bf16.msra.mxu0 0
      %2159 = vmatprep.subr.bf16.mxu0 0
      %2160 = vmatpush1.bf16.msra.mxu0 0
      %2161 = vmatprep.subr.bf16.mxu0 0
      %2162 = vmatpush1.bf16.msra.mxu0 0
      %2163 = vmatprep.subr.bf16.mxu0 0
      %2164 = vmatpush1.bf16.msra.mxu0 0
      %2165 = vmatprep.mubr.bf16.mxu0 0
      %2166 = vmatmul.mubr.bf16.gmra.mrb[0].mxu0 %v2082
      %v2167 = vpop.f32.mrb[0].mxu0
      %v2168 = vadd.f32 %v2063, %v2167
      %v2169 = vpop.f32.mrb[0].mxu0
      %v2170 = vpop.f32.mrb[0].mxu0
      %v2171 = vadd.f32 %v2063, %v2170
      %v2172 = vpop.f32.mrb[0].mxu0
      %2173 = vmatprep.mubr.bf16.mxu0 0
      %2174 = vmatmul.mubr.bf16.gmra.mrb[0].mxu0 %v2085
      %v2175 = vpop.f32.mrb[0].mxu0
      %v2176 = vadd.f32 %v2063, %v2175
      %v2177 = vpop.f32.mrb[0].mxu0
      %v2178 = vpop.f32.mrb[0].mxu0
      %v2179 = vadd.f32 %v2063, %v2178
      %v2180 = vpop.f32.mrb[0].mxu0
      %2181 = vmatprep.mubr.bf16.mxu0 0
      %2182 = vmatmul.mubr.bf16.gmra.mrb[0].mxu0 %v2088
      %v2183 = vpop.f32.mrb[0].mxu0
      %v2184 = vadd.f32 %v2063, %v2183
      %v2185 = vpop.f32.mrb[0].mxu0
      %v2186 = vpop.f32.mrb[0].mxu0
      %v2187 = vadd.f32 %v2063, %v2186
      %v2188 = vpop.f32.mrb[0].mxu0
      %2189 = vmatprep.mubr.bf16.mxu0 0
      %2190 = vmatmul.mubr.bf16.gmra.mrb[0].mxu0 %v2091
      %v2191 = vpop.f32.mrb[0].mxu0
      %v2192 = vadd.f32 %v2063, %v2191
      %v2193 = vpop.f32.mrb[0].mxu0
      %v2194 = vpop.f32.mrb[0].mxu0
      %v2195 = vadd.f32 %v2063, %v2194
      %v2196 = vpop.f32.mrb[0].mxu0
      %2197 = vmatprep.mubr.bf16.mxu0 0
      %2198 = vmatmul.mubr.bf16.gmra.mrb[0].mxu0 %v2094
      %v2199 = vpop.f32.mrb[0].mxu0
      %v2200 = vadd.f32 %v2063, %v2199
      %v2201 = vpop.f32.mrb[0].mxu0
      %v2202 = vpop.f32.mrb[0].mxu0
      %v2203 = vadd.f32 %v2063, %v2202
      %v2204 = vpop.f32.mrb[0].mxu0
      %2205 = vmatprep.mubr.bf16.mxu0 0
      %2206 = vmatmul.mubr.bf16.gmra.mrb[0].mxu0 %v2097
      %v2207 = vpop.f32.mrb[0].mxu0
      %v2208 = vadd.f32 %v2063, %v2207
      %v2209 = vpop.f32.mrb[0].mxu0
      %v2210 = vpop.f32.mrb[0].mxu0
      %v2211 = vadd.f32 %v2063, %v2210
      %v2212 = vpop.f32.mrb[0].mxu0
      %2213 = vmatprep.mubr.bf16.mxu0 0
      %2214 = vmatmul.mubr.bf16.gmra.mrb[0].mxu0 %v2100
      %v2215 = vpop.f32.mrb[0].mxu0
      %v2216 = vadd.f32 %v2063, %v2215
      %v2217 = vpop.f32.mrb[0].mxu0
      %v2218 = vpop.f32.mrb[0].mxu0
      %v2219 = vadd.f32 %v2063, %v2218
      %v2220 = vpop.f32.mrb[0].mxu0
      %2221 = vmatprep.mubr.bf16.mxu0 0
      %2222 = vmatmul.mubr.bf16.gmra.mrb[0].mxu0 %v2103
      %v2223 = vpop.f32.mrb[0].mxu0
      %v2224 = vadd.f32 %v2063, %v2223
      %v2225 = vpop.f32.mrb[0].mxu0
      %v2226 = vpop.f32.mrb[0].mxu0
      %v2227 = vadd.f32 %v2063, %v2226
      %v2228 = vpop.f32.mrb[0].mxu0
      %2229 = vmatprep.mubr.bf16.mxu0 0
      %2230 = vmatmul.mubr.bf16.gmra.mrb[0].mxu0 %v2106
      %v2231 = vpop.f32.mrb[0].mxu0
      %v2232 = vadd.f32 %v2063, %v2231
      %v2233 = vpop.f32.mrb[0].mxu0
      %v2234 = vpop.f32.mrb[0].mxu0
      %v2235 = vadd.f32 %v2063, %v2234
      %v2236 = vpop.f32.mrb[0].mxu0
      %2237 = vmatprep.mubr.bf16.mxu0 0
      %2238 = vmatmul.mubr.bf16.gmra.mrb[0].mxu0 %v2109
      %v2239 = vpop.f32.mrb[0].mxu0
      %v2240 = vadd.f32 %v2063, %v2239
      %v2241 = vpop.f32.mrb[0].mxu0
      %v2242 = vpop.f32.mrb[0].mxu0
      %v2243 = vadd.f32 %v2063, %v2242
      %v2244 = vpop.f32.mrb[0].mxu0
      %2245 = vmatprep.mubr.bf16.mxu0 0
      %2246 = vmatmul.mubr.bf16.gmra.mrb[0].mxu0 %v2112
      %v2247 = vpop.f32.mrb[0].mxu0
      %v2248 = vadd.f32 %v2063, %v2247
      %v2249 = vpop.f32.mrb[0].mxu0
      %v2250 = vpop.f32.mrb[0].mxu0
      %v2251 = vadd.f32 %v2063, %v2250
      %v2252 = vpop.f32.mrb[0].mxu0
      %2253 = vmatprep.mubr.bf16.mxu0 0
      %2254 = vmatmul.mubr.bf16.gmra.mrb[0].mxu0 %v2115
      %v2255 = vpop.f32.mrb[0].mxu0
      %v2256 = vadd.f32 %v2063, %v2255
      %v2257 = vpop.f32.mrb[0].mxu0
      %v2258 = vpop.f32.mrb[0].mxu0
      %v2259 = vadd.f32 %v2063, %v2258
      %v2260 = vpop.f32.mrb[0].mxu0
      %2261 = vmatprep.mubr.bf16.mxu0 0
      %2262 = vmatmul.mubr.bf16.gmra.mrb[0].mxu0 %v2118
      %v2263 = vpop.f32.mrb[0].mxu0
      %v2264 = vadd.f32 %v2063, %v2263
      %v2265 = vpop.f32.mrb[0].mxu0
      %v2266 = vpop.f32.mrb[0].mxu0
      %v2267 = vadd.f32 %v2063, %v2266
      %v2268 = vpop.f32.mrb[0].mxu0
      %2269 = vmatprep.mubr.bf16.mxu0 0
      %2270 = vmatmul.mubr.bf16.gmra.mrb[0].mxu0 %v2121
      %v2271 = vpop.f32.mrb[0].mxu0
      %v2272 = vadd.f32 %v2063, %v2271
      %v2273 = vpop.f32.mrb[0].mxu0
      %v2274 = vpop.f32.mrb[0].mxu0
      %v2275 = vadd.f32 %v2063, %v2274
      %v2276 = vpop.f32.mrb[0].mxu0
      %2277 = vmatprep.mubr.bf16.mxu0 0
      %2278 = vmatmul.mubr.bf16.gmra.mrb[0].mxu0 %v2124
      %v2279 = vpop.f32.mrb[0].mxu0
      %v2280 = vadd.f32 %v2063, %v2279
      %v2281 = vpop.f32.mrb[0].mxu0
      %v2282 = vpop.f32.mrb[0].mxu0
      %v2283 = vadd.f32 %v2063, %v2282
      %v2284 = vpop.f32.mrb[0].mxu0
      %2285 = vmatprep.mubr.bf16.mxu0 0
      %2286 = vmatmul.mubr.bf16.gmra.mrb[0].mxu0 %v2127
      %v2287 = vpop.f32.mrb[0].mxu0
      %v2288 = vadd.f32 %v2063, %v2287
      %v2289 = vpop.f32.mrb[0].mxu0
      %v2290 = vpop.f32.mrb[0].mxu0
      %v2291 = vadd.f32 %v2063, %v2290
      %v2292 = vpop.f32.mrb[0].mxu0
      %2293 = vdwg.mxu0
      %v2294 = vpack.c.bf16 %v341, %v340
      %v2295 = vpack.c.bf16 %v343, %v342
      %v2296 = vpack.c.bf16 %v345, %v344
      %v2297 = vpack.c.bf16 %v347, %v346
      %v2298 = vpack.c.bf16 %v349, %v348
      %v2299 = vpack.c.bf16 %v351, %v350
      %v2300 = vpack.c.bf16 %v353, %v352
      %v2301 = vpack.c.bf16 %v355, %v354
      %v2302 = vpack.c.bf16 %v357, %v356
      %v2303 = vpack.c.bf16 %v359, %v358
      %v2304 = vpack.c.bf16 %v361, %v360
      %v2305 = vpack.c.bf16 %v363, %v362
      %v2306 = vpack.c.bf16 %v365, %v364
      %v2307 = vpack.c.bf16 %v367, %v366
      %v2308 = vpack.c.bf16 %v369, %v368
      %v2309 = vpack.c.bf16 %v371, %v370
      %v2310 = vld [vmem:[%s3] sm:$0x3]
      %v2311 = vld [vmem:[%s4] sm:$0x1]
      %v2313 = vlaneseq
      %v2314 = vshrl.u32 %v2313, 7
      %v2315 = vsub.s32 0, %v2314
      %v2316 = vrot.slane %v2311, %v2315
      %v2319 = vsel %vm372, %v2294, 0
      %v2322 = vsel %vm372, %v2295, 0
      %v2325 = vsel %vm372, %v2296, 0
      %v2328 = vsel %vm372, %v2297, 0
      %v2331 = vsel %vm372, %v2298, 0
      %v2334 = vsel %vm372, %v2299, 0
      %v2337 = vsel %vm372, %v2300, 0
      %v2340 = vsel %vm372, %v2301, 0
      %v2343 = vsel %vm372, %v2302, 0
      %v2346 = vsel %vm372, %v2303, 0
      %v2349 = vsel %vm372, %v2304, 0
      %v2352 = vsel %vm372, %v2305, 0
      %v2355 = vsel %vm372, %v2306, 0
      %v2358 = vsel %vm372, %v2307, 0
      %v2361 = vsel %vm372, %v2308, 0
      %v2364 = vsel %vm372, %v2309, 0
      %v2367 = vsel %vm2129, %v2310, 0
      %2369 = vmatprep.subr.bf16.mxu0 0
      %2370 = vmatpush1.bf16.msra.mxu0 %v2367
      %2371 = vmatprep.subr.bf16.mxu0 0
      %2372 = vmatpush1.bf16.msra.mxu0 0
      %2373 = vmatprep.subr.bf16.mxu0 0
      %2374 = vmatpush1.bf16.msra.mxu0 0
      %2375 = vmatprep.subr.bf16.mxu0 0
      %2376 = vmatpush1.bf16.msra.mxu0 0
      %2377 = vmatprep.subr.bf16.mxu0 0
      %2378 = vmatpush1.bf16.msra.mxu0 0
      %2379 = vmatprep.subr.bf16.mxu0 0
      %2380 = vmatpush1.bf16.msra.mxu0 0
      %2381 = vmatprep.subr.bf16.mxu0 0
      %2382 = vmatpush1.bf16.msra.mxu0 0
      %2383 = vmatprep.subr.bf16.mxu0 0
      %2384 = vmatpush1.bf16.msra.mxu0 0
      %2385 = vmatprep.subr.bf16.mxu0 0
      %2386 = vmatpush1.bf16.msra.mxu0 0
      %2387 = vmatprep.subr.bf16.mxu0 0
      %2388 = vmatpush1.bf16.msra.mxu0 0
      %2389 = vmatprep.subr.bf16.mxu0 0
      %2390 = vmatpush1.bf16.msra.mxu0 0
      %2391 = vmatprep.subr.bf16.mxu0 0
      %2392 = vmatpush1.bf16.msra.mxu0 0
      %2393 = vmatprep.subr.bf16.mxu0 0
      %2394 = vmatpush1.bf16.msra.mxu0 0
      %2395 = vmatprep.subr.bf16.mxu0 0
      %2396 = vmatpush1.bf16.msra.mxu0 0
      %2397 = vmatprep.subr.bf16.mxu0 0
      %2398 = vmatpush1.bf16.msra.mxu0 0
      %2399 = vmatprep.subr.bf16.mxu0 0
      %2400 = vmatpush1.bf16.msra.mxu0 0
      %2401 = vmatprep.mubr.bf16.mxu0 0
      %2402 = vmatmul.mubr.bf16.gmra.mrb[0].mxu0 %v2319
      %v2403 = vpop.f32.mrb[0].mxu0
      %v2404 = vadd.f32 %v2316, %v2403
      %v2405 = vpop.f32.mrb[0].mxu0
      %v2406 = vpop.f32.mrb[0].mxu0
      %v2407 = vadd.f32 %v2316, %v2406
      %v2408 = vpop.f32.mrb[0].mxu0
      %2409 = vmatprep.mubr.bf16.mxu0 0
      %2410 = vmatmul.mubr.bf16.gmra.mrb[0].mxu0 %v2322
      %v2411 = vpop.f32.mrb[0].mxu0
      %v2412 = vadd.f32 %v2316, %v2411
      %v2413 = vpop.f32.mrb[0].mxu0
      %v2414 = vpop.f32.mrb[0].mxu0
      %v2415 = vadd.f32 %v2316, %v2414
      %v2416 = vpop.f32.mrb[0].mxu0
      %2417 = vmatprep.mubr.bf16.mxu0 0
      %2418 = vmatmul.mubr.bf16.gmra.mrb[0].mxu0 %v2325
      %v2419 = vpop.f32.mrb[0].mxu0
      %v2420 = vadd.f32 %v2316, %v2419
      %v2421 = vpop.f32.mrb[0].mxu0
      %v2422 = vpop.f32.mrb[0].mxu0
      %v2423 = vadd.f32 %v2316, %v2422
      %v2424 = vpop.f32.mrb[0].mxu0
      %2425 = vmatprep.mubr.bf16.mxu0 0
      %2426 = vmatmul.mubr.bf16.gmra.mrb[0].mxu0 %v2328
      %v2427 = vpop.f32.mrb[0].mxu0
      %v2428 = vadd.f32 %v2316, %v2427
      %v2429 = vpop.f32.mrb[0].mxu0
      %v2430 = vpop.f32.mrb[0].mxu0
      %v2431 = vadd.f32 %v2316, %v2430
      %v2432 = vpop.f32.mrb[0].mxu0
      %2433 = vmatprep.mubr.bf16.mxu0 0
      %2434 = vmatmul.mubr.bf16.gmra.mrb[0].mxu0 %v2331
      %v2435 = vpop.f32.mrb[0].mxu0
      %v2436 = vadd.f32 %v2316, %v2435
      %v2437 = vpop.f32.mrb[0].mxu0
      %v2438 = vpop.f32.mrb[0].mxu0
      %v2439 = vadd.f32 %v2316, %v2438
      %v2440 = vpop.f32.mrb[0].mxu0
      %2441 = vmatprep.mubr.bf16.mxu0 0
      %2442 = vmatmul.mubr.bf16.gmra.mrb[0].mxu0 %v2334
      %v2443 = vpop.f32.mrb[0].mxu0
      %v2444 = vadd.f32 %v2316, %v2443
      %v2445 = vpop.f32.mrb[0].mxu0
      %v2446 = vpop.f32.mrb[0].mxu0
      %v2447 = vadd.f32 %v2316, %v2446
      %v2448 = vpop.f32.mrb[0].mxu0
      %2449 = vmatprep.mubr.bf16.mxu0 0
      %2450 = vmatmul.mubr.bf16.gmra.mrb[0].mxu0 %v2337
      %v2451 = vpop.f32.mrb[0].mxu0
      %v2452 = vadd.f32 %v2316, %v2451
      %v2453 = vpop.f32.mrb[0].mxu0
      %v2454 = vpop.f32.mrb[0].mxu0
      %v2455 = vadd.f32 %v2316, %v2454
      %v2456 = vpop.f32.mrb[0].mxu0
      %2457 = vmatprep.mubr.bf16.mxu0 0
      %2458 = vmatmul.mubr.bf16.gmra.mrb[0].mxu0 %v2340
      %v2459 = vpop.f32.mrb[0].mxu0
      %v2460 = vadd.f32 %v2316, %v2459
      %v2461 = vpop.f32.mrb[0].mxu0
      %v2462 = vpop.f32.mrb[0].mxu0
      %v2463 = vadd.f32 %v2316, %v2462
      %v2464 = vpop.f32.mrb[0].mxu0
      %2465 = vmatprep.mubr.bf16.mxu0 0
      %2466 = vmatmul.mubr.bf16.gmra.mrb[0].mxu0 %v2343
      %v2467 = vpop.f32.mrb[0].mxu0
      %v2468 = vadd.f32 %v2316, %v2467
      %v2469 = vpop.f32.mrb[0].mxu0
      %v2470 = vpop.f32.mrb[0].mxu0
      %v2471 = vadd.f32 %v2316, %v2470
      %v2472 = vpop.f32.mrb[0].mxu0
      %2473 = vmatprep.mubr.bf16.mxu0 0
      %2474 = vmatmul.mubr.bf16.gmra.mrb[0].mxu0 %v2346
      %v2475 = vpop.f32.mrb[0].mxu0
      %v2476 = vadd.f32 %v2316, %v2475
      %v2477 = vpop.f32.mrb[0].mxu0
      %v2478 = vpop.f32.mrb[0].mxu0
      %v2479 = vadd.f32 %v2316, %v2478
      %v2480 = vpop.f32.mrb[0].mxu0
      %2481 = vmatprep.mubr.bf16.mxu0 0
      %2482 = vmatmul.mubr.bf16.gmra.mrb[0].mxu0 %v2349
      %v2483 = vpop.f32.mrb[0].mxu0
      %v2484 = vadd.f32 %v2316, %v2483
      %v2485 = vpop.f32.mrb[0].mxu0
      %v2486 = vpop.f32.mrb[0].mxu0
      %v2487 = vadd.f32 %v2316, %v2486
      %v2488 = vpop.f32.mrb[0].mxu0
      %2489 = vmatprep.mubr.bf16.mxu0 0
      %2490 = vmatmul.mubr.bf16.gmra.mrb[0].mxu0 %v2352
      %v2491 = vpop.f32.mrb[0].mxu0
      %v2492 = vadd.f32 %v2316, %v2491
      %v2493 = vpop.f32.mrb[0].mxu0
      %v2494 = vpop.f32.mrb[0].mxu0
      %v2495 = vadd.f32 %v2316, %v2494
      %v2496 = vpop.f32.mrb[0].mxu0
      %2497 = vmatprep.mubr.bf16.mxu0 0
      %2498 = vmatmul.mubr.bf16.gmra.mrb[0].mxu0 %v2355
      %v2499 = vpop.f32.mrb[0].mxu0
      %v2500 = vadd.f32 %v2316, %v2499
      %v2501 = vpop.f32.mrb[0].mxu0
      %v2502 = vpop.f32.mrb[0].mxu0
      %v2503 = vadd.f32 %v2316, %v2502
      %v2504 = vpop.f32.mrb[0].mxu0
      %2505 = vmatprep.mubr.bf16.mxu0 0
      %2506 = vmatmul.mubr.bf16.gmra.mrb[0].mxu0 %v2358
      %v2507 = vpop.f32.mrb[0].mxu0
      %v2508 = vadd.f32 %v2316, %v2507
      %v2509 = vpop.f32.mrb[0].mxu0
      %v2510 = vpop.f32.mrb[0].mxu0
      %v2511 = vadd.f32 %v2316, %v2510
      %v2512 = vpop.f32.mrb[0].mxu0
      %2513 = vmatprep.mubr.bf16.mxu0 0
      %2514 = vmatmul.mubr.bf16.gmra.mrb[0].mxu0 %v2361
      %v2515 = vpop.f32.mrb[0].mxu0
      %v2516 = vadd.f32 %v2316, %v2515
      %v2517 = vpop.f32.mrb[0].mxu0
      %v2518 = vpop.f32.mrb[0].mxu0
      %v2519 = vadd.f32 %v2316, %v2518
      %v2520 = vpop.f32.mrb[0].mxu0
      %2521 = vmatprep.mubr.bf16.mxu0 0
      %2522 = vmatmul.mubr.bf16.gmra.mrb[0].mxu0 %v2364
      %v2523 = vpop.f32.mrb[0].mxu0
      %v2524 = vadd.f32 %v2316, %v2523
      %v2525 = vpop.f32.mrb[0].mxu0
      %v2526 = vpop.f32.mrb[0].mxu0
      %v2527 = vadd.f32 %v2316, %v2526
      %v2528 = vpop.f32.mrb[0].mxu0
      %2529 = vdwg.mxu0
      %v2530 = vsel %vm1806, %v2168, 0.0
      %v2531 = vsel %vm1806, %v2171, 0.0
      %v2532 = vadd.f32 %v2530, %v2531
      %v2533 = vsel %vm1806, %v2176, 0.0
      %v2534 = vadd.f32 %v2532, %v2533
      %v2535 = vsel %vm1806, %v2179, 0.0
      %v2536 = vadd.f32 %v2534, %v2535
      %v2537 = vsel %vm1806, %v2184, 0.0
      %v2538 = vadd.f32 %v2536, %v2537
      %v2539 = vsel %vm1806, %v2187, 0.0
      %v2540 = vadd.f32 %v2538, %v2539
      %v2541 = vsel %vm1806, %v2192, 0.0
      %v2542 = vadd.f32 %v2540, %v2541
      %v2543 = vsel %vm1806, %v2195, 0.0
      %v2544 = vadd.f32 %v2542, %v2543
      %v2545 = vsel %vm1806, %v2200, 0.0
      %v2546 = vadd.f32 %v2544, %v2545
      %v2547 = vsel %vm1806, %v2203, 0.0
      %v2548 = vadd.f32 %v2546, %v2547
      %v2549 = vsel %vm1806, %v2208, 0.0
      %v2550 = vadd.f32 %v2548, %v2549
      %v2551 = vsel %vm1806, %v2211, 0.0
      %v2552 = vadd.f32 %v2550, %v2551
      %v2553 = vsel %vm1806, %v2216, 0.0
      %v2554 = vadd.f32 %v2552, %v2553
      %v2555 = vsel %vm1806, %v2219, 0.0
      %v2556 = vadd.f32 %v2554, %v2555
      %v2557 = vsel %vm1806, %v2224, 0.0
      %v2558 = vadd.f32 %v2556, %v2557
      %v2559 = vsel %vm1806, %v2227, 0.0
      %v2560 = vadd.f32 %v2558, %v2559
      %v2561 = vsel %vm1806, %v2232, 0.0
      %v2562 = vadd.f32 %v2560, %v2561
      %v2563 = vsel %vm1806, %v2235, 0.0
      %v2564 = vadd.f32 %v2562, %v2563
      %v2565 = vsel %vm1806, %v2240, 0.0
      %v2566 = vadd.f32 %v2564, %v2565
      %v2567 = vsel %vm1806, %v2243, 0.0
      %v2568 = vadd.f32 %v2566, %v2567
      %v2569 = vsel %vm1806, %v2248, 0.0
      %v2570 = vadd.f32 %v2568, %v2569
      %v2571 = vsel %vm1806, %v2251, 0.0
      %v2572 = vadd.f32 %v2570, %v2571
      %v2573 = vsel %vm1806, %v2256, 0.0
      %v2574 = vadd.f32 %v2572, %v2573
      %v2575 = vsel %vm1806, %v2259, 0.0
      %v2576 = vadd.f32 %v2574, %v2575
      %v2577 = vsel %vm1806, %v2264, 0.0
      %v2578 = vadd.f32 %v2576, %v2577
      %v2579 = vsel %vm1806, %v2267, 0.0
      %v2580 = vadd.f32 %v2578, %v2579
      %v2581 = vsel %vm1806, %v2272, 0.0
      %v2582 = vadd.f32 %v2580, %v2581
      %v2583 = vsel %vm1806, %v2275, 0.0
      %v2584 = vadd.f32 %v2582, %v2583
      %v2585 = vsel %vm1806, %v2280, 0.0
      %v2586 = vadd.f32 %v2584, %v2585
      %v2587 = vsel %vm1806, %v2283, 0.0
      %v2588 = vadd.f32 %v2586, %v2587
      %v2589 = vsel %vm1806, %v2288, 0.0
      %v2590 = vadd.f32 %v2588, %v2589
      %v2591 = vsel %vm1806, %v2291, 0.0
      %v2592 = vadd.f32 %v2590, %v2591
      %v2593 = vrot.slane %v2592, 4
      %v2594 = vadd.f32 %v2592, %v2593
      %v2595 = vrot.slane %v2594, 2
      %v2596 = vadd.f32 %v2594, %v2595
      %v2597 = vrot.slane %v2596, 1
      %v2598 = vadd.f32 %v2596, %v2597
      %v2599 = vmul.f32 %v2598, 0.00390625
      %v2600 = vsub.f32 %v2168, %v2599
      %v2601 = vsub.f32 %v2171, %v2599
      %v2602 = vsub.f32 %v2176, %v2599
      %v2603 = vsub.f32 %v2179, %v2599
      %v2604 = vsub.f32 %v2184, %v2599
      %v2605 = vsub.f32 %v2187, %v2599
      %v2606 = vsub.f32 %v2192, %v2599
      %v2607 = vsub.f32 %v2195, %v2599
      %v2608 = vsub.f32 %v2200, %v2599
      %v2609 = vsub.f32 %v2203, %v2599
      %v2610 = vsub.f32 %v2208, %v2599
      %v2611 = vsub.f32 %v2211, %v2599
      %v2612 = vsub.f32 %v2216, %v2599
      %v2613 = vsub.f32 %v2219, %v2599
      %v2614 = vsub.f32 %v2224, %v2599
      %v2615 = vsub.f32 %v2227, %v2599
      %v2616 = vsub.f32 %v2232, %v2599
      %v2617 = vsub.f32 %v2235, %v2599
      %v2618 = vsub.f32 %v2240, %v2599
      %v2619 = vsub.f32 %v2243, %v2599
      %v2620 = vsub.f32 %v2248, %v2599
      %v2621 = vsub.f32 %v2251, %v2599
      %v2622 = vsub.f32 %v2256, %v2599
      %v2623 = vsub.f32 %v2259, %v2599
      %v2624 = vsub.f32 %v2264, %v2599
      %v2625 = vsub.f32 %v2267, %v2599
      %v2626 = vsub.f32 %v2272, %v2599
      %v2627 = vsub.f32 %v2275, %v2599
      %v2628 = vsub.f32 %v2280, %v2599
      %v2629 = vsub.f32 %v2283, %v2599
      %v2630 = vsub.f32 %v2288, %v2599
      %v2631 = vsub.f32 %v2291, %v2599
      %v2632 = vmul.f32 %v2600, %v2600
      %v2633 = vmul.f32 %v2601, %v2601
      %v2634 = vmul.f32 %v2602, %v2602
      %v2635 = vmul.f32 %v2603, %v2603
      %v2636 = vmul.f32 %v2604, %v2604
      %v2637 = vmul.f32 %v2605, %v2605
      %v2638 = vmul.f32 %v2606, %v2606
      %v2639 = vmul.f32 %v2607, %v2607
      %v2640 = vmul.f32 %v2608, %v2608
      %v2641 = vmul.f32 %v2609, %v2609
      %v2642 = vmul.f32 %v2610, %v2610
      %v2643 = vmul.f32 %v2611, %v2611
      %v2644 = vmul.f32 %v2612, %v2612
      %v2645 = vmul.f32 %v2613, %v2613
      %v2646 = vmul.f32 %v2614, %v2614
      %v2647 = vmul.f32 %v2615, %v2615
      %v2648 = vmul.f32 %v2616, %v2616
      %v2649 = vmul.f32 %v2617, %v2617
      %v2650 = vmul.f32 %v2618, %v2618
      %v2651 = vmul.f32 %v2619, %v2619
      %v2652 = vmul.f32 %v2620, %v2620
      %v2653 = vmul.f32 %v2621, %v2621
      %v2654 = vmul.f32 %v2622, %v2622
      %v2655 = vmul.f32 %v2623, %v2623
      %v2656 = vmul.f32 %v2624, %v2624
      %v2657 = vmul.f32 %v2625, %v2625
      %v2658 = vmul.f32 %v2626, %v2626
      %v2659 = vmul.f32 %v2627, %v2627
      %v2660 = vmul.f32 %v2628, %v2628
      %v2661 = vmul.f32 %v2629, %v2629
      %v2662 = vmul.f32 %v2630, %v2630
      %v2663 = vmul.f32 %v2631, %v2631
      %v2664 = vsel %vm1806, %v2632, 0.0
      %v2665 = vsel %vm1806, %v2633, 0.0
      %v2666 = vadd.f32 %v2664, %v2665
      %v2667 = vsel %vm1806, %v2634, 0.0
      %v2668 = vadd.f32 %v2666, %v2667
      %v2669 = vsel %vm1806, %v2635, 0.0
      %v2670 = vadd.f32 %v2668, %v2669
      %v2671 = vsel %vm1806, %v2636, 0.0
      %v2672 = vadd.f32 %v2670, %v2671
      %v2673 = vsel %vm1806, %v2637, 0.0
      %v2674 = vadd.f32 %v2672, %v2673
      %v2675 = vsel %vm1806, %v2638, 0.0
      %v2676 = vadd.f32 %v2674, %v2675
      %v2677 = vsel %vm1806, %v2639, 0.0
      %v2678 = vadd.f32 %v2676, %v2677
      %v2679 = vsel %vm1806, %v2640, 0.0
      %v2680 = vadd.f32 %v2678, %v2679
      %v2681 = vsel %vm1806, %v2641, 0.0
      %v2682 = vadd.f32 %v2680, %v2681
      %v2683 = vsel %vm1806, %v2642, 0.0
      %v2684 = vadd.f32 %v2682, %v2683
      %v2685 = vsel %vm1806, %v2643, 0.0
      %v2686 = vadd.f32 %v2684, %v2685
      %v2687 = vsel %vm1806, %v2644, 0.0
      %v2688 = vadd.f32 %v2686, %v2687
      %v2689 = vsel %vm1806, %v2645, 0.0
      %v2690 = vadd.f32 %v2688, %v2689
      %v2691 = vsel %vm1806, %v2646, 0.0
      %v2692 = vadd.f32 %v2690, %v2691
      %v2693 = vsel %vm1806, %v2647, 0.0
      %v2694 = vadd.f32 %v2692, %v2693
      %v2695 = vsel %vm1806, %v2648, 0.0
      %v2696 = vadd.f32 %v2694, %v2695
      %v2697 = vsel %vm1806, %v2649, 0.0
      %v2698 = vadd.f32 %v2696, %v2697
      %v2699 = vsel %vm1806, %v2650, 0.0
      %v2700 = vadd.f32 %v2698, %v2699
      %v2701 = vsel %vm1806, %v2651, 0.0
      %v2702 = vadd.f32 %v2700, %v2701
      %v2703 = vsel %vm1806, %v2652, 0.0
      %v2704 = vadd.f32 %v2702, %v2703
      %v2705 = vsel %vm1806, %v2653, 0.0
      %v2706 = vadd.f32 %v2704, %v2705
      %v2707 = vsel %vm1806, %v2654, 0.0
      %v2708 = vadd.f32 %v2706, %v2707
      %v2709 = vsel %vm1806, %v2655, 0.0
      %v2710 = vadd.f32 %v2708, %v2709
      %v2711 = vsel %vm1806, %v2656, 0.0
      %v2712 = vadd.f32 %v2710, %v2711
      %v2713 = vsel %vm1806, %v2657, 0.0
      %v2714 = vadd.f32 %v2712, %v2713
      %v2715 = vsel %vm1806, %v2658, 0.0
      %v2716 = vadd.f32 %v2714, %v2715
      %v2717 = vsel %vm1806, %v2659, 0.0
      %v2718 = vadd.f32 %v2716, %v2717
      %v2719 = vsel %vm1806, %v2660, 0.0
      %v2720 = vadd.f32 %v2718, %v2719
      %v2721 = vsel %vm1806, %v2661, 0.0
      %v2722 = vadd.f32 %v2720, %v2721
      %v2723 = vsel %vm1806, %v2662, 0.0
      %v2724 = vadd.f32 %v2722, %v2723
      %v2725 = vsel %vm1806, %v2663, 0.0
      %v2726 = vadd.f32 %v2724, %v2725
      %v2727 = vrot.slane %v2726, 4
      %v2728 = vadd.f32 %v2726, %v2727
      %v2729 = vrot.slane %v2728, 2
      %v2730 = vadd.f32 %v2728, %v2729
      %v2731 = vrot.slane %v2730, 1
      %v2732 = vadd.f32 %v2730, %v2731
      %vm2733 = vcmask 1040384
      %v2734 = vsel %vm2733, %v2598, %v2732
      %vm2735 = vcmask 58368
      %2736 = vst.msk [vmem:[%s334] sm:$0x3] %vm2735, %v2734
      %v2737 = vsel %vm1806, %v2404, 0.0
      %v2738 = vsel %vm1806, %v2407, 0.0
      %v2739 = vadd.f32 %v2737, %v2738
      %v2740 = vsel %vm1806, %v2412, 0.0
      %v2741 = vadd.f32 %v2739, %v2740
      %v2742 = vsel %vm1806, %v2415, 0.0
      %v2743 = vadd.f32 %v2741, %v2742
      %v2744 = vsel %vm1806, %v2420, 0.0
      %v2745 = vadd.f32 %v2743, %v2744
      %v2746 = vsel %vm1806, %v2423, 0.0
      %v2747 = vadd.f32 %v2745, %v2746
      %v2748 = vsel %vm1806, %v2428, 0.0
      %v2749 = vadd.f32 %v2747, %v2748
      %v2750 = vsel %vm1806, %v2431, 0.0
      %v2751 = vadd.f32 %v2749, %v2750
      %v2752 = vsel %vm1806, %v2436, 0.0
      %v2753 = vadd.f32 %v2751, %v2752
      %v2754 = vsel %vm1806, %v2439, 0.0
      %v2755 = vadd.f32 %v2753, %v2754
      %v2756 = vsel %vm1806, %v2444, 0.0
      %v2757 = vadd.f32 %v2755, %v2756
      %v2758 = vsel %vm1806, %v2447, 0.0
      %v2759 = vadd.f32 %v2757, %v2758
      %v2760 = vsel %vm1806, %v2452, 0.0
      %v2761 = vadd.f32 %v2759, %v2760
      %v2762 = vsel %vm1806, %v2455, 0.0
      %v2763 = vadd.f32 %v2761, %v2762
      %v2764 = vsel %vm1806, %v2460, 0.0
      %v2765 = vadd.f32 %v2763, %v2764
      %v2766 = vsel %vm1806, %v2463, 0.0
      %v2767 = vadd.f32 %v2765, %v2766
      %v2768 = vsel %vm1806, %v2468, 0.0
      %v2769 = vadd.f32 %v2767, %v2768
      %v2770 = vsel %vm1806, %v2471, 0.0
      %v2771 = vadd.f32 %v2769, %v2770
      %v2772 = vsel %vm1806, %v2476, 0.0
      %v2773 = vadd.f32 %v2771, %v2772
      %v2774 = vsel %vm1806, %v2479, 0.0
      %v2775 = vadd.f32 %v2773, %v2774
      %v2776 = vsel %vm1806, %v2484, 0.0
      %v2777 = vadd.f32 %v2775, %v2776
      %v2778 = vsel %vm1806, %v2487, 0.0
      %v2779 = vadd.f32 %v2777, %v2778
      %v2780 = vsel %vm1806, %v2492, 0.0
      %v2781 = vadd.f32 %v2779, %v2780
      %v2782 = vsel %vm1806, %v2495, 0.0
      %v2783 = vadd.f32 %v2781, %v2782
      %v2784 = vsel %vm1806, %v2500, 0.0
      %v2785 = vadd.f32 %v2783, %v2784
      %v2786 = vsel %vm1806, %v2503, 0.0
      %v2787 = vadd.f32 %v2785, %v2786
      %v2788 = vsel %vm1806, %v2508, 0.0
      %v2789 = vadd.f32 %v2787, %v2788
      %v2790 = vsel %vm1806, %v2511, 0.0
      %v2791 = vadd.f32 %v2789, %v2790
      %v2792 = vsel %vm1806, %v2516, 0.0
      %v2793 = vadd.f32 %v2791, %v2792
      %v2794 = vsel %vm1806, %v2519, 0.0
      %v2795 = vadd.f32 %v2793, %v2794
      %v2796 = vsel %vm1806, %v2524, 0.0
      %v2797 = vadd.f32 %v2795, %v2796
      %v2798 = vsel %vm1806, %v2527, 0.0
      %v2799 = vadd.f32 %v2797, %v2798
      %v2800 = vrot.slane %v2799, 4
      %v2801 = vadd.f32 %v2799, %v2800
      %v2802 = vrot.slane %v2801, 2
      %v2803 = vadd.f32 %v2801, %v2802
      %v2804 = vrot.slane %v2803, 1
      %v2805 = vadd.f32 %v2803, %v2804
      %v2806 = vmul.f32 %v2805, 0.00390625
      %v2807 = vsub.f32 %v2404, %v2806
      %v2808 = vsub.f32 %v2407, %v2806
      %v2809 = vsub.f32 %v2412, %v2806
      %v2810 = vsub.f32 %v2415, %v2806
      %v2811 = vsub.f32 %v2420, %v2806
      %v2812 = vsub.f32 %v2423, %v2806
      %v2813 = vsub.f32 %v2428, %v2806
      %v2814 = vsub.f32 %v2431, %v2806
      %v2815 = vsub.f32 %v2436, %v2806
      %v2816 = vsub.f32 %v2439, %v2806
      %v2817 = vsub.f32 %v2444, %v2806
      %v2818 = vsub.f32 %v2447, %v2806
      %v2819 = vsub.f32 %v2452, %v2806
      %v2820 = vsub.f32 %v2455, %v2806
      %v2821 = vsub.f32 %v2460, %v2806
      %v2822 = vsub.f32 %v2463, %v2806
      %v2823 = vsub.f32 %v2468, %v2806
      %v2824 = vsub.f32 %v2471, %v2806
      %v2825 = vsub.f32 %v2476, %v2806
      %v2826 = vsub.f32 %v2479, %v2806
      %v2827 = vsub.f32 %v2484, %v2806
      %v2828 = vsub.f32 %v2487, %v2806
      %v2829 = vsub.f32 %v2492, %v2806
      %v2830 = vsub.f32 %v2495, %v2806
      %v2831 = vsub.f32 %v2500, %v2806
      %v2832 = vsub.f32 %v2503, %v2806
      %v2833 = vsub.f32 %v2508, %v2806
      %v2834 = vsub.f32 %v2511, %v2806
      %v2835 = vsub.f32 %v2516, %v2806
      %v2836 = vsub.f32 %v2519, %v2806
      %v2837 = vsub.f32 %v2524, %v2806
      %v2838 = vsub.f32 %v2527, %v2806
      %v2839 = vmul.f32 %v2807, %v2807
      %v2840 = vmul.f32 %v2808, %v2808
      %v2841 = vmul.f32 %v2809, %v2809
      %v2842 = vmul.f32 %v2810, %v2810
      %v2843 = vmul.f32 %v2811, %v2811
      %v2844 = vmul.f32 %v2812, %v2812
      %v2845 = vmul.f32 %v2813, %v2813
      %v2846 = vmul.f32 %v2814, %v2814
      %v2847 = vmul.f32 %v2815, %v2815
      %v2848 = vmul.f32 %v2816, %v2816
      %v2849 = vmul.f32 %v2817, %v2817
      %v2850 = vmul.f32 %v2818, %v2818
      %v2851 = vmul.f32 %v2819, %v2819
      %v2852 = vmul.f32 %v2820, %v2820
      %v2853 = vmul.f32 %v2821, %v2821
      %v2854 = vmul.f32 %v2822, %v2822
      %v2855 = vmul.f32 %v2823, %v2823
      %v2856 = vmul.f32 %v2824, %v2824
      %v2857 = vmul.f32 %v2825, %v2825
      %v2858 = vmul.f32 %v2826, %v2826
      %v2859 = vmul.f32 %v2827, %v2827
      %v2860 = vmul.f32 %v2828, %v2828
      %v2861 = vmul.f32 %v2829, %v2829
      %v2862 = vmul.f32 %v2830, %v2830
      %v2863 = vmul.f32 %v2831, %v2831
      %v2864 = vmul.f32 %v2832, %v2832
      %v2865 = vmul.f32 %v2833, %v2833
      %v2866 = vmul.f32 %v2834, %v2834
      %v2867 = vmul.f32 %v2835, %v2835
      %v2868 = vmul.f32 %v2836, %v2836
      %v2869 = vmul.f32 %v2837, %v2837
      %v2870 = vmul.f32 %v2838, %v2838
      %v2871 = vsel %vm1806, %v2839, 0.0
      %v2872 = vsel %vm1806, %v2840, 0.0
      %v2873 = vadd.f32 %v2871, %v2872
      %v2874 = vsel %vm1806, %v2841, 0.0
      %v2875 = vadd.f32 %v2873, %v2874
      %v2876 = vsel %vm1806, %v2842, 0.0
      %v2877 = vadd.f32 %v2875, %v2876
      %v2878 = vsel %vm1806, %v2843, 0.0
      %v2879 = vadd.f32 %v2877, %v2878
      %v2880 = vsel %vm1806, %v2844, 0.0
      %v2881 = vadd.f32 %v2879, %v2880
      %v2882 = vsel %vm1806, %v2845, 0.0
      %v2883 = vadd.f32 %v2881, %v2882
      %v2884 = vsel %vm1806, %v2846, 0.0
      %v2885 = vadd.f32 %v2883, %v2884
      %v2886 = vsel %vm1806, %v2847, 0.0
      %v2887 = vadd.f32 %v2885, %v2886
      %v2888 = vsel %vm1806, %v2848, 0.0
      %v2889 = vadd.f32 %v2887, %v2888
      %v2890 = vsel %vm1806, %v2849, 0.0
      %v2891 = vadd.f32 %v2889, %v2890
      %v2892 = vsel %vm1806, %v2850, 0.0
      %v2893 = vadd.f32 %v2891, %v2892
      %v2894 = vsel %vm1806, %v2851, 0.0
      %v2895 = vadd.f32 %v2893, %v2894
      %v2896 = vsel %vm1806, %v2852, 0.0
      %v2897 = vadd.f32 %v2895, %v2896
      %v2898 = vsel %vm1806, %v2853, 0.0
      %v2899 = vadd.f32 %v2897, %v2898
      %v2900 = vsel %vm1806, %v2854, 0.0
      %v2901 = vadd.f32 %v2899, %v2900
      %v2902 = vsel %vm1806, %v2855, 0.0
      %v2903 = vadd.f32 %v2901, %v2902
      %v2904 = vsel %vm1806, %v2856, 0.0
      %v2905 = vadd.f32 %v2903, %v2904
      %v2906 = vsel %vm1806, %v2857, 0.0
      %v2907 = vadd.f32 %v2905, %v2906
      %v2908 = vsel %vm1806, %v2858, 0.0
      %v2909 = vadd.f32 %v2907, %v2908
      %v2910 = vsel %vm1806, %v2859, 0.0
      %v2911 = vadd.f32 %v2909, %v2910
      %v2912 = vsel %vm1806, %v2860, 0.0
      %v2913 = vadd.f32 %v2911, %v2912
      %v2914 = vsel %vm1806, %v2861, 0.0
      %v2915 = vadd.f32 %v2913, %v2914
      %v2916 = vsel %vm1806, %v2862, 0.0
      %v2917 = vadd.f32 %v2915, %v2916
      %v2918 = vsel %vm1806, %v2863, 0.0
      %v2919 = vadd.f32 %v2917, %v2918
      %v2920 = vsel %vm1806, %v2864, 0.0
      %v2921 = vadd.f32 %v2919, %v2920
      %v2922 = vsel %vm1806, %v2865, 0.0
      %v2923 = vadd.f32 %v2921, %v2922
      %v2924 = vsel %vm1806, %v2866, 0.0
      %v2925 = vadd.f32 %v2923, %v2924
      %v2926 = vsel %vm1806, %v2867, 0.0
      %v2927 = vadd.f32 %v2925, %v2926
      %v2928 = vsel %vm1806, %v2868, 0.0
      %v2929 = vadd.f32 %v2927, %v2928
      %v2930 = vsel %vm1806, %v2869, 0.0
      %v2931 = vadd.f32 %v2929, %v2930
      %v2932 = vsel %vm1806, %v2870, 0.0
      %v2933 = vadd.f32 %v2931, %v2932
      %v2934 = vrot.slane %v2933, 4
      %v2935 = vadd.f32 %v2933, %v2934
      %v2936 = vrot.slane %v2935, 2
      %v2937 = vadd.f32 %v2935, %v2936
      %v2938 = vrot.slane %v2937, 1
      %v2939 = vadd.f32 %v2937, %v2938
      %v2940 = vsel %vm2733, %v2805, %v2939
      %2941 = vst.msk [vmem:[%s338] sm:$0x3] %vm2735, %v2940
      %v2942 = vpack.c.bf16 %v2171, %v2168
      %v2943 = vpack.c.bf16 %v2179, %v2176
      %v2944 = vpack.c.bf16 %v2187, %v2184
      %v2945 = vpack.c.bf16 %v2195, %v2192
      %v2946 = vpack.c.bf16 %v2203, %v2200
      %v2947 = vpack.c.bf16 %v2211, %v2208
      %v2948 = vpack.c.bf16 %v2219, %v2216
      %v2949 = vpack.c.bf16 %v2227, %v2224
      %v2950 = vpack.c.bf16 %v2235, %v2232
      %v2951 = vpack.c.bf16 %v2243, %v2240
      %v2952 = vpack.c.bf16 %v2251, %v2248
      %v2953 = vpack.c.bf16 %v2259, %v2256
      %v2954 = vpack.c.bf16 %v2267, %v2264
      %v2955 = vpack.c.bf16 %v2275, %v2272
      %v2956 = vpack.c.bf16 %v2283, %v2280
      %v2957 = vpack.c.bf16 %v2291, %v2288
      %v2974 = vunpack.c.l.b16 %v2942
      %v2975 = vunpack.c.h.b16 %v2942
      %v2976 = vunpack.c.l.b16 %v2943
      %v2977 = vunpack.c.h.b16 %v2943
      %v2978 = vunpack.c.l.b16 %v2944
      %v2979 = vunpack.c.h.b16 %v2944
      %v2980 = vunpack.c.l.b16 %v2945
      %v2981 = vunpack.c.h.b16 %v2945
      %v2982 = vunpack.c.l.b16 %v2946
      %v2983 = vunpack.c.h.b16 %v2946
      %v2984 = vunpack.c.l.b16 %v2947
      %v2985 = vunpack.c.h.b16 %v2947
      %v2986 = vunpack.c.l.b16 %v2948
      %v2987 = vunpack.c.h.b16 %v2948
      %v2988 = vunpack.c.l.b16 %v2949
      %v2989 = vunpack.c.h.b16 %v2949
      %v2990 = vunpack.c.l.b16 %v2950
      %v2991 = vunpack.c.h.b16 %v2950
      %v2992 = vunpack.c.l.b16 %v2951
      %v2993 = vunpack.c.h.b16 %v2951
      %v2994 = vunpack.c.l.b16 %v2952
      %v2995 = vunpack.c.h.b16 %v2952
      %v2996 = vunpack.c.l.b16 %v2953
      %v2997 = vunpack.c.h.b16 %v2953
      %v2998 = vunpack.c.l.b16 %v2954
      %v2999 = vunpack.c.h.b16 %v2954
      %v3000 = vunpack.c.l.b16 %v2955
      %v3001 = vunpack.c.h.b16 %v2955
      %v3002 = vunpack.c.l.b16 %v2956
      %v3003 = vunpack.c.h.b16 %v2956
      %v3004 = vunpack.c.l.b16 %v2957
      %v3005 = vunpack.c.h.b16 %v2957
      %v3006 = vpack.c.b16 %v2974, %v2974
      %v3007 = vpack.c.b16 %v2975, %v2975
      %v3008 = vpack.c.b16 %v2976, %v2976
      %v3009 = vpack.c.b16 %v2977, %v2977
      %v3010 = vpack.c.b16 %v2978, %v2978
      %v3011 = vpack.c.b16 %v2979, %v2979
      %v3012 = vpack.c.b16 %v2980, %v2980
      %v3013 = vpack.c.b16 %v2981, %v2981
      %v3014 = vpack.c.b16 %v2982, %v2982
      %v3015 = vpack.c.b16 %v2983, %v2983
      %v3016 = vpack.c.b16 %v2984, %v2984
      %v3017 = vpack.c.b16 %v2985, %v2985
      %v3018 = vpack.c.b16 %v2986, %v2986
      %v3019 = vpack.c.b16 %v2987, %v2987
      %v3020 = vpack.c.b16 %v2988, %v2988
      %v3021 = vpack.c.b16 %v2989, %v2989
      %v3022 = vpack.c.b16 %v2990, %v2990
      %v3023 = vpack.c.b16 %v2991, %v2991
      %v3024 = vpack.c.b16 %v2992, %v2992
      %v3025 = vpack.c.b16 %v2993, %v2993
      %v3026 = vpack.c.b16 %v2994, %v2994
      %v3027 = vpack.c.b16 %v2995, %v2995
      %v3028 = vpack.c.b16 %v2996, %v2996
      %v3029 = vpack.c.b16 %v2997, %v2997
      %v3030 = vpack.c.b16 %v2998, %v2998
      %v3031 = vpack.c.b16 %v2999, %v2999
      %v3032 = vpack.c.b16 %v3000, %v3000
      %v3033 = vpack.c.b16 %v3001, %v3001
      %v3034 = vpack.c.b16 %v3002, %v3002
      %v3035 = vpack.c.b16 %v3003, %v3003
      %v3036 = vpack.c.b16 %v3004, %v3004
      %v3037 = vpack.c.b16 %v3005, %v3005
      %vm3070 = vcmask 60416
      %3071 = vst.msk [vmem:[%s325] sm:$0xf] %vm3070, %v3006
      %3072 = vst.msk [vmem:[%s325 + $0x4] sm:$0xf] %vm3070, %v3007
      %3073 = vst.msk [vmem:[%s325 + $0x8] sm:$0xf] %vm3070, %v3008
      %3074 = vst.msk [vmem:[%s325 + $0xc] sm:$0xf] %vm3070, %v3009
      %3075 = vst.msk [vmem:[%s325 + $0x10] sm:$0xf] %vm3070, %v3010
      %3076 = vst.msk [vmem:[%s325 + $0x14] sm:$0xf] %vm3070, %v3011
      %3077 = vst.msk [vmem:[%s325 + $0x18] sm:$0xf] %vm3070, %v3012
      %3078 = vst.msk [vmem:[%s325 + $0x1c] sm:$0xf] %vm3070, %v3013
      %3079 = vst.msk [vmem:[%s325 + $0x20] sm:$0xf] %vm3070, %v3014
      %3080 = vst.msk [vmem:[%s325 + $0x24] sm:$0xf] %vm3070, %v3015
      %3081 = vst.msk [vmem:[%s325 + $0x28] sm:$0xf] %vm3070, %v3016
      %3082 = vst.msk [vmem:[%s325 + $0x2c] sm:$0xf] %vm3070, %v3017
      %3083 = vst.msk [vmem:[%s325 + $0x30] sm:$0xf] %vm3070, %v3018
      %3084 = vst.msk [vmem:[%s325 + $0x34] sm:$0xf] %vm3070, %v3019
      %3085 = vst.msk [vmem:[%s325 + $0x38] sm:$0xf] %vm3070, %v3020
      %3086 = vst.msk [vmem:[%s325 + $0x3c] sm:$0xf] %vm3070, %v3021
      %3087 = vst.msk [vmem:[%s325 + $0x40] sm:$0xf] %vm3070, %v3022
      %3088 = vst.msk [vmem:[%s325 + $0x44] sm:$0xf] %vm3070, %v3023
      %3089 = vst.msk [vmem:[%s325 + $0x48] sm:$0xf] %vm3070, %v3024
      %3090 = vst.msk [vmem:[%s325 + $0x4c] sm:$0xf] %vm3070, %v3025
      %3091 = vst.msk [vmem:[%s325 + $0x50] sm:$0xf] %vm3070, %v3026
      %3092 = vst.msk [vmem:[%s325 + $0x54] sm:$0xf] %vm3070, %v3027
      %3093 = vst.msk [vmem:[%s325 + $0x58] sm:$0xf] %vm3070, %v3028
      %3094 = vst.msk [vmem:[%s325 + $0x5c] sm:$0xf] %vm3070, %v3029
      %3095 = vst.msk [vmem:[%s325 + $0x60] sm:$0xf] %vm3070, %v3030
      %3096 = vst.msk [vmem:[%s325 + $0x64] sm:$0xf] %vm3070, %v3031
      %3097 = vst.msk [vmem:[%s325 + $0x68] sm:$0xf] %vm3070, %v3032
      %3098 = vst.msk [vmem:[%s325 + $0x6c] sm:$0xf] %vm3070, %v3033
      %3099 = vst.msk [vmem:[%s325 + $0x70] sm:$0xf] %vm3070, %v3034
      %3100 = vst.msk [vmem:[%s325 + $0x74] sm:$0xf] %vm3070, %v3035
      %3101 = vst.msk [vmem:[%s325 + $0x78] sm:$0xf] %vm3070, %v3036
      %3102 = vst.msk [vmem:[%s325 + $0x7c] sm:$0xf] %vm3070, %v3037
      %v3103 = vpack.c.bf16 %v2407, %v2404
      %v3104 = vpack.c.bf16 %v2415, %v2412
      %v3105 = vpack.c.bf16 %v2423, %v2420
      %v3106 = vpack.c.bf16 %v2431, %v2428
      %v3107 = vpack.c.bf16 %v2439, %v2436
      %v3108 = vpack.c.bf16 %v2447, %v2444
      %v3109 = vpack.c.bf16 %v2455, %v2452
      %v3110 = vpack.c.bf16 %v2463, %v2460
      %v3111 = vpack.c.bf16 %v2471, %v2468
      %v3112 = vpack.c.bf16 %v2479, %v2476
      %v3113 = vpack.c.bf16 %v2487, %v2484
      %v3114 = vpack.c.bf16 %v2495, %v2492
      %v3115 = vpack.c.bf16 %v2503, %v2500
      %v3116 = vpack.c.bf16 %v2511, %v2508
      %v3117 = vpack.c.bf16 %v2519, %v2516
      %v3118 = vpack.c.bf16 %v2527, %v2524
      %v3135 = vunpack.c.l.b16 %v3103
      %v3136 = vunpack.c.h.b16 %v3103
      %v3137 = vunpack.c.l.b16 %v3104
      %v3138 = vunpack.c.h.b16 %v3104
      %v3139 = vunpack.c.l.b16 %v3105
      %v3140 = vunpack.c.h.b16 %v3105
      %v3141 = vunpack.c.l.b16 %v3106
      %v3142 = vunpack.c.h.b16 %v3106
      %v3143 = vunpack.c.l.b16 %v3107
      %v3144 = vunpack.c.h.b16 %v3107
      %v3145 = vunpack.c.l.b16 %v3108
      %v3146 = vunpack.c.h.b16 %v3108
      %v3147 = vunpack.c.l.b16 %v3109
      %v3148 = vunpack.c.h.b16 %v3109
      %v3149 = vunpack.c.l.b16 %v3110
      %v3150 = vunpack.c.h.b16 %v3110
      %v3151 = vunpack.c.l.b16 %v3111
      %v3152 = vunpack.c.h.b16 %v3111
      %v3153 = vunpack.c.l.b16 %v3112
      %v3154 = vunpack.c.h.b16 %v3112
      %v3155 = vunpack.c.l.b16 %v3113
      %v3156 = vunpack.c.h.b16 %v3113
      %v3157 = vunpack.c.l.b16 %v3114
      %v3158 = vunpack.c.h.b16 %v3114
      %v3159 = vunpack.c.l.b16 %v3115
      %v3160 = vunpack.c.h.b16 %v3115
      %v3161 = vunpack.c.l.b16 %v3116
      %v3162 = vunpack.c.h.b16 %v3116
      %v3163 = vunpack.c.l.b16 %v3117
      %v3164 = vunpack.c.h.b16 %v3117
      %v3165 = vunpack.c.l.b16 %v3118
      %v3166 = vunpack.c.h.b16 %v3118
      %v3167 = vpack.c.b16 %v3135, %v3135
      %v3168 = vpack.c.b16 %v3136, %v3136
      %v3169 = vpack.c.b16 %v3137, %v3137
      %v3170 = vpack.c.b16 %v3138, %v3138
      %v3171 = vpack.c.b16 %v3139, %v3139
      %v3172 = vpack.c.b16 %v3140, %v3140
      %v3173 = vpack.c.b16 %v3141, %v3141
      %v3174 = vpack.c.b16 %v3142, %v3142
      %v3175 = vpack.c.b16 %v3143, %v3143
      %v3176 = vpack.c.b16 %v3144, %v3144
      %v3177 = vpack.c.b16 %v3145, %v3145
      %v3178 = vpack.c.b16 %v3146, %v3146
      %v3179 = vpack.c.b16 %v3147, %v3147
      %v3180 = vpack.c.b16 %v3148, %v3148
      %v3181 = vpack.c.b16 %v3149, %v3149
      %v3182 = vpack.c.b16 %v3150, %v3150
      %v3183 = vpack.c.b16 %v3151, %v3151
      %v3184 = vpack.c.b16 %v3152, %v3152
      %v3185 = vpack.c.b16 %v3153, %v3153
      %v3186 = vpack.c.b16 %v3154, %v3154
      %v3187 = vpack.c.b16 %v3155, %v3155
      %v3188 = vpack.c.b16 %v3156, %v3156
      %v3189 = vpack.c.b16 %v3157, %v3157
      %v3190 = vpack.c.b16 %v3158, %v3158
      %v3191 = vpack.c.b16 %v3159, %v3159
      %v3192 = vpack.c.b16 %v3160, %v3160
      %v3193 = vpack.c.b16 %v3161, %v3161
      %v3194 = vpack.c.b16 %v3162, %v3162
      %v3195 = vpack.c.b16 %v3163, %v3163
      %v3196 = vpack.c.b16 %v3164, %v3164
      %v3197 = vpack.c.b16 %v3165, %v3165
      %v3198 = vpack.c.b16 %v3166, %v3166
      %3231 = vst.msk [vmem:[%s330] sm:$0xf] %vm3070, %v3167
      %3232 = vst.msk [vmem:[%s330 + $0x4] sm:$0xf] %vm3070, %v3168
      %3233 = vst.msk [vmem:[%s330 + $0x8] sm:$0xf] %vm3070, %v3169
      %3234 = vst.msk [vmem:[%s330 + $0xc] sm:$0xf] %vm3070, %v3170
      %3235 = vst.msk [vmem:[%s330 + $0x10] sm:$0xf] %vm3070, %v3171
      %3236 = vst.msk [vmem:[%s330 + $0x14] sm:$0xf] %vm3070, %v3172
      %3237 = vst.msk [vmem:[%s330 + $0x18] sm:$0xf] %vm3070, %v3173
      %3238 = vst.msk [vmem:[%s330 + $0x1c] sm:$0xf] %vm3070, %v3174
      %3239 = vst.msk [vmem:[%s330 + $0x20] sm:$0xf] %vm3070, %v3175
      %3240 = vst.msk [vmem:[%s330 + $0x24] sm:$0xf] %vm3070, %v3176
      %3241 = vst.msk [vmem:[%s330 + $0x28] sm:$0xf] %vm3070, %v3177
      %3242 = vst.msk [vmem:[%s330 + $0x2c] sm:$0xf] %vm3070, %v3178
      %3243 = vst.msk [vmem:[%s330 + $0x30] sm:$0xf] %vm3070, %v3179
      %3244 = vst.msk [vmem:[%s330 + $0x34] sm:$0xf] %vm3070, %v3180
      %3245 = vst.msk [vmem:[%s330 + $0x38] sm:$0xf] %vm3070, %v3181
      %3246 = vst.msk [vmem:[%s330 + $0x3c] sm:$0xf] %vm3070, %v3182
      %3247 = vst.msk [vmem:[%s330 + $0x40] sm:$0xf] %vm3070, %v3183
      %3248 = vst.msk [vmem:[%s330 + $0x44] sm:$0xf] %vm3070, %v3184
      %3249 = vst.msk [vmem:[%s330 + $0x48] sm:$0xf] %vm3070, %v3185
      %3250 = vst.msk [vmem:[%s330 + $0x4c] sm:$0xf] %vm3070, %v3186
      %3251 = vst.msk [vmem:[%s330 + $0x50] sm:$0xf] %vm3070, %v3187
      %3252 = vst.msk [vmem:[%s330 + $0x54] sm:$0xf] %vm3070, %v3188
      %3253 = vst.msk [vmem:[%s330 + $0x58] sm:$0xf] %vm3070, %v3189
      %3254 = vst.msk [vmem:[%s330 + $0x5c] sm:$0xf] %vm3070, %v3190
      %3255 = vst.msk [vmem:[%s330 + $0x60] sm:$0xf] %vm3070, %v3191
      %3256 = vst.msk [vmem:[%s330 + $0x64] sm:$0xf] %vm3070, %v3192
      %3257 = vst.msk [vmem:[%s330 + $0x68] sm:$0xf] %vm3070, %v3193
      %3258 = vst.msk [vmem:[%s330 + $0x6c] sm:$0xf] %vm3070, %v3194
      %3259 = vst.msk [vmem:[%s330 + $0x70] sm:$0xf] %vm3070, %v3195
      %3260 = vst.msk [vmem:[%s330 + $0x74] sm:$0xf] %vm3070, %v3196
      %3261 = vst.msk [vmem:[%s330 + $0x78] sm:$0xf] %vm3070, %v3197
      %3262 = vst.msk [vmem:[%s330 + $0x7c] sm:$0xf] %vm3070, %v3198
      %p3263 = scmp.lt.s32.totalorder %s20, 1
      %s3264 = scalar_select %p3263, %s20, 1
      %s3265 = smul.addr %s3264, 32
      %s3266 = smul.addr %s3265, 4
      %s3267 = scalar_lea.vmem %s5, %s3266
      %p3268 = scmp.lt.s32.totalorder %s20, 1
      %s3269 = scalar_select %p3268, %s20, 1
      %s3270 = smul.addr %s3269, 32
      %s3271 = smul.addr %s3270, 4
      %s3272 = scalar_lea.vmem %s6, %s3271
      %p3273 = scmp.lt.s32.totalorder %s20, 1
      %s3274 = scalar_select %p3273, %s20, 1
      %s3275 = smul.addr %s3274, 2
      %s3276 = scalar_lea.vmem %s7, %s3275
      %p3277 = scmp.lt.s32.totalorder %s20, 1
      %s3278 = scalar_select %p3277, %s20, 1
      %s3279 = smul.addr %s3278, 2
      %s3280 = scalar_lea.vmem %s8, %s3279
      // Predicated region
      $region41: #{residual_unit_forward.3} parent=39 // pred_check
        %p3281 = pneg %p148
      $region42: #{residual_unit_forward.3} parent=39 // pred_check_branch
        %3283 = sbr.rel (%p3281) target = $region44
      $region43: #{residual_unit_forward.3} parent=39 // pred_region
        _
      $region44: #{residual_unit_forward.3} parent=39 // pred_fallthru
        _
      // Predicated region
      $region45: #{residual_unit_forward.3} parent=39 // pred_check
        %p3284 = pneg %p174
      $region46: #{residual_unit_forward.3} parent=39 // pred_check_branch
        %3286 = sbr.rel (%p3284) target = $region48
      $region47: #{residual_unit_forward.3} parent=39 // pred_region
        _
      $region48: #{residual_unit_forward.3} parent=39 // pred_fallthru
        _
      // Predicated region
      $region49: #{residual_unit_forward.3} parent=39 // pred_check
        %p3287 = pneg %p200
      $region50: #{residual_unit_forward.3} parent=39 // pred_check_branch
        %3289 = sbr.rel (%p3287) target = $region52
      $region51: #{residual_unit_forward.3} parent=39 // pred_region
        _
      $region52: #{residual_unit_forward.3} parent=39 // pred_fallthru
        _
      // Predicated region
      $region53: #{residual_unit_forward.3} parent=39 // pred_check
        %p3290 = pneg %p226
      $region54: #{residual_unit_forward.3} parent=39 // pred_check_branch
        %3292 = sbr.rel (%p3290) target = $region56
      $region55: #{residual_unit_forward.3} parent=39 // pred_region
        _
      $region56: #{residual_unit_forward.3} parent=39 // pred_fallthru
        _
    $region40: #{residual_unit_forward.3} parent=5 // pred_fallthru
      _
    %p3293 = scmp.le.s32.totalorder 2, %s15
    // Predicated region
    $region57: #{residual_unit_forward.3} parent=5 // pred_check
      %p3294 = pneg %p3293
    $region58: #{residual_unit_forward.3} parent=5 // pred_check_branch
      %3296 = sbr.rel (%p3294) target = $region60
    $region59: #{residual_unit_forward.3} parent=5 // pred_region
      %s3297 = ssub.s32 %s15, 2
      // Predicated region
      $region61: #{residual_unit_forward.3} parent=59 // pred_check
        %p3298 = pneg %p154
      $region62: #{residual_unit_forward.3} parent=59 // pred_check_branch
        %3300 = sbr.rel (%p3298) target = $region64
      $region63: #{residual_unit_forward.3} parent=59 // pred_region
        %p3301 = scmp.lt.s32.totalorder %s21, 1
        %s3302 = scalar_select %p3301, %s21, 1
        %s3303 = smul.addr %s3302, 32
        %s3304 = smul.addr %s3303, 4
        %s3305 = scalar_lea.vmem %s5, %s3304
      $region64: #{residual_unit_forward.3} parent=59 // pred_fallthru
        _
      // Predicated region
      $region65: #{residual_unit_forward.3} parent=59 // pred_check
        %p3306 = pneg %p180
      $region66: #{residual_unit_forward.3} parent=59 // pred_check_branch
        %3308 = sbr.rel (%p3306) target = $region68
      $region67: #{residual_unit_forward.3} parent=59 // pred_region
        %p3309 = scmp.lt.s32.totalorder %s21, 1
        %s3310 = scalar_select %p3309, %s21, 1
        %s3311 = smul.addr %s3310, 32
        %s3312 = smul.addr %s3311, 4
        %s3313 = scalar_lea.vmem %s6, %s3312
      $region68: #{residual_unit_forward.3} parent=59 // pred_fallthru
        _
      // Predicated region
      $region69: #{residual_unit_forward.3} parent=59 // pred_check
        %p3314 = pneg %p206
      $region70: #{residual_unit_forward.3} parent=59 // pred_check_branch
        %3316 = sbr.rel (%p3314) target = $region72
      $region71: #{residual_unit_forward.3} parent=59 // pred_region
        %p3317 = scmp.lt.s32.totalorder %s21, 1
        %s3318 = scalar_select %p3317, %s21, 1
        %s3319 = smul.addr %s3318, 2
        %s3320 = scalar_lea.vmem %s7, %s3319
      $region72: #{residual_unit_forward.3} parent=59 // pred_fallthru
        _
      // Predicated region
      $region73: #{residual_unit_forward.3} parent=59 // pred_check
        %p3321 = pneg %p232
      $region74: #{residual_unit_forward.3} parent=59 // pred_check_branch
        %3323 = sbr.rel (%p3321) target = $region76
      $region75: #{residual_unit_forward.3} parent=59 // pred_region
        %p3324 = scmp.lt.s32.totalorder %s21, 1
        %s3325 = scalar_select %p3324, %s21, 1
        %s3326 = smul.addr %s3325, 2
        %s3327 = scalar_lea.vmem %s8, %s3326
      $region76: #{residual_unit_forward.3} parent=59 // pred_fallthru
        _
    $region60: #{residual_unit_forward.3} parent=5 // pred_fallthru
      _
  $region6: #{residual_unit_forward.3} parent=0 // loop_footer
    %s19 = sadd.s32 1, %s15
  $region7: #{residual_unit_forward.3} parent=0 // loop_footer_branch
    %14 = sbr.rel target = $region3
  $region8: #{residual_unit_forward.3} parent=0 // loop_exit
    _

</llo_original>
